<compile_context>
chip_gen: v6e
topology: v6e:2x2x1
jax: 0.10.0
libtpu: 0.0.40
codegen_flags: <defaults>
</compile_context>

<pallas_src>
import functools

import jax
import jax.numpy as jnp
from jax.experimental import pallas as pl
from jax.experimental.pallas import tpu as pltpu

INPUT_DIM = 768
HIDDEN1 = 256
SHARED_DIM = 128
CAL_DIM = 64
NUM_HEADS = 8
HEAD_DIM = INPUT_DIM // NUM_HEADS        # 96

# Order of the prepared/stacked weight arrays passed to the kernel.
FUSED_PARAM_ORDER = [
    "wqkv", "bqkv",                      # fused in-projection (scale folded into Q)
    "wom1", "bom1",                      # fused out_proj @ MLP-linear1
    "g1", "be1", "w2", "b2", "g2", "be2",            # MLP LN/ReLU + Linear(256->128) + LN
    "a1", "ab1", "ag1", "abe1", "a2", "ab2", "ag2", "abe2",  # aligner (128->128->64)
]


def _layernorm(x, gamma, beta, eps=1e-5):
    mu = jnp.mean(x, axis=-1, keepdims=True)
    var = jnp.mean((x - mu) ** 2, axis=-1, keepdims=True)
    return (x - mu) * jax.lax.rsqrt(var + eps) * gamma + beta


# ---------------- Pallas kernel: one encoder+aligner branch per grid step ----------------

def branch_kernel(x_ref,
                  wqkv_ref, bqkv_ref, wom1_ref, bom1_ref,
                  g1_ref, be1_ref, w2_ref, b2_ref, g2_ref, be2_ref,
                  a1_ref, ab1_ref, ag1_ref, abe1_ref,
                  a2_ref, ab2_ref, ag2_ref, abe2_ref,
                  out_ref, *, batch, seq):
    x = x_ref[0]                                             # (B*S, 768) f32

    # --- fused Q/K/V projection on the whole (B*S, D) slab (bf16 weights, f32 accum) ---
    qkv = jnp.dot(x.astype(jnp.bfloat16), wqkv_ref[0],
                  preferred_element_type=jnp.float32) + bqkv_ref[0]   # (B*S, 3*768)
    q = qkv[:, :INPUT_DIM].reshape(batch, seq, INPUT_DIM)    # 1/sqrt(head_dim) folded in
    k = qkv[:, INPUT_DIM:2 * INPUT_DIM].reshape(batch, seq, INPUT_DIM)
    v = qkv[:, 2 * INPUT_DIM:].reshape(batch, seq, INPUT_DIM)

    # --- per-head softmax(QK^T)V, batched over B.  The 96-wide head slices are lane-
    #     misaligned, but they act on tiny (B,S,96) activations; the relayout/VPU cost is
    #     hidden under the weight DMA (kernel is memory-bound).  Attention dropout (0.5)
    #     is identity in eval. ---
    ctx_heads = []
    for h in range(NUM_HEADS):
        lo = h * HEAD_DIM
        qs = q[:, :, lo:lo + HEAD_DIM].astype(jnp.bfloat16)
        ks = k[:, :, lo:lo + HEAD_DIM].astype(jnp.bfloat16)
        vs = v[:, :, lo:lo + HEAD_DIM].astype(jnp.bfloat16)
        s = jnp.einsum('bqe,bke->bqk', qs, ks,
                       preferred_element_type=jnp.float32)   # (B, S, S)
        s = s - jnp.max(s, axis=-1, keepdims=True)
        p = jnp.exp(s)
        # EUP reciprocal (otherwise-idle slot) instead of a VPU divide.
        p = p * pl.reciprocal(jnp.sum(p, axis=-1, keepdims=True), approx=True)
        ctx_heads.append(jnp.einsum('bqk,bke->bqe', p.astype(jnp.bfloat16), vs,
                                    preferred_element_type=jnp.float32))
    ctx = jnp.concatenate(ctx_heads, axis=-1).reshape(batch * seq, INPUT_DIM)

    # --- fused out_proj @ MLP-linear1 (eval-only algebraic fusion), then LN -> ReLU ---
    h1 = jnp.dot(ctx.astype(jnp.bfloat16), wom1_ref[0],
                 preferred_element_type=jnp.float32) + bom1_ref[0]    # (B*S, 256)
    h1 = jnp.maximum(_layernorm(h1, g1_ref[0], be1_ref[0]), 0.0)
    # nn.Dropout() here is identity in eval.
    h2 = jnp.dot(h1.astype(jnp.bfloat16), w2_ref[0],
                 preferred_element_type=jnp.float32) + b2_ref[0]      # (B*S, 128)
    h2 = jnp.maximum(_layernorm(h2, g2_ref[0], be2_ref[0]), 0.0)

    # --- aligner: Linear -> LN -> ReLU -> Linear -> LN -> ReLU ---
    z1 = jnp.dot(h2.astype(jnp.bfloat16), a1_ref[0],
                 preferred_element_type=jnp.float32) + ab1_ref[0]
    z1 = jnp.maximum(_layernorm(z1, ag1_ref[0], abe1_ref[0]), 0.0)
    z2 = jnp.dot(z1.astype(jnp.bfloat16), a2_ref[0],
                 preferred_element_type=jnp.float32) + ab2_ref[0]
    z2 = jnp.maximum(_layernorm(z2, ag2_ref[0], abe2_ref[0]), 0.0)

    out_ref[0] = z2.astype(out_ref.dtype)                    # (B*S, 64)


# ---------------- wrappers ----------------

def prepare_branch_params(p):
    """Run ONCE outside jit.  Fold 1/sqrt(head_dim) into Q, fuse QKV into one matmul,
    algebraically fuse out_proj @ MLP-linear1 (compose in f32), cast matmul weights to
    bf16 (halves their HBM stream).  LN params / biases stay f32."""
    scale = 1.0 / (HEAD_DIM ** 0.5)
    wqkv = jnp.concatenate([p["wq"] * scale, p["wk"], p["wv"]], axis=1)   # (768, 2304)
    bqkv = jnp.concatenate([p["bq"] * scale, p["bk"], p["bv"]], axis=1)   # (1, 2304)
    wom1 = p["wo"] @ p["w1"]                                              # (768, 256) f32
    bom1 = p["bo"] @ p["w1"] + p["b1"]                                    # (1, 256)
    return {
        "wqkv": wqkv.astype(jnp.bfloat16),
        "bqkv": bqkv.astype(jnp.float32),
        "wom1": wom1.astype(jnp.bfloat16),
        "bom1": bom1.astype(jnp.float32),
        "g1": p["g1"], "be1": p["be1"],
        "w2": p["w2"].astype(jnp.bfloat16), "b2": p["b2"], "g2": p["g2"], "be2": p["be2"],
        "a1": p["a1"].astype(jnp.bfloat16), "ab1": p["ab1"], "ag1": p["ag1"], "abe1": p["abe1"],
        "a2": p["a2"].astype(jnp.bfloat16), "ab2": p["ab2"], "ag2": p["ag2"], "abe2": p["abe2"],
    }


def prepare_similarity_space_params(text_params, image_params):
    """Run ONCE outside jit: stacks text/image prepared params along a leading modality axis."""
    tp = prepare_branch_params(text_params)
    ip = prepare_branch_params(image_params)
    return {k: jnp.stack([tp[k], ip[k]], axis=0) for k in FUSED_PARAM_ORDER}


def encode_branches(post, image, prepared):
    B, S, D = post.shape
    N = B * S
    xs = jnp.stack([post.reshape(N, D), image.reshape(N, D)], axis=0)     # (2, N, D)
    weights = [prepared[k] for k in FUSED_PARAM_ORDER]

    idx = lambda m: (m, 0, 0)
    in_specs = [pl.BlockSpec((1, N, D), idx)]
    in_specs += [pl.BlockSpec((1,) + w.shape[1:], idx) for w in weights]

    out = pl.pallas_call(
        functools.partial(branch_kernel, batch=B, seq=S),
        out_shape=jax.ShapeDtypeStruct((2, N, CAL_DIM), jnp.float32),
        grid=(2,),                                   # modality axis: text / image
        in_specs=in_specs,
        out_specs=pl.BlockSpec((1, N, CAL_DIM), idx),
        compiler_params=pltpu.CompilerParams(
            # "parallel" lets the modality axis shard across the two TensorCores on v7x
            # (no-op on v5e/v6e).  TODO(synk): verify in xprof that both v7x TCs are
            # active; switch to pltpu.CORE_PARALLEL if plain "parallel" does not split.
            dimension_semantics=("parallel",),
            # Explicit (v5e default scoped VMEM is 16 MiB); ~9 MiB actually needed,
            # leaves >30 MiB headroom even on v7x's 64 MiB physical VMEM.
            vmem_limit_bytes=32 << 20),
    )(xs, *weights)
    return out[0].reshape(B, S, CAL_DIM), out[1].reshape(B, S, CAL_DIM)


def similarity_space_forward(post, image, prepared):
    post_out, image_out = encode_branches(post, image, prepared)
    # Cosine-similarity tail as plain jnp (XLA fuses it): at (B,S,S)=(2,8,8) the compute is
    # sub-microsecond, so a second pallas_call launch would cost more than the work.
    # Mirrors torch exactly: matmul, then divide by ||post|| and ||image||^T (no eps clamp).
    sim = jnp.einsum('bqc,bkc->bqk', post_out, image_out,
                     preferred_element_type=jnp.float32)
    sim = sim / jnp.linalg.norm(post_out, axis=-1, keepdims=True)
    sim = sim / jnp.linalg.norm(image_out, axis=-1)[:, None, :]
    return post_out, image_out, sim


# ---------------- deterministic parameter construction ----------------

def _init_linear(key, fan_in, fan_out):
    # Mirrors torch.nn.Linear default init: U(-1/sqrt(fan_in), 1/sqrt(fan_in)).
    kw, kb = jax.random.split(key)
    bound = 1.0 / (fan_in ** 0.5)
    w = jax.random.uniform(kw, (fan_in, fan_out), jnp.float32, -bound, bound)
    b = jax.random.uniform(kb, (1, fan_out), jnp.float32, -bound, bound)
    return w, b


def make_branch_params(key):
    keys = jax.random.split(key, 8)
    p = {}
    p["wq"], p["bq"] = _init_linear(keys[0], INPUT_DIM, INPUT_DIM)
    p["wk"], p["bk"] = _init_linear(keys[1], INPUT_DIM, INPUT_DIM)
    p["wv"], p["bv"] = _init_linear(keys[2], INPUT_DIM, INPUT_DIM)
    p["wo"], p["bo"] = _init_linear(keys[3], INPUT_DIM, INPUT_DIM)
    p["w1"], p["b1"] = _init_linear(keys[4], INPUT_DIM, HIDDEN1)
    p["g1"], p["be1"] = jnp.ones((1, HIDDEN1), jnp.float32), jnp.zeros((1, HIDDEN1), jnp.float32)
    p["w2"], p["b2"] = _init_linear(keys[5], HIDDEN1, SHARED_DIM)
    p["g2"], p["be2"] = jnp.ones((1, SHARED_DIM), jnp.float32), jnp.zeros((1, SHARED_DIM), jnp.float32)
    p["a1"], p["ab1"] = _init_linear(keys[6], SHARED_DIM, SHARED_DIM)
    p["ag1"], p["abe1"] = jnp.ones((1, SHARED_DIM), jnp.float32), jnp.zeros((1, SHARED_DIM), jnp.float32)
    p["a2"], p["ab2"] = _init_linear(keys[7], SHARED_DIM, CAL_DIM)
    p["ag2"], p["abe2"] = jnp.ones((1, CAL_DIM), jnp.float32), jnp.zeros((1, CAL_DIM), jnp.float32)
    return p


if __name__ == "__main__":
    key = jax.random.PRNGKey(0)
    k_post, k_img, k_tp, k_ip = jax.random.split(key, 4)

    B, S = 2, 8
    post = jax.random.normal(k_post, (B, S, INPUT_DIM), jnp.float32)
    image = jax.random.normal(k_img, (B, S, INPUT_DIM), jnp.float32)

    text_params = make_branch_params(k_tp)
    image_params = make_branch_params(k_ip)

    # Weight preprocessing hoisted out of the jitted per-call path: run exactly once.
    prepared = jax.block_until_ready(
        prepare_similarity_space_params(text_params, image_params))

    fwd = jax.jit(similarity_space_forward)
    post_out, image_out, sim = fwd(post, image, prepared)
    jax.block_until_ready((post_out, image_out, sim))

    assert post_out.shape == (B, S, CAL_DIM)
    assert image_out.shape == (B, S, CAL_DIM)
    assert sim.shape == (B, S, S)
    assert bool(jnp.all(jnp.isfinite(post_out)))
    assert bool(jnp.all(jnp.isfinite(image_out)))
    assert bool(jnp.all(jnp.isfinite(sim)))
    print("KERNEL_OK")
</pallas_src>

<mosaic_0001>
module attributes {stable_mosaic.version = 11 : i64} {
  func.func @branch_kernel(%arg0: i32, %arg1: memref<1x16x768xf32, #tpu.memory_space<vmem>>, %arg2: memref<1x768x2304xbf16, #tpu.memory_space<vmem>>, %arg3: memref<1x1x2304xf32, #tpu.memory_space<vmem>>, %arg4: memref<1x768x256xbf16, #tpu.memory_space<vmem>>, %arg5: memref<1x1x256xf32, #tpu.memory_space<vmem>>, %arg6: memref<1x1x256xf32, #tpu.memory_space<vmem>>, %arg7: memref<1x1x256xf32, #tpu.memory_space<vmem>>, %arg8: memref<1x256x128xbf16, #tpu.memory_space<vmem>>, %arg9: memref<1x1x128xf32, #tpu.memory_space<vmem>>, %arg10: memref<1x1x128xf32, #tpu.memory_space<vmem>>, %arg11: memref<1x1x128xf32, #tpu.memory_space<vmem>>, %arg12: memref<1x128x128xbf16, #tpu.memory_space<vmem>>, %arg13: memref<1x1x128xf32, #tpu.memory_space<vmem>>, %arg14: memref<1x1x128xf32, #tpu.memory_space<vmem>>, %arg15: memref<1x1x128xf32, #tpu.memory_space<vmem>>, %arg16: memref<1x128x64xbf16, #tpu.memory_space<vmem>>, %arg17: memref<1x1x64xf32, #tpu.memory_space<vmem>>, %arg18: memref<1x1x64xf32, #tpu.memory_space<vmem>>, %arg19: memref<1x1x64xf32, #tpu.memory_space<vmem>>, %arg20: memref<1x16x64xf32, #tpu.memory_space<vmem>>) attributes {dimension_semantics = [#tpu.dimension_semantics<parallel>], iteration_bounds = array<i64: 2>, scalar_prefetch = 0 : i64, scratch_operands = 0 : i64, tpu.core_type = #tpu.core_type<tc>, window_params = [{transform_indices = @transform_0, window_bounds = array<i64: 1, 16, 768>}, {transform_indices = @transform_1, window_bounds = array<i64: 1, 768, 2304>}, {transform_indices = @transform_2, window_bounds = array<i64: 1, 1, 2304>}, {transform_indices = @transform_3, window_bounds = array<i64: 1, 768, 256>}, {transform_indices = @transform_4, window_bounds = array<i64: 1, 1, 256>}, {transform_indices = @transform_5, window_bounds = array<i64: 1, 1, 256>}, {transform_indices = @transform_6, window_bounds = array<i64: 1, 1, 256>}, {transform_indices = @transform_7, window_bounds = array<i64: 1, 256, 128>}, {transform_indices = @transform_8, window_bounds = array<i64: 1, 1, 128>}, {transform_indices = @transform_9, window_bounds = array<i64: 1, 1, 128>}, {transform_indices = @transform_10, window_bounds = array<i64: 1, 1, 128>}, {transform_indices = @transform_11, window_bounds = array<i64: 1, 128, 128>}, {transform_indices = @transform_12, window_bounds = array<i64: 1, 1, 128>}, {transform_indices = @transform_13, window_bounds = array<i64: 1, 1, 128>}, {transform_indices = @transform_14, window_bounds = array<i64: 1, 1, 128>}, {transform_indices = @transform_15, window_bounds = array<i64: 1, 128, 64>}, {transform_indices = @transform_16, window_bounds = array<i64: 1, 1, 64>}, {transform_indices = @transform_17, window_bounds = array<i64: 1, 1, 64>}, {transform_indices = @transform_18, window_bounds = array<i64: 1, 1, 64>}, {transform_indices = @transform_19, window_bounds = array<i64: 1, 16, 64>}]} {
    %c0 = arith.constant 0 : index
    %c0_0 = arith.constant 0 : index
    %c0_1 = arith.constant 0 : index
    %0 = vector.load %arg1[%c0, %c0_0, %c0_1] : memref<1x16x768xf32, #tpu.memory_space<vmem>>, vector<1x16x768xf32>
    %1 = vector.shape_cast %0 : vector<1x16x768xf32> to vector<16x768xf32>
    %2 = arith.truncf %1 : vector<16x768xf32> to vector<16x768xbf16>
    %c0_2 = arith.constant 0 : index
    %c0_3 = arith.constant 0 : index
    %c0_4 = arith.constant 0 : index
    %3 = vector.load %arg2[%c0_2, %c0_3, %c0_4] : memref<1x768x2304xbf16, #tpu.memory_space<vmem>>, vector<1x768x2304xbf16>
    %4 = vector.shape_cast %3 : vector<1x768x2304xbf16> to vector<768x2304xbf16>
    %cst = arith.constant dense<0.000000e+00> : vector<16x2304xf32>
    %5 = tpu.matmul %2, %4, %cst {dimension_numbers = #tpu.dot_dimension_numbers<[1], [0], [0], [1], [0, 0, 1, 1], [], []>} : vector<16x768xbf16>, vector<768x2304xbf16>, vector<16x2304xf32> -> vector<16x2304xf32>
    %c0_5 = arith.constant 0 : index
    %c0_6 = arith.constant 0 : index
    %c0_7 = arith.constant 0 : index
    %6 = vector.load %arg3[%c0_5, %c0_6, %c0_7] : memref<1x1x2304xf32, #tpu.memory_space<vmem>>, vector<1x1x2304xf32>
    %7 = vector.shape_cast %6 : vector<1x1x2304xf32> to vector<1x2304xf32>
    %8 = vector.broadcast %7 : vector<1x2304xf32> to vector<16x2304xf32>
    %9 = arith.addf %5, %8 : vector<16x2304xf32>
    %10 = vector.extract_strided_slice %9 {offsets = [0, 0], sizes = [16, 768], strides = [1, 1]} : vector<16x2304xf32> to vector<16x768xf32>
    %11 = vector.shape_cast %10 : vector<16x768xf32> to vector<2x8x768xf32>
    %12 = vector.extract_strided_slice %9 {offsets = [0, 768], sizes = [16, 768], strides = [1, 1]} : vector<16x2304xf32> to vector<16x768xf32>
    %13 = vector.shape_cast %12 : vector<16x768xf32> to vector<2x8x768xf32>
    %14 = vector.extract_strided_slice %9 {offsets = [0, 1536], sizes = [16, 768], strides = [1, 1]} : vector<16x2304xf32> to vector<16x768xf32>
    %15 = vector.shape_cast %14 : vector<16x768xf32> to vector<2x8x768xf32>
    %16 = vector.extract_strided_slice %11 {offsets = [0, 0, 0], sizes = [2, 8, 96], strides = [1, 1, 1]} : vector<2x8x768xf32> to vector<2x8x96xf32>
    %17 = arith.truncf %16 : vector<2x8x96xf32> to vector<2x8x96xbf16>
    %18 = vector.extract_strided_slice %13 {offsets = [0, 0, 0], sizes = [2, 8, 96], strides = [1, 1, 1]} : vector<2x8x768xf32> to vector<2x8x96xf32>
    %19 = arith.truncf %18 : vector<2x8x96xf32> to vector<2x8x96xbf16>
    %20 = vector.extract_strided_slice %15 {offsets = [0, 0, 0], sizes = [2, 8, 96], strides = [1, 1, 1]} : vector<2x8x768xf32> to vector<2x8x96xf32>
    %21 = arith.truncf %20 : vector<2x8x96xf32> to vector<2x8x96xbf16>
    "tpu.trace_start"() <{level = 10 : i32, message = "bqe,bke->bqk"}> : () -> ()
    %cst_8 = arith.constant dense<0.000000e+00> : vector<2x8x8xf32>
    %22 = tpu.matmul %17, %19, %cst_8 {dimension_numbers = #tpu.dot_dimension_numbers<[2], [2], [1], [1], [0, 0, 0, 1, 1, 1], [0], [0]>} : vector<2x8x96xbf16>, vector<2x8x96xbf16>, vector<2x8x8xf32> -> vector<2x8x8xf32>
    "tpu.trace_stop"() : () -> ()
    %cst_9 = arith.constant dense<0xFF800000> : vector<2x8xf32>
    %23 = vector.multi_reduction <maximumf>, %22, %cst_9 [2] : vector<2x8x8xf32> to vector<2x8xf32>
    %24 = vector.shape_cast %23 : vector<2x8xf32> to vector<2x8x1xf32>
    %25 = vector.broadcast %24 : vector<2x8x1xf32> to vector<2x8x8xf32>
    %26 = arith.subf %22, %25 : vector<2x8x8xf32>
    %27 = math.exp %26 : vector<2x8x8xf32>
    %cst_10 = arith.constant dense<0.000000e+00> : vector<2x8xf32>
    %28 = vector.multi_reduction <add>, %27, %cst_10 [2] : vector<2x8x8xf32> to vector<2x8xf32>
    %29 = vector.shape_cast %28 : vector<2x8xf32> to vector<2x8x1xf32>
    %30 = tpu.reciprocal %29 {approx = true} : vector<2x8x1xf32> -> vector<2x8x1xf32>
    %31 = vector.broadcast %30 : vector<2x8x1xf32> to vector<2x8x8xf32>
    %32 = arith.mulf %27, %31 : vector<2x8x8xf32>
    %33 = arith.truncf %32 : vector<2x8x8xf32> to vector<2x8x8xbf16>
    "tpu.trace_start"() <{level = 10 : i32, message = "bqk,bke->bqe"}> : () -> ()
    %cst_11 = arith.constant dense<0.000000e+00> : vector<2x8x96xf32>
    %34 = tpu.matmul %33, %21, %cst_11 {dimension_numbers = #tpu.dot_dimension_numbers<[2], [1], [1], [2], [0, 0, 0, 1, 1, 2], [0], [0]>} : vector<2x8x8xbf16>, vector<2x8x96xbf16>, vector<2x8x96xf32> -> vector<2x8x96xf32>
    "tpu.trace_stop"() : () -> ()
    %35 = vector.extract_strided_slice %11 {offsets = [0, 0, 96], sizes = [2, 8, 96], strides = [1, 1, 1]} : vector<2x8x768xf32> to vector<2x8x96xf32>
    %36 = arith.truncf %35 : vector<2x8x96xf32> to vector<2x8x96xbf16>
    %37 = vector.extract_strided_slice %13 {offsets = [0, 0, 96], sizes = [2, 8, 96], strides = [1, 1, 1]} : vector<2x8x768xf32> to vector<2x8x96xf32>
    %38 = arith.truncf %37 : vector<2x8x96xf32> to vector<2x8x96xbf16>
    %39 = vector.extract_strided_slice %15 {offsets = [0, 0, 96], sizes = [2, 8, 96], strides = [1, 1, 1]} : vector<2x8x768xf32> to vector<2x8x96xf32>
    %40 = arith.truncf %39 : vector<2x8x96xf32> to vector<2x8x96xbf16>
    "tpu.trace_start"() <{level = 10 : i32, message = "bqe,bke->bqk"}> : () -> ()
    %cst_12 = arith.constant dense<0.000000e+00> : vector<2x8x8xf32>
    %41 = tpu.matmul %36, %38, %cst_12 {dimension_numbers = #tpu.dot_dimension_numbers<[2], [2], [1], [1], [0, 0, 0, 1, 1, 1], [0], [0]>} : vector<2x8x96xbf16>, vector<2x8x96xbf16>, vector<2x8x8xf32> -> vector<2x8x8xf32>
    "tpu.trace_stop"() : () -> ()
    %cst_13 = arith.constant dense<0xFF800000> : vector<2x8xf32>
    %42 = vector.multi_reduction <maximumf>, %41, %cst_13 [2] : vector<2x8x8xf32> to vector<2x8xf32>
    %43 = vector.shape_cast %42 : vector<2x8xf32> to vector<2x8x1xf32>
    %44 = vector.broadcast %43 : vector<2x8x1xf32> to vector<2x8x8xf32>
    %45 = arith.subf %41, %44 : vector<2x8x8xf32>
    %46 = math.exp %45 : vector<2x8x8xf32>
    %cst_14 = arith.constant dense<0.000000e+00> : vector<2x8xf32>
    %47 = vector.multi_reduction <add>, %46, %cst_14 [2] : vector<2x8x8xf32> to vector<2x8xf32>
    %48 = vector.shape_cast %47 : vector<2x8xf32> to vector<2x8x1xf32>
    %49 = tpu.reciprocal %48 {approx = true} : vector<2x8x1xf32> -> vector<2x8x1xf32>
    %50 = vector.broadcast %49 : vector<2x8x1xf32> to vector<2x8x8xf32>
    %51 = arith.mulf %46, %50 : vector<2x8x8xf32>
    %52 = arith.truncf %51 : vector<2x8x8xf32> to vector<2x8x8xbf16>
    "tpu.trace_start"() <{level = 10 : i32, message = "bqk,bke->bqe"}> : () -> ()
    %cst_15 = arith.constant dense<0.000000e+00> : vector<2x8x96xf32>
    %53 = tpu.matmul %52, %40, %cst_15 {dimension_numbers = #tpu.dot_dimension_numbers<[2], [1], [1], [2], [0, 0, 0, 1, 1, 2], [0], [0]>} : vector<2x8x8xbf16>, vector<2x8x96xbf16>, vector<2x8x96xf32> -> vector<2x8x96xf32>
    "tpu.trace_stop"() : () -> ()
    %54 = vector.extract_strided_slice %11 {offsets = [0, 0, 192], sizes = [2, 8, 96], strides = [1, 1, 1]} : vector<2x8x768xf32> to vector<2x8x96xf32>
    %55 = arith.truncf %54 : vector<2x8x96xf32> to vector<2x8x96xbf16>
    %56 = vector.extract_strided_slice %13 {offsets = [0, 0, 192], sizes = [2, 8, 96], strides = [1, 1, 1]} : vector<2x8x768xf32> to vector<2x8x96xf32>
    %57 = arith.truncf %56 : vector<2x8x96xf32> to vector<2x8x96xbf16>
    %58 = vector.extract_strided_slice %15 {offsets = [0, 0, 192], sizes = [2, 8, 96], strides = [1, 1, 1]} : vector<2x8x768xf32> to vector<2x8x96xf32>
    %59 = arith.truncf %58 : vector<2x8x96xf32> to vector<2x8x96xbf16>
    "tpu.trace_start"() <{level = 10 : i32, message = "bqe,bke->bqk"}> : () -> ()
    %cst_16 = arith.constant dense<0.000000e+00> : vector<2x8x8xf32>
    %60 = tpu.matmul %55, %57, %cst_16 {dimension_numbers = #tpu.dot_dimension_numbers<[2], [2], [1], [1], [0, 0, 0, 1, 1, 1], [0], [0]>} : vector<2x8x96xbf16>, vector<2x8x96xbf16>, vector<2x8x8xf32> -> vector<2x8x8xf32>
    "tpu.trace_stop"() : () -> ()
    %cst_17 = arith.constant dense<0xFF800000> : vector<2x8xf32>
    %61 = vector.multi_reduction <maximumf>, %60, %cst_17 [2] : vector<2x8x8xf32> to vector<2x8xf32>
    %62 = vector.shape_cast %61 : vector<2x8xf32> to vector<2x8x1xf32>
    %63 = vector.broadcast %62 : vector<2x8x1xf32> to vector<2x8x8xf32>
    %64 = arith.subf %60, %63 : vector<2x8x8xf32>
    %65 = math.exp %64 : vector<2x8x8xf32>
    %cst_18 = arith.constant dense<0.000000e+00> : vector<2x8xf32>
    %66 = vector.multi_reduction <add>, %65, %cst_18 [2] : vector<2x8x8xf32> to vector<2x8xf32>
    %67 = vector.shape_cast %66 : vector<2x8xf32> to vector<2x8x1xf32>
    %68 = tpu.reciprocal %67 {approx = true} : vector<2x8x1xf32> -> vector<2x8x1xf32>
    %69 = vector.broadcast %68 : vector<2x8x1xf32> to vector<2x8x8xf32>
    %70 = arith.mulf %65, %69 : vector<2x8x8xf32>
    %71 = arith.truncf %70 : vector<2x8x8xf32> to vector<2x8x8xbf16>
    "tpu.trace_start"() <{level = 10 : i32, message = "bqk,bke->bqe"}> : () -> ()
    %cst_19 = arith.constant dense<0.000000e+00> : vector<2x8x96xf32>
    %72 = tpu.matmul %71, %59, %cst_19 {dimension_numbers = #tpu.dot_dimension_numbers<[2], [1], [1], [2], [0, 0, 0, 1, 1, 2], [0], [0]>} : vector<2x8x8xbf16>, vector<2x8x96xbf16>, vector<2x8x96xf32> -> vector<2x8x96xf32>
    "tpu.trace_stop"() : () -> ()
    %73 = vector.extract_strided_slice %11 {offsets = [0, 0, 288], sizes = [2, 8, 96], strides = [1, 1, 1]} : vector<2x8x768xf32> to vector<2x8x96xf32>
    %74 = arith.truncf %73 : vector<2x8x96xf32> to vector<2x8x96xbf16>
    %75 = vector.extract_strided_slice %13 {offsets = [0, 0, 288], sizes = [2, 8, 96], strides = [1, 1, 1]} : vector<2x8x768xf32> to vector<2x8x96xf32>
    %76 = arith.truncf %75 : vector<2x8x96xf32> to vector<2x8x96xbf16>
    %77 = vector.extract_strided_slice %15 {offsets = [0, 0, 288], sizes = [2, 8, 96], strides = [1, 1, 1]} : vector<2x8x768xf32> to vector<2x8x96xf32>
    %78 = arith.truncf %77 : vector<2x8x96xf32> to vector<2x8x96xbf16>
    "tpu.trace_start"() <{level = 10 : i32, message = "bqe,bke->bqk"}> : () -> ()
    %cst_20 = arith.constant dense<0.000000e+00> : vector<2x8x8xf32>
    %79 = tpu.matmul %74, %76, %cst_20 {dimension_numbers = #tpu.dot_dimension_numbers<[2], [2], [1], [1], [0, 0, 0, 1, 1, 1], [0], [0]>} : vector<2x8x96xbf16>, vector<2x8x96xbf16>, vector<2x8x8xf32> -> vector<2x8x8xf32>
    "tpu.trace_stop"() : () -> ()
    %cst_21 = arith.constant dense<0xFF800000> : vector<2x8xf32>
    %80 = vector.multi_reduction <maximumf>, %79, %cst_21 [2] : vector<2x8x8xf32> to vector<2x8xf32>
    %81 = vector.shape_cast %80 : vector<2x8xf32> to vector<2x8x1xf32>
    %82 = vector.broadcast %81 : vector<2x8x1xf32> to vector<2x8x8xf32>
    %83 = arith.subf %79, %82 : vector<2x8x8xf32>
    %84 = math.exp %83 : vector<2x8x8xf32>
    %cst_22 = arith.constant dense<0.000000e+00> : vector<2x8xf32>
    %85 = vector.multi_reduction <add>, %84, %cst_22 [2] : vector<2x8x8xf32> to vector<2x8xf32>
    %86 = vector.shape_cast %85 : vector<2x8xf32> to vector<2x8x1xf32>
    %87 = tpu.reciprocal %86 {approx = true} : vector<2x8x1xf32> -> vector<2x8x1xf32>
    %88 = vector.broadcast %87 : vector<2x8x1xf32> to vector<2x8x8xf32>
    %89 = arith.mulf %84, %88 : vector<2x8x8xf32>
    %90 = arith.truncf %89 : vector<2x8x8xf32> to vector<2x8x8xbf16>
    "tpu.trace_start"() <{level = 10 : i32, message = "bqk,bke->bqe"}> : () -> ()
    %cst_23 = arith.constant dense<0.000000e+00> : vector<2x8x96xf32>
    %91 = tpu.matmul %90, %78, %cst_23 {dimension_numbers = #tpu.dot_dimension_numbers<[2], [1], [1], [2], [0, 0, 0, 1, 1, 2], [0], [0]>} : vector<2x8x8xbf16>, vector<2x8x96xbf16>, vector<2x8x96xf32> -> vector<2x8x96xf32>
    "tpu.trace_stop"() : () -> ()
    %92 = vector.extract_strided_slice %11 {offsets = [0, 0, 384], sizes = [2, 8, 96], strides = [1, 1, 1]} : vector<2x8x768xf32> to vector<2x8x96xf32>
    %93 = arith.truncf %92 : vector<2x8x96xf32> to vector<2x8x96xbf16>
    %94 = vector.extract_strided_slice %13 {offsets = [0, 0, 384], sizes = [2, 8, 96], strides = [1, 1, 1]} : vector<2x8x768xf32> to vector<2x8x96xf32>
    %95 = arith.truncf %94 : vector<2x8x96xf32> to vector<2x8x96xbf16>
    %96 = vector.extract_strided_slice %15 {offsets = [0, 0, 384], sizes = [2, 8, 96], strides = [1, 1, 1]} : vector<2x8x768xf32> to vector<2x8x96xf32>
    %97 = arith.truncf %96 : vector<2x8x96xf32> to vector<2x8x96xbf16>
    "tpu.trace_start"() <{level = 10 : i32, message = "bqe,bke->bqk"}> : () -> ()
    %cst_24 = arith.constant dense<0.000000e+00> : vector<2x8x8xf32>
    %98 = tpu.matmul %93, %95, %cst_24 {dimension_numbers = #tpu.dot_dimension_numbers<[2], [2], [1], [1], [0, 0, 0, 1, 1, 1], [0], [0]>} : vector<2x8x96xbf16>, vector<2x8x96xbf16>, vector<2x8x8xf32> -> vector<2x8x8xf32>
    "tpu.trace_stop"() : () -> ()
    %cst_25 = arith.constant dense<0xFF800000> : vector<2x8xf32>
    %99 = vector.multi_reduction <maximumf>, %98, %cst_25 [2] : vector<2x8x8xf32> to vector<2x8xf32>
    %100 = vector.shape_cast %99 : vector<2x8xf32> to vector<2x8x1xf32>
    %101 = vector.broadcast %100 : vector<2x8x1xf32> to vector<2x8x8xf32>
    %102 = arith.subf %98, %101 : vector<2x8x8xf32>
    %103 = math.exp %102 : vector<2x8x8xf32>
    %cst_26 = arith.constant dense<0.000000e+00> : vector<2x8xf32>
    %104 = vector.multi_reduction <add>, %103, %cst_26 [2] : vector<2x8x8xf32> to vector<2x8xf32>
    %105 = vector.shape_cast %104 : vector<2x8xf32> to vector<2x8x1xf32>
    %106 = tpu.reciprocal %105 {approx = true} : vector<2x8x1xf32> -> vector<2x8x1xf32>
    %107 = vector.broadcast %106 : vector<2x8x1xf32> to vector<2x8x8xf32>
    %108 = arith.mulf %103, %107 : vector<2x8x8xf32>
    %109 = arith.truncf %108 : vector<2x8x8xf32> to vector<2x8x8xbf16>
    "tpu.trace_start"() <{level = 10 : i32, message = "bqk,bke->bqe"}> : () -> ()
    %cst_27 = arith.constant dense<0.000000e+00> : vector<2x8x96xf32>
    %110 = tpu.matmul %109, %97, %cst_27 {dimension_numbers = #tpu.dot_dimension_numbers<[2], [1], [1], [2], [0, 0, 0, 1, 1, 2], [0], [0]>} : vector<2x8x8xbf16>, vector<2x8x96xbf16>, vector<2x8x96xf32> -> vector<2x8x96xf32>
    "tpu.trace_stop"() : () -> ()
    %111 = vector.extract_strided_slice %11 {offsets = [0, 0, 480], sizes = [2, 8, 96], strides = [1, 1, 1]} : vector<2x8x768xf32> to vector<2x8x96xf32>
    %112 = arith.truncf %111 : vector<2x8x96xf32> to vector<2x8x96xbf16>
    %113 = vector.extract_strided_slice %13 {offsets = [0, 0, 480], sizes = [2, 8, 96], strides = [1, 1, 1]} : vector<2x8x768xf32> to vector<2x8x96xf32>
    %114 = arith.truncf %113 : vector<2x8x96xf32> to vector<2x8x96xbf16>
    %115 = vector.extract_strided_slice %15 {offsets = [0, 0, 480], sizes = [2, 8, 96], strides = [1, 1, 1]} : vector<2x8x768xf32> to vector<2x8x96xf32>
    %116 = arith.truncf %115 : vector<2x8x96xf32> to vector<2x8x96xbf16>
    "tpu.trace_start"() <{level = 10 : i32, message = "bqe,bke->bqk"}> : () -> ()
    %cst_28 = arith.constant dense<0.000000e+00> : vector<2x8x8xf32>
    %117 = tpu.matmul %112, %114, %cst_28 {dimension_numbers = #tpu.dot_dimension_numbers<[2], [2], [1], [1], [0, 0, 0, 1, 1, 1], [0], [0]>} : vector<2x8x96xbf16>, vector<2x8x96xbf16>, vector<2x8x8xf32> -> vector<2x8x8xf32>
    "tpu.trace_stop"() : () -> ()
    %cst_29 = arith.constant dense<0xFF800000> : vector<2x8xf32>
    %118 = vector.multi_reduction <maximumf>, %117, %cst_29 [2] : vector<2x8x8xf32> to vector<2x8xf32>
    %119 = vector.shape_cast %118 : vector<2x8xf32> to vector<2x8x1xf32>
    %120 = vector.broadcast %119 : vector<2x8x1xf32> to vector<2x8x8xf32>
    %121 = arith.subf %117, %120 : vector<2x8x8xf32>
    %122 = math.exp %121 : vector<2x8x8xf32>
    %cst_30 = arith.constant dense<0.000000e+00> : vector<2x8xf32>
    %123 = vector.multi_reduction <add>, %122, %cst_30 [2] : vector<2x8x8xf32> to vector<2x8xf32>
    %124 = vector.shape_cast %123 : vector<2x8xf32> to vector<2x8x1xf32>
    %125 = tpu.reciprocal %124 {approx = true} : vector<2x8x1xf32> -> vector<2x8x1xf32>
    %126 = vector.broadcast %125 : vector<2x8x1xf32> to vector<2x8x8xf32>
    %127 = arith.mulf %122, %126 : vector<2x8x8xf32>
    %128 = arith.truncf %127 : vector<2x8x8xf32> to vector<2x8x8xbf16>
    "tpu.trace_start"() <{level = 10 : i32, message = "bqk,bke->bqe"}> : () -> ()
    %cst_31 = arith.constant dense<0.000000e+00> : vector<2x8x96xf32>
    %129 = tpu.matmul %128, %116, %cst_31 {dimension_numbers = #tpu.dot_dimension_numbers<[2], [1], [1], [2], [0, 0, 0, 1, 1, 2], [0], [0]>} : vector<2x8x8xbf16>, vector<2x8x96xbf16>, vector<2x8x96xf32> -> vector<2x8x96xf32>
    "tpu.trace_stop"() : () -> ()
    %130 = vector.extract_strided_slice %11 {offsets = [0, 0, 576], sizes = [2, 8, 96], strides = [1, 1, 1]} : vector<2x8x768xf32> to vector<2x8x96xf32>
    %131 = arith.truncf %130 : vector<2x8x96xf32> to vector<2x8x96xbf16>
    %132 = vector.extract_strided_slice %13 {offsets = [0, 0, 576], sizes = [2, 8, 96], strides = [1, 1, 1]} : vector<2x8x768xf32> to vector<2x8x96xf32>
    %133 = arith.truncf %132 : vector<2x8x96xf32> to vector<2x8x96xbf16>
    %134 = vector.extract_strided_slice %15 {offsets = [0, 0, 576], sizes = [2, 8, 96], strides = [1, 1, 1]} : vector<2x8x768xf32> to vector<2x8x96xf32>
    %135 = arith.truncf %134 : vector<2x8x96xf32> to vector<2x8x96xbf16>
    "tpu.trace_start"() <{level = 10 : i32, message = "bqe,bke->bqk"}> : () -> ()
    %cst_32 = arith.constant dense<0.000000e+00> : vector<2x8x8xf32>
    %136 = tpu.matmul %131, %133, %cst_32 {dimension_numbers = #tpu.dot_dimension_numbers<[2], [2], [1], [1], [0, 0, 0, 1, 1, 1], [0], [0]>} : vector<2x8x96xbf16>, vector<2x8x96xbf16>, vector<2x8x8xf32> -> vector<2x8x8xf32>
    "tpu.trace_stop"() : () -> ()
    %cst_33 = arith.constant dense<0xFF800000> : vector<2x8xf32>
    %137 = vector.multi_reduction <maximumf>, %136, %cst_33 [2] : vector<2x8x8xf32> to vector<2x8xf32>
    %138 = vector.shape_cast %137 : vector<2x8xf32> to vector<2x8x1xf32>
    %139 = vector.broadcast %138 : vector<2x8x1xf32> to vector<2x8x8xf32>
    %140 = arith.subf %136, %139 : vector<2x8x8xf32>
    %141 = math.exp %140 : vector<2x8x8xf32>
    %cst_34 = arith.constant dense<0.000000e+00> : vector<2x8xf32>
    %142 = vector.multi_reduction <add>, %141, %cst_34 [2] : vector<2x8x8xf32> to vector<2x8xf32>
    %143 = vector.shape_cast %142 : vector<2x8xf32> to vector<2x8x1xf32>
    %144 = tpu.reciprocal %143 {approx = true} : vector<2x8x1xf32> -> vector<2x8x1xf32>
    %145 = vector.broadcast %144 : vector<2x8x1xf32> to vector<2x8x8xf32>
    %146 = arith.mulf %141, %145 : vector<2x8x8xf32>
    %147 = arith.truncf %146 : vector<2x8x8xf32> to vector<2x8x8xbf16>
    "tpu.trace_start"() <{level = 10 : i32, message = "bqk,bke->bqe"}> : () -> ()
    %cst_35 = arith.constant dense<0.000000e+00> : vector<2x8x96xf32>
    %148 = tpu.matmul %147, %135, %cst_35 {dimension_numbers = #tpu.dot_dimension_numbers<[2], [1], [1], [2], [0, 0, 0, 1, 1, 2], [0], [0]>} : vector<2x8x8xbf16>, vector<2x8x96xbf16>, vector<2x8x96xf32> -> vector<2x8x96xf32>
    "tpu.trace_stop"() : () -> ()
    %149 = vector.extract_strided_slice %11 {offsets = [0, 0, 672], sizes = [2, 8, 96], strides = [1, 1, 1]} : vector<2x8x768xf32> to vector<2x8x96xf32>
    %150 = arith.truncf %149 : vector<2x8x96xf32> to vector<2x8x96xbf16>
    %151 = vector.extract_strided_slice %13 {offsets = [0, 0, 672], sizes = [2, 8, 96], strides = [1, 1, 1]} : vector<2x8x768xf32> to vector<2x8x96xf32>
    %152 = arith.truncf %151 : vector<2x8x96xf32> to vector<2x8x96xbf16>
    %153 = vector.extract_strided_slice %15 {offsets = [0, 0, 672], sizes = [2, 8, 96], strides = [1, 1, 1]} : vector<2x8x768xf32> to vector<2x8x96xf32>
    %154 = arith.truncf %153 : vector<2x8x96xf32> to vector<2x8x96xbf16>
    "tpu.trace_start"() <{level = 10 : i32, message = "bqe,bke->bqk"}> : () -> ()
    %cst_36 = arith.constant dense<0.000000e+00> : vector<2x8x8xf32>
    %155 = tpu.matmul %150, %152, %cst_36 {dimension_numbers = #tpu.dot_dimension_numbers<[2], [2], [1], [1], [0, 0, 0, 1, 1, 1], [0], [0]>} : vector<2x8x96xbf16>, vector<2x8x96xbf16>, vector<2x8x8xf32> -> vector<2x8x8xf32>
    "tpu.trace_stop"() : () -> ()
    %cst_37 = arith.constant dense<0xFF800000> : vector<2x8xf32>
    %156 = vector.multi_reduction <maximumf>, %155, %cst_37 [2] : vector<2x8x8xf32> to vector<2x8xf32>
    %157 = vector.shape_cast %156 : vector<2x8xf32> to vector<2x8x1xf32>
    %158 = vector.broadcast %157 : vector<2x8x1xf32> to vector<2x8x8xf32>
    %159 = arith.subf %155, %158 : vector<2x8x8xf32>
    %160 = math.exp %159 : vector<2x8x8xf32>
    %cst_38 = arith.constant dense<0.000000e+00> : vector<2x8xf32>
    %161 = vector.multi_reduction <add>, %160, %cst_38 [2] : vector<2x8x8xf32> to vector<2x8xf32>
    %162 = vector.shape_cast %161 : vector<2x8xf32> to vector<2x8x1xf32>
    %163 = tpu.reciprocal %162 {approx = true} : vector<2x8x1xf32> -> vector<2x8x1xf32>
    %164 = vector.broadcast %163 : vector<2x8x1xf32> to vector<2x8x8xf32>
    %165 = arith.mulf %160, %164 : vector<2x8x8xf32>
    %166 = arith.truncf %165 : vector<2x8x8xf32> to vector<2x8x8xbf16>
    "tpu.trace_start"() <{level = 10 : i32, message = "bqk,bke->bqe"}> : () -> ()
    %cst_39 = arith.constant dense<0.000000e+00> : vector<2x8x96xf32>
    %167 = tpu.matmul %166, %154, %cst_39 {dimension_numbers = #tpu.dot_dimension_numbers<[2], [1], [1], [2], [0, 0, 0, 1, 1, 2], [0], [0]>} : vector<2x8x8xbf16>, vector<2x8x96xbf16>, vector<2x8x96xf32> -> vector<2x8x96xf32>
    "tpu.trace_stop"() : () -> ()
    %168 = tpu.concatenate %34, %53, %72, %91, %110, %129, %148, %167 in 2 : vector<2x8x96xf32>, vector<2x8x96xf32>, vector<2x8x96xf32>, vector<2x8x96xf32>, vector<2x8x96xf32>, vector<2x8x96xf32>, vector<2x8x96xf32>, vector<2x8x96xf32> -> vector<2x8x768xf32>
    %169 = vector.shape_cast %168 : vector<2x8x768xf32> to vector<16x768xf32>
    %170 = arith.truncf %169 : vector<16x768xf32> to vector<16x768xbf16>
    %c0_40 = arith.constant 0 : index
    %c0_41 = arith.constant 0 : index
    %c0_42 = arith.constant 0 : index
    %171 = vector.load %arg4[%c0_40, %c0_41, %c0_42] : memref<1x768x256xbf16, #tpu.memory_space<vmem>>, vector<1x768x256xbf16>
    %172 = vector.shape_cast %171 : vector<1x768x256xbf16> to vector<768x256xbf16>
    %cst_43 = arith.constant dense<0.000000e+00> : vector<16x256xf32>
    %173 = tpu.matmul %170, %172, %cst_43 {dimension_numbers = #tpu.dot_dimension_numbers<[1], [0], [0], [1], [0, 0, 1, 1], [], []>} : vector<16x768xbf16>, vector<768x256xbf16>, vector<16x256xf32> -> vector<16x256xf32>
    %c0_44 = arith.constant 0 : index
    %c0_45 = arith.constant 0 : index
    %c0_46 = arith.constant 0 : index
    %174 = vector.load %arg5[%c0_44, %c0_45, %c0_46] : memref<1x1x256xf32, #tpu.memory_space<vmem>>, vector<1x1x256xf32>
    %175 = vector.shape_cast %174 : vector<1x1x256xf32> to vector<1x256xf32>
    %176 = vector.broadcast %175 : vector<1x256xf32> to vector<16x256xf32>
    %177 = arith.addf %173, %176 : vector<16x256xf32>
    %c0_47 = arith.constant 0 : index
    %c0_48 = arith.constant 0 : index
    %c0_49 = arith.constant 0 : index
    %178 = vector.load %arg6[%c0_47, %c0_48, %c0_49] : memref<1x1x256xf32, #tpu.memory_space<vmem>>, vector<1x1x256xf32>
    %179 = vector.shape_cast %178 : vector<1x1x256xf32> to vector<1x256xf32>
    %c0_50 = arith.constant 0 : index
    %c0_51 = arith.constant 0 : index
    %c0_52 = arith.constant 0 : index
    %180 = vector.load %arg7[%c0_50, %c0_51, %c0_52] : memref<1x1x256xf32, #tpu.memory_space<vmem>>, vector<1x1x256xf32>
    %181 = vector.shape_cast %180 : vector<1x1x256xf32> to vector<1x256xf32>
    %cst_53 = arith.constant dense<0.000000e+00> : vector<16xf32>
    %182 = vector.multi_reduction <add>, %177, %cst_53 [1] : vector<16x256xf32> to vector<16xf32>
    %183 = vector.shape_cast %182 : vector<16xf32> to vector<16x1xf32>
    %cst_54 = arith.constant 2.560000e+02 : f32
    %184 = vector.broadcast %cst_54 : f32 to vector<16x1xf32>
    %185 = arith.divf %183, %184 : vector<16x1xf32>
    %186 = vector.broadcast %185 : vector<16x1xf32> to vector<16x256xf32>
    %187 = arith.subf %177, %186 : vector<16x256xf32>
    %188 = arith.mulf %187, %187 : vector<16x256xf32>
    %cst_55 = arith.constant dense<0.000000e+00> : vector<16xf32>
    %189 = vector.multi_reduction <add>, %188, %cst_55 [1] : vector<16x256xf32> to vector<16xf32>
    %190 = vector.shape_cast %189 : vector<16xf32> to vector<16x1xf32>
    %cst_56 = arith.constant 2.560000e+02 : f32
    %191 = vector.broadcast %cst_56 : f32 to vector<16x1xf32>
    %192 = arith.divf %190, %191 : vector<16x1xf32>
    %193 = vector.broadcast %185 : vector<16x1xf32> to vector<16x256xf32>
    %194 = arith.subf %177, %193 : vector<16x256xf32>
    %cst_57 = arith.constant 9.99999974E-6 : f32
    %195 = vector.broadcast %cst_57 : f32 to vector<16x1xf32>
    %196 = arith.addf %192, %195 : vector<16x1xf32>
    %197 = math.rsqrt %196 : vector<16x1xf32>
    %198 = vector.broadcast %197 : vector<16x1xf32> to vector<16x256xf32>
    %199 = arith.mulf %194, %198 : vector<16x256xf32>
    %200 = vector.broadcast %179 : vector<1x256xf32> to vector<16x256xf32>
    %201 = arith.mulf %199, %200 : vector<16x256xf32>
    %202 = vector.broadcast %181 : vector<1x256xf32> to vector<16x256xf32>
    %203 = arith.addf %201, %202 : vector<16x256xf32>
    %cst_58 = arith.constant 0.000000e+00 : f32
    %204 = vector.broadcast %cst_58 : f32 to vector<16x256xf32>
    %205 = arith.maximumf %203, %204 : vector<16x256xf32>
    %206 = arith.truncf %205 : vector<16x256xf32> to vector<16x256xbf16>
    %c0_59 = arith.constant 0 : index
    %c0_60 = arith.constant 0 : index
    %c0_61 = arith.constant 0 : index
    %207 = vector.load %arg8[%c0_59, %c0_60, %c0_61] : memref<1x256x128xbf16, #tpu.memory_space<vmem>>, vector<1x256x128xbf16>
    %208 = vector.shape_cast %207 : vector<1x256x128xbf16> to vector<256x128xbf16>
    %cst_62 = arith.constant dense<0.000000e+00> : vector<16x128xf32>
    %209 = tpu.matmul %206, %208, %cst_62 {dimension_numbers = #tpu.dot_dimension_numbers<[1], [0], [0], [1], [0, 0, 1, 1], [], []>} : vector<16x256xbf16>, vector<256x128xbf16>, vector<16x128xf32> -> vector<16x128xf32>
    %c0_63 = arith.constant 0 : index
    %c0_64 = arith.constant 0 : index
    %c0_65 = arith.constant 0 : index
    %210 = vector.load %arg9[%c0_63, %c0_64, %c0_65] : memref<1x1x128xf32, #tpu.memory_space<vmem>>, vector<1x1x128xf32>
    %211 = vector.shape_cast %210 : vector<1x1x128xf32> to vector<1x128xf32>
    %212 = vector.broadcast %211 : vector<1x128xf32> to vector<16x128xf32>
    %213 = arith.addf %209, %212 : vector<16x128xf32>
    %c0_66 = arith.constant 0 : index
    %c0_67 = arith.constant 0 : index
    %c0_68 = arith.constant 0 : index
    %214 = vector.load %arg10[%c0_66, %c0_67, %c0_68] : memref<1x1x128xf32, #tpu.memory_space<vmem>>, vector<1x1x128xf32>
    %215 = vector.shape_cast %214 : vector<1x1x128xf32> to vector<1x128xf32>
    %c0_69 = arith.constant 0 : index
    %c0_70 = arith.constant 0 : index
    %c0_71 = arith.constant 0 : index
    %216 = vector.load %arg11[%c0_69, %c0_70, %c0_71] : memref<1x1x128xf32, #tpu.memory_space<vmem>>, vector<1x1x128xf32>
    %217 = vector.shape_cast %216 : vector<1x1x128xf32> to vector<1x128xf32>
    %cst_72 = arith.constant dense<0.000000e+00> : vector<16xf32>
    %218 = vector.multi_reduction <add>, %213, %cst_72 [1] : vector<16x128xf32> to vector<16xf32>
    %219 = vector.shape_cast %218 : vector<16xf32> to vector<16x1xf32>
    %cst_73 = arith.constant 1.280000e+02 : f32
    %220 = vector.broadcast %cst_73 : f32 to vector<16x1xf32>
    %221 = arith.divf %219, %220 : vector<16x1xf32>
    %222 = vector.broadcast %221 : vector<16x1xf32> to vector<16x128xf32>
    %223 = arith.subf %213, %222 : vector<16x128xf32>
    %224 = arith.mulf %223, %223 : vector<16x128xf32>
    %cst_74 = arith.constant dense<0.000000e+00> : vector<16xf32>
    %225 = vector.multi_reduction <add>, %224, %cst_74 [1] : vector<16x128xf32> to vector<16xf32>
    %226 = vector.shape_cast %225 : vector<16xf32> to vector<16x1xf32>
    %cst_75 = arith.constant 1.280000e+02 : f32
    %227 = vector.broadcast %cst_75 : f32 to vector<16x1xf32>
    %228 = arith.divf %226, %227 : vector<16x1xf32>
    %229 = vector.broadcast %221 : vector<16x1xf32> to vector<16x128xf32>
    %230 = arith.subf %213, %229 : vector<16x128xf32>
    %cst_76 = arith.constant 9.99999974E-6 : f32
    %231 = vector.broadcast %cst_76 : f32 to vector<16x1xf32>
    %232 = arith.addf %228, %231 : vector<16x1xf32>
    %233 = math.rsqrt %232 : vector<16x1xf32>
    %234 = vector.broadcast %233 : vector<16x1xf32> to vector<16x128xf32>
    %235 = arith.mulf %230, %234 : vector<16x128xf32>
    %236 = vector.broadcast %215 : vector<1x128xf32> to vector<16x128xf32>
    %237 = arith.mulf %235, %236 : vector<16x128xf32>
    %238 = vector.broadcast %217 : vector<1x128xf32> to vector<16x128xf32>
    %239 = arith.addf %237, %238 : vector<16x128xf32>
    %cst_77 = arith.constant 0.000000e+00 : f32
    %240 = vector.broadcast %cst_77 : f32 to vector<16x128xf32>
    %241 = arith.maximumf %239, %240 : vector<16x128xf32>
    %242 = arith.truncf %241 : vector<16x128xf32> to vector<16x128xbf16>
    %c0_78 = arith.constant 0 : index
    %c0_79 = arith.constant 0 : index
    %c0_80 = arith.constant 0 : index
    %243 = vector.load %arg12[%c0_78, %c0_79, %c0_80] : memref<1x128x128xbf16, #tpu.memory_space<vmem>>, vector<1x128x128xbf16>
    %244 = vector.shape_cast %243 : vector<1x128x128xbf16> to vector<128x128xbf16>
    %cst_81 = arith.constant dense<0.000000e+00> : vector<16x128xf32>
    %245 = tpu.matmul %242, %244, %cst_81 {dimension_numbers = #tpu.dot_dimension_numbers<[1], [0], [0], [1], [0, 0, 1, 1], [], []>} : vector<16x128xbf16>, vector<128x128xbf16>, vector<16x128xf32> -> vector<16x128xf32>
    %c0_82 = arith.constant 0 : index
    %c0_83 = arith.constant 0 : index
    %c0_84 = arith.constant 0 : index
    %246 = vector.load %arg13[%c0_82, %c0_83, %c0_84] : memref<1x1x128xf32, #tpu.memory_space<vmem>>, vector<1x1x128xf32>
    %247 = vector.shape_cast %246 : vector<1x1x128xf32> to vector<1x128xf32>
    %248 = vector.broadcast %247 : vector<1x128xf32> to vector<16x128xf32>
    %249 = arith.addf %245, %248 : vector<16x128xf32>
    %c0_85 = arith.constant 0 : index
    %c0_86 = arith.constant 0 : index
    %c0_87 = arith.constant 0 : index
    %250 = vector.load %arg14[%c0_85, %c0_86, %c0_87] : memref<1x1x128xf32, #tpu.memory_space<vmem>>, vector<1x1x128xf32>
    %251 = vector.shape_cast %250 : vector<1x1x128xf32> to vector<1x128xf32>
    %c0_88 = arith.constant 0 : index
    %c0_89 = arith.constant 0 : index
    %c0_90 = arith.constant 0 : index
    %252 = vector.load %arg15[%c0_88, %c0_89, %c0_90] : memref<1x1x128xf32, #tpu.memory_space<vmem>>, vector<1x1x128xf32>
    %253 = vector.shape_cast %252 : vector<1x1x128xf32> to vector<1x128xf32>
    %cst_91 = arith.constant dense<0.000000e+00> : vector<16xf32>
    %254 = vector.multi_reduction <add>, %249, %cst_91 [1] : vector<16x128xf32> to vector<16xf32>
    %255 = vector.shape_cast %254 : vector<16xf32> to vector<16x1xf32>
    %cst_92 = arith.constant 1.280000e+02 : f32
    %256 = vector.broadcast %cst_92 : f32 to vector<16x1xf32>
    %257 = arith.divf %255, %256 : vector<16x1xf32>
    %258 = vector.broadcast %257 : vector<16x1xf32> to vector<16x128xf32>
    %259 = arith.subf %249, %258 : vector<16x128xf32>
    %260 = arith.mulf %259, %259 : vector<16x128xf32>
    %cst_93 = arith.constant dense<0.000000e+00> : vector<16xf32>
    %261 = vector.multi_reduction <add>, %260, %cst_93 [1] : vector<16x128xf32> to vector<16xf32>
    %262 = vector.shape_cast %261 : vector<16xf32> to vector<16x1xf32>
    %cst_94 = arith.constant 1.280000e+02 : f32
    %263 = vector.broadcast %cst_94 : f32 to vector<16x1xf32>
    %264 = arith.divf %262, %263 : vector<16x1xf32>
    %265 = vector.broadcast %257 : vector<16x1xf32> to vector<16x128xf32>
    %266 = arith.subf %249, %265 : vector<16x128xf32>
    %cst_95 = arith.constant 9.99999974E-6 : f32
    %267 = vector.broadcast %cst_95 : f32 to vector<16x1xf32>
    %268 = arith.addf %264, %267 : vector<16x1xf32>
    %269 = math.rsqrt %268 : vector<16x1xf32>
    %270 = vector.broadcast %269 : vector<16x1xf32> to vector<16x128xf32>
    %271 = arith.mulf %266, %270 : vector<16x128xf32>
    %272 = vector.broadcast %251 : vector<1x128xf32> to vector<16x128xf32>
    %273 = arith.mulf %271, %272 : vector<16x128xf32>
    %274 = vector.broadcast %253 : vector<1x128xf32> to vector<16x128xf32>
    %275 = arith.addf %273, %274 : vector<16x128xf32>
    %cst_96 = arith.constant 0.000000e+00 : f32
    %276 = vector.broadcast %cst_96 : f32 to vector<16x128xf32>
    %277 = arith.maximumf %275, %276 : vector<16x128xf32>
    %278 = arith.truncf %277 : vector<16x128xf32> to vector<16x128xbf16>
    %c0_97 = arith.constant 0 : index
    %c0_98 = arith.constant 0 : index
    %c0_99 = arith.constant 0 : index
    %279 = vector.load %arg16[%c0_97, %c0_98, %c0_99] : memref<1x128x64xbf16, #tpu.memory_space<vmem>>, vector<1x128x64xbf16>
    %280 = vector.shape_cast %279 : vector<1x128x64xbf16> to vector<128x64xbf16>
    %cst_100 = arith.constant dense<0.000000e+00> : vector<16x64xf32>
    %281 = tpu.matmul %278, %280, %cst_100 {dimension_numbers = #tpu.dot_dimension_numbers<[1], [0], [0], [1], [0, 0, 1, 1], [], []>} : vector<16x128xbf16>, vector<128x64xbf16>, vector<16x64xf32> -> vector<16x64xf32>
    %c0_101 = arith.constant 0 : index
    %c0_102 = arith.constant 0 : index
    %c0_103 = arith.constant 0 : index
    %282 = vector.load %arg17[%c0_101, %c0_102, %c0_103] : memref<1x1x64xf32, #tpu.memory_space<vmem>>, vector<1x1x64xf32>
    %283 = vector.shape_cast %282 : vector<1x1x64xf32> to vector<1x64xf32>
    %284 = vector.broadcast %283 : vector<1x64xf32> to vector<16x64xf32>
    %285 = arith.addf %281, %284 : vector<16x64xf32>
    %c0_104 = arith.constant 0 : index
    %c0_105 = arith.constant 0 : index
    %c0_106 = arith.constant 0 : index
    %286 = vector.load %arg18[%c0_104, %c0_105, %c0_106] : memref<1x1x64xf32, #tpu.memory_space<vmem>>, vector<1x1x64xf32>
    %287 = vector.shape_cast %286 : vector<1x1x64xf32> to vector<1x64xf32>
    %c0_107 = arith.constant 0 : index
    %c0_108 = arith.constant 0 : index
    %c0_109 = arith.constant 0 : index
    %288 = vector.load %arg19[%c0_107, %c0_108, %c0_109] : memref<1x1x64xf32, #tpu.memory_space<vmem>>, vector<1x1x64xf32>
    %289 = vector.shape_cast %288 : vector<1x1x64xf32> to vector<1x64xf32>
    %cst_110 = arith.constant dense<0.000000e+00> : vector<16xf32>
    %290 = vector.multi_reduction <add>, %285, %cst_110 [1] : vector<16x64xf32> to vector<16xf32>
    %291 = vector.shape_cast %290 : vector<16xf32> to vector<16x1xf32>
    %cst_111 = arith.constant 6.400000e+01 : f32
    %292 = vector.broadcast %cst_111 : f32 to vector<16x1xf32>
    %293 = arith.divf %291, %292 : vector<16x1xf32>
    %294 = vector.broadcast %293 : vector<16x1xf32> to vector<16x64xf32>
    %295 = arith.subf %285, %294 : vector<16x64xf32>
    %296 = arith.mulf %295, %295 : vector<16x64xf32>
    %cst_112 = arith.constant dense<0.000000e+00> : vector<16xf32>
    %297 = vector.multi_reduction <add>, %296, %cst_112 [1] : vector<16x64xf32> to vector<16xf32>
    %298 = vector.shape_cast %297 : vector<16xf32> to vector<16x1xf32>
    %cst_113 = arith.constant 6.400000e+01 : f32
    %299 = vector.broadcast %cst_113 : f32 to vector<16x1xf32>
    %300 = arith.divf %298, %299 : vector<16x1xf32>
    %301 = vector.broadcast %293 : vector<16x1xf32> to vector<16x64xf32>
    %302 = arith.subf %285, %301 : vector<16x64xf32>
    %cst_114 = arith.constant 9.99999974E-6 : f32
    %303 = vector.broadcast %cst_114 : f32 to vector<16x1xf32>
    %304 = arith.addf %300, %303 : vector<16x1xf32>
    %305 = math.rsqrt %304 : vector<16x1xf32>
    %306 = vector.broadcast %305 : vector<16x1xf32> to vector<16x64xf32>
    %307 = arith.mulf %302, %306 : vector<16x64xf32>
    %308 = vector.broadcast %287 : vector<1x64xf32> to vector<16x64xf32>
    %309 = arith.mulf %307, %308 : vector<16x64xf32>
    %310 = vector.broadcast %289 : vector<1x64xf32> to vector<16x64xf32>
    %311 = arith.addf %309, %310 : vector<16x64xf32>
    %cst_115 = arith.constant 0.000000e+00 : f32
    %312 = vector.broadcast %cst_115 : f32 to vector<16x64xf32>
    %313 = arith.maximumf %311, %312 : vector<16x64xf32>
    %c0_116 = arith.constant 0 : index
    %c0_117 = arith.constant 0 : index
    %c0_118 = arith.constant 0 : index
    %314 = vector.load %arg20[%c0_116, %c0_117, %c0_118] : memref<1x16x64xf32, #tpu.memory_space<vmem>>, vector<1x16x64xf32>
    %315 = vector.shape_cast %314 : vector<1x16x64xf32> to vector<16x64xf32>
    %316 = vector.shape_cast %313 : vector<16x64xf32> to vector<1x16x64xf32>
    tpu.vector_store %arg20[%c0_116, %c0_117, %c0_118], %316 {strides = array<i32>} : memref<1x16x64xf32, #tpu.memory_space<vmem>>, vector<1x16x64xf32>,
    return
  }
  func.func @transform_0(%arg0: i32) -> (i32, i32, i32) {
    %c0_i32 = arith.constant 0 : i32
    %c0_i32_0 = arith.constant 0 : i32
    %c0_i32_1 = arith.constant 0 : i32
    return %arg0, %c0_i32, %c0_i32_0 : i32, i32, i32
  }
  func.func @transform_1(%arg0: i32) -> (i32, i32, i32) {
    %c0_i32 = arith.constant 0 : i32
    %c0_i32_0 = arith.constant 0 : i32
    %c0_i32_1 = arith.constant 0 : i32
    return %arg0, %c0_i32, %c0_i32_0 : i32, i32, i32
  }
  func.func @transform_2(%arg0: i32) -> (i32, i32, i32) {
    %c0_i32 = arith.constant 0 : i32
    %c0_i32_0 = arith.constant 0 : i32
    %c0_i32_1 = arith.constant 0 : i32
    return %arg0, %c0_i32, %c0_i32_0 : i32, i32, i32
  }
  func.func @transform_3(%arg0: i32) -> (i32, i32, i32) {
    %c0_i32 = arith.constant 0 : i32
    %c0_i32_0 = arith.constant 0 : i32
    %c0_i32_1 = arith.constant 0 : i32
    return %arg0, %c0_i32, %c0_i32_0 : i32, i32, i32
  }
  func.func @transform_4(%arg0: i32) -> (i32, i32, i32) {
    %c0_i32 = arith.constant 0 : i32
    %c0_i32_0 = arith.constant 0 : i32
    %c0_i32_1 = arith.constant 0 : i32
    return %arg0, %c0_i32, %c0_i32_0 : i32, i32, i32
  }
  func.func @transform_5(%arg0: i32) -> (i32, i32, i32) {
    %c0_i32 = arith.constant 0 : i32
    %c0_i32_0 = arith.constant 0 : i32
    %c0_i32_1 = arith.constant 0 : i32
    return %arg0, %c0_i32, %c0_i32_0 : i32, i32, i32
  }
  func.func @transform_6(%arg0: i32) -> (i32, i32, i32) {
    %c0_i32 = arith.constant 0 : i32
    %c0_i32_0 = arith.constant 0 : i32
    %c0_i32_1 = arith.constant 0 : i32
    return %arg0, %c0_i32, %c0_i32_0 : i32, i32, i32
  }
  func.func @transform_7(%arg0: i32) -> (i32, i32, i32) {
    %c0_i32 = arith.constant 0 : i32
    %c0_i32_0 = arith.constant 0 : i32
    %c0_i32_1 = arith.constant 0 : i32
    return %arg0, %c0_i32, %c0_i32_0 : i32, i32, i32
  }
  func.func @transform_8(%arg0: i32) -> (i32, i32, i32) {
    %c0_i32 = arith.constant 0 : i32
    %c0_i32_0 = arith.constant 0 : i32
    %c0_i32_1 = arith.constant 0 : i32
    return %arg0, %c0_i32, %c0_i32_0 : i32, i32, i32
  }
  func.func @transform_9(%arg0: i32) -> (i32, i32, i32) {
    %c0_i32 = arith.constant 0 : i32
    %c0_i32_0 = arith.constant 0 : i32
    %c0_i32_1 = arith.constant 0 : i32
    return %arg0, %c0_i32, %c0_i32_0 : i32, i32, i32
  }
  func.func @transform_10(%arg0: i32) -> (i32, i32, i32) {
    %c0_i32 = arith.constant 0 : i32
    %c0_i32_0 = arith.constant 0 : i32
    %c0_i32_1 = arith.constant 0 : i32
    return %arg0, %c0_i32, %c0_i32_0 : i32, i32, i32
  }
  func.func @transform_11(%arg0: i32) -> (i32, i32, i32) {
    %c0_i32 = arith.constant 0 : i32
    %c0_i32_0 = arith.constant 0 : i32
    %c0_i32_1 = arith.constant 0 : i32
    return %arg0, %c0_i32, %c0_i32_0 : i32, i32, i32
  }
  func.func @transform_12(%arg0: i32) -> (i32, i32, i32) {
    %c0_i32 = arith.constant 0 : i32
    %c0_i32_0 = arith.constant 0 : i32
    %c0_i32_1 = arith.constant 0 : i32
    return %arg0, %c0_i32, %c0_i32_0 : i32, i32, i32
  }
  func.func @transform_13(%arg0: i32) -> (i32, i32, i32) {
    %c0_i32 = arith.constant 0 : i32
    %c0_i32_0 = arith.constant 0 : i32
    %c0_i32_1 = arith.constant 0 : i32
    return %arg0, %c0_i32, %c0_i32_0 : i32, i32, i32
  }
  func.func @transform_14(%arg0: i32) -> (i32, i32, i32) {
    %c0_i32 = arith.constant 0 : i32
    %c0_i32_0 = arith.constant 0 : i32
    %c0_i32_1 = arith.constant 0 : i32
    return %arg0, %c0_i32, %c0_i32_0 : i32, i32, i32
  }
  func.func @transform_15(%arg0: i32) -> (i32, i32, i32) {
    %c0_i32 = arith.constant 0 : i32
    %c0_i32_0 = arith.constant 0 : i32
    %c0_i32_1 = arith.constant 0 : i32
    return %arg0, %c0_i32, %c0_i32_0 : i32, i32, i32
  }
  func.func @transform_16(%arg0: i32) -> (i32, i32, i32) {
    %c0_i32 = arith.constant 0 : i32
    %c0_i32_0 = arith.constant 0 : i32
    %c0_i32_1 = arith.constant 0 : i32
    return %arg0, %c0_i32, %c0_i32_0 : i32, i32, i32
  }
  func.func @transform_17(%arg0: i32) -> (i32, i32, i32) {
    %c0_i32 = arith.constant 0 : i32
    %c0_i32_0 = arith.constant 0 : i32
    %c0_i32_1 = arith.constant 0 : i32
    return %arg0, %c0_i32, %c0_i32_0 : i32, i32, i32
  }
  func.func @transform_18(%arg0: i32) -> (i32, i32, i32) {
    %c0_i32 = arith.constant 0 : i32
    %c0_i32_0 = arith.constant 0 : i32
    %c0_i32_1 = arith.constant 0 : i32
    return %arg0, %c0_i32, %c0_i32_0 : i32, i32, i32
  }
  func.func @transform_19(%arg0: i32) -> (i32, i32, i32) {
    %c0_i32 = arith.constant 0 : i32
    %c0_i32_0 = arith.constant 0 : i32
    %c0_i32_1 = arith.constant 0 : i32
    return %arg0, %c0_i32, %c0_i32_0 : i32, i32, i32
  }
}

</mosaic_0001>

<llo_original>
// kernel: similarity_space_forward.1
$region0: #{similarity_space_forward.1}
  #allocation0 [shape = 'u32[]', space=smem, size = 0x4, offset = 0x4, fixed_abs, tag = 'smem constant byte address 0x4 - core index']
  #allocation1 [shape = 'u32[144,128]{1,0:T(1,128)}', space=vmem, size = 0x12000, scoped, tag = 'internal scratch']
  %s0 = inlined_call_operand.vmem [shape: f32[2,16,768], index: 0, kind: input, shape index: {}]
  %s1 = inlined_call_operand.hbm [shape: bf16[2,768,2304], index: 1, kind: input, shape index: {}]
  %s2 = inlined_call_operand.hbm [shape: f32[2,1,2304], index: 2, kind: input, shape index: {}]
  %s3 = inlined_call_operand.hbm [shape: bf16[2,768,256], index: 3, kind: input, shape index: {}]
  %s4 = inlined_call_operand.hbm [shape: f32[2,1,256], index: 4, kind: input, shape index: {}]
  %s5 = inlined_call_operand.hbm [shape: f32[2,1,256], index: 5, kind: input, shape index: {}]
  %s6 = inlined_call_operand.hbm [shape: f32[2,1,256], index: 6, kind: input, shape index: {}]
  %s7 = inlined_call_operand.hbm [shape: bf16[2,256,128], index: 7, kind: input, shape index: {}]
  %s8 = inlined_call_operand.hbm [shape: f32[2,1,128], index: 8, kind: input, shape index: {}]
  %s9 = inlined_call_operand.hbm [shape: f32[2,1,128], index: 9, kind: input, shape index: {}]
  %s10 = inlined_call_operand.hbm [shape: f32[2,1,128], index: 10, kind: input, shape index: {}]
  %s11 = inlined_call_operand.hbm [shape: bf16[2,128,128], index: 11, kind: input, shape index: {}]
  %s12 = inlined_call_operand.hbm [shape: f32[2,1,128], index: 12, kind: input, shape index: {}]
  %s13 = inlined_call_operand.hbm [shape: f32[2,1,128], index: 13, kind: input, shape index: {}]
  %s14 = inlined_call_operand.hbm [shape: f32[2,1,128], index: 14, kind: input, shape index: {}]
  %s15 = inlined_call_operand.vmem [shape: bf16[2,128,64], index: 15, kind: input, shape index: {}]
  %s16 = inlined_call_operand.hbm [shape: f32[2,1,64], index: 16, kind: input, shape index: {}]
  %s17 = inlined_call_operand.hbm [shape: f32[2,1,64], index: 17, kind: input, shape index: {}]
  %s18 = inlined_call_operand.hbm [shape: f32[2,1,64], index: 18, kind: input, shape index: {}]
  %s19 = inlined_call_operand.vmem [shape: f32[2,16,64], index: 19, kind: output, shape index: {}]
  %s20 = sld [smem:[#allocation0]]
  $region177: #{similarity_space_forward.1} parent=0
    _
  %s22 = ssub.s32 1, %s20
  %s23 = scalar_select 0, %s22, %s20
  $region1: #{similarity_space_forward.1} parent=0
    #allocation2 [shape = 'u8[7077888]{0}', space=vmem, size = 0x6c0000, scoped, tag = 'input window, operand 1']
    #allocation3 [shape = 's32[2]{0}', space=sflag, size = 0x8, scoped, tag = 'scoped memory for similarity_space_forward.1']
    #allocation4 [shape = 'u8[18432]{0}', space=vmem, size = 0x4800, scoped, tag = 'input window, operand 2']
    #allocation5 [shape = 's32[2]{0}', space=sflag, size = 0x8, scoped, tag = 'scoped memory for similarity_space_forward.1']
    #allocation6 [shape = 'u8[786432]{0}', space=vmem, size = 0xc0000, scoped, tag = 'input window, operand 3']
    #allocation7 [shape = 'u8[2048]{0}', space=vmem, size = 0x800, scoped, tag = 'input window, operand 4']
    #allocation8 [shape = 's32[2]{0}', space=sflag, size = 0x8, scoped, tag = 'scoped memory for similarity_space_forward.1']
    #allocation9 [shape = 'u8[2048]{0}', space=vmem, size = 0x800, scoped, tag = 'input window, operand 5']
    #allocation10 [shape = 'u8[2048]{0}', space=vmem, size = 0x800, scoped, tag = 'input window, operand 6']
    #allocation11 [shape = 's32[2]{0}', space=sflag, size = 0x8, scoped, tag = 'scoped memory for similarity_space_forward.1']
    #allocation12 [shape = 'u8[131072]{0}', space=vmem, size = 0x20000, scoped, tag = 'input window, operand 7']
    #allocation13 [shape = 'u8[1024]{0}', space=vmem, size = 0x400, scoped, tag = 'input window, operand 8']
    #allocation14 [shape = 's32[2]{0}', space=sflag, size = 0x8, scoped, tag = 'scoped memory for similarity_space_forward.1']
    #allocation15 [shape = 'u8[1024]{0}', space=vmem, size = 0x400, scoped, tag = 'input window, operand 9']
    #allocation16 [shape = 'u8[1024]{0}', space=vmem, size = 0x400, scoped, tag = 'input window, operand 10']
    #allocation17 [shape = 's32[2]{0}', space=sflag, size = 0x8, scoped, tag = 'scoped memory for similarity_space_forward.1']
    #allocation18 [shape = 'u8[65536]{0}', space=vmem, size = 0x10000, scoped, tag = 'input window, operand 11']
    #allocation19 [shape = 'u8[1024]{0}', space=vmem, size = 0x400, scoped, tag = 'input window, operand 12']
    #allocation20 [shape = 's32[2]{0}', space=sflag, size = 0x8, scoped, tag = 'scoped memory for similarity_space_forward.1']
    #allocation21 [shape = 'u8[1024]{0}', space=vmem, size = 0x400, scoped, tag = 'input window, operand 13']
    #allocation22 [shape = 'u8[1024]{0}', space=vmem, size = 0x400, scoped, tag = 'input window, operand 14']
    #allocation23 [shape = 's32[2]{0}', space=sflag, size = 0x8, scoped, tag = 'scoped memory for similarity_space_forward.1']
    #allocation24 [shape = 'u8[1024]{0}', space=vmem, size = 0x400, scoped, tag = 'input window, operand 16']
    #allocation25 [shape = 'u8[1024]{0}', space=vmem, size = 0x400, scoped, tag = 'input window, operand 17']
    #allocation26 [shape = 's32[2]{0}', space=sflag, size = 0x8, scoped, tag = 'scoped memory for similarity_space_forward.1']
    #allocation27 [shape = 'u8[1024]{0}', space=vmem, size = 0x400, scoped, tag = 'input window, operand 18']
    %24 = vsyncpa [#allocation3], 0
    %s25 = scalar_lea.sflag [#allocation3], 1
    %26 = vsyncpa %s25, 0
    %27 = vsyncpa [#allocation5], 0
    %s28 = scalar_lea.sflag [#allocation5], 1
    %29 = vsyncpa %s28, 0
    %30 = vsyncpa [#allocation8], 0
    %s31 = scalar_lea.sflag [#allocation8], 1
    %32 = vsyncpa %s31, 0
    %33 = vsyncpa [#allocation11], 0
    %s34 = scalar_lea.sflag [#allocation11], 1
    %35 = vsyncpa %s34, 0
    %36 = vsyncpa [#allocation14], 0
    %s37 = scalar_lea.sflag [#allocation14], 1
    %38 = vsyncpa %s37, 0
    %39 = vsyncpa [#allocation17], 0
    %s40 = scalar_lea.sflag [#allocation17], 1
    %41 = vsyncpa %s40, 0
    %42 = vsyncpa [#allocation20], 0
    %s43 = scalar_lea.sflag [#allocation20], 1
    %44 = vsyncpa %s43, 0
    %45 = vsyncpa [#allocation23], 0
    %s46 = scalar_lea.sflag [#allocation23], 1
    %47 = vsyncpa %s46, 0
    %48 = vsyncpa [#allocation26], 0
    %s49 = scalar_lea.sflag [#allocation26], 1
    %50 = vsyncpa %s49, 0
    loop: start=0, step=1, limit=4
    $region2: #{similarity_space_forward.1} parent=1 // loop_pre_header
      _
    $region3: #{similarity_space_forward.1} parent=1 // loop_header
      %s52 = sphi 0, %s56
      %p53 = scmp.ge.s32.totalorder %s52, 4
      %s62 = sphi 0, %s64
      %s65 = sphi 0, %s62
      %s66 = sphi 0, %s65
      %s82 = sphi 0, %s66
      %s88 = sphi 0, %s90
      %s91 = sphi 0, %s88
      %s92 = sphi 0, %s91
      %s108 = sphi 0, %s92
      %s114 = sphi 0, %s116
      %s117 = sphi 0, %s114
      %s118 = sphi 0, %s117
      %s134 = sphi 0, %s118
      %s140 = sphi 0, %s142
      %s143 = sphi 0, %s140
      %s144 = sphi 0, %s143
      %s160 = sphi 0, %s144
      %s166 = sphi 0, %s168
      %s169 = sphi 0, %s166
      %s170 = sphi 0, %s169
      %s186 = sphi 0, %s170
      %s192 = sphi 0, %s194
      %s195 = sphi 0, %s192
      %s196 = sphi 0, %s195
      %s212 = sphi 0, %s196
      %s218 = sphi 0, %s220
      %s221 = sphi 0, %s218
      %s222 = sphi 0, %s221
      %s238 = sphi 0, %s222
      %s244 = sphi 0, %s246
      %s247 = sphi 0, %s244
      %s248 = sphi 0, %s247
      %s264 = sphi 0, %s248
      %s270 = sphi 0, %s272
      %s273 = sphi 0, %s270
      %s274 = sphi 0, %s273
      %s290 = sphi 0, %s274
      %s296 = sphi 0, %s298
      %s299 = sphi 0, %s296
      %s300 = sphi 0, %s299
      %s316 = sphi 0, %s300
      %s322 = sphi 0, %s324
      %s325 = sphi 0, %s322
      %s326 = sphi 0, %s325
      %s342 = sphi 0, %s326
      %s348 = sphi 0, %s350
      %s351 = sphi 0, %s348
      %s352 = sphi 0, %s351
      %s368 = sphi 0, %s352
      %s374 = sphi 0, %s376
      %s377 = sphi 0, %s374
      %s378 = sphi 0, %s377
      %s394 = sphi 0, %s378
      %s400 = sphi 0, %s402
      %s403 = sphi 0, %s400
      %s404 = sphi 0, %s403
      %s420 = sphi 0, %s404
      %s426 = sphi 0, %s428
      %s429 = sphi 0, %s426
      %s430 = sphi 0, %s429
      %s446 = sphi 0, %s430
      %s452 = sphi 0, %s454
      %s455 = sphi 0, %s452
      %s456 = sphi 0, %s455
      %s472 = sphi 0, %s456
      %s478 = sphi 0, %s480
      %s481 = sphi 0, %s478
      %s482 = sphi 0, %s481
      %s498 = sphi 0, %s482
      %s504 = sphi 0, %s506
      %s507 = sphi 0, %s504
      %s508 = sphi 0, %s507
      %s524 = sphi 0, %s508
      %s530 = sphi 0, %s532
      %s533 = sphi 0, %s530
      %s534 = sphi 0, %s533
      %s550 = sphi 0, %s534
      %s556 = sphi 0, %s558
      %s559 = sphi 0, %s556
      %s560 = sphi 0, %s559
      %s576 = sphi 0, %s560
    $region4: #{similarity_space_forward.1} parent=1 // loop_header_branch
      %55 = sbr.rel (%p53) target = $region8
    $region5: #{similarity_space_forward.1} parent=1 // loop_body
      %s57 = ssub.s32 %s52, 1
      %s58 = ssub.s32 %s52, 2
      %s59 = sadd.s32 %s52, 1
      %s60 = ssub.s32 %s52, %s59
      %p61 = scmp.eq.s32.totalorder %s60, 0
      %s63 = sadd.s32 %s62, 1
      %s64 = scalar_select %p61, %s62, %s63
      %p67 = pneg %p61
      %p68 = scmp.eq.s32.totalorder %s52, 1
      %p69 = por %p67, %p68
      %p70 = scmp.ne.s32.totalorder %s62, %s65
      %p71 = scmp.eq.s32.totalorder %s52, 0
      %p72 = por %p70, %p71
      %p73 = scmp.ne.s32.totalorder %s62, %s65
      %p74 = scmp.eq.s32.totalorder %s57, 1
      %p75 = por %p73, %p74
      %p76 = scmp.ne.s32.totalorder %s65, %s66
      %p77 = scmp.eq.s32.totalorder %s57, 0
      %p78 = por %p76, %p77
      %p79 = scmp.ne.s32.totalorder %s65, %s66
      %p80 = scmp.eq.s32.totalorder %s58, 1
      %p81 = por %p79, %p80
      %p83 = scmp.ne.s32.totalorder %s66, %s82
      %p84 = scmp.eq.s32.totalorder %s58, 0
      %p85 = por %p83, %p84
      %s86 = ssub.s32 %s52, %s59
      %p87 = scmp.eq.s32.totalorder %s86, 0
      %s89 = sadd.s32 %s88, 1
      %s90 = scalar_select %p87, %s88, %s89
      %p93 = pneg %p87
      %p94 = scmp.eq.s32.totalorder %s52, 1
      %p95 = por %p93, %p94
      %p96 = scmp.ne.s32.totalorder %s88, %s91
      %p97 = scmp.eq.s32.totalorder %s52, 0
      %p98 = por %p96, %p97
      %p99 = scmp.ne.s32.totalorder %s88, %s91
      %p100 = scmp.eq.s32.totalorder %s57, 1
      %p101 = por %p99, %p100
      %p102 = scmp.ne.s32.totalorder %s91, %s92
      %p103 = scmp.eq.s32.totalorder %s57, 0
      %p104 = por %p102, %p103
      %p105 = scmp.ne.s32.totalorder %s91, %s92
      %p106 = scmp.eq.s32.totalorder %s58, 1
      %p107 = por %p105, %p106
      %p109 = scmp.ne.s32.totalorder %s92, %s108
      %p110 = scmp.eq.s32.totalorder %s58, 0
      %p111 = por %p109, %p110
      %s112 = ssub.s32 %s52, %s59
      %p113 = scmp.eq.s32.totalorder %s112, 0
      %s115 = sadd.s32 %s114, 1
      %s116 = scalar_select %p113, %s114, %s115
      %p119 = pneg %p113
      %p120 = scmp.eq.s32.totalorder %s52, 1
      %p121 = por %p119, %p120
      %p122 = scmp.ne.s32.totalorder %s114, %s117
      %p123 = scmp.eq.s32.totalorder %s52, 0
      %p124 = por %p122, %p123
      %p125 = scmp.ne.s32.totalorder %s114, %s117
      %p126 = scmp.eq.s32.totalorder %s57, 1
      %p127 = por %p125, %p126
      %p128 = scmp.ne.s32.totalorder %s117, %s118
      %p129 = scmp.eq.s32.totalorder %s57, 0
      %p130 = por %p128, %p129
      %p131 = scmp.ne.s32.totalorder %s117, %s118
      %p132 = scmp.eq.s32.totalorder %s58, 1
      %p133 = por %p131, %p132
      %p135 = scmp.ne.s32.totalorder %s118, %s134
      %p136 = scmp.eq.s32.totalorder %s58, 0
      %p137 = por %p135, %p136
      %s138 = ssub.s32 %s52, %s59
      %p139 = scmp.eq.s32.totalorder %s138, 0
      %s141 = sadd.s32 %s140, 1
      %s142 = scalar_select %p139, %s140, %s141
      %p145 = pneg %p139
      %p146 = scmp.eq.s32.totalorder %s52, 1
      %p147 = por %p145, %p146
      %p148 = scmp.ne.s32.totalorder %s140, %s143
      %p149 = scmp.eq.s32.totalorder %s52, 0
      %p150 = por %p148, %p149
      %p151 = scmp.ne.s32.totalorder %s140, %s143
      %p152 = scmp.eq.s32.totalorder %s57, 1
      %p153 = por %p151, %p152
      %p154 = scmp.ne.s32.totalorder %s143, %s144
      %p155 = scmp.eq.s32.totalorder %s57, 0
      %p156 = por %p154, %p155
      %p157 = scmp.ne.s32.totalorder %s143, %s144
      %p158 = scmp.eq.s32.totalorder %s58, 1
      %p159 = por %p157, %p158
      %p161 = scmp.ne.s32.totalorder %s144, %s160
      %p162 = scmp.eq.s32.totalorder %s58, 0
      %p163 = por %p161, %p162
      %s164 = ssub.s32 %s52, %s59
      %p165 = scmp.eq.s32.totalorder %s164, 0
      %s167 = sadd.s32 %s166, 1
      %s168 = scalar_select %p165, %s166, %s167
      %p171 = pneg %p165
      %p172 = scmp.eq.s32.totalorder %s52, 1
      %p173 = por %p171, %p172
      %p174 = scmp.ne.s32.totalorder %s166, %s169
      %p175 = scmp.eq.s32.totalorder %s52, 0
      %p176 = por %p174, %p175
      %p177 = scmp.ne.s32.totalorder %s166, %s169
      %p178 = scmp.eq.s32.totalorder %s57, 1
      %p179 = por %p177, %p178
      %p180 = scmp.ne.s32.totalorder %s169, %s170
      %p181 = scmp.eq.s32.totalorder %s57, 0
      %p182 = por %p180, %p181
      %p183 = scmp.ne.s32.totalorder %s169, %s170
      %p184 = scmp.eq.s32.totalorder %s58, 1
      %p185 = por %p183, %p184
      %p187 = scmp.ne.s32.totalorder %s170, %s186
      %p188 = scmp.eq.s32.totalorder %s58, 0
      %p189 = por %p187, %p188
      %s190 = ssub.s32 %s52, %s59
      %p191 = scmp.eq.s32.totalorder %s190, 0
      %s193 = sadd.s32 %s192, 1
      %s194 = scalar_select %p191, %s192, %s193
      %p197 = pneg %p191
      %p198 = scmp.eq.s32.totalorder %s52, 1
      %p199 = por %p197, %p198
      %p200 = scmp.ne.s32.totalorder %s192, %s195
      %p201 = scmp.eq.s32.totalorder %s52, 0
      %p202 = por %p200, %p201
      %p203 = scmp.ne.s32.totalorder %s192, %s195
      %p204 = scmp.eq.s32.totalorder %s57, 1
      %p205 = por %p203, %p204
      %p206 = scmp.ne.s32.totalorder %s195, %s196
      %p207 = scmp.eq.s32.totalorder %s57, 0
      %p208 = por %p206, %p207
      %p209 = scmp.ne.s32.totalorder %s195, %s196
      %p210 = scmp.eq.s32.totalorder %s58, 1
      %p211 = por %p209, %p210
      %p213 = scmp.ne.s32.totalorder %s196, %s212
      %p214 = scmp.eq.s32.totalorder %s58, 0
      %p215 = por %p213, %p214
      %s216 = ssub.s32 %s52, %s59
      %p217 = scmp.eq.s32.totalorder %s216, 0
      %s219 = sadd.s32 %s218, 1
      %s220 = scalar_select %p217, %s218, %s219
      %p223 = pneg %p217
      %p224 = scmp.eq.s32.totalorder %s52, 1
      %p225 = por %p223, %p224
      %p226 = scmp.ne.s32.totalorder %s218, %s221
      %p227 = scmp.eq.s32.totalorder %s52, 0
      %p228 = por %p226, %p227
      %p229 = scmp.ne.s32.totalorder %s218, %s221
      %p230 = scmp.eq.s32.totalorder %s57, 1
      %p231 = por %p229, %p230
      %p232 = scmp.ne.s32.totalorder %s221, %s222
      %p233 = scmp.eq.s32.totalorder %s57, 0
      %p234 = por %p232, %p233
      %p235 = scmp.ne.s32.totalorder %s221, %s222
      %p236 = scmp.eq.s32.totalorder %s58, 1
      %p237 = por %p235, %p236
      %p239 = scmp.ne.s32.totalorder %s222, %s238
      %p240 = scmp.eq.s32.totalorder %s58, 0
      %p241 = por %p239, %p240
      %s242 = ssub.s32 %s52, %s59
      %p243 = scmp.eq.s32.totalorder %s242, 0
      %s245 = sadd.s32 %s244, 1
      %s246 = scalar_select %p243, %s244, %s245
      %p249 = pneg %p243
      %p250 = scmp.eq.s32.totalorder %s52, 1
      %p251 = por %p249, %p250
      %p252 = scmp.ne.s32.totalorder %s244, %s247
      %p253 = scmp.eq.s32.totalorder %s52, 0
      %p254 = por %p252, %p253
      %p255 = scmp.ne.s32.totalorder %s244, %s247
      %p256 = scmp.eq.s32.totalorder %s57, 1
      %p257 = por %p255, %p256
      %p258 = scmp.ne.s32.totalorder %s247, %s248
      %p259 = scmp.eq.s32.totalorder %s57, 0
      %p260 = por %p258, %p259
      %p261 = scmp.ne.s32.totalorder %s247, %s248
      %p262 = scmp.eq.s32.totalorder %s58, 1
      %p263 = por %p261, %p262
      %p265 = scmp.ne.s32.totalorder %s248, %s264
      %p266 = scmp.eq.s32.totalorder %s58, 0
      %p267 = por %p265, %p266
      %s268 = ssub.s32 %s52, %s59
      %p269 = scmp.eq.s32.totalorder %s268, 0
      %s271 = sadd.s32 %s270, 1
      %s272 = scalar_select %p269, %s270, %s271
      %p275 = pneg %p269
      %p276 = scmp.eq.s32.totalorder %s52, 1
      %p277 = por %p275, %p276
      %p278 = scmp.ne.s32.totalorder %s270, %s273
      %p279 = scmp.eq.s32.totalorder %s52, 0
      %p280 = por %p278, %p279
      %p281 = scmp.ne.s32.totalorder %s270, %s273
      %p282 = scmp.eq.s32.totalorder %s57, 1
      %p283 = por %p281, %p282
      %p284 = scmp.ne.s32.totalorder %s273, %s274
      %p285 = scmp.eq.s32.totalorder %s57, 0
      %p286 = por %p284, %p285
      %p287 = scmp.ne.s32.totalorder %s273, %s274
      %p288 = scmp.eq.s32.totalorder %s58, 1
      %p289 = por %p287, %p288
      %p291 = scmp.ne.s32.totalorder %s274, %s290
      %p292 = scmp.eq.s32.totalorder %s58, 0
      %p293 = por %p291, %p292
      %s294 = ssub.s32 %s52, %s59
      %p295 = scmp.eq.s32.totalorder %s294, 0
      %s297 = sadd.s32 %s296, 1
      %s298 = scalar_select %p295, %s296, %s297
      %p301 = pneg %p295
      %p302 = scmp.eq.s32.totalorder %s52, 1
      %p303 = por %p301, %p302
      %p304 = scmp.ne.s32.totalorder %s296, %s299
      %p305 = scmp.eq.s32.totalorder %s52, 0
      %p306 = por %p304, %p305
      %p307 = scmp.ne.s32.totalorder %s296, %s299
      %p308 = scmp.eq.s32.totalorder %s57, 1
      %p309 = por %p307, %p308
      %p310 = scmp.ne.s32.totalorder %s299, %s300
      %p311 = scmp.eq.s32.totalorder %s57, 0
      %p312 = por %p310, %p311
      %p313 = scmp.ne.s32.totalorder %s299, %s300
      %p314 = scmp.eq.s32.totalorder %s58, 1
      %p315 = por %p313, %p314
      %p317 = scmp.ne.s32.totalorder %s300, %s316
      %p318 = scmp.eq.s32.totalorder %s58, 0
      %p319 = por %p317, %p318
      %s320 = ssub.s32 %s52, %s59
      %p321 = scmp.eq.s32.totalorder %s320, 0
      %s323 = sadd.s32 %s322, 1
      %s324 = scalar_select %p321, %s322, %s323
      %p327 = pneg %p321
      %p328 = scmp.eq.s32.totalorder %s52, 1
      %p329 = por %p327, %p328
      %p330 = scmp.ne.s32.totalorder %s322, %s325
      %p331 = scmp.eq.s32.totalorder %s52, 0
      %p332 = por %p330, %p331
      %p333 = scmp.ne.s32.totalorder %s322, %s325
      %p334 = scmp.eq.s32.totalorder %s57, 1
      %p335 = por %p333, %p334
      %p336 = scmp.ne.s32.totalorder %s325, %s326
      %p337 = scmp.eq.s32.totalorder %s57, 0
      %p338 = por %p336, %p337
      %p339 = scmp.ne.s32.totalorder %s325, %s326
      %p340 = scmp.eq.s32.totalorder %s58, 1
      %p341 = por %p339, %p340
      %p343 = scmp.ne.s32.totalorder %s326, %s342
      %p344 = scmp.eq.s32.totalorder %s58, 0
      %p345 = por %p343, %p344
      %s346 = ssub.s32 %s52, %s59
      %p347 = scmp.eq.s32.totalorder %s346, 0
      %s349 = sadd.s32 %s348, 1
      %s350 = scalar_select %p347, %s348, %s349
      %p353 = pneg %p347
      %p354 = scmp.eq.s32.totalorder %s52, 1
      %p355 = por %p353, %p354
      %p356 = scmp.ne.s32.totalorder %s348, %s351
      %p357 = scmp.eq.s32.totalorder %s52, 0
      %p358 = por %p356, %p357
      %p359 = scmp.ne.s32.totalorder %s348, %s351
      %p360 = scmp.eq.s32.totalorder %s57, 1
      %p361 = por %p359, %p360
      %p362 = scmp.ne.s32.totalorder %s351, %s352
      %p363 = scmp.eq.s32.totalorder %s57, 0
      %p364 = por %p362, %p363
      %p365 = scmp.ne.s32.totalorder %s351, %s352
      %p366 = scmp.eq.s32.totalorder %s58, 1
      %p367 = por %p365, %p366
      %p369 = scmp.ne.s32.totalorder %s352, %s368
      %p370 = scmp.eq.s32.totalorder %s58, 0
      %p371 = por %p369, %p370
      %s372 = ssub.s32 %s52, %s59
      %p373 = scmp.eq.s32.totalorder %s372, 0
      %s375 = sadd.s32 %s374, 1
      %s376 = scalar_select %p373, %s374, %s375
      %p379 = pneg %p373
      %p380 = scmp.eq.s32.totalorder %s52, 1
      %p381 = por %p379, %p380
      %p382 = scmp.ne.s32.totalorder %s374, %s377
      %p383 = scmp.eq.s32.totalorder %s52, 0
      %p384 = por %p382, %p383
      %p385 = scmp.ne.s32.totalorder %s374, %s377
      %p386 = scmp.eq.s32.totalorder %s57, 1
      %p387 = por %p385, %p386
      %p388 = scmp.ne.s32.totalorder %s377, %s378
      %p389 = scmp.eq.s32.totalorder %s57, 0
      %p390 = por %p388, %p389
      %p391 = scmp.ne.s32.totalorder %s377, %s378
      %p392 = scmp.eq.s32.totalorder %s58, 1
      %p393 = por %p391, %p392
      %p395 = scmp.ne.s32.totalorder %s378, %s394
      %p396 = scmp.eq.s32.totalorder %s58, 0
      %p397 = por %p395, %p396
      %s398 = ssub.s32 %s52, %s59
      %p399 = scmp.eq.s32.totalorder %s398, 0
      %s401 = sadd.s32 %s400, 1
      %s402 = scalar_select %p399, %s400, %s401
      %p405 = pneg %p399
      %p406 = scmp.eq.s32.totalorder %s52, 1
      %p407 = por %p405, %p406
      %p408 = scmp.ne.s32.totalorder %s400, %s403
      %p409 = scmp.eq.s32.totalorder %s52, 0
      %p410 = por %p408, %p409
      %p411 = scmp.ne.s32.totalorder %s400, %s403
      %p412 = scmp.eq.s32.totalorder %s57, 1
      %p413 = por %p411, %p412
      %p414 = scmp.ne.s32.totalorder %s403, %s404
      %p415 = scmp.eq.s32.totalorder %s57, 0
      %p416 = por %p414, %p415
      %p417 = scmp.ne.s32.totalorder %s403, %s404
      %p418 = scmp.eq.s32.totalorder %s58, 1
      %p419 = por %p417, %p418
      %p421 = scmp.ne.s32.totalorder %s404, %s420
      %p422 = scmp.eq.s32.totalorder %s58, 0
      %p423 = por %p421, %p422
      %s424 = ssub.s32 %s52, %s59
      %p425 = scmp.eq.s32.totalorder %s424, 0
      %s427 = sadd.s32 %s426, 1
      %s428 = scalar_select %p425, %s426, %s427
      %p431 = pneg %p425
      %p432 = scmp.eq.s32.totalorder %s52, 1
      %p433 = por %p431, %p432
      %p434 = scmp.ne.s32.totalorder %s426, %s429
      %p435 = scmp.eq.s32.totalorder %s52, 0
      %p436 = por %p434, %p435
      %p437 = scmp.ne.s32.totalorder %s426, %s429
      %p438 = scmp.eq.s32.totalorder %s57, 1
      %p439 = por %p437, %p438
      %p440 = scmp.ne.s32.totalorder %s429, %s430
      %p441 = scmp.eq.s32.totalorder %s57, 0
      %p442 = por %p440, %p441
      %p443 = scmp.ne.s32.totalorder %s429, %s430
      %p444 = scmp.eq.s32.totalorder %s58, 1
      %p445 = por %p443, %p444
      %p447 = scmp.ne.s32.totalorder %s430, %s446
      %p448 = scmp.eq.s32.totalorder %s58, 0
      %p449 = por %p447, %p448
      %s450 = ssub.s32 %s52, %s59
      %p451 = scmp.eq.s32.totalorder %s450, 0
      %s453 = sadd.s32 %s452, 1
      %s454 = scalar_select %p451, %s452, %s453
      %p457 = pneg %p451
      %p458 = scmp.eq.s32.totalorder %s52, 1
      %p459 = por %p457, %p458
      %p460 = scmp.ne.s32.totalorder %s452, %s455
      %p461 = scmp.eq.s32.totalorder %s52, 0
      %p462 = por %p460, %p461
      %p463 = scmp.ne.s32.totalorder %s452, %s455
      %p464 = scmp.eq.s32.totalorder %s57, 1
      %p465 = por %p463, %p464
      %p466 = scmp.ne.s32.totalorder %s455, %s456
      %p467 = scmp.eq.s32.totalorder %s57, 0
      %p468 = por %p466, %p467
      %p469 = scmp.ne.s32.totalorder %s455, %s456
      %p470 = scmp.eq.s32.totalorder %s58, 1
      %p471 = por %p469, %p470
      %p473 = scmp.ne.s32.totalorder %s456, %s472
      %p474 = scmp.eq.s32.totalorder %s58, 0
      %p475 = por %p473, %p474
      %s476 = ssub.s32 %s52, %s59
      %p477 = scmp.eq.s32.totalorder %s476, 0
      %s479 = sadd.s32 %s478, 1
      %s480 = scalar_select %p477, %s478, %s479
      %p483 = pneg %p477
      %p484 = scmp.eq.s32.totalorder %s52, 1
      %p485 = por %p483, %p484
      %p486 = scmp.ne.s32.totalorder %s478, %s481
      %p487 = scmp.eq.s32.totalorder %s52, 0
      %p488 = por %p486, %p487
      %p489 = scmp.ne.s32.totalorder %s478, %s481
      %p490 = scmp.eq.s32.totalorder %s57, 1
      %p491 = por %p489, %p490
      %p492 = scmp.ne.s32.totalorder %s481, %s482
      %p493 = scmp.eq.s32.totalorder %s57, 0
      %p494 = por %p492, %p493
      %p495 = scmp.ne.s32.totalorder %s481, %s482
      %p496 = scmp.eq.s32.totalorder %s58, 1
      %p497 = por %p495, %p496
      %p499 = scmp.ne.s32.totalorder %s482, %s498
      %p500 = scmp.eq.s32.totalorder %s58, 0
      %p501 = por %p499, %p500
      %s502 = ssub.s32 %s52, %s59
      %p503 = scmp.eq.s32.totalorder %s502, 0
      %s505 = sadd.s32 %s504, 1
      %s506 = scalar_select %p503, %s504, %s505
      %p509 = pneg %p503
      %p510 = scmp.eq.s32.totalorder %s52, 1
      %p511 = por %p509, %p510
      %p512 = scmp.ne.s32.totalorder %s504, %s507
      %p513 = scmp.eq.s32.totalorder %s52, 0
      %p514 = por %p512, %p513
      %p515 = scmp.ne.s32.totalorder %s504, %s507
      %p516 = scmp.eq.s32.totalorder %s57, 1
      %p517 = por %p515, %p516
      %p518 = scmp.ne.s32.totalorder %s507, %s508
      %p519 = scmp.eq.s32.totalorder %s57, 0
      %p520 = por %p518, %p519
      %p521 = scmp.ne.s32.totalorder %s507, %s508
      %p522 = scmp.eq.s32.totalorder %s58, 1
      %p523 = por %p521, %p522
      %p525 = scmp.ne.s32.totalorder %s508, %s524
      %p526 = scmp.eq.s32.totalorder %s58, 0
      %p527 = por %p525, %p526
      %s528 = ssub.s32 %s52, %s59
      %p529 = scmp.eq.s32.totalorder %s528, 0
      %s531 = sadd.s32 %s530, 1
      %s532 = scalar_select %p529, %s530, %s531
      %p535 = pneg %p529
      %p536 = scmp.eq.s32.totalorder %s52, 1
      %p537 = por %p535, %p536
      %p538 = scmp.ne.s32.totalorder %s530, %s533
      %p539 = scmp.eq.s32.totalorder %s52, 0
      %p540 = por %p538, %p539
      %p541 = scmp.ne.s32.totalorder %s530, %s533
      %p542 = scmp.eq.s32.totalorder %s57, 1
      %p543 = por %p541, %p542
      %p544 = scmp.ne.s32.totalorder %s533, %s534
      %p545 = scmp.eq.s32.totalorder %s57, 0
      %p546 = por %p544, %p545
      %p547 = scmp.ne.s32.totalorder %s533, %s534
      %p548 = scmp.eq.s32.totalorder %s58, 1
      %p549 = por %p547, %p548
      %p551 = scmp.ne.s32.totalorder %s534, %s550
      %p552 = scmp.eq.s32.totalorder %s58, 0
      %p553 = por %p551, %p552
      %s554 = ssub.s32 %s52, %s59
      %p555 = scmp.eq.s32.totalorder %s554, 0
      %s557 = sadd.s32 %s556, 1
      %s558 = scalar_select %p555, %s556, %s557
      %p561 = pneg %p555
      %p562 = scmp.eq.s32.totalorder %s52, 1
      %p563 = por %p561, %p562
      %p564 = scmp.ne.s32.totalorder %s556, %s559
      %p565 = scmp.eq.s32.totalorder %s52, 0
      %p566 = por %p564, %p565
      %p567 = scmp.ne.s32.totalorder %s556, %s559
      %p568 = scmp.eq.s32.totalorder %s57, 1
      %p569 = por %p567, %p568
      %p570 = scmp.ne.s32.totalorder %s559, %s560
      %p571 = scmp.eq.s32.totalorder %s57, 0
      %p572 = por %p570, %p571
      %p573 = scmp.ne.s32.totalorder %s559, %s560
      %p574 = scmp.eq.s32.totalorder %s58, 1
      %p575 = por %p573, %p574
      %p577 = scmp.ne.s32.totalorder %s560, %s576
      %p578 = scmp.eq.s32.totalorder %s58, 0
      %p579 = por %p577, %p578
      %p580 = scmp.le.s32.totalorder 1, %s52
      %p581 = scmp.lt.s32.totalorder %s52, 3
      %p582 = pnand %p580, %p581
      %p583 = pneg %p582
      // Predicated region
      $region9: #{similarity_space_forward.1} parent=5 // pred_check
        _
      $region10: #{similarity_space_forward.1} parent=5 // pred_check_branch
        %585 = sbr.rel (%p582) target = $region12
      $region11: #{similarity_space_forward.1} parent=5 // pred_region
        %s586 = ssub.s32 %s52, 1
      $region12: #{similarity_space_forward.1} parent=5 // pred_fallthru
        _
      %p587 = scmp.lt.s32.totalorder %s52, 2
      // Predicated region
      $region13: #{similarity_space_forward.1} parent=5 // pred_check
        %p588 = pneg %p587
      $region14: #{similarity_space_forward.1} parent=5 // pred_check_branch
        %590 = sbr.rel (%p588) target = $region16
      $region15: #{similarity_space_forward.1} parent=5 // pred_region
        // Predicated region
        $region17: #{similarity_space_forward.1} parent=15 // pred_check
          %p591 = pneg %p72
        $region18: #{similarity_space_forward.1} parent=15 // pred_check_branch
          %593 = sbr.rel (%p591) target = $region20
        $region19: #{similarity_space_forward.1} parent=15 // pred_region
          %p594 = scmp.lt.s32.totalorder %s52, 1
          %s595 = scalar_select %p594, %s52, 1
          %s596 = smul.addr %s595, 12
          %s597 = smul.addr %s596, 8
          %s598 = scalar_lea.vmem %s0, %s597
        $region20: #{similarity_space_forward.1} parent=15 // pred_fallthru
          _
        // Predicated region
        $region21: #{similarity_space_forward.1} parent=15 // pred_check
          %p599 = pneg %p98
        $region22: #{similarity_space_forward.1} parent=15 // pred_check_branch
          %601 = sbr.rel (%p599) target = $region24
        $region23: #{similarity_space_forward.1} parent=15 // pred_region
          %s602 = sand.u32 %s88, 1
          %s603 = scalar_lea.sflag [#allocation3], %s602
          %s604 = sand.u32 %s88, 1
          %s605 = smul.addr %s604, 6912
          %s606 = scalar_lea.vmem [#allocation2], %s605
          %s608 = ssub.s32 110592, 110592
          %609 = vsyncadd %s603, %s608
          %s610 = smul.addr %s52, 1728
          %s611 = smul.addr %s610, 64
          %s612 = scalar_lea.hbm %s1, %s611
          %s613 = sshll.u32 %s606, 4
          %s614 = int_to_ptr.vmem [resolvable:$true] %s613
          %619 = dma.hbm_to_vmem [thread:$0]  %s612, 110592, %s614, %s603, 1152, 1152, 72
        $region24: #{similarity_space_forward.1} parent=15 // pred_fallthru
          _
        // Predicated region
        $region25: #{similarity_space_forward.1} parent=15 // pred_check
          %p620 = pneg %p124
        $region26: #{similarity_space_forward.1} parent=15 // pred_check_branch
          %622 = sbr.rel (%p620) target = $region28
        $region27: #{similarity_space_forward.1} parent=15 // pred_region
          %s623 = sand.u32 %s52, 1
          %s624 = scalar_lea.sflag [#allocation5], %s623
          %s625 = sand.u32 %s114, 1
          %s626 = smul.addr %s625, 18
          %s627 = scalar_lea.vmem [#allocation4], %s626
          %s629 = ssub.s32 288, 288
          %630 = vsyncadd %s624, %s629
          %s631 = smul.addr %s52, 18
          %s632 = smul.addr %s631, 16
          %s633 = scalar_lea.hbm %s2, %s632
          %s635 = sshll.u32 %s627, 4
          %s636 = int_to_ptr.vmem [resolvable:$true] %s635
          %638 = dma.hbm_to_vmem [thread:$0]  %s633, 288, %s636, %s624
        $region28: #{similarity_space_forward.1} parent=15 // pred_fallthru
          _
        // Predicated region
        $region29: #{similarity_space_forward.1} parent=15 // pred_check
          %p639 = pneg %p150
        $region30: #{similarity_space_forward.1} parent=15 // pred_check_branch
          %641 = sbr.rel (%p639) target = $region32
        $region31: #{similarity_space_forward.1} parent=15 // pred_region
          %s642 = sand.u32 %s52, 1
          %s643 = scalar_lea.sflag [#allocation5], %s642
          %s644 = sand.u32 %s140, 1
          %s645 = smul.addr %s644, 768
          %s646 = scalar_lea.vmem [#allocation6], %s645
          %s648 = ssub.s32 12288, 12288
          %649 = vsyncadd %s643, %s648
          %s650 = smul.addr %s52, 192
          %s651 = smul.addr %s650, 64
          %s652 = scalar_lea.hbm %s3, %s651
          %s653 = sshll.u32 %s646, 4
          %s654 = int_to_ptr.vmem [resolvable:$true] %s653
          %659 = dma.hbm_to_vmem [thread:$0]  %s652, 12288, %s654, %s643, 128, 128, 8
        $region32: #{similarity_space_forward.1} parent=15 // pred_fallthru
          _
        // Predicated region
        $region33: #{similarity_space_forward.1} parent=15 // pred_check
          %p660 = pneg %p176
        $region34: #{similarity_space_forward.1} parent=15 // pred_check_branch
          %662 = sbr.rel (%p660) target = $region36
        $region35: #{similarity_space_forward.1} parent=15 // pred_region
          %s663 = sand.u32 %s52, 1
          %s664 = scalar_lea.sflag [#allocation8], %s663
          %s665 = sand.u32 %s166, 1
          %s666 = smul.addr %s665, 2
          %s667 = scalar_lea.vmem [#allocation7], %s666
          %s669 = ssub.s32 32, 32
          %670 = vsyncadd %s664, %s669
          %s671 = smul.addr %s52, 2
          %s672 = smul.addr %s671, 16
          %s673 = scalar_lea.hbm %s4, %s672
          %s675 = sshll.u32 %s667, 4
          %s676 = int_to_ptr.vmem [resolvable:$true] %s675
          %678 = dma.hbm_to_vmem [thread:$0]  %s673, 32, %s676, %s664
        $region36: #{similarity_space_forward.1} parent=15 // pred_fallthru
          _
        // Predicated region
        $region37: #{similarity_space_forward.1} parent=15 // pred_check
          %p679 = pneg %p202
        $region38: #{similarity_space_forward.1} parent=15 // pred_check_branch
          %681 = sbr.rel (%p679) target = $region40
        $region39: #{similarity_space_forward.1} parent=15 // pred_region
          %s682 = sand.u32 %s52, 1
          %s683 = scalar_lea.sflag [#allocation8], %s682
          %s684 = sand.u32 %s192, 1
          %s685 = smul.addr %s684, 2
          %s686 = scalar_lea.vmem [#allocation9], %s685
          %s688 = ssub.s32 32, 32
          %689 = vsyncadd %s683, %s688
          %s690 = smul.addr %s52, 2
          %s691 = smul.addr %s690, 16
          %s692 = scalar_lea.hbm %s5, %s691
          %s694 = sshll.u32 %s686, 4
          %s695 = int_to_ptr.vmem [resolvable:$true] %s694
          %697 = dma.hbm_to_vmem [thread:$0]  %s692, 32, %s695, %s683
        $region40: #{similarity_space_forward.1} parent=15 // pred_fallthru
          _
        // Predicated region
        $region41: #{similarity_space_forward.1} parent=15 // pred_check
          %p698 = pneg %p228
        $region42: #{similarity_space_forward.1} parent=15 // pred_check_branch
          %700 = sbr.rel (%p698) target = $region44
        $region43: #{similarity_space_forward.1} parent=15 // pred_region
          %s701 = sand.u32 %s52, 1
          %s702 = scalar_lea.sflag [#allocation11], %s701
          %s703 = sand.u32 %s218, 1
          %s704 = smul.addr %s703, 2
          %s705 = scalar_lea.vmem [#allocation10], %s704
          %s707 = ssub.s32 32, 32
          %708 = vsyncadd %s702, %s707
          %s709 = smul.addr %s52, 2
          %s710 = smul.addr %s709, 16
          %s711 = scalar_lea.hbm %s6, %s710
          %s713 = sshll.u32 %s705, 4
          %s714 = int_to_ptr.vmem [resolvable:$true] %s713
          %716 = dma.hbm_to_vmem [thread:$0]  %s711, 32, %s714, %s702
        $region44: #{similarity_space_forward.1} parent=15 // pred_fallthru
          _
        // Predicated region
        $region45: #{similarity_space_forward.1} parent=15 // pred_check
          %p717 = pneg %p254
        $region46: #{similarity_space_forward.1} parent=15 // pred_check_branch
          %719 = sbr.rel (%p717) target = $region48
        $region47: #{similarity_space_forward.1} parent=15 // pred_region
          %s720 = sand.u32 %s52, 1
          %s721 = scalar_lea.sflag [#allocation11], %s720
          %s722 = sand.u32 %s244, 1
          %s723 = smul.addr %s722, 128
          %s724 = scalar_lea.vmem [#allocation12], %s723
          %s726 = ssub.s32 2048, 2048
          %727 = vsyncadd %s721, %s726
          %s728 = smul.addr %s52, 32
          %s729 = smul.addr %s728, 64
          %s730 = scalar_lea.hbm %s7, %s729
          %s731 = sshll.u32 %s724, 4
          %s732 = int_to_ptr.vmem [resolvable:$true] %s731
          %737 = dma.hbm_to_vmem [thread:$0]  %s730, 2048, %s732, %s721, 64, 64, 4
        $region48: #{similarity_space_forward.1} parent=15 // pred_fallthru
          _
        // Predicated region
        $region49: #{similarity_space_forward.1} parent=15 // pred_check
          %p738 = pneg %p280
        $region50: #{similarity_space_forward.1} parent=15 // pred_check_branch
          %740 = sbr.rel (%p738) target = $region52
        $region51: #{similarity_space_forward.1} parent=15 // pred_region
          %s741 = sand.u32 %s52, 1
          %s742 = scalar_lea.sflag [#allocation14], %s741
          %s743 = sand.u32 %s270, 1
          %s744 = scalar_lea.vmem [#allocation13], %s743
          %s746 = ssub.s32 16, 16
          %747 = vsyncadd %s742, %s746
          %s748 = smul.addr %s52, 16
          %s749 = scalar_lea.hbm %s8, %s748
          %s751 = sshll.u32 %s744, 4
          %s752 = int_to_ptr.vmem [resolvable:$true] %s751
          %754 = dma.hbm_to_vmem [thread:$0]  %s749, 16, %s752, %s742
        $region52: #{similarity_space_forward.1} parent=15 // pred_fallthru
          _
        // Predicated region
        $region53: #{similarity_space_forward.1} parent=15 // pred_check
          %p755 = pneg %p306
        $region54: #{similarity_space_forward.1} parent=15 // pred_check_branch
          %757 = sbr.rel (%p755) target = $region56
        $region55: #{similarity_space_forward.1} parent=15 // pred_region
          %s758 = sand.u32 %s52, 1
          %s759 = scalar_lea.sflag [#allocation14], %s758
          %s760 = sand.u32 %s296, 1
          %s761 = scalar_lea.vmem [#allocation15], %s760
          %s763 = ssub.s32 16, 16
          %764 = vsyncadd %s759, %s763
          %s765 = smul.addr %s52, 16
          %s766 = scalar_lea.hbm %s9, %s765
          %s768 = sshll.u32 %s761, 4
          %s769 = int_to_ptr.vmem [resolvable:$true] %s768
          %771 = dma.hbm_to_vmem [thread:$0]  %s766, 16, %s769, %s759
        $region56: #{similarity_space_forward.1} parent=15 // pred_fallthru
          _
        // Predicated region
        $region57: #{similarity_space_forward.1} parent=15 // pred_check
          %p772 = pneg %p332
        $region58: #{similarity_space_forward.1} parent=15 // pred_check_branch
          %774 = sbr.rel (%p772) target = $region60
        $region59: #{similarity_space_forward.1} parent=15 // pred_region
          %s775 = sand.u32 %s52, 1
          %s776 = scalar_lea.sflag [#allocation17], %s775
          %s777 = sand.u32 %s322, 1
          %s778 = scalar_lea.vmem [#allocation16], %s777
          %s780 = ssub.s32 16, 16
          %781 = vsyncadd %s776, %s780
          %s782 = smul.addr %s52, 16
          %s783 = scalar_lea.hbm %s10, %s782
          %s785 = sshll.u32 %s778, 4
          %s786 = int_to_ptr.vmem [resolvable:$true] %s785
          %788 = dma.hbm_to_vmem [thread:$0]  %s783, 16, %s786, %s776
        $region60: #{similarity_space_forward.1} parent=15 // pred_fallthru
          _
        // Predicated region
        $region61: #{similarity_space_forward.1} parent=15 // pred_check
          %p789 = pneg %p358
        $region62: #{similarity_space_forward.1} parent=15 // pred_check_branch
          %791 = sbr.rel (%p789) target = $region64
        $region63: #{similarity_space_forward.1} parent=15 // pred_region
          %s792 = sand.u32 %s52, 1
          %s793 = scalar_lea.sflag [#allocation17], %s792
          %s794 = sand.u32 %s348, 1
          %s795 = smul.addr %s794, 64
          %s796 = scalar_lea.vmem [#allocation18], %s795
          %s798 = ssub.s32 1024, 1024
          %799 = vsyncadd %s793, %s798
          %s800 = smul.addr %s52, 16
          %s801 = smul.addr %s800, 64
          %s802 = scalar_lea.hbm %s11, %s801
          %s803 = sshll.u32 %s796, 4
          %s804 = int_to_ptr.vmem [resolvable:$true] %s803
          %809 = dma.hbm_to_vmem [thread:$0]  %s802, 1024, %s804, %s793, 64, 64, 4
        $region64: #{similarity_space_forward.1} parent=15 // pred_fallthru
          _
        // Predicated region
        $region65: #{similarity_space_forward.1} parent=15 // pred_check
          %p810 = pneg %p384
        $region66: #{similarity_space_forward.1} parent=15 // pred_check_branch
          %812 = sbr.rel (%p810) target = $region68
        $region67: #{similarity_space_forward.1} parent=15 // pred_region
          %s813 = sand.u32 %s52, 1
          %s814 = scalar_lea.sflag [#allocation20], %s813
          %s815 = sand.u32 %s374, 1
          %s816 = scalar_lea.vmem [#allocation19], %s815
          %s818 = ssub.s32 16, 16
          %819 = vsyncadd %s814, %s818
          %s820 = smul.addr %s52, 16
          %s821 = scalar_lea.hbm %s12, %s820
          %s823 = sshll.u32 %s816, 4
          %s824 = int_to_ptr.vmem [resolvable:$true] %s823
          %826 = dma.hbm_to_vmem [thread:$0]  %s821, 16, %s824, %s814
        $region68: #{similarity_space_forward.1} parent=15 // pred_fallthru
          _
        // Predicated region
        $region69: #{similarity_space_forward.1} parent=15 // pred_check
          %p827 = pneg %p410
        $region70: #{similarity_space_forward.1} parent=15 // pred_check_branch
          %829 = sbr.rel (%p827) target = $region72
        $region71: #{similarity_space_forward.1} parent=15 // pred_region
          %s830 = sand.u32 %s52, 1
          %s831 = scalar_lea.sflag [#allocation20], %s830
          %s832 = sand.u32 %s400, 1
          %s833 = scalar_lea.vmem [#allocation21], %s832
          %s835 = ssub.s32 16, 16
          %836 = vsyncadd %s831, %s835
          %s837 = smul.addr %s52, 16
          %s838 = scalar_lea.hbm %s13, %s837
          %s840 = sshll.u32 %s833, 4
          %s841 = int_to_ptr.vmem [resolvable:$true] %s840
          %843 = dma.hbm_to_vmem [thread:$0]  %s838, 16, %s841, %s831
        $region72: #{similarity_space_forward.1} parent=15 // pred_fallthru
          _
        // Predicated region
        $region73: #{similarity_space_forward.1} parent=15 // pred_check
          %p844 = pneg %p436
        $region74: #{similarity_space_forward.1} parent=15 // pred_check_branch
          %846 = sbr.rel (%p844) target = $region76
        $region75: #{similarity_space_forward.1} parent=15 // pred_region
          %s847 = sand.u32 %s52, 1
          %s848 = scalar_lea.sflag [#allocation23], %s847
          %s849 = sand.u32 %s426, 1
          %s850 = scalar_lea.vmem [#allocation22], %s849
          %s852 = ssub.s32 16, 16
          %853 = vsyncadd %s848, %s852
          %s854 = smul.addr %s52, 16
          %s855 = scalar_lea.hbm %s14, %s854
          %s857 = sshll.u32 %s850, 4
          %s858 = int_to_ptr.vmem [resolvable:$true] %s857
          %860 = dma.hbm_to_vmem [thread:$0]  %s855, 16, %s858, %s848
        $region76: #{similarity_space_forward.1} parent=15 // pred_fallthru
          _
        // Predicated region
        $region77: #{similarity_space_forward.1} parent=15 // pred_check
          %p861 = pneg %p462
        $region78: #{similarity_space_forward.1} parent=15 // pred_check_branch
          %863 = sbr.rel (%p861) target = $region80
        $region79: #{similarity_space_forward.1} parent=15 // pred_region
          %p864 = scmp.lt.s32.totalorder %s52, 1
          %s865 = scalar_select %p864, %s52, 1
          %s866 = smul.addr %s865, 16
          %s867 = smul.addr %s866, 4
          %s868 = scalar_lea.vmem %s15, %s867
        $region80: #{similarity_space_forward.1} parent=15 // pred_fallthru
          _
        // Predicated region
        $region81: #{similarity_space_forward.1} parent=15 // pred_check
          %p869 = pneg %p488
        $region82: #{similarity_space_forward.1} parent=15 // pred_check_branch
          %871 = sbr.rel (%p869) target = $region84
        $region83: #{similarity_space_forward.1} parent=15 // pred_region
          %s872 = sand.u32 %s52, 1
          %s873 = scalar_lea.sflag [#allocation23], %s872
          %s874 = sand.u32 %s478, 1
          %s875 = scalar_lea.vmem [#allocation24], %s874
          %s877 = ssub.s32 16, 16
          %878 = vsyncadd %s873, %s877
          %s879 = smul.addr %s52, 16
          %s880 = scalar_lea.hbm %s16, %s879
          %s882 = sshll.u32 %s875, 4
          %s883 = int_to_ptr.vmem [resolvable:$true] %s882
          %885 = dma.hbm_to_vmem [thread:$0]  %s880, 16, %s883, %s873
        $region84: #{similarity_space_forward.1} parent=15 // pred_fallthru
          _
        // Predicated region
        $region85: #{similarity_space_forward.1} parent=15 // pred_check
          %p886 = pneg %p514
        $region86: #{similarity_space_forward.1} parent=15 // pred_check_branch
          %888 = sbr.rel (%p886) target = $region88
        $region87: #{similarity_space_forward.1} parent=15 // pred_region
          %s889 = sand.u32 %s52, 1
          %s890 = scalar_lea.sflag [#allocation26], %s889
          %s891 = sand.u32 %s504, 1
          %s892 = scalar_lea.vmem [#allocation25], %s891
          %s894 = ssub.s32 16, 16
          %895 = vsyncadd %s890, %s894
          %s896 = smul.addr %s52, 16
          %s897 = scalar_lea.hbm %s17, %s896
          %s899 = sshll.u32 %s892, 4
          %s900 = int_to_ptr.vmem [resolvable:$true] %s899
          %902 = dma.hbm_to_vmem [thread:$0]  %s897, 16, %s900, %s890
        $region88: #{similarity_space_forward.1} parent=15 // pred_fallthru
          _
        // Predicated region
        $region89: #{similarity_space_forward.1} parent=15 // pred_check
          %p903 = pneg %p540
        $region90: #{similarity_space_forward.1} parent=15 // pred_check_branch
          %905 = sbr.rel (%p903) target = $region92
        $region91: #{similarity_space_forward.1} parent=15 // pred_region
          %s906 = sand.u32 %s52, 1
          %s907 = scalar_lea.sflag [#allocation26], %s906
          %s908 = sand.u32 %s530, 1
          %s909 = scalar_lea.vmem [#allocation27], %s908
          %s911 = ssub.s32 16, 16
          %912 = vsyncadd %s907, %s911
          %s913 = smul.addr %s52, 16
          %s914 = scalar_lea.hbm %s18, %s913
          %s916 = sshll.u32 %s909, 4
          %s917 = int_to_ptr.vmem [resolvable:$true] %s916
          %919 = dma.hbm_to_vmem [thread:$0]  %s914, 16, %s917, %s907
        $region92: #{similarity_space_forward.1} parent=15 // pred_fallthru
          _
      $region16: #{similarity_space_forward.1} parent=5 // pred_fallthru
        _
      %p920 = scmp.le.s32.totalorder 1, %s52
      %p921 = scmp.lt.s32.totalorder %s52, 3
      %p922 = pnand %p920, %p921
      %p923 = pneg %p922
      // Predicated region
      $region93: #{similarity_space_forward.1} parent=5 // pred_check
        _
      $region94: #{similarity_space_forward.1} parent=5 // pred_check_branch
        %925 = sbr.rel (%p922) target = $region96
      $region95: #{similarity_space_forward.1} parent=5 // pred_region
        %s926 = ssub.s32 %s52, 1
        %s927 = sand.u32 %s91, 1
        %s928 = scalar_lea.sflag [#allocation3], %s927
        %s929 = sand.u32 %s91, 1
        %s930 = smul.addr %s929, 6912
        %s931 = scalar_lea.vmem [#allocation2], %s930
        // Predicated region
        $region97: #{similarity_space_forward.1} parent=95 // pred_check
          %p932 = pneg %p104
        $region98: #{similarity_space_forward.1} parent=95 // pred_check_branch
          %934 = sbr.rel (%p932) target = $region100
        $region99: #{similarity_space_forward.1} parent=95 // pred_region
          %935 = dma.done %s928, 110592
        $region100: #{similarity_space_forward.1} parent=95 // pred_fallthru
          _
        %s936 = sand.u32 %s57, 1
        %s937 = scalar_lea.sflag [#allocation5], %s936
        %s938 = sand.u32 %s117, 1
        %s939 = smul.addr %s938, 18
        %s940 = scalar_lea.vmem [#allocation4], %s939
        // Predicated region
        $region101: #{similarity_space_forward.1} parent=95 // pred_check
          %p941 = pneg %p130
        $region102: #{similarity_space_forward.1} parent=95 // pred_check_branch
          %943 = sbr.rel (%p941) target = $region104
        $region103: #{similarity_space_forward.1} parent=95 // pred_region
          %944 = dma.done %s937, 288
        $region104: #{similarity_space_forward.1} parent=95 // pred_fallthru
          _
        %s945 = sand.u32 %s57, 1
        %s946 = scalar_lea.sflag [#allocation5], %s945
        %s947 = sand.u32 %s143, 1
        %s948 = smul.addr %s947, 768
        %s949 = scalar_lea.vmem [#allocation6], %s948
        // Predicated region
        $region105: #{similarity_space_forward.1} parent=95 // pred_check
          %p950 = pneg %p156
        $region106: #{similarity_space_forward.1} parent=95 // pred_check_branch
          %952 = sbr.rel (%p950) target = $region108
        $region107: #{similarity_space_forward.1} parent=95 // pred_region
          %953 = dma.done %s946, 12288
        $region108: #{similarity_space_forward.1} parent=95 // pred_fallthru
          _
        %s954 = sand.u32 %s57, 1
        %s955 = scalar_lea.sflag [#allocation8], %s954
        %s956 = sand.u32 %s169, 1
        %s957 = smul.addr %s956, 2
        %s958 = scalar_lea.vmem [#allocation7], %s957
        // Predicated region
        $region109: #{similarity_space_forward.1} parent=95 // pred_check
          %p959 = pneg %p182
        $region110: #{similarity_space_forward.1} parent=95 // pred_check_branch
          %961 = sbr.rel (%p959) target = $region112
        $region111: #{similarity_space_forward.1} parent=95 // pred_region
          %962 = dma.done %s955, 32
        $region112: #{similarity_space_forward.1} parent=95 // pred_fallthru
          _
        %s963 = sand.u32 %s57, 1
        %s964 = scalar_lea.sflag [#allocation8], %s963
        %s965 = sand.u32 %s195, 1
        %s966 = smul.addr %s965, 2
        %s967 = scalar_lea.vmem [#allocation9], %s966
        // Predicated region
        $region113: #{similarity_space_forward.1} parent=95 // pred_check
          %p968 = pneg %p208
        $region114: #{similarity_space_forward.1} parent=95 // pred_check_branch
          %970 = sbr.rel (%p968) target = $region116
        $region115: #{similarity_space_forward.1} parent=95 // pred_region
          %971 = dma.done %s964, 32
        $region116: #{similarity_space_forward.1} parent=95 // pred_fallthru
          _
        %s972 = sand.u32 %s57, 1
        %s973 = scalar_lea.sflag [#allocation11], %s972
        %s974 = sand.u32 %s221, 1
        %s975 = smul.addr %s974, 2
        %s976 = scalar_lea.vmem [#allocation10], %s975
        // Predicated region
        $region117: #{similarity_space_forward.1} parent=95 // pred_check
          %p977 = pneg %p234
        $region118: #{similarity_space_forward.1} parent=95 // pred_check_branch
          %979 = sbr.rel (%p977) target = $region120
        $region119: #{similarity_space_forward.1} parent=95 // pred_region
          %980 = dma.done %s973, 32
        $region120: #{similarity_space_forward.1} parent=95 // pred_fallthru
          _
        %s981 = sand.u32 %s57, 1
        %s982 = scalar_lea.sflag [#allocation11], %s981
        %s983 = sand.u32 %s247, 1
        %s984 = smul.addr %s983, 128
        %s985 = scalar_lea.vmem [#allocation12], %s984
        // Predicated region
        $region121: #{similarity_space_forward.1} parent=95 // pred_check
          %p986 = pneg %p260
        $region122: #{similarity_space_forward.1} parent=95 // pred_check_branch
          %988 = sbr.rel (%p986) target = $region124
        $region123: #{similarity_space_forward.1} parent=95 // pred_region
          %989 = dma.done %s982, 2048
        $region124: #{similarity_space_forward.1} parent=95 // pred_fallthru
          _
        %s990 = sand.u32 %s57, 1
        %s991 = scalar_lea.sflag [#allocation14], %s990
        %s992 = sand.u32 %s273, 1
        %s993 = scalar_lea.vmem [#allocation13], %s992
        // Predicated region
        $region125: #{similarity_space_forward.1} parent=95 // pred_check
          %p994 = pneg %p286
        $region126: #{similarity_space_forward.1} parent=95 // pred_check_branch
          %996 = sbr.rel (%p994) target = $region128
        $region127: #{similarity_space_forward.1} parent=95 // pred_region
          %997 = dma.done %s991, 16
        $region128: #{similarity_space_forward.1} parent=95 // pred_fallthru
          _
        %s998 = sand.u32 %s57, 1
        %s999 = scalar_lea.sflag [#allocation14], %s998
        %s1000 = sand.u32 %s299, 1
        %s1001 = scalar_lea.vmem [#allocation15], %s1000
        // Predicated region
        $region129: #{similarity_space_forward.1} parent=95 // pred_check
          %p1002 = pneg %p312
        $region130: #{similarity_space_forward.1} parent=95 // pred_check_branch
          %1004 = sbr.rel (%p1002) target = $region132
        $region131: #{similarity_space_forward.1} parent=95 // pred_region
          %1005 = dma.done %s999, 16
        $region132: #{similarity_space_forward.1} parent=95 // pred_fallthru
          _
        %s1006 = sand.u32 %s57, 1
        %s1007 = scalar_lea.sflag [#allocation17], %s1006
        %s1008 = sand.u32 %s325, 1
        %s1009 = scalar_lea.vmem [#allocation16], %s1008
        // Predicated region
        $region133: #{similarity_space_forward.1} parent=95 // pred_check
          %p1010 = pneg %p338
        $region134: #{similarity_space_forward.1} parent=95 // pred_check_branch
          %1012 = sbr.rel (%p1010) target = $region136
        $region135: #{similarity_space_forward.1} parent=95 // pred_region
          %1013 = dma.done %s1007, 16
        $region136: #{similarity_space_forward.1} parent=95 // pred_fallthru
          _
        %s1014 = sand.u32 %s57, 1
        %s1015 = scalar_lea.sflag [#allocation17], %s1014
        %s1016 = sand.u32 %s351, 1
        %s1017 = smul.addr %s1016, 64
        %s1018 = scalar_lea.vmem [#allocation18], %s1017
        // Predicated region
        $region137: #{similarity_space_forward.1} parent=95 // pred_check
          %p1019 = pneg %p364
        $region138: #{similarity_space_forward.1} parent=95 // pred_check_branch
          %1021 = sbr.rel (%p1019) target = $region140
        $region139: #{similarity_space_forward.1} parent=95 // pred_region
          %1022 = dma.done %s1015, 1024
        $region140: #{similarity_space_forward.1} parent=95 // pred_fallthru
          _
        %s1023 = sand.u32 %s57, 1
        %s1024 = scalar_lea.sflag [#allocation20], %s1023
        %s1025 = sand.u32 %s377, 1
        %s1026 = scalar_lea.vmem [#allocation19], %s1025
        // Predicated region
        $region141: #{similarity_space_forward.1} parent=95 // pred_check
          %p1027 = pneg %p390
        $region142: #{similarity_space_forward.1} parent=95 // pred_check_branch
          %1029 = sbr.rel (%p1027) target = $region144
        $region143: #{similarity_space_forward.1} parent=95 // pred_region
          %1030 = dma.done %s1024, 16
        $region144: #{similarity_space_forward.1} parent=95 // pred_fallthru
          _
        %s1031 = sand.u32 %s57, 1
        %s1032 = scalar_lea.sflag [#allocation20], %s1031
        %s1033 = sand.u32 %s403, 1
        %s1034 = scalar_lea.vmem [#allocation21], %s1033
        // Predicated region
        $region145: #{similarity_space_forward.1} parent=95 // pred_check
          %p1035 = pneg %p416
        $region146: #{similarity_space_forward.1} parent=95 // pred_check_branch
          %1037 = sbr.rel (%p1035) target = $region148
        $region147: #{similarity_space_forward.1} parent=95 // pred_region
          %1038 = dma.done %s1032, 16
        $region148: #{similarity_space_forward.1} parent=95 // pred_fallthru
          _
        %s1039 = sand.u32 %s57, 1
        %s1040 = scalar_lea.sflag [#allocation23], %s1039
        %s1041 = sand.u32 %s429, 1
        %s1042 = scalar_lea.vmem [#allocation22], %s1041
        // Predicated region
        $region149: #{similarity_space_forward.1} parent=95 // pred_check
          %p1043 = pneg %p442
        $region150: #{similarity_space_forward.1} parent=95 // pred_check_branch
          %1045 = sbr.rel (%p1043) target = $region152
        $region151: #{similarity_space_forward.1} parent=95 // pred_region
          %1046 = dma.done %s1040, 16
        $region152: #{similarity_space_forward.1} parent=95 // pred_fallthru
          _
        %s1047 = sand.u32 %s57, 1
        %s1048 = scalar_lea.sflag [#allocation23], %s1047
        %s1049 = sand.u32 %s481, 1
        %s1050 = scalar_lea.vmem [#allocation24], %s1049
        // Predicated region
        $region153: #{similarity_space_forward.1} parent=95 // pred_check
          %p1051 = pneg %p494
        $region154: #{similarity_space_forward.1} parent=95 // pred_check_branch
          %1053 = sbr.rel (%p1051) target = $region156
        $region155: #{similarity_space_forward.1} parent=95 // pred_region
          %1054 = dma.done %s1048, 16
        $region156: #{similarity_space_forward.1} parent=95 // pred_fallthru
          _
        %s1055 = sand.u32 %s57, 1
        %s1056 = scalar_lea.sflag [#allocation26], %s1055
        %s1057 = sand.u32 %s507, 1
        %s1058 = scalar_lea.vmem [#allocation25], %s1057
        // Predicated region
        $region157: #{similarity_space_forward.1} parent=95 // pred_check
          %p1059 = pneg %p520
        $region158: #{similarity_space_forward.1} parent=95 // pred_check_branch
          %1061 = sbr.rel (%p1059) target = $region160
        $region159: #{similarity_space_forward.1} parent=95 // pred_region
          %1062 = dma.done %s1056, 16
        $region160: #{similarity_space_forward.1} parent=95 // pred_fallthru
          _
        %s1063 = sand.u32 %s57, 1
        %s1064 = scalar_lea.sflag [#allocation26], %s1063
        %s1065 = sand.u32 %s533, 1
        %s1066 = scalar_lea.vmem [#allocation27], %s1065
        // Predicated region
        $region161: #{similarity_space_forward.1} parent=95 // pred_check
          %p1067 = pneg %p546
        $region162: #{similarity_space_forward.1} parent=95 // pred_check_branch
          %1069 = sbr.rel (%p1067) target = $region164
        $region163: #{similarity_space_forward.1} parent=95 // pred_region
          %1070 = dma.done %s1064, 16
        $region164: #{similarity_space_forward.1} parent=95 // pred_fallthru
          _
        %p1071 = scmp.lt.s32.totalorder %s57, 1
        %s1072 = scalar_select %p1071, %s57, 1
        %s1073 = smul.addr %s1072, 12
        %s1074 = smul.addr %s1073, 8
        %s1075 = scalar_lea.vmem %s0, %s1074
        %p1076 = pneg %p78
        %p1077 = pneg %p75
        %s1078 = sand.u32 %s91, 1
        %s1079 = scalar_lea.sflag [#allocation3], %s1078
        %s1080 = sand.u32 %s91, 1
        %s1081 = smul.addr %s1080, 6912
        %s1082 = scalar_lea.vmem [#allocation2], %s1081
        %p1083 = pneg %p104
        %p1084 = pneg %p101
        %s1085 = sand.u32 %s57, 1
        %s1086 = scalar_lea.sflag [#allocation5], %s1085
        %s1087 = sand.u32 %s117, 1
        %s1088 = smul.addr %s1087, 18
        %s1089 = scalar_lea.vmem [#allocation4], %s1088
        %p1090 = pneg %p130
        %p1091 = pneg %p127
        %s1092 = sand.u32 %s57, 1
        %s1093 = scalar_lea.sflag [#allocation5], %s1092
        %s1094 = sand.u32 %s143, 1
        %s1095 = smul.addr %s1094, 768
        %s1096 = scalar_lea.vmem [#allocation6], %s1095
        %p1097 = pneg %p156
        %p1098 = pneg %p153
        %s1099 = sand.u32 %s57, 1
        %s1100 = scalar_lea.sflag [#allocation8], %s1099
        %s1101 = sand.u32 %s169, 1
        %s1102 = smul.addr %s1101, 2
        %s1103 = scalar_lea.vmem [#allocation7], %s1102
        %p1104 = pneg %p182
        %p1105 = pneg %p179
        %s1106 = sand.u32 %s57, 1
        %s1107 = scalar_lea.sflag [#allocation8], %s1106
        %s1108 = sand.u32 %s195, 1
        %s1109 = smul.addr %s1108, 2
        %s1110 = scalar_lea.vmem [#allocation9], %s1109
        %p1111 = pneg %p208
        %p1112 = pneg %p205
        %s1113 = sand.u32 %s57, 1
        %s1114 = scalar_lea.sflag [#allocation11], %s1113
        %s1115 = sand.u32 %s221, 1
        %s1116 = smul.addr %s1115, 2
        %s1117 = scalar_lea.vmem [#allocation10], %s1116
        %p1118 = pneg %p234
        %p1119 = pneg %p231
        %s1120 = sand.u32 %s57, 1
        %s1121 = scalar_lea.sflag [#allocation11], %s1120
        %s1122 = sand.u32 %s247, 1
        %s1123 = smul.addr %s1122, 128
        %s1124 = scalar_lea.vmem [#allocation12], %s1123
        %p1125 = pneg %p260
        %p1126 = pneg %p257
        %s1127 = sand.u32 %s57, 1
        %s1128 = scalar_lea.sflag [#allocation14], %s1127
        %s1129 = sand.u32 %s273, 1
        %s1130 = scalar_lea.vmem [#allocation13], %s1129
        %p1131 = pneg %p286
        %p1132 = pneg %p283
        %s1133 = sand.u32 %s57, 1
        %s1134 = scalar_lea.sflag [#allocation14], %s1133
        %s1135 = sand.u32 %s299, 1
        %s1136 = scalar_lea.vmem [#allocation15], %s1135
        %p1137 = pneg %p312
        %p1138 = pneg %p309
        %s1139 = sand.u32 %s57, 1
        %s1140 = scalar_lea.sflag [#allocation17], %s1139
        %s1141 = sand.u32 %s325, 1
        %s1142 = scalar_lea.vmem [#allocation16], %s1141
        %p1143 = pneg %p338
        %p1144 = pneg %p335
        %s1145 = sand.u32 %s57, 1
        %s1146 = scalar_lea.sflag [#allocation17], %s1145
        %s1147 = sand.u32 %s351, 1
        %s1148 = smul.addr %s1147, 64
        %s1149 = scalar_lea.vmem [#allocation18], %s1148
        %p1150 = pneg %p364
        %p1151 = pneg %p361
        %s1152 = sand.u32 %s57, 1
        %s1153 = scalar_lea.sflag [#allocation20], %s1152
        %s1154 = sand.u32 %s377, 1
        %s1155 = scalar_lea.vmem [#allocation19], %s1154
        %p1156 = pneg %p390
        %p1157 = pneg %p387
        %s1158 = sand.u32 %s57, 1
        %s1159 = scalar_lea.sflag [#allocation20], %s1158
        %s1160 = sand.u32 %s403, 1
        %s1161 = scalar_lea.vmem [#allocation21], %s1160
        %p1162 = pneg %p416
        %p1163 = pneg %p413
        %s1164 = sand.u32 %s57, 1
        %s1165 = scalar_lea.sflag [#allocation23], %s1164
        %s1166 = sand.u32 %s429, 1
        %s1167 = scalar_lea.vmem [#allocation22], %s1166
        %p1168 = pneg %p442
        %p1169 = pneg %p439
        %p1170 = scmp.lt.s32.totalorder %s57, 1
        %s1171 = scalar_select %p1170, %s57, 1
        %s1172 = smul.addr %s1171, 16
        %s1173 = smul.addr %s1172, 4
        %s1174 = scalar_lea.vmem %s15, %s1173
        %p1175 = pneg %p468
        %p1176 = pneg %p465
        %s1177 = sand.u32 %s57, 1
        %s1178 = scalar_lea.sflag [#allocation23], %s1177
        %s1179 = sand.u32 %s481, 1
        %s1180 = scalar_lea.vmem [#allocation24], %s1179
        %p1181 = pneg %p494
        %p1182 = pneg %p491
        %s1183 = sand.u32 %s57, 1
        %s1184 = scalar_lea.sflag [#allocation26], %s1183
        %s1185 = sand.u32 %s507, 1
        %s1186 = scalar_lea.vmem [#allocation25], %s1185
        %p1187 = pneg %p520
        %p1188 = pneg %p517
        %s1189 = sand.u32 %s57, 1
        %s1190 = scalar_lea.sflag [#allocation26], %s1189
        %s1191 = sand.u32 %s533, 1
        %s1192 = scalar_lea.vmem [#allocation27], %s1191
        %p1193 = pneg %p546
        %p1194 = pneg %p543
        %p1195 = pneg %p572
        %p1196 = pneg %p569
        %p1197 = scmp.lt.s32.totalorder %s57, 1
        %s1198 = scalar_select %p1197, %s57, 1
        %s1199 = smul.addr %s1198, 2
        %s1200 = smul.addr %s1199, 8
        %s1201 = scalar_lea.vmem %s19, %s1200
        %p1202 = scmp.lt.s32.totalorder %s57, 1
        %s1203 = scalar_select %p1202, %s57, 1
        %s1204 = smul.addr %s1203, 12
        %s1205 = smul.addr %s1204, 8
        %s1206 = scalar_lea.vmem %s0, %s1205
        %p1207 = scmp.lt.s32.totalorder %s57, 1
        %s1208 = scalar_select %p1207, %s57, 1
        %s1209 = smul.addr %s1208, 16
        %s1210 = smul.addr %s1209, 4
        %s1211 = scalar_lea.vmem %s15, %s1210
        %p1212 = scmp.lt.s32.totalorder %s57, 1
        %s1213 = scalar_select %p1212, %s57, 1
        %s1214 = smul.addr %s1213, 2
        %s1215 = smul.addr %s1214, 8
        %s1216 = scalar_lea.vmem %s19, %s1215
        %v1218 = vld [vmem:[%s1206] sm:$0xff]
        %v1219 = vld [vmem:[%s1206 + $0x8] sm:$0xff]
        %v1220 = vld [vmem:[%s1206 + $0x10] sm:$0xff]
        %v1221 = vld [vmem:[%s1206 + $0x18] sm:$0xff]
        %v1222 = vld [vmem:[%s1206 + $0x20] sm:$0xff]
        %v1223 = vld [vmem:[%s1206 + $0x28] sm:$0xff]
        %v1224 = vld [vmem:[%s1206 + $0x30] sm:$0xff]
        %v1225 = vld [vmem:[%s1206 + $0x38] sm:$0xff]
        %v1226 = vld [vmem:[%s1206 + $0x40] sm:$0xff]
        %v1227 = vld [vmem:[%s1206 + $0x48] sm:$0xff]
        %v1228 = vld [vmem:[%s1206 + $0x50] sm:$0xff]
        %v1229 = vld [vmem:[%s1206 + $0x58] sm:$0xff]
        %v1230 = vpack.c.bf16 %v1224, %v1218
        %v1231 = vpack.c.bf16 %v1225, %v1219
        %v1232 = vpack.c.bf16 %v1226, %v1220
        %v1233 = vpack.c.bf16 %v1227, %v1221
        %v1234 = vpack.c.bf16 %v1228, %v1222
        %v1235 = vpack.c.bf16 %v1229, %v1223
        %v1236 = vld [vmem:[%s931] sm:$0xff]
        %v1237 = vld [vmem:[%s931 + $0x8] sm:$0xff]
        %v1238 = vld [vmem:[%s931 + $0x10] sm:$0xff]
        %v1239 = vld [vmem:[%s931 + $0x18] sm:$0xff]
        %v1240 = vld [vmem:[%s931 + $0x20] sm:$0xff]
        %v1241 = vld [vmem:[%s931 + $0x28] sm:$0xff]
        %v1242 = vld [vmem:[%s931 + $0x30] sm:$0xff]
        %v1243 = vld [vmem:[%s931 + $0x38] sm:$0xff]
        %v1244 = vld [vmem:[%s931 + $0x40] sm:$0xff]
        %v1245 = vld [vmem:[%s931 + $0x48] sm:$0xff]
        %v1246 = vld [vmem:[%s931 + $0x50] sm:$0xff]
        %v1247 = vld [vmem:[%s931 + $0x58] sm:$0xff]
        %v1248 = vld [vmem:[%s931 + $0x60] sm:$0xff]
        %v1249 = vld [vmem:[%s931 + $0x68] sm:$0xff]
        %v1250 = vld [vmem:[%s931 + $0x70] sm:$0xff]
        %v1251 = vld [vmem:[%s931 + $0x78] sm:$0xff]
        %v1252 = vld [vmem:[%s931 + $0x80] sm:$0xff]
        %v1253 = vld [vmem:[%s931 + $0x88] sm:$0xff]
        %v1254 = vld [vmem:[%s931 + $0x90] sm:$0xff]
        %v1255 = vld [vmem:[%s931 + $0x98] sm:$0xff]
        %v1256 = vld [vmem:[%s931 + $0xa0] sm:$0xff]
        %v1257 = vld [vmem:[%s931 + $0xa8] sm:$0xff]
        %v1258 = vld [vmem:[%s931 + $0xb0] sm:$0xff]
        %v1259 = vld [vmem:[%s931 + $0xb8] sm:$0xff]
        %v1260 = vld [vmem:[%s931 + $0xc0] sm:$0xff]
        %v1261 = vld [vmem:[%s931 + $0xc8] sm:$0xff]
        %v1262 = vld [vmem:[%s931 + $0xd0] sm:$0xff]
        %v1263 = vld [vmem:[%s931 + $0xd8] sm:$0xff]
        %v1264 = vld [vmem:[%s931 + $0xe0] sm:$0xff]
        %v1265 = vld [vmem:[%s931 + $0xe8] sm:$0xff]
        %v1266 = vld [vmem:[%s931 + $0xf0] sm:$0xff]
        %v1267 = vld [vmem:[%s931 + $0xf8] sm:$0xff]
        %v1268 = vld [vmem:[%s931 + $0x100] sm:$0xff]
        %v1269 = vld [vmem:[%s931 + $0x108] sm:$0xff]
        %v1270 = vld [vmem:[%s931 + $0x110] sm:$0xff]
        %v1271 = vld [vmem:[%s931 + $0x118] sm:$0xff]
        %v1272 = vld [vmem:[%s931 + $0x120] sm:$0xff]
        %v1273 = vld [vmem:[%s931 + $0x128] sm:$0xff]
        %v1274 = vld [vmem:[%s931 + $0x130] sm:$0xff]
        %v1275 = vld [vmem:[%s931 + $0x138] sm:$0xff]
        %v1276 = vld [vmem:[%s931 + $0x140] sm:$0xff]
        %v1277 = vld [vmem:[%s931 + $0x148] sm:$0xff]
        %v1278 = vld [vmem:[%s931 + $0x150] sm:$0xff]
        %v1279 = vld [vmem:[%s931 + $0x158] sm:$0xff]
        %v1280 = vld [vmem:[%s931 + $0x160] sm:$0xff]
        %v1281 = vld [vmem:[%s931 + $0x168] sm:$0xff]
        %v1282 = vld [vmem:[%s931 + $0x170] sm:$0xff]
        %v1283 = vld [vmem:[%s931 + $0x178] sm:$0xff]
        %v1284 = vld [vmem:[%s931 + $0x180] sm:$0xff]
        %v1285 = vld [vmem:[%s931 + $0x188] sm:$0xff]
        %v1286 = vld [vmem:[%s931 + $0x190] sm:$0xff]
        %v1287 = vld [vmem:[%s931 + $0x198] sm:$0xff]
        %v1288 = vld [vmem:[%s931 + $0x1a0] sm:$0xff]
        %v1289 = vld [vmem:[%s931 + $0x1a8] sm:$0xff]
        %v1290 = vld [vmem:[%s931 + $0x1b0] sm:$0xff]
        %v1291 = vld [vmem:[%s931 + $0x1b8] sm:$0xff]
        %v1292 = vld [vmem:[%s931 + $0x1c0] sm:$0xff]
        %v1293 = vld [vmem:[%s931 + $0x1c8] sm:$0xff]
        %v1294 = vld [vmem:[%s931 + $0x1d0] sm:$0xff]
        %v1295 = vld [vmem:[%s931 + $0x1d8] sm:$0xff]
        %v1296 = vld [vmem:[%s931 + $0x1e0] sm:$0xff]
        %v1297 = vld [vmem:[%s931 + $0x1e8] sm:$0xff]
        %v1298 = vld [vmem:[%s931 + $0x1f0] sm:$0xff]
        %v1299 = vld [vmem:[%s931 + $0x1f8] sm:$0xff]
        %v1300 = vld [vmem:[%s931 + $0x200] sm:$0xff]
        %v1301 = vld [vmem:[%s931 + $0x208] sm:$0xff]
        %v1302 = vld [vmem:[%s931 + $0x210] sm:$0xff]
        %v1303 = vld [vmem:[%s931 + $0x218] sm:$0xff]
        %v1304 = vld [vmem:[%s931 + $0x220] sm:$0xff]
        %v1305 = vld [vmem:[%s931 + $0x228] sm:$0xff]
        %v1306 = vld [vmem:[%s931 + $0x230] sm:$0xff]
        %v1307 = vld [vmem:[%s931 + $0x238] sm:$0xff]
        %v1308 = vld [vmem:[%s931 + $0x240] sm:$0xff]
        %v1309 = vld [vmem:[%s931 + $0x248] sm:$0xff]
        %v1310 = vld [vmem:[%s931 + $0x250] sm:$0xff]
        %v1311 = vld [vmem:[%s931 + $0x258] sm:$0xff]
        %v1312 = vld [vmem:[%s931 + $0x260] sm:$0xff]
        %v1313 = vld [vmem:[%s931 + $0x268] sm:$0xff]
        %v1314 = vld [vmem:[%s931 + $0x270] sm:$0xff]
        %v1315 = vld [vmem:[%s931 + $0x278] sm:$0xff]
        %v1316 = vld [vmem:[%s931 + $0x280] sm:$0xff]
        %v1317 = vld [vmem:[%s931 + $0x288] sm:$0xff]
        %v1318 = vld [vmem:[%s931 + $0x290] sm:$0xff]
        %v1319 = vld [vmem:[%s931 + $0x298] sm:$0xff]
        %v1320 = vld [vmem:[%s931 + $0x2a0] sm:$0xff]
        %v1321 = vld [vmem:[%s931 + $0x2a8] sm:$0xff]
        %v1322 = vld [vmem:[%s931 + $0x2b0] sm:$0xff]
        %v1323 = vld [vmem:[%s931 + $0x2b8] sm:$0xff]
        %v1324 = vld [vmem:[%s931 + $0x2c0] sm:$0xff]
        %v1325 = vld [vmem:[%s931 + $0x2c8] sm:$0xff]
        %v1326 = vld [vmem:[%s931 + $0x2d0] sm:$0xff]
        %v1327 = vld [vmem:[%s931 + $0x2d8] sm:$0xff]
        %v1328 = vld [vmem:[%s931 + $0x2e0] sm:$0xff]
        %v1329 = vld [vmem:[%s931 + $0x2e8] sm:$0xff]
        %v1330 = vld [vmem:[%s931 + $0x2f0] sm:$0xff]
        %v1331 = vld [vmem:[%s931 + $0x2f8] sm:$0xff]
        %v1332 = vld [vmem:[%s931 + $0x300] sm:$0xff]
        %v1333 = vld [vmem:[%s931 + $0x308] sm:$0xff]
        %v1334 = vld [vmem:[%s931 + $0x310] sm:$0xff]
        %v1335 = vld [vmem:[%s931 + $0x318] sm:$0xff]
        %v1336 = vld [vmem:[%s931 + $0x320] sm:$0xff]
        %v1337 = vld [vmem:[%s931 + $0x328] sm:$0xff]
        %v1338 = vld [vmem:[%s931 + $0x330] sm:$0xff]
        %v1339 = vld [vmem:[%s931 + $0x338] sm:$0xff]
        %v1340 = vld [vmem:[%s931 + $0x340] sm:$0xff]
        %v1341 = vld [vmem:[%s931 + $0x348] sm:$0xff]
        %v1342 = vld [vmem:[%s931 + $0x350] sm:$0xff]
        %v1343 = vld [vmem:[%s931 + $0x358] sm:$0xff]
        %v1344 = vld [vmem:[%s931 + $0x360] sm:$0xff]
        %v1345 = vld [vmem:[%s931 + $0x368] sm:$0xff]
        %v1346 = vld [vmem:[%s931 + $0x370] sm:$0xff]
        %v1347 = vld [vmem:[%s931 + $0x378] sm:$0xff]
        %v1348 = vld [vmem:[%s931 + $0x380] sm:$0xff]
        %v1349 = vld [vmem:[%s931 + $0x388] sm:$0xff]
        %v1350 = vld [vmem:[%s931 + $0x390] sm:$0xff]
        %v1351 = vld [vmem:[%s931 + $0x398] sm:$0xff]
        %v1352 = vld [vmem:[%s931 + $0x3a0] sm:$0xff]
        %v1353 = vld [vmem:[%s931 + $0x3a8] sm:$0xff]
        %v1354 = vld [vmem:[%s931 + $0x3b0] sm:$0xff]
        %v1355 = vld [vmem:[%s931 + $0x3b8] sm:$0xff]
        %v1356 = vld [vmem:[%s931 + $0x3c0] sm:$0xff]
        %v1357 = vld [vmem:[%s931 + $0x3c8] sm:$0xff]
        %v1358 = vld [vmem:[%s931 + $0x3d0] sm:$0xff]
        %v1359 = vld [vmem:[%s931 + $0x3d8] sm:$0xff]
        %v1360 = vld [vmem:[%s931 + $0x3e0] sm:$0xff]
        %v1361 = vld [vmem:[%s931 + $0x3e8] sm:$0xff]
        %v1362 = vld [vmem:[%s931 + $0x3f0] sm:$0xff]
        %v1363 = vld [vmem:[%s931 + $0x3f8] sm:$0xff]
        %v1364 = vld [vmem:[%s931 + $0x400] sm:$0xff]
        %v1365 = vld [vmem:[%s931 + $0x408] sm:$0xff]
        %v1366 = vld [vmem:[%s931 + $0x410] sm:$0xff]
        %v1367 = vld [vmem:[%s931 + $0x418] sm:$0xff]
        %v1368 = vld [vmem:[%s931 + $0x420] sm:$0xff]
        %v1369 = vld [vmem:[%s931 + $0x428] sm:$0xff]
        %v1370 = vld [vmem:[%s931 + $0x430] sm:$0xff]
        %v1371 = vld [vmem:[%s931 + $0x438] sm:$0xff]
        %v1372 = vld [vmem:[%s931 + $0x440] sm:$0xff]
        %v1373 = vld [vmem:[%s931 + $0x448] sm:$0xff]
        %v1374 = vld [vmem:[%s931 + $0x450] sm:$0xff]
        %v1375 = vld [vmem:[%s931 + $0x458] sm:$0xff]
        %v1376 = vld [vmem:[%s931 + $0x460] sm:$0xff]
        %v1377 = vld [vmem:[%s931 + $0x468] sm:$0xff]
        %v1378 = vld [vmem:[%s931 + $0x470] sm:$0xff]
        %v1379 = vld [vmem:[%s931 + $0x478] sm:$0xff]
        %v1380 = vld [vmem:[%s931 + $0x480] sm:$0xff]
        %v1381 = vld [vmem:[%s931 + $0x488] sm:$0xff]
        %v1382 = vld [vmem:[%s931 + $0x490] sm:$0xff]
        %v1383 = vld [vmem:[%s931 + $0x498] sm:$0xff]
        %v1384 = vld [vmem:[%s931 + $0x4a0] sm:$0xff]
        %v1385 = vld [vmem:[%s931 + $0x4a8] sm:$0xff]
        %v1386 = vld [vmem:[%s931 + $0x4b0] sm:$0xff]
        %v1387 = vld [vmem:[%s931 + $0x4b8] sm:$0xff]
        %v1388 = vld [vmem:[%s931 + $0x4c0] sm:$0xff]
        %v1389 = vld [vmem:[%s931 + $0x4c8] sm:$0xff]
        %v1390 = vld [vmem:[%s931 + $0x4d0] sm:$0xff]
        %v1391 = vld [vmem:[%s931 + $0x4d8] sm:$0xff]
        %v1392 = vld [vmem:[%s931 + $0x4e0] sm:$0xff]
        %v1393 = vld [vmem:[%s931 + $0x4e8] sm:$0xff]
        %v1394 = vld [vmem:[%s931 + $0x4f0] sm:$0xff]
        %v1395 = vld [vmem:[%s931 + $0x4f8] sm:$0xff]
        %v1396 = vld [vmem:[%s931 + $0x500] sm:$0xff]
        %v1397 = vld [vmem:[%s931 + $0x508] sm:$0xff]
        %v1398 = vld [vmem:[%s931 + $0x510] sm:$0xff]
        %v1399 = vld [vmem:[%s931 + $0x518] sm:$0xff]
        %v1400 = vld [vmem:[%s931 + $0x520] sm:$0xff]
        %v1401 = vld [vmem:[%s931 + $0x528] sm:$0xff]
        %v1402 = vld [vmem:[%s931 + $0x530] sm:$0xff]
        %v1403 = vld [vmem:[%s931 + $0x538] sm:$0xff]
        %v1404 = vld [vmem:[%s931 + $0x540] sm:$0xff]
        %v1405 = vld [vmem:[%s931 + $0x548] sm:$0xff]
        %v1406 = vld [vmem:[%s931 + $0x550] sm:$0xff]
        %v1407 = vld [vmem:[%s931 + $0x558] sm:$0xff]
        %v1408 = vld [vmem:[%s931 + $0x560] sm:$0xff]
        %v1409 = vld [vmem:[%s931 + $0x568] sm:$0xff]
        %v1410 = vld [vmem:[%s931 + $0x570] sm:$0xff]
        %v1411 = vld [vmem:[%s931 + $0x578] sm:$0xff]
        %v1412 = vld [vmem:[%s931 + $0x580] sm:$0xff]
        %v1413 = vld [vmem:[%s931 + $0x588] sm:$0xff]
        %v1414 = vld [vmem:[%s931 + $0x590] sm:$0xff]
        %v1415 = vld [vmem:[%s931 + $0x598] sm:$0xff]
        %v1416 = vld [vmem:[%s931 + $0x5a0] sm:$0xff]
        %v1417 = vld [vmem:[%s931 + $0x5a8] sm:$0xff]
        %v1418 = vld [vmem:[%s931 + $0x5b0] sm:$0xff]
        %v1419 = vld [vmem:[%s931 + $0x5b8] sm:$0xff]
        %v1420 = vld [vmem:[%s931 + $0x5c0] sm:$0xff]
        %v1421 = vld [vmem:[%s931 + $0x5c8] sm:$0xff]
        %v1422 = vld [vmem:[%s931 + $0x5d0] sm:$0xff]
        %v1423 = vld [vmem:[%s931 + $0x5d8] sm:$0xff]
        %v1424 = vld [vmem:[%s931 + $0x5e0] sm:$0xff]
        %v1425 = vld [vmem:[%s931 + $0x5e8] sm:$0xff]
        %v1426 = vld [vmem:[%s931 + $0x5f0] sm:$0xff]
        %v1427 = vld [vmem:[%s931 + $0x5f8] sm:$0xff]
        %v1428 = vld [vmem:[%s931 + $0x600] sm:$0xff]
        %v1429 = vld [vmem:[%s931 + $0x608] sm:$0xff]
        %v1430 = vld [vmem:[%s931 + $0x610] sm:$0xff]
        %v1431 = vld [vmem:[%s931 + $0x618] sm:$0xff]
        %v1432 = vld [vmem:[%s931 + $0x620] sm:$0xff]
        %v1433 = vld [vmem:[%s931 + $0x628] sm:$0xff]
        %v1434 = vld [vmem:[%s931 + $0x630] sm:$0xff]
        %v1435 = vld [vmem:[%s931 + $0x638] sm:$0xff]
        %v1436 = vld [vmem:[%s931 + $0x640] sm:$0xff]
        %v1437 = vld [vmem:[%s931 + $0x648] sm:$0xff]
        %v1438 = vld [vmem:[%s931 + $0x650] sm:$0xff]
        %v1439 = vld [vmem:[%s931 + $0x658] sm:$0xff]
        %v1440 = vld [vmem:[%s931 + $0x660] sm:$0xff]
        %v1441 = vld [vmem:[%s931 + $0x668] sm:$0xff]
        %v1442 = vld [vmem:[%s931 + $0x670] sm:$0xff]
        %v1443 = vld [vmem:[%s931 + $0x678] sm:$0xff]
        %v1444 = vld [vmem:[%s931 + $0x680] sm:$0xff]
        %v1445 = vld [vmem:[%s931 + $0x688] sm:$0xff]
        %v1446 = vld [vmem:[%s931 + $0x690] sm:$0xff]
        %v1447 = vld [vmem:[%s931 + $0x698] sm:$0xff]
        %v1448 = vld [vmem:[%s931 + $0x6a0] sm:$0xff]
        %v1449 = vld [vmem:[%s931 + $0x6a8] sm:$0xff]
        %v1450 = vld [vmem:[%s931 + $0x6b0] sm:$0xff]
        %v1451 = vld [vmem:[%s931 + $0x6b8] sm:$0xff]
        %v1452 = vld [vmem:[%s931 + $0x6c0] sm:$0xff]
        %v1453 = vld [vmem:[%s931 + $0x6c8] sm:$0xff]
        %v1454 = vld [vmem:[%s931 + $0x6d0] sm:$0xff]
        %v1455 = vld [vmem:[%s931 + $0x6d8] sm:$0xff]
        %v1456 = vld [vmem:[%s931 + $0x6e0] sm:$0xff]
        %v1457 = vld [vmem:[%s931 + $0x6e8] sm:$0xff]
        %v1458 = vld [vmem:[%s931 + $0x6f0] sm:$0xff]
        %v1459 = vld [vmem:[%s931 + $0x6f8] sm:$0xff]
        %v1460 = vld [vmem:[%s931 + $0x700] sm:$0xff]
        %v1461 = vld [vmem:[%s931 + $0x708] sm:$0xff]
        %v1462 = vld [vmem:[%s931 + $0x710] sm:$0xff]
        %v1463 = vld [vmem:[%s931 + $0x718] sm:$0xff]
        %v1464 = vld [vmem:[%s931 + $0x720] sm:$0xff]
        %v1465 = vld [vmem:[%s931 + $0x728] sm:$0xff]
        %v1466 = vld [vmem:[%s931 + $0x730] sm:$0xff]
        %v1467 = vld [vmem:[%s931 + $0x738] sm:$0xff]
        %v1468 = vld [vmem:[%s931 + $0x740] sm:$0xff]
        %v1469 = vld [vmem:[%s931 + $0x748] sm:$0xff]
        %v1470 = vld [vmem:[%s931 + $0x750] sm:$0xff]
        %v1471 = vld [vmem:[%s931 + $0x758] sm:$0xff]
        %v1472 = vld [vmem:[%s931 + $0x760] sm:$0xff]
        %v1473 = vld [vmem:[%s931 + $0x768] sm:$0xff]
        %v1474 = vld [vmem:[%s931 + $0x770] sm:$0xff]
        %v1475 = vld [vmem:[%s931 + $0x778] sm:$0xff]
        %v1476 = vld [vmem:[%s931 + $0x780] sm:$0xff]
        %v1477 = vld [vmem:[%s931 + $0x788] sm:$0xff]
        %v1478 = vld [vmem:[%s931 + $0x790] sm:$0xff]
        %v1479 = vld [vmem:[%s931 + $0x798] sm:$0xff]
        %v1480 = vld [vmem:[%s931 + $0x7a0] sm:$0xff]
        %v1481 = vld [vmem:[%s931 + $0x7a8] sm:$0xff]
        %v1482 = vld [vmem:[%s931 + $0x7b0] sm:$0xff]
        %v1483 = vld [vmem:[%s931 + $0x7b8] sm:$0xff]
        %v1484 = vld [vmem:[%s931 + $0x7c0] sm:$0xff]
        %v1485 = vld [vmem:[%s931 + $0x7c8] sm:$0xff]
        %v1486 = vld [vmem:[%s931 + $0x7d0] sm:$0xff]
        %v1487 = vld [vmem:[%s931 + $0x7d8] sm:$0xff]
        %v1488 = vld [vmem:[%s931 + $0x7e0] sm:$0xff]
        %v1489 = vld [vmem:[%s931 + $0x7e8] sm:$0xff]
        %v1490 = vld [vmem:[%s931 + $0x7f0] sm:$0xff]
        %v1491 = vld [vmem:[%s931 + $0x7f8] sm:$0xff]
        %v1492 = vld [vmem:[%s931 + $0x800] sm:$0xff]
        %v1493 = vld [vmem:[%s931 + $0x808] sm:$0xff]
        %v1494 = vld [vmem:[%s931 + $0x810] sm:$0xff]
        %v1495 = vld [vmem:[%s931 + $0x818] sm:$0xff]
        %v1496 = vld [vmem:[%s931 + $0x820] sm:$0xff]
        %v1497 = vld [vmem:[%s931 + $0x828] sm:$0xff]
        %v1498 = vld [vmem:[%s931 + $0x830] sm:$0xff]
        %v1499 = vld [vmem:[%s931 + $0x838] sm:$0xff]
        %v1500 = vld [vmem:[%s931 + $0x840] sm:$0xff]
        %v1501 = vld [vmem:[%s931 + $0x848] sm:$0xff]
        %v1502 = vld [vmem:[%s931 + $0x850] sm:$0xff]
        %v1503 = vld [vmem:[%s931 + $0x858] sm:$0xff]
        %v1504 = vld [vmem:[%s931 + $0x860] sm:$0xff]
        %v1505 = vld [vmem:[%s931 + $0x868] sm:$0xff]
        %v1506 = vld [vmem:[%s931 + $0x870] sm:$0xff]
        %v1507 = vld [vmem:[%s931 + $0x878] sm:$0xff]
        %v1508 = vld [vmem:[%s931 + $0x880] sm:$0xff]
        %v1509 = vld [vmem:[%s931 + $0x888] sm:$0xff]
        %v1510 = vld [vmem:[%s931 + $0x890] sm:$0xff]
        %v1511 = vld [vmem:[%s931 + $0x898] sm:$0xff]
        %v1512 = vld [vmem:[%s931 + $0x8a0] sm:$0xff]
        %v1513 = vld [vmem:[%s931 + $0x8a8] sm:$0xff]
        %v1514 = vld [vmem:[%s931 + $0x8b0] sm:$0xff]
        %v1515 = vld [vmem:[%s931 + $0x8b8] sm:$0xff]
        %v1516 = vld [vmem:[%s931 + $0x8c0] sm:$0xff]
        %v1517 = vld [vmem:[%s931 + $0x8c8] sm:$0xff]
        %v1518 = vld [vmem:[%s931 + $0x8d0] sm:$0xff]
        %v1519 = vld [vmem:[%s931 + $0x8d8] sm:$0xff]
        %v1520 = vld [vmem:[%s931 + $0x8e0] sm:$0xff]
        %v1521 = vld [vmem:[%s931 + $0x8e8] sm:$0xff]
        %v1522 = vld [vmem:[%s931 + $0x8f0] sm:$0xff]
        %v1523 = vld [vmem:[%s931 + $0x8f8] sm:$0xff]
        %v1524 = vld [vmem:[%s931 + $0x900] sm:$0xff]
        %v1525 = vld [vmem:[%s931 + $0x908] sm:$0xff]
        %v1526 = vld [vmem:[%s931 + $0x910] sm:$0xff]
        %v1527 = vld [vmem:[%s931 + $0x918] sm:$0xff]
        %v1528 = vld [vmem:[%s931 + $0x920] sm:$0xff]
        %v1529 = vld [vmem:[%s931 + $0x928] sm:$0xff]
        %v1530 = vld [vmem:[%s931 + $0x930] sm:$0xff]
        %v1531 = vld [vmem:[%s931 + $0x938] sm:$0xff]
        %v1532 = vld [vmem:[%s931 + $0x940] sm:$0xff]
        %v1533 = vld [vmem:[%s931 + $0x948] sm:$0xff]
        %v1534 = vld [vmem:[%s931 + $0x950] sm:$0xff]
        %v1535 = vld [vmem:[%s931 + $0x958] sm:$0xff]
        %v1536 = vld [vmem:[%s931 + $0x960] sm:$0xff]
        %v1537 = vld [vmem:[%s931 + $0x968] sm:$0xff]
        %v1538 = vld [vmem:[%s931 + $0x970] sm:$0xff]
        %v1539 = vld [vmem:[%s931 + $0x978] sm:$0xff]
        %v1540 = vld [vmem:[%s931 + $0x980] sm:$0xff]
        %v1541 = vld [vmem:[%s931 + $0x988] sm:$0xff]
        %v1542 = vld [vmem:[%s931 + $0x990] sm:$0xff]
        %v1543 = vld [vmem:[%s931 + $0x998] sm:$0xff]
        %v1544 = vld [vmem:[%s931 + $0x9a0] sm:$0xff]
        %v1545 = vld [vmem:[%s931 + $0x9a8] sm:$0xff]
        %v1546 = vld [vmem:[%s931 + $0x9b0] sm:$0xff]
        %v1547 = vld [vmem:[%s931 + $0x9b8] sm:$0xff]
        %v1548 = vld [vmem:[%s931 + $0x9c0] sm:$0xff]
        %v1549 = vld [vmem:[%s931 + $0x9c8] sm:$0xff]
        %v1550 = vld [vmem:[%s931 + $0x9d0] sm:$0xff]
        %v1551 = vld [vmem:[%s931 + $0x9d8] sm:$0xff]
        %v1552 = vld [vmem:[%s931 + $0x9e0] sm:$0xff]
        %v1553 = vld [vmem:[%s931 + $0x9e8] sm:$0xff]
        %v1554 = vld [vmem:[%s931 + $0x9f0] sm:$0xff]
        %v1555 = vld [vmem:[%s931 + $0x9f8] sm:$0xff]
        %v1556 = vld [vmem:[%s931 + $0xa00] sm:$0xff]
        %v1557 = vld [vmem:[%s931 + $0xa08] sm:$0xff]
        %v1558 = vld [vmem:[%s931 + $0xa10] sm:$0xff]
        %v1559 = vld [vmem:[%s931 + $0xa18] sm:$0xff]
        %v1560 = vld [vmem:[%s931 + $0xa20] sm:$0xff]
        %v1561 = vld [vmem:[%s931 + $0xa28] sm:$0xff]
        %v1562 = vld [vmem:[%s931 + $0xa30] sm:$0xff]
        %v1563 = vld [vmem:[%s931 + $0xa38] sm:$0xff]
        %v1564 = vld [vmem:[%s931 + $0xa40] sm:$0xff]
        %v1565 = vld [vmem:[%s931 + $0xa48] sm:$0xff]
        %v1566 = vld [vmem:[%s931 + $0xa50] sm:$0xff]
        %v1567 = vld [vmem:[%s931 + $0xa58] sm:$0xff]
        %v1568 = vld [vmem:[%s931 + $0xa60] sm:$0xff]
        %v1569 = vld [vmem:[%s931 + $0xa68] sm:$0xff]
        %v1570 = vld [vmem:[%s931 + $0xa70] sm:$0xff]
        %v1571 = vld [vmem:[%s931 + $0xa78] sm:$0xff]
        %v1572 = vld [vmem:[%s931 + $0xa80] sm:$0xff]
        %v1573 = vld [vmem:[%s931 + $0xa88] sm:$0xff]
        %v1574 = vld [vmem:[%s931 + $0xa90] sm:$0xff]
        %v1575 = vld [vmem:[%s931 + $0xa98] sm:$0xff]
        %v1576 = vld [vmem:[%s931 + $0xaa0] sm:$0xff]
        %v1577 = vld [vmem:[%s931 + $0xaa8] sm:$0xff]
        %v1578 = vld [vmem:[%s931 + $0xab0] sm:$0xff]
        %v1579 = vld [vmem:[%s931 + $0xab8] sm:$0xff]
        %v1580 = vld [vmem:[%s931 + $0xac0] sm:$0xff]
        %v1581 = vld [vmem:[%s931 + $0xac8] sm:$0xff]
        %v1582 = vld [vmem:[%s931 + $0xad0] sm:$0xff]
        %v1583 = vld [vmem:[%s931 + $0xad8] sm:$0xff]
        %v1584 = vld [vmem:[%s931 + $0xae0] sm:$0xff]
        %v1585 = vld [vmem:[%s931 + $0xae8] sm:$0xff]
        %v1586 = vld [vmem:[%s931 + $0xaf0] sm:$0xff]
        %v1587 = vld [vmem:[%s931 + $0xaf8] sm:$0xff]
        %v1588 = vld [vmem:[%s931 + $0xb00] sm:$0xff]
        %v1589 = vld [vmem:[%s931 + $0xb08] sm:$0xff]
        %v1590 = vld [vmem:[%s931 + $0xb10] sm:$0xff]
        %v1591 = vld [vmem:[%s931 + $0xb18] sm:$0xff]
        %v1592 = vld [vmem:[%s931 + $0xb20] sm:$0xff]
        %v1593 = vld [vmem:[%s931 + $0xb28] sm:$0xff]
        %v1594 = vld [vmem:[%s931 + $0xb30] sm:$0xff]
        %v1595 = vld [vmem:[%s931 + $0xb38] sm:$0xff]
        %v1596 = vld [vmem:[%s931 + $0xb40] sm:$0xff]
        %v1597 = vld [vmem:[%s931 + $0xb48] sm:$0xff]
        %v1598 = vld [vmem:[%s931 + $0xb50] sm:$0xff]
        %v1599 = vld [vmem:[%s931 + $0xb58] sm:$0xff]
        %v1600 = vld [vmem:[%s931 + $0xb60] sm:$0xff]
        %v1601 = vld [vmem:[%s931 + $0xb68] sm:$0xff]
        %v1602 = vld [vmem:[%s931 + $0xb70] sm:$0xff]
        %v1603 = vld [vmem:[%s931 + $0xb78] sm:$0xff]
        %v1604 = vld [vmem:[%s931 + $0xb80] sm:$0xff]
        %v1605 = vld [vmem:[%s931 + $0xb88] sm:$0xff]
        %v1606 = vld [vmem:[%s931 + $0xb90] sm:$0xff]
        %v1607 = vld [vmem:[%s931 + $0xb98] sm:$0xff]
        %v1608 = vld [vmem:[%s931 + $0xba0] sm:$0xff]
        %v1609 = vld [vmem:[%s931 + $0xba8] sm:$0xff]
        %v1610 = vld [vmem:[%s931 + $0xbb0] sm:$0xff]
        %v1611 = vld [vmem:[%s931 + $0xbb8] sm:$0xff]
        %v1612 = vld [vmem:[%s931 + $0xbc0] sm:$0xff]
        %v1613 = vld [vmem:[%s931 + $0xbc8] sm:$0xff]
        %v1614 = vld [vmem:[%s931 + $0xbd0] sm:$0xff]
        %v1615 = vld [vmem:[%s931 + $0xbd8] sm:$0xff]
        %v1616 = vld [vmem:[%s931 + $0xbe0] sm:$0xff]
        %v1617 = vld [vmem:[%s931 + $0xbe8] sm:$0xff]
        %v1618 = vld [vmem:[%s931 + $0xbf0] sm:$0xff]
        %v1619 = vld [vmem:[%s931 + $0xbf8] sm:$0xff]
        %v1620 = vld [vmem:[%s931 + $0xc00] sm:$0xff]
        %v1621 = vld [vmem:[%s931 + $0xc08] sm:$0xff]
        %v1622 = vld [vmem:[%s931 + $0xc10] sm:$0xff]
        %v1623 = vld [vmem:[%s931 + $0xc18] sm:$0xff]
        %v1624 = vld [vmem:[%s931 + $0xc20] sm:$0xff]
        %v1625 = vld [vmem:[%s931 + $0xc28] sm:$0xff]
        %v1626 = vld [vmem:[%s931 + $0xc30] sm:$0xff]
        %v1627 = vld [vmem:[%s931 + $0xc38] sm:$0xff]
        %v1628 = vld [vmem:[%s931 + $0xc40] sm:$0xff]
        %v1629 = vld [vmem:[%s931 + $0xc48] sm:$0xff]
        %v1630 = vld [vmem:[%s931 + $0xc50] sm:$0xff]
        %v1631 = vld [vmem:[%s931 + $0xc58] sm:$0xff]
        %v1632 = vld [vmem:[%s931 + $0xc60] sm:$0xff]
        %v1633 = vld [vmem:[%s931 + $0xc68] sm:$0xff]
        %v1634 = vld [vmem:[%s931 + $0xc70] sm:$0xff]
        %v1635 = vld [vmem:[%s931 + $0xc78] sm:$0xff]
        %v1636 = vld [vmem:[%s931 + $0xc80] sm:$0xff]
        %v1637 = vld [vmem:[%s931 + $0xc88] sm:$0xff]
        %v1638 = vld [vmem:[%s931 + $0xc90] sm:$0xff]
        %v1639 = vld [vmem:[%s931 + $0xc98] sm:$0xff]
        %v1640 = vld [vmem:[%s931 + $0xca0] sm:$0xff]
        %v1641 = vld [vmem:[%s931 + $0xca8] sm:$0xff]
        %v1642 = vld [vmem:[%s931 + $0xcb0] sm:$0xff]
        %v1643 = vld [vmem:[%s931 + $0xcb8] sm:$0xff]
        %v1644 = vld [vmem:[%s931 + $0xcc0] sm:$0xff]
        %v1645 = vld [vmem:[%s931 + $0xcc8] sm:$0xff]
        %v1646 = vld [vmem:[%s931 + $0xcd0] sm:$0xff]
        %v1647 = vld [vmem:[%s931 + $0xcd8] sm:$0xff]
        %v1648 = vld [vmem:[%s931 + $0xce0] sm:$0xff]
        %v1649 = vld [vmem:[%s931 + $0xce8] sm:$0xff]
        %v1650 = vld [vmem:[%s931 + $0xcf0] sm:$0xff]
        %v1651 = vld [vmem:[%s931 + $0xcf8] sm:$0xff]
        %v1652 = vld [vmem:[%s931 + $0xd00] sm:$0xff]
        %v1653 = vld [vmem:[%s931 + $0xd08] sm:$0xff]
        %v1654 = vld [vmem:[%s931 + $0xd10] sm:$0xff]
        %v1655 = vld [vmem:[%s931 + $0xd18] sm:$0xff]
        %v1656 = vld [vmem:[%s931 + $0xd20] sm:$0xff]
        %v1657 = vld [vmem:[%s931 + $0xd28] sm:$0xff]
        %v1658 = vld [vmem:[%s931 + $0xd30] sm:$0xff]
        %v1659 = vld [vmem:[%s931 + $0xd38] sm:$0xff]
        %v1660 = vld [vmem:[%s931 + $0xd40] sm:$0xff]
        %v1661 = vld [vmem:[%s931 + $0xd48] sm:$0xff]
        %v1662 = vld [vmem:[%s931 + $0xd50] sm:$0xff]
        %v1663 = vld [vmem:[%s931 + $0xd58] sm:$0xff]
        %v1664 = vld [vmem:[%s931 + $0xd60] sm:$0xff]
        %v1665 = vld [vmem:[%s931 + $0xd68] sm:$0xff]
        %v1666 = vld [vmem:[%s931 + $0xd70] sm:$0xff]
        %v1667 = vld [vmem:[%s931 + $0xd78] sm:$0xff]
        %v1668 = vld [vmem:[%s931 + $0xd80] sm:$0xff]
        %v1669 = vld [vmem:[%s931 + $0xd88] sm:$0xff]
        %v1670 = vld [vmem:[%s931 + $0xd90] sm:$0xff]
        %v1671 = vld [vmem:[%s931 + $0xd98] sm:$0xff]
        %v1672 = vld [vmem:[%s931 + $0xda0] sm:$0xff]
        %v1673 = vld [vmem:[%s931 + $0xda8] sm:$0xff]
        %v1674 = vld [vmem:[%s931 + $0xdb0] sm:$0xff]
        %v1675 = vld [vmem:[%s931 + $0xdb8] sm:$0xff]
        %v1676 = vld [vmem:[%s931 + $0xdc0] sm:$0xff]
        %v1677 = vld [vmem:[%s931 + $0xdc8] sm:$0xff]
        %v1678 = vld [vmem:[%s931 + $0xdd0] sm:$0xff]
        %v1679 = vld [vmem:[%s931 + $0xdd8] sm:$0xff]
        %v1680 = vld [vmem:[%s931 + $0xde0] sm:$0xff]
        %v1681 = vld [vmem:[%s931 + $0xde8] sm:$0xff]
        %v1682 = vld [vmem:[%s931 + $0xdf0] sm:$0xff]
        %v1683 = vld [vmem:[%s931 + $0xdf8] sm:$0xff]
        %v1684 = vld [vmem:[%s931 + $0xe00] sm:$0xff]
        %v1685 = vld [vmem:[%s931 + $0xe08] sm:$0xff]
        %v1686 = vld [vmem:[%s931 + $0xe10] sm:$0xff]
        %v1687 = vld [vmem:[%s931 + $0xe18] sm:$0xff]
        %v1688 = vld [vmem:[%s931 + $0xe20] sm:$0xff]
        %v1689 = vld [vmem:[%s931 + $0xe28] sm:$0xff]
        %v1690 = vld [vmem:[%s931 + $0xe30] sm:$0xff]
        %v1691 = vld [vmem:[%s931 + $0xe38] sm:$0xff]
        %v1692 = vld [vmem:[%s931 + $0xe40] sm:$0xff]
        %v1693 = vld [vmem:[%s931 + $0xe48] sm:$0xff]
        %v1694 = vld [vmem:[%s931 + $0xe50] sm:$0xff]
        %v1695 = vld [vmem:[%s931 + $0xe58] sm:$0xff]
        %v1696 = vld [vmem:[%s931 + $0xe60] sm:$0xff]
        %v1697 = vld [vmem:[%s931 + $0xe68] sm:$0xff]
        %v1698 = vld [vmem:[%s931 + $0xe70] sm:$0xff]
        %v1699 = vld [vmem:[%s931 + $0xe78] sm:$0xff]
        %v1700 = vld [vmem:[%s931 + $0xe80] sm:$0xff]
        %v1701 = vld [vmem:[%s931 + $0xe88] sm:$0xff]
        %v1702 = vld [vmem:[%s931 + $0xe90] sm:$0xff]
        %v1703 = vld [vmem:[%s931 + $0xe98] sm:$0xff]
        %v1704 = vld [vmem:[%s931 + $0xea0] sm:$0xff]
        %v1705 = vld [vmem:[%s931 + $0xea8] sm:$0xff]
        %v1706 = vld [vmem:[%s931 + $0xeb0] sm:$0xff]
        %v1707 = vld [vmem:[%s931 + $0xeb8] sm:$0xff]
        %v1708 = vld [vmem:[%s931 + $0xec0] sm:$0xff]
        %v1709 = vld [vmem:[%s931 + $0xec8] sm:$0xff]
        %v1710 = vld [vmem:[%s931 + $0xed0] sm:$0xff]
        %v1711 = vld [vmem:[%s931 + $0xed8] sm:$0xff]
        %v1712 = vld [vmem:[%s931 + $0xee0] sm:$0xff]
        %v1713 = vld [vmem:[%s931 + $0xee8] sm:$0xff]
        %v1714 = vld [vmem:[%s931 + $0xef0] sm:$0xff]
        %v1715 = vld [vmem:[%s931 + $0xef8] sm:$0xff]
        %v1716 = vld [vmem:[%s931 + $0xf00] sm:$0xff]
        %v1717 = vld [vmem:[%s931 + $0xf08] sm:$0xff]
        %v1718 = vld [vmem:[%s931 + $0xf10] sm:$0xff]
        %v1719 = vld [vmem:[%s931 + $0xf18] sm:$0xff]
        %v1720 = vld [vmem:[%s931 + $0xf20] sm:$0xff]
        %v1721 = vld [vmem:[%s931 + $0xf28] sm:$0xff]
        %v1722 = vld [vmem:[%s931 + $0xf30] sm:$0xff]
        %v1723 = vld [vmem:[%s931 + $0xf38] sm:$0xff]
        %v1724 = vld [vmem:[%s931 + $0xf40] sm:$0xff]
        %v1725 = vld [vmem:[%s931 + $0xf48] sm:$0xff]
        %v1726 = vld [vmem:[%s931 + $0xf50] sm:$0xff]
        %v1727 = vld [vmem:[%s931 + $0xf58] sm:$0xff]
        %v1728 = vld [vmem:[%s931 + $0xf60] sm:$0xff]
        %v1729 = vld [vmem:[%s931 + $0xf68] sm:$0xff]
        %v1730 = vld [vmem:[%s931 + $0xf70] sm:$0xff]
        %v1731 = vld [vmem:[%s931 + $0xf78] sm:$0xff]
        %v1732 = vld [vmem:[%s931 + $0xf80] sm:$0xff]
        %v1733 = vld [vmem:[%s931 + $0xf88] sm:$0xff]
        %v1734 = vld [vmem:[%s931 + $0xf90] sm:$0xff]
        %v1735 = vld [vmem:[%s931 + $0xf98] sm:$0xff]
        %v1736 = vld [vmem:[%s931 + $0xfa0] sm:$0xff]
        %v1737 = vld [vmem:[%s931 + $0xfa8] sm:$0xff]
        %v1738 = vld [vmem:[%s931 + $0xfb0] sm:$0xff]
        %v1739 = vld [vmem:[%s931 + $0xfb8] sm:$0xff]
        %v1740 = vld [vmem:[%s931 + $0xfc0] sm:$0xff]
        %v1741 = vld [vmem:[%s931 + $0xfc8] sm:$0xff]
        %v1742 = vld [vmem:[%s931 + $0xfd0] sm:$0xff]
        %v1743 = vld [vmem:[%s931 + $0xfd8] sm:$0xff]
        %v1744 = vld [vmem:[%s931 + $0xfe0] sm:$0xff]
        %v1745 = vld [vmem:[%s931 + $0xfe8] sm:$0xff]
        %v1746 = vld [vmem:[%s931 + $0xff0] sm:$0xff]
        %v1747 = vld [vmem:[%s931 + $0xff8] sm:$0xff]
        %v1748 = vld [vmem:[%s931 + $0x1000] sm:$0xff]
        %v1749 = vld [vmem:[%s931 + $0x1008] sm:$0xff]
        %v1750 = vld [vmem:[%s931 + $0x1010] sm:$0xff]
        %v1751 = vld [vmem:[%s931 + $0x1018] sm:$0xff]
        %v1752 = vld [vmem:[%s931 + $0x1020] sm:$0xff]
        %v1753 = vld [vmem:[%s931 + $0x1028] sm:$0xff]
        %v1754 = vld [vmem:[%s931 + $0x1030] sm:$0xff]
        %v1755 = vld [vmem:[%s931 + $0x1038] sm:$0xff]
        %v1756 = vld [vmem:[%s931 + $0x1040] sm:$0xff]
        %v1757 = vld [vmem:[%s931 + $0x1048] sm:$0xff]
        %v1758 = vld [vmem:[%s931 + $0x1050] sm:$0xff]
        %v1759 = vld [vmem:[%s931 + $0x1058] sm:$0xff]
        %v1760 = vld [vmem:[%s931 + $0x1060] sm:$0xff]
        %v1761 = vld [vmem:[%s931 + $0x1068] sm:$0xff]
        %v1762 = vld [vmem:[%s931 + $0x1070] sm:$0xff]
        %v1763 = vld [vmem:[%s931 + $0x1078] sm:$0xff]
        %v1764 = vld [vmem:[%s931 + $0x1080] sm:$0xff]
        %v1765 = vld [vmem:[%s931 + $0x1088] sm:$0xff]
        %v1766 = vld [vmem:[%s931 + $0x1090] sm:$0xff]
        %v1767 = vld [vmem:[%s931 + $0x1098] sm:$0xff]
        %v1768 = vld [vmem:[%s931 + $0x10a0] sm:$0xff]
        %v1769 = vld [vmem:[%s931 + $0x10a8] sm:$0xff]
        %v1770 = vld [vmem:[%s931 + $0x10b0] sm:$0xff]
        %v1771 = vld [vmem:[%s931 + $0x10b8] sm:$0xff]
        %v1772 = vld [vmem:[%s931 + $0x10c0] sm:$0xff]
        %v1773 = vld [vmem:[%s931 + $0x10c8] sm:$0xff]
        %v1774 = vld [vmem:[%s931 + $0x10d0] sm:$0xff]
        %v1775 = vld [vmem:[%s931 + $0x10d8] sm:$0xff]
        %v1776 = vld [vmem:[%s931 + $0x10e0] sm:$0xff]
        %v1777 = vld [vmem:[%s931 + $0x10e8] sm:$0xff]
        %v1778 = vld [vmem:[%s931 + $0x10f0] sm:$0xff]
        %v1779 = vld [vmem:[%s931 + $0x10f8] sm:$0xff]
        %v1780 = vld [vmem:[%s931 + $0x1100] sm:$0xff]
        %v1781 = vld [vmem:[%s931 + $0x1108] sm:$0xff]
        %v1782 = vld [vmem:[%s931 + $0x1110] sm:$0xff]
        %v1783 = vld [vmem:[%s931 + $0x1118] sm:$0xff]
        %v1784 = vld [vmem:[%s931 + $0x1120] sm:$0xff]
        %v1785 = vld [vmem:[%s931 + $0x1128] sm:$0xff]
        %v1786 = vld [vmem:[%s931 + $0x1130] sm:$0xff]
        %v1787 = vld [vmem:[%s931 + $0x1138] sm:$0xff]
        %v1788 = vld [vmem:[%s931 + $0x1140] sm:$0xff]
        %v1789 = vld [vmem:[%s931 + $0x1148] sm:$0xff]
        %v1790 = vld [vmem:[%s931 + $0x1150] sm:$0xff]
        %v1791 = vld [vmem:[%s931 + $0x1158] sm:$0xff]
        %v1792 = vld [vmem:[%s931 + $0x1160] sm:$0xff]
        %v1793 = vld [vmem:[%s931 + $0x1168] sm:$0xff]
        %v1794 = vld [vmem:[%s931 + $0x1170] sm:$0xff]
        %v1795 = vld [vmem:[%s931 + $0x1178] sm:$0xff]
        %v1796 = vld [vmem:[%s931 + $0x1180] sm:$0xff]
        %v1797 = vld [vmem:[%s931 + $0x1188] sm:$0xff]
        %v1798 = vld [vmem:[%s931 + $0x1190] sm:$0xff]
        %v1799 = vld [vmem:[%s931 + $0x1198] sm:$0xff]
        %v1800 = vld [vmem:[%s931 + $0x11a0] sm:$0xff]
        %v1801 = vld [vmem:[%s931 + $0x11a8] sm:$0xff]
        %v1802 = vld [vmem:[%s931 + $0x11b0] sm:$0xff]
        %v1803 = vld [vmem:[%s931 + $0x11b8] sm:$0xff]
        %v1804 = vld [vmem:[%s931 + $0x11c0] sm:$0xff]
        %v1805 = vld [vmem:[%s931 + $0x11c8] sm:$0xff]
        %v1806 = vld [vmem:[%s931 + $0x11d0] sm:$0xff]
        %v1807 = vld [vmem:[%s931 + $0x11d8] sm:$0xff]
        %v1808 = vld [vmem:[%s931 + $0x11e0] sm:$0xff]
        %v1809 = vld [vmem:[%s931 + $0x11e8] sm:$0xff]
        %v1810 = vld [vmem:[%s931 + $0x11f0] sm:$0xff]
        %v1811 = vld [vmem:[%s931 + $0x11f8] sm:$0xff]
        %v1812 = vld [vmem:[%s931 + $0x1200] sm:$0xff]
        %v1813 = vld [vmem:[%s931 + $0x1208] sm:$0xff]
        %v1814 = vld [vmem:[%s931 + $0x1210] sm:$0xff]
        %v1815 = vld [vmem:[%s931 + $0x1218] sm:$0xff]
        %v1816 = vld [vmem:[%s931 + $0x1220] sm:$0xff]
        %v1817 = vld [vmem:[%s931 + $0x1228] sm:$0xff]
        %v1818 = vld [vmem:[%s931 + $0x1230] sm:$0xff]
        %v1819 = vld [vmem:[%s931 + $0x1238] sm:$0xff]
        %v1820 = vld [vmem:[%s931 + $0x1240] sm:$0xff]
        %v1821 = vld [vmem:[%s931 + $0x1248] sm:$0xff]
        %v1822 = vld [vmem:[%s931 + $0x1250] sm:$0xff]
        %v1823 = vld [vmem:[%s931 + $0x1258] sm:$0xff]
        %v1824 = vld [vmem:[%s931 + $0x1260] sm:$0xff]
        %v1825 = vld [vmem:[%s931 + $0x1268] sm:$0xff]
        %v1826 = vld [vmem:[%s931 + $0x1270] sm:$0xff]
        %v1827 = vld [vmem:[%s931 + $0x1278] sm:$0xff]
        %v1828 = vld [vmem:[%s931 + $0x1280] sm:$0xff]
        %v1829 = vld [vmem:[%s931 + $0x1288] sm:$0xff]
        %v1830 = vld [vmem:[%s931 + $0x1290] sm:$0xff]
        %v1831 = vld [vmem:[%s931 + $0x1298] sm:$0xff]
        %v1832 = vld [vmem:[%s931 + $0x12a0] sm:$0xff]
        %v1833 = vld [vmem:[%s931 + $0x12a8] sm:$0xff]
        %v1834 = vld [vmem:[%s931 + $0x12b0] sm:$0xff]
        %v1835 = vld [vmem:[%s931 + $0x12b8] sm:$0xff]
        %v1836 = vld [vmem:[%s931 + $0x12c0] sm:$0xff]
        %v1837 = vld [vmem:[%s931 + $0x12c8] sm:$0xff]
        %v1838 = vld [vmem:[%s931 + $0x12d0] sm:$0xff]
        %v1839 = vld [vmem:[%s931 + $0x12d8] sm:$0xff]
        %v1840 = vld [vmem:[%s931 + $0x12e0] sm:$0xff]
        %v1841 = vld [vmem:[%s931 + $0x12e8] sm:$0xff]
        %v1842 = vld [vmem:[%s931 + $0x12f0] sm:$0xff]
        %v1843 = vld [vmem:[%s931 + $0x12f8] sm:$0xff]
        %v1844 = vld [vmem:[%s931 + $0x1300] sm:$0xff]
        %v1845 = vld [vmem:[%s931 + $0x1308] sm:$0xff]
        %v1846 = vld [vmem:[%s931 + $0x1310] sm:$0xff]
        %v1847 = vld [vmem:[%s931 + $0x1318] sm:$0xff]
        %v1848 = vld [vmem:[%s931 + $0x1320] sm:$0xff]
        %v1849 = vld [vmem:[%s931 + $0x1328] sm:$0xff]
        %v1850 = vld [vmem:[%s931 + $0x1330] sm:$0xff]
        %v1851 = vld [vmem:[%s931 + $0x1338] sm:$0xff]
        %v1852 = vld [vmem:[%s931 + $0x1340] sm:$0xff]
        %v1853 = vld [vmem:[%s931 + $0x1348] sm:$0xff]
        %v1854 = vld [vmem:[%s931 + $0x1350] sm:$0xff]
        %v1855 = vld [vmem:[%s931 + $0x1358] sm:$0xff]
        %v1856 = vld [vmem:[%s931 + $0x1360] sm:$0xff]
        %v1857 = vld [vmem:[%s931 + $0x1368] sm:$0xff]
        %v1858 = vld [vmem:[%s931 + $0x1370] sm:$0xff]
        %v1859 = vld [vmem:[%s931 + $0x1378] sm:$0xff]
        %v1860 = vld [vmem:[%s931 + $0x1380] sm:$0xff]
        %v1861 = vld [vmem:[%s931 + $0x1388] sm:$0xff]
        %v1862 = vld [vmem:[%s931 + $0x1390] sm:$0xff]
        %v1863 = vld [vmem:[%s931 + $0x1398] sm:$0xff]
        %v1864 = vld [vmem:[%s931 + $0x13a0] sm:$0xff]
        %v1865 = vld [vmem:[%s931 + $0x13a8] sm:$0xff]
        %v1866 = vld [vmem:[%s931 + $0x13b0] sm:$0xff]
        %v1867 = vld [vmem:[%s931 + $0x13b8] sm:$0xff]
        %v1868 = vld [vmem:[%s931 + $0x13c0] sm:$0xff]
        %v1869 = vld [vmem:[%s931 + $0x13c8] sm:$0xff]
        %v1870 = vld [vmem:[%s931 + $0x13d0] sm:$0xff]
        %v1871 = vld [vmem:[%s931 + $0x13d8] sm:$0xff]
        %v1872 = vld [vmem:[%s931 + $0x13e0] sm:$0xff]
        %v1873 = vld [vmem:[%s931 + $0x13e8] sm:$0xff]
        %v1874 = vld [vmem:[%s931 + $0x13f0] sm:$0xff]
        %v1875 = vld [vmem:[%s931 + $0x13f8] sm:$0xff]
        %v1876 = vld [vmem:[%s931 + $0x1400] sm:$0xff]
        %v1877 = vld [vmem:[%s931 + $0x1408] sm:$0xff]
        %v1878 = vld [vmem:[%s931 + $0x1410] sm:$0xff]
        %v1879 = vld [vmem:[%s931 + $0x1418] sm:$0xff]
        %v1880 = vld [vmem:[%s931 + $0x1420] sm:$0xff]
        %v1881 = vld [vmem:[%s931 + $0x1428] sm:$0xff]
        %v1882 = vld [vmem:[%s931 + $0x1430] sm:$0xff]
        %v1883 = vld [vmem:[%s931 + $0x1438] sm:$0xff]
        %v1884 = vld [vmem:[%s931 + $0x1440] sm:$0xff]
        %v1885 = vld [vmem:[%s931 + $0x1448] sm:$0xff]
        %v1886 = vld [vmem:[%s931 + $0x1450] sm:$0xff]
        %v1887 = vld [vmem:[%s931 + $0x1458] sm:$0xff]
        %v1888 = vld [vmem:[%s931 + $0x1460] sm:$0xff]
        %v1889 = vld [vmem:[%s931 + $0x1468] sm:$0xff]
        %v1890 = vld [vmem:[%s931 + $0x1470] sm:$0xff]
        %v1891 = vld [vmem:[%s931 + $0x1478] sm:$0xff]
        %v1892 = vld [vmem:[%s931 + $0x1480] sm:$0xff]
        %v1893 = vld [vmem:[%s931 + $0x1488] sm:$0xff]
        %v1894 = vld [vmem:[%s931 + $0x1490] sm:$0xff]
        %v1895 = vld [vmem:[%s931 + $0x1498] sm:$0xff]
        %v1896 = vld [vmem:[%s931 + $0x14a0] sm:$0xff]
        %v1897 = vld [vmem:[%s931 + $0x14a8] sm:$0xff]
        %v1898 = vld [vmem:[%s931 + $0x14b0] sm:$0xff]
        %v1899 = vld [vmem:[%s931 + $0x14b8] sm:$0xff]
        %v1900 = vld [vmem:[%s931 + $0x14c0] sm:$0xff]
        %v1901 = vld [vmem:[%s931 + $0x14c8] sm:$0xff]
        %v1902 = vld [vmem:[%s931 + $0x14d0] sm:$0xff]
        %v1903 = vld [vmem:[%s931 + $0x14d8] sm:$0xff]
        %v1904 = vld [vmem:[%s931 + $0x14e0] sm:$0xff]
        %v1905 = vld [vmem:[%s931 + $0x14e8] sm:$0xff]
        %v1906 = vld [vmem:[%s931 + $0x14f0] sm:$0xff]
        %v1907 = vld [vmem:[%s931 + $0x14f8] sm:$0xff]
        %v1908 = vld [vmem:[%s931 + $0x1500] sm:$0xff]
        %v1909 = vld [vmem:[%s931 + $0x1508] sm:$0xff]
        %v1910 = vld [vmem:[%s931 + $0x1510] sm:$0xff]
        %v1911 = vld [vmem:[%s931 + $0x1518] sm:$0xff]
        %v1912 = vld [vmem:[%s931 + $0x1520] sm:$0xff]
        %v1913 = vld [vmem:[%s931 + $0x1528] sm:$0xff]
        %v1914 = vld [vmem:[%s931 + $0x1530] sm:$0xff]
        %v1915 = vld [vmem:[%s931 + $0x1538] sm:$0xff]
        %v1916 = vld [vmem:[%s931 + $0x1540] sm:$0xff]
        %v1917 = vld [vmem:[%s931 + $0x1548] sm:$0xff]
        %v1918 = vld [vmem:[%s931 + $0x1550] sm:$0xff]
        %v1919 = vld [vmem:[%s931 + $0x1558] sm:$0xff]
        %v1920 = vld [vmem:[%s931 + $0x1560] sm:$0xff]
        %v1921 = vld [vmem:[%s931 + $0x1568] sm:$0xff]
        %v1922 = vld [vmem:[%s931 + $0x1570] sm:$0xff]
        %v1923 = vld [vmem:[%s931 + $0x1578] sm:$0xff]
        %v1924 = vld [vmem:[%s931 + $0x1580] sm:$0xff]
        %v1925 = vld [vmem:[%s931 + $0x1588] sm:$0xff]
        %v1926 = vld [vmem:[%s931 + $0x1590] sm:$0xff]
        %v1927 = vld [vmem:[%s931 + $0x1598] sm:$0xff]
        %v1928 = vld [vmem:[%s931 + $0x15a0] sm:$0xff]
        %v1929 = vld [vmem:[%s931 + $0x15a8] sm:$0xff]
        %v1930 = vld [vmem:[%s931 + $0x15b0] sm:$0xff]
        %v1931 = vld [vmem:[%s931 + $0x15b8] sm:$0xff]
        %v1932 = vld [vmem:[%s931 + $0x15c0] sm:$0xff]
        %v1933 = vld [vmem:[%s931 + $0x15c8] sm:$0xff]
        %v1934 = vld [vmem:[%s931 + $0x15d0] sm:$0xff]
        %v1935 = vld [vmem:[%s931 + $0x15d8] sm:$0xff]
        %v1936 = vld [vmem:[%s931 + $0x15e0] sm:$0xff]
        %v1937 = vld [vmem:[%s931 + $0x15e8] sm:$0xff]
        %v1938 = vld [vmem:[%s931 + $0x15f0] sm:$0xff]
        %v1939 = vld [vmem:[%s931 + $0x15f8] sm:$0xff]
        %v1940 = vld [vmem:[%s931 + $0x1600] sm:$0xff]
        %v1941 = vld [vmem:[%s931 + $0x1608] sm:$0xff]
        %v1942 = vld [vmem:[%s931 + $0x1610] sm:$0xff]
        %v1943 = vld [vmem:[%s931 + $0x1618] sm:$0xff]
        %v1944 = vld [vmem:[%s931 + $0x1620] sm:$0xff]
        %v1945 = vld [vmem:[%s931 + $0x1628] sm:$0xff]
        %v1946 = vld [vmem:[%s931 + $0x1630] sm:$0xff]
        %v1947 = vld [vmem:[%s931 + $0x1638] sm:$0xff]
        %v1948 = vld [vmem:[%s931 + $0x1640] sm:$0xff]
        %v1949 = vld [vmem:[%s931 + $0x1648] sm:$0xff]
        %v1950 = vld [vmem:[%s931 + $0x1650] sm:$0xff]
        %v1951 = vld [vmem:[%s931 + $0x1658] sm:$0xff]
        %v1952 = vld [vmem:[%s931 + $0x1660] sm:$0xff]
        %v1953 = vld [vmem:[%s931 + $0x1668] sm:$0xff]
        %v1954 = vld [vmem:[%s931 + $0x1670] sm:$0xff]
        %v1955 = vld [vmem:[%s931 + $0x1678] sm:$0xff]
        %v1956 = vld [vmem:[%s931 + $0x1680] sm:$0xff]
        %v1957 = vld [vmem:[%s931 + $0x1688] sm:$0xff]
        %v1958 = vld [vmem:[%s931 + $0x1690] sm:$0xff]
        %v1959 = vld [vmem:[%s931 + $0x1698] sm:$0xff]
        %v1960 = vld [vmem:[%s931 + $0x16a0] sm:$0xff]
        %v1961 = vld [vmem:[%s931 + $0x16a8] sm:$0xff]
        %v1962 = vld [vmem:[%s931 + $0x16b0] sm:$0xff]
        %v1963 = vld [vmem:[%s931 + $0x16b8] sm:$0xff]
        %v1964 = vld [vmem:[%s931 + $0x16c0] sm:$0xff]
        %v1965 = vld [vmem:[%s931 + $0x16c8] sm:$0xff]
        %v1966 = vld [vmem:[%s931 + $0x16d0] sm:$0xff]
        %v1967 = vld [vmem:[%s931 + $0x16d8] sm:$0xff]
        %v1968 = vld [vmem:[%s931 + $0x16e0] sm:$0xff]
        %v1969 = vld [vmem:[%s931 + $0x16e8] sm:$0xff]
        %v1970 = vld [vmem:[%s931 + $0x16f0] sm:$0xff]
        %v1971 = vld [vmem:[%s931 + $0x16f8] sm:$0xff]
        %v1972 = vld [vmem:[%s931 + $0x1700] sm:$0xff]
        %v1973 = vld [vmem:[%s931 + $0x1708] sm:$0xff]
        %v1974 = vld [vmem:[%s931 + $0x1710] sm:$0xff]
        %v1975 = vld [vmem:[%s931 + $0x1718] sm:$0xff]
        %v1976 = vld [vmem:[%s931 + $0x1720] sm:$0xff]
        %v1977 = vld [vmem:[%s931 + $0x1728] sm:$0xff]
        %v1978 = vld [vmem:[%s931 + $0x1730] sm:$0xff]
        %v1979 = vld [vmem:[%s931 + $0x1738] sm:$0xff]
        %v1980 = vld [vmem:[%s931 + $0x1740] sm:$0xff]
        %v1981 = vld [vmem:[%s931 + $0x1748] sm:$0xff]
        %v1982 = vld [vmem:[%s931 + $0x1750] sm:$0xff]
        %v1983 = vld [vmem:[%s931 + $0x1758] sm:$0xff]
        %v1984 = vld [vmem:[%s931 + $0x1760] sm:$0xff]
        %v1985 = vld [vmem:[%s931 + $0x1768] sm:$0xff]
        %v1986 = vld [vmem:[%s931 + $0x1770] sm:$0xff]
        %v1987 = vld [vmem:[%s931 + $0x1778] sm:$0xff]
        %v1988 = vld [vmem:[%s931 + $0x1780] sm:$0xff]
        %v1989 = vld [vmem:[%s931 + $0x1788] sm:$0xff]
        %v1990 = vld [vmem:[%s931 + $0x1790] sm:$0xff]
        %v1991 = vld [vmem:[%s931 + $0x1798] sm:$0xff]
        %v1992 = vld [vmem:[%s931 + $0x17a0] sm:$0xff]
        %v1993 = vld [vmem:[%s931 + $0x17a8] sm:$0xff]
        %v1994 = vld [vmem:[%s931 + $0x17b0] sm:$0xff]
        %v1995 = vld [vmem:[%s931 + $0x17b8] sm:$0xff]
        %v1996 = vld [vmem:[%s931 + $0x17c0] sm:$0xff]
        %v1997 = vld [vmem:[%s931 + $0x17c8] sm:$0xff]
        %v1998 = vld [vmem:[%s931 + $0x17d0] sm:$0xff]
        %v1999 = vld [vmem:[%s931 + $0x17d8] sm:$0xff]
        %v2000 = vld [vmem:[%s931 + $0x17e0] sm:$0xff]
        %v2001 = vld [vmem:[%s931 + $0x17e8] sm:$0xff]
        %v2002 = vld [vmem:[%s931 + $0x17f0] sm:$0xff]
        %v2003 = vld [vmem:[%s931 + $0x17f8] sm:$0xff]
        %v2004 = vld [vmem:[%s931 + $0x1800] sm:$0xff]
        %v2005 = vld [vmem:[%s931 + $0x1808] sm:$0xff]
        %v2006 = vld [vmem:[%s931 + $0x1810] sm:$0xff]
        %v2007 = vld [vmem:[%s931 + $0x1818] sm:$0xff]
        %v2008 = vld [vmem:[%s931 + $0x1820] sm:$0xff]
        %v2009 = vld [vmem:[%s931 + $0x1828] sm:$0xff]
        %v2010 = vld [vmem:[%s931 + $0x1830] sm:$0xff]
        %v2011 = vld [vmem:[%s931 + $0x1838] sm:$0xff]
        %v2012 = vld [vmem:[%s931 + $0x1840] sm:$0xff]
        %v2013 = vld [vmem:[%s931 + $0x1848] sm:$0xff]
        %v2014 = vld [vmem:[%s931 + $0x1850] sm:$0xff]
        %v2015 = vld [vmem:[%s931 + $0x1858] sm:$0xff]
        %v2016 = vld [vmem:[%s931 + $0x1860] sm:$0xff]
        %v2017 = vld [vmem:[%s931 + $0x1868] sm:$0xff]
        %v2018 = vld [vmem:[%s931 + $0x1870] sm:$0xff]
        %v2019 = vld [vmem:[%s931 + $0x1878] sm:$0xff]
        %v2020 = vld [vmem:[%s931 + $0x1880] sm:$0xff]
        %v2021 = vld [vmem:[%s931 + $0x1888] sm:$0xff]
        %v2022 = vld [vmem:[%s931 + $0x1890] sm:$0xff]
        %v2023 = vld [vmem:[%s931 + $0x1898] sm:$0xff]
        %v2024 = vld [vmem:[%s931 + $0x18a0] sm:$0xff]
        %v2025 = vld [vmem:[%s931 + $0x18a8] sm:$0xff]
        %v2026 = vld [vmem:[%s931 + $0x18b0] sm:$0xff]
        %v2027 = vld [vmem:[%s931 + $0x18b8] sm:$0xff]
        %v2028 = vld [vmem:[%s931 + $0x18c0] sm:$0xff]
        %v2029 = vld [vmem:[%s931 + $0x18c8] sm:$0xff]
        %v2030 = vld [vmem:[%s931 + $0x18d0] sm:$0xff]
        %v2031 = vld [vmem:[%s931 + $0x18d8] sm:$0xff]
        %v2032 = vld [vmem:[%s931 + $0x18e0] sm:$0xff]
        %v2033 = vld [vmem:[%s931 + $0x18e8] sm:$0xff]
        %v2034 = vld [vmem:[%s931 + $0x18f0] sm:$0xff]
        %v2035 = vld [vmem:[%s931 + $0x18f8] sm:$0xff]
        %v2036 = vld [vmem:[%s931 + $0x1900] sm:$0xff]
        %v2037 = vld [vmem:[%s931 + $0x1908] sm:$0xff]
        %v2038 = vld [vmem:[%s931 + $0x1910] sm:$0xff]
        %v2039 = vld [vmem:[%s931 + $0x1918] sm:$0xff]
        %v2040 = vld [vmem:[%s931 + $0x1920] sm:$0xff]
        %v2041 = vld [vmem:[%s931 + $0x1928] sm:$0xff]
        %v2042 = vld [vmem:[%s931 + $0x1930] sm:$0xff]
        %v2043 = vld [vmem:[%s931 + $0x1938] sm:$0xff]
        %v2044 = vld [vmem:[%s931 + $0x1940] sm:$0xff]
        %v2045 = vld [vmem:[%s931 + $0x1948] sm:$0xff]
        %v2046 = vld [vmem:[%s931 + $0x1950] sm:$0xff]
        %v2047 = vld [vmem:[%s931 + $0x1958] sm:$0xff]
        %v2048 = vld [vmem:[%s931 + $0x1960] sm:$0xff]
        %v2049 = vld [vmem:[%s931 + $0x1968] sm:$0xff]
        %v2050 = vld [vmem:[%s931 + $0x1970] sm:$0xff]
        %v2051 = vld [vmem:[%s931 + $0x1978] sm:$0xff]
        %v2052 = vld [vmem:[%s931 + $0x1980] sm:$0xff]
        %v2053 = vld [vmem:[%s931 + $0x1988] sm:$0xff]
        %v2054 = vld [vmem:[%s931 + $0x1990] sm:$0xff]
        %v2055 = vld [vmem:[%s931 + $0x1998] sm:$0xff]
        %v2056 = vld [vmem:[%s931 + $0x19a0] sm:$0xff]
        %v2057 = vld [vmem:[%s931 + $0x19a8] sm:$0xff]
        %v2058 = vld [vmem:[%s931 + $0x19b0] sm:$0xff]
        %v2059 = vld [vmem:[%s931 + $0x19b8] sm:$0xff]
        %v2060 = vld [vmem:[%s931 + $0x19c0] sm:$0xff]
        %v2061 = vld [vmem:[%s931 + $0x19c8] sm:$0xff]
        %v2062 = vld [vmem:[%s931 + $0x19d0] sm:$0xff]
        %v2063 = vld [vmem:[%s931 + $0x19d8] sm:$0xff]
        %v2064 = vld [vmem:[%s931 + $0x19e0] sm:$0xff]
        %v2065 = vld [vmem:[%s931 + $0x19e8] sm:$0xff]
        %v2066 = vld [vmem:[%s931 + $0x19f0] sm:$0xff]
        %v2067 = vld [vmem:[%s931 + $0x19f8] sm:$0xff]
        %v2068 = vld [vmem:[%s931 + $0x1a00] sm:$0xff]
        %v2069 = vld [vmem:[%s931 + $0x1a08] sm:$0xff]
        %v2070 = vld [vmem:[%s931 + $0x1a10] sm:$0xff]
        %v2071 = vld [vmem:[%s931 + $0x1a18] sm:$0xff]
        %v2072 = vld [vmem:[%s931 + $0x1a20] sm:$0xff]
        %v2073 = vld [vmem:[%s931 + $0x1a28] sm:$0xff]
        %v2074 = vld [vmem:[%s931 + $0x1a30] sm:$0xff]
        %v2075 = vld [vmem:[%s931 + $0x1a38] sm:$0xff]
        %v2076 = vld [vmem:[%s931 + $0x1a40] sm:$0xff]
        %v2077 = vld [vmem:[%s931 + $0x1a48] sm:$0xff]
        %v2078 = vld [vmem:[%s931 + $0x1a50] sm:$0xff]
        %v2079 = vld [vmem:[%s931 + $0x1a58] sm:$0xff]
        %v2080 = vld [vmem:[%s931 + $0x1a60] sm:$0xff]
        %v2081 = vld [vmem:[%s931 + $0x1a68] sm:$0xff]
        %v2082 = vld [vmem:[%s931 + $0x1a70] sm:$0xff]
        %v2083 = vld [vmem:[%s931 + $0x1a78] sm:$0xff]
        %v2084 = vld [vmem:[%s931 + $0x1a80] sm:$0xff]
        %v2085 = vld [vmem:[%s931 + $0x1a88] sm:$0xff]
        %v2086 = vld [vmem:[%s931 + $0x1a90] sm:$0xff]
        %v2087 = vld [vmem:[%s931 + $0x1a98] sm:$0xff]
        %v2088 = vld [vmem:[%s931 + $0x1aa0] sm:$0xff]
        %v2089 = vld [vmem:[%s931 + $0x1aa8] sm:$0xff]
        %v2090 = vld [vmem:[%s931 + $0x1ab0] sm:$0xff]
        %v2091 = vld [vmem:[%s931 + $0x1ab8] sm:$0xff]
        %v2092 = vld [vmem:[%s931 + $0x1ac0] sm:$0xff]
        %v2093 = vld [vmem:[%s931 + $0x1ac8] sm:$0xff]
        %v2094 = vld [vmem:[%s931 + $0x1ad0] sm:$0xff]
        %v2095 = vld [vmem:[%s931 + $0x1ad8] sm:$0xff]
        %v2096 = vld [vmem:[%s931 + $0x1ae0] sm:$0xff]
        %v2097 = vld [vmem:[%s931 + $0x1ae8] sm:$0xff]
        %v2098 = vld [vmem:[%s931 + $0x1af0] sm:$0xff]
        %v2099 = vld [vmem:[%s931 + $0x1af8] sm:$0xff]
        %v2100 = vld [vmem:[%s940] sm:$0xff]
        %v2101 = vld [vmem:[%s940 + $0x8] sm:$0xff]
        %v2102 = vld [vmem:[%s940 + $0x10] sm:$0x3]
        %v2106 = vlaneseq
        %v2107 = vshrl.u32 %v2106, 7
        %v2108 = vsub.s32 0, %v2107
        %v2109 = vrot.slane %v2100, %v2108
        %v2110 = vlaneseq
        %v2111 = vshrl.u32 %v2110, 7
        %v2112 = vsub.s32 1, %v2111
        %v2113 = vrot.slane %v2100, %v2112
        %v2114 = vlaneseq
        %v2115 = vshrl.u32 %v2114, 7
        %v2116 = vsub.s32 2, %v2115
        %v2117 = vrot.slane %v2100, %v2116
        %v2118 = vlaneseq
        %v2119 = vshrl.u32 %v2118, 7
        %v2120 = vsub.s32 3, %v2119
        %v2121 = vrot.slane %v2100, %v2120
        %v2122 = vlaneseq
        %v2123 = vshrl.u32 %v2122, 7
        %v2124 = vsub.s32 4, %v2123
        %v2125 = vrot.slane %v2100, %v2124
        %v2126 = vlaneseq
        %v2127 = vshrl.u32 %v2126, 7
        %v2128 = vsub.s32 5, %v2127
        %v2129 = vrot.slane %v2100, %v2128
        %v2130 = vlaneseq
        %v2131 = vshrl.u32 %v2130, 7
        %v2132 = vsub.s32 6, %v2131
        %v2133 = vrot.slane %v2100, %v2132
        %v2134 = vlaneseq
        %v2135 = vshrl.u32 %v2134, 7
        %v2136 = vsub.s32 7, %v2135
        %v2137 = vrot.slane %v2100, %v2136
        %v2138 = vlaneseq
        %v2139 = vshrl.u32 %v2138, 7
        %v2140 = vsub.s32 0, %v2139
        %v2141 = vrot.slane %v2101, %v2140
        %v2142 = vlaneseq
        %v2143 = vshrl.u32 %v2142, 7
        %v2144 = vsub.s32 1, %v2143
        %v2145 = vrot.slane %v2101, %v2144
        %v2146 = vlaneseq
        %v2147 = vshrl.u32 %v2146, 7
        %v2148 = vsub.s32 2, %v2147
        %v2149 = vrot.slane %v2101, %v2148
        %v2150 = vlaneseq
        %v2151 = vshrl.u32 %v2150, 7
        %v2152 = vsub.s32 3, %v2151
        %v2153 = vrot.slane %v2101, %v2152
        %v2154 = vlaneseq
        %v2155 = vshrl.u32 %v2154, 7
        %v2156 = vsub.s32 4, %v2155
        %v2157 = vrot.slane %v2101, %v2156
        %v2158 = vlaneseq
        %v2159 = vshrl.u32 %v2158, 7
        %v2160 = vsub.s32 5, %v2159
        %v2161 = vrot.slane %v2101, %v2160
        %v2162 = vlaneseq
        %v2163 = vshrl.u32 %v2162, 7
        %v2164 = vsub.s32 6, %v2163
        %v2165 = vrot.slane %v2101, %v2164
        %v2166 = vlaneseq
        %v2167 = vshrl.u32 %v2166, 7
        %v2168 = vsub.s32 7, %v2167
        %v2169 = vrot.slane %v2101, %v2168
        %v2170 = vlaneseq
        %v2171 = vshrl.u32 %v2170, 7
        %v2172 = vsub.s32 0, %v2171
        %v2173 = vrot.slane %v2102, %v2172
        %v2174 = vlaneseq
        %v2175 = vshrl.u32 %v2174, 7
        %v2176 = vsub.s32 1, %v2175
        %v2177 = vrot.slane %v2102, %v2176
        %v3060 = vunpack.c.l.b16 %v1236
        %v3061 = vunpack.c.h.b16 %v1236
        %v3062 = vunpack.c.l.b16 %v1237
        %v3063 = vunpack.c.h.b16 %v1237
        %v3064 = vunpack.c.l.b16 %v1238
        %v3065 = vunpack.c.h.b16 %v1238
        %v3066 = vunpack.c.l.b16 %v1239
        %v3067 = vunpack.c.h.b16 %v1239
        %v3068 = vunpack.c.l.b16 %v1240
        %v3069 = vunpack.c.h.b16 %v1240
        %v3070 = vunpack.c.l.b16 %v1241
        %v3071 = vunpack.c.h.b16 %v1241
        %v3072 = vunpack.c.l.b16 %v1242
        %v3073 = vunpack.c.h.b16 %v1242
        %v3074 = vunpack.c.l.b16 %v1243
        %v3075 = vunpack.c.h.b16 %v1243
        %v3076 = vunpack.c.l.b16 %v1244
        %v3077 = vunpack.c.h.b16 %v1244
        %v3078 = vunpack.c.l.b16 %v1245
        %v3079 = vunpack.c.h.b16 %v1245
        %v3080 = vunpack.c.l.b16 %v1246
        %v3081 = vunpack.c.h.b16 %v1246
        %v3082 = vunpack.c.l.b16 %v1247
        %v3083 = vunpack.c.h.b16 %v1247
        %v3084 = vunpack.c.l.b16 %v1248
        %v3085 = vunpack.c.h.b16 %v1248
        %v3086 = vunpack.c.l.b16 %v1249
        %v3087 = vunpack.c.h.b16 %v1249
        %v3088 = vunpack.c.l.b16 %v1250
        %v3089 = vunpack.c.h.b16 %v1250
        %v3090 = vunpack.c.l.b16 %v1251
        %v3091 = vunpack.c.h.b16 %v1251
        %v3092 = vunpack.c.l.b16 %v1252
        %v3093 = vunpack.c.h.b16 %v1252
        %v3094 = vunpack.c.l.b16 %v1253
        %v3095 = vunpack.c.h.b16 %v1253
        %v3096 = vunpack.c.l.b16 %v1254
        %v3097 = vunpack.c.h.b16 %v1254
        %v3098 = vunpack.c.l.b16 %v1255
        %v3099 = vunpack.c.h.b16 %v1255
        %v3100 = vunpack.c.l.b16 %v1256
        %v3101 = vunpack.c.h.b16 %v1256
        %v3102 = vunpack.c.l.b16 %v1257
        %v3103 = vunpack.c.h.b16 %v1257
        %v3104 = vunpack.c.l.b16 %v1258
        %v3105 = vunpack.c.h.b16 %v1258
        %v3106 = vunpack.c.l.b16 %v1259
        %v3107 = vunpack.c.h.b16 %v1259
        %v3108 = vunpack.c.l.b16 %v1260
        %v3109 = vunpack.c.h.b16 %v1260
        %v3110 = vunpack.c.l.b16 %v1261
        %v3111 = vunpack.c.h.b16 %v1261
        %v3112 = vunpack.c.l.b16 %v1262
        %v3113 = vunpack.c.h.b16 %v1262
        %v3114 = vunpack.c.l.b16 %v1263
        %v3115 = vunpack.c.h.b16 %v1263
        %v3116 = vunpack.c.l.b16 %v1264
        %v3117 = vunpack.c.h.b16 %v1264
        %v3118 = vunpack.c.l.b16 %v1265
        %v3119 = vunpack.c.h.b16 %v1265
        %v3120 = vunpack.c.l.b16 %v1266
        %v3121 = vunpack.c.h.b16 %v1266
        %v3122 = vunpack.c.l.b16 %v1267
        %v3123 = vunpack.c.h.b16 %v1267
        %v3124 = vunpack.c.l.b16 %v1268
        %v3125 = vunpack.c.h.b16 %v1268
        %v3126 = vunpack.c.l.b16 %v1269
        %v3127 = vunpack.c.h.b16 %v1269
        %v3128 = vunpack.c.l.b16 %v1270
        %v3129 = vunpack.c.h.b16 %v1270
        %v3130 = vunpack.c.l.b16 %v1271
        %v3131 = vunpack.c.h.b16 %v1271
        %v3132 = vunpack.c.l.b16 %v1272
        %v3133 = vunpack.c.h.b16 %v1272
        %v3134 = vunpack.c.l.b16 %v1273
        %v3135 = vunpack.c.h.b16 %v1273
        %v3136 = vunpack.c.l.b16 %v1274
        %v3137 = vunpack.c.h.b16 %v1274
        %v3138 = vunpack.c.l.b16 %v1275
        %v3139 = vunpack.c.h.b16 %v1275
        %v3140 = vunpack.c.l.b16 %v1276
        %v3141 = vunpack.c.h.b16 %v1276
        %v3142 = vunpack.c.l.b16 %v1277
        %v3143 = vunpack.c.h.b16 %v1277
        %v3144 = vunpack.c.l.b16 %v1278
        %v3145 = vunpack.c.h.b16 %v1278
        %v3146 = vunpack.c.l.b16 %v1279
        %v3147 = vunpack.c.h.b16 %v1279
        %v3148 = vunpack.c.l.b16 %v1280
        %v3149 = vunpack.c.h.b16 %v1280
        %v3150 = vunpack.c.l.b16 %v1281
        %v3151 = vunpack.c.h.b16 %v1281
        %v3152 = vunpack.c.l.b16 %v1282
        %v3153 = vunpack.c.h.b16 %v1282
        %v3154 = vunpack.c.l.b16 %v1283
        %v3155 = vunpack.c.h.b16 %v1283
        %v3156 = vunpack.c.l.b16 %v1284
        %v3157 = vunpack.c.h.b16 %v1284
        %v3158 = vunpack.c.l.b16 %v1285
        %v3159 = vunpack.c.h.b16 %v1285
        %v3160 = vunpack.c.l.b16 %v1286
        %v3161 = vunpack.c.h.b16 %v1286
        %v3162 = vunpack.c.l.b16 %v1287
        %v3163 = vunpack.c.h.b16 %v1287
        %v3164 = vunpack.c.l.b16 %v1288
        %v3165 = vunpack.c.h.b16 %v1288
        %v3166 = vunpack.c.l.b16 %v1289
        %v3167 = vunpack.c.h.b16 %v1289
        %v3168 = vunpack.c.l.b16 %v1290
        %v3169 = vunpack.c.h.b16 %v1290
        %v3170 = vunpack.c.l.b16 %v1291
        %v3171 = vunpack.c.h.b16 %v1291
        %v3172 = vunpack.c.l.b16 %v1292
        %v3173 = vunpack.c.h.b16 %v1292
        %v3174 = vunpack.c.l.b16 %v1293
        %v3175 = vunpack.c.h.b16 %v1293
        %v3176 = vunpack.c.l.b16 %v1294
        %v3177 = vunpack.c.h.b16 %v1294
        %v3178 = vunpack.c.l.b16 %v1295
        %v3179 = vunpack.c.h.b16 %v1295
        %v3180 = vunpack.c.l.b16 %v1296
        %v3181 = vunpack.c.h.b16 %v1296
        %v3182 = vunpack.c.l.b16 %v1297
        %v3183 = vunpack.c.h.b16 %v1297
        %v3184 = vunpack.c.l.b16 %v1298
        %v3185 = vunpack.c.h.b16 %v1298
        %v3186 = vunpack.c.l.b16 %v1299
        %v3187 = vunpack.c.h.b16 %v1299
        %v3188 = vunpack.c.l.b16 %v1300
        %v3189 = vunpack.c.h.b16 %v1300
        %v3190 = vunpack.c.l.b16 %v1301
        %v3191 = vunpack.c.h.b16 %v1301
        %v3192 = vunpack.c.l.b16 %v1302
        %v3193 = vunpack.c.h.b16 %v1302
        %v3194 = vunpack.c.l.b16 %v1303
        %v3195 = vunpack.c.h.b16 %v1303
        %v3196 = vunpack.c.l.b16 %v1304
        %v3197 = vunpack.c.h.b16 %v1304
        %v3198 = vunpack.c.l.b16 %v1305
        %v3199 = vunpack.c.h.b16 %v1305
        %v3200 = vunpack.c.l.b16 %v1306
        %v3201 = vunpack.c.h.b16 %v1306
        %v3202 = vunpack.c.l.b16 %v1307
        %v3203 = vunpack.c.h.b16 %v1307
        %v3204 = vunpack.c.l.b16 %v1308
        %v3205 = vunpack.c.h.b16 %v1308
        %v3206 = vunpack.c.l.b16 %v1309
        %v3207 = vunpack.c.h.b16 %v1309
        %v3208 = vunpack.c.l.b16 %v1310
        %v3209 = vunpack.c.h.b16 %v1310
        %v3210 = vunpack.c.l.b16 %v1311
        %v3211 = vunpack.c.h.b16 %v1311
        %v3212 = vunpack.c.l.b16 %v1312
        %v3213 = vunpack.c.h.b16 %v1312
        %v3214 = vunpack.c.l.b16 %v1313
        %v3215 = vunpack.c.h.b16 %v1313
        %v3216 = vunpack.c.l.b16 %v1314
        %v3217 = vunpack.c.h.b16 %v1314
        %v3218 = vunpack.c.l.b16 %v1315
        %v3219 = vunpack.c.h.b16 %v1315
        %v3220 = vunpack.c.l.b16 %v1316
        %v3221 = vunpack.c.h.b16 %v1316
        %v3222 = vunpack.c.l.b16 %v1317
        %v3223 = vunpack.c.h.b16 %v1317
        %v3224 = vunpack.c.l.b16 %v1318
        %v3225 = vunpack.c.h.b16 %v1318
        %v3226 = vunpack.c.l.b16 %v1319
        %v3227 = vunpack.c.h.b16 %v1319
        %v3228 = vunpack.c.l.b16 %v1320
        %v3229 = vunpack.c.h.b16 %v1320
        %v3230 = vunpack.c.l.b16 %v1321
        %v3231 = vunpack.c.h.b16 %v1321
        %v3232 = vunpack.c.l.b16 %v1322
        %v3233 = vunpack.c.h.b16 %v1322
        %v3234 = vunpack.c.l.b16 %v1323
        %v3235 = vunpack.c.h.b16 %v1323
        %v3236 = vunpack.c.l.b16 %v1324
        %v3237 = vunpack.c.h.b16 %v1324
        %v3238 = vunpack.c.l.b16 %v1325
        %v3239 = vunpack.c.h.b16 %v1325
        %v3240 = vunpack.c.l.b16 %v1326
        %v3241 = vunpack.c.h.b16 %v1326
        %v3242 = vunpack.c.l.b16 %v1327
        %v3243 = vunpack.c.h.b16 %v1327
        %v3244 = vunpack.c.l.b16 %v1328
        %v3245 = vunpack.c.h.b16 %v1328
        %v3246 = vunpack.c.l.b16 %v1329
        %v3247 = vunpack.c.h.b16 %v1329
        %v3248 = vunpack.c.l.b16 %v1330
        %v3249 = vunpack.c.h.b16 %v1330
        %v3250 = vunpack.c.l.b16 %v1331
        %v3251 = vunpack.c.h.b16 %v1331
        %v3252 = vunpack.c.l.b16 %v1332
        %v3253 = vunpack.c.h.b16 %v1332
        %v3254 = vunpack.c.l.b16 %v1333
        %v3255 = vunpack.c.h.b16 %v1333
        %v3256 = vunpack.c.l.b16 %v1334
        %v3257 = vunpack.c.h.b16 %v1334
        %v3258 = vunpack.c.l.b16 %v1335
        %v3259 = vunpack.c.h.b16 %v1335
        %v3260 = vunpack.c.l.b16 %v1336
        %v3261 = vunpack.c.h.b16 %v1336
        %v3262 = vunpack.c.l.b16 %v1337
        %v3263 = vunpack.c.h.b16 %v1337
        %v3264 = vunpack.c.l.b16 %v1338
        %v3265 = vunpack.c.h.b16 %v1338
        %v3266 = vunpack.c.l.b16 %v1339
        %v3267 = vunpack.c.h.b16 %v1339
        %v3268 = vunpack.c.l.b16 %v1340
        %v3269 = vunpack.c.h.b16 %v1340
        %v3270 = vunpack.c.l.b16 %v1341
        %v3271 = vunpack.c.h.b16 %v1341
        %v3272 = vunpack.c.l.b16 %v1342
        %v3273 = vunpack.c.h.b16 %v1342
        %v3274 = vunpack.c.l.b16 %v1343
        %v3275 = vunpack.c.h.b16 %v1343
        %v3276 = vunpack.c.l.b16 %v1344
        %v3277 = vunpack.c.h.b16 %v1344
        %v3278 = vunpack.c.l.b16 %v1345
        %v3279 = vunpack.c.h.b16 %v1345
        %v3280 = vunpack.c.l.b16 %v1346
        %v3281 = vunpack.c.h.b16 %v1346
        %v3282 = vunpack.c.l.b16 %v1347
        %v3283 = vunpack.c.h.b16 %v1347
        %v3284 = vunpack.c.l.b16 %v1348
        %v3285 = vunpack.c.h.b16 %v1348
        %v3286 = vunpack.c.l.b16 %v1349
        %v3287 = vunpack.c.h.b16 %v1349
        %v3288 = vunpack.c.l.b16 %v1350
        %v3289 = vunpack.c.h.b16 %v1350
        %v3290 = vunpack.c.l.b16 %v1351
        %v3291 = vunpack.c.h.b16 %v1351
        %v3292 = vunpack.c.l.b16 %v1352
        %v3293 = vunpack.c.h.b16 %v1352
        %v3294 = vunpack.c.l.b16 %v1353
        %v3295 = vunpack.c.h.b16 %v1353
        %v3296 = vunpack.c.l.b16 %v1354
        %v3297 = vunpack.c.h.b16 %v1354
        %v3298 = vunpack.c.l.b16 %v1355
        %v3299 = vunpack.c.h.b16 %v1355
        %v3300 = vunpack.c.l.b16 %v1356
        %v3301 = vunpack.c.h.b16 %v1356
        %v3302 = vunpack.c.l.b16 %v1357
        %v3303 = vunpack.c.h.b16 %v1357
        %v3304 = vunpack.c.l.b16 %v1358
        %v3305 = vunpack.c.h.b16 %v1358
        %v3306 = vunpack.c.l.b16 %v1359
        %v3307 = vunpack.c.h.b16 %v1359
        %v3308 = vunpack.c.l.b16 %v1360
        %v3309 = vunpack.c.h.b16 %v1360
        %v3310 = vunpack.c.l.b16 %v1361
        %v3311 = vunpack.c.h.b16 %v1361
        %v3312 = vunpack.c.l.b16 %v1362
        %v3313 = vunpack.c.h.b16 %v1362
        %v3314 = vunpack.c.l.b16 %v1363
        %v3315 = vunpack.c.h.b16 %v1363
        %v3316 = vunpack.c.l.b16 %v1364
        %v3317 = vunpack.c.h.b16 %v1364
        %v3318 = vunpack.c.l.b16 %v1365
        %v3319 = vunpack.c.h.b16 %v1365
        %v3320 = vunpack.c.l.b16 %v1366
        %v3321 = vunpack.c.h.b16 %v1366
        %v3322 = vunpack.c.l.b16 %v1367
        %v3323 = vunpack.c.h.b16 %v1367
        %v3324 = vunpack.c.l.b16 %v1368
        %v3325 = vunpack.c.h.b16 %v1368
        %v3326 = vunpack.c.l.b16 %v1369
        %v3327 = vunpack.c.h.b16 %v1369
        %v3328 = vunpack.c.l.b16 %v1370
        %v3329 = vunpack.c.h.b16 %v1370
        %v3330 = vunpack.c.l.b16 %v1371
        %v3331 = vunpack.c.h.b16 %v1371
        %v3332 = vunpack.c.l.b16 %v1372
        %v3333 = vunpack.c.h.b16 %v1372
        %v3334 = vunpack.c.l.b16 %v1373
        %v3335 = vunpack.c.h.b16 %v1373
        %v3336 = vunpack.c.l.b16 %v1374
        %v3337 = vunpack.c.h.b16 %v1374
        %v3338 = vunpack.c.l.b16 %v1375
        %v3339 = vunpack.c.h.b16 %v1375
        %v3340 = vunpack.c.l.b16 %v1376
        %v3341 = vunpack.c.h.b16 %v1376
        %v3342 = vunpack.c.l.b16 %v1377
        %v3343 = vunpack.c.h.b16 %v1377
        %v3344 = vunpack.c.l.b16 %v1378
        %v3345 = vunpack.c.h.b16 %v1378
        %v3346 = vunpack.c.l.b16 %v1379
        %v3347 = vunpack.c.h.b16 %v1379
        %v3348 = vunpack.c.l.b16 %v1380
        %v3349 = vunpack.c.h.b16 %v1380
        %v3350 = vunpack.c.l.b16 %v1381
        %v3351 = vunpack.c.h.b16 %v1381
        %v3352 = vunpack.c.l.b16 %v1382
        %v3353 = vunpack.c.h.b16 %v1382
        %v3354 = vunpack.c.l.b16 %v1383
        %v3355 = vunpack.c.h.b16 %v1383
        %v3356 = vunpack.c.l.b16 %v1384
        %v3357 = vunpack.c.h.b16 %v1384
        %v3358 = vunpack.c.l.b16 %v1385
        %v3359 = vunpack.c.h.b16 %v1385
        %v3360 = vunpack.c.l.b16 %v1386
        %v3361 = vunpack.c.h.b16 %v1386
        %v3362 = vunpack.c.l.b16 %v1387
        %v3363 = vunpack.c.h.b16 %v1387
        %v3364 = vunpack.c.l.b16 %v1388
        %v3365 = vunpack.c.h.b16 %v1388
        %v3366 = vunpack.c.l.b16 %v1389
        %v3367 = vunpack.c.h.b16 %v1389
        %v3368 = vunpack.c.l.b16 %v1390
        %v3369 = vunpack.c.h.b16 %v1390
        %v3370 = vunpack.c.l.b16 %v1391
        %v3371 = vunpack.c.h.b16 %v1391
        %v3372 = vunpack.c.l.b16 %v1392
        %v3373 = vunpack.c.h.b16 %v1392
        %v3374 = vunpack.c.l.b16 %v1393
        %v3375 = vunpack.c.h.b16 %v1393
        %v3376 = vunpack.c.l.b16 %v1394
        %v3377 = vunpack.c.h.b16 %v1394
        %v3378 = vunpack.c.l.b16 %v1395
        %v3379 = vunpack.c.h.b16 %v1395
        %v3380 = vunpack.c.l.b16 %v1396
        %v3381 = vunpack.c.h.b16 %v1396
        %v3382 = vunpack.c.l.b16 %v1397
        %v3383 = vunpack.c.h.b16 %v1397
        %v3384 = vunpack.c.l.b16 %v1398
        %v3385 = vunpack.c.h.b16 %v1398
        %v3386 = vunpack.c.l.b16 %v1399
        %v3387 = vunpack.c.h.b16 %v1399
        %v3388 = vunpack.c.l.b16 %v1400
        %v3389 = vunpack.c.h.b16 %v1400
        %v3390 = vunpack.c.l.b16 %v1401
        %v3391 = vunpack.c.h.b16 %v1401
        %v3392 = vunpack.c.l.b16 %v1402
        %v3393 = vunpack.c.h.b16 %v1402
        %v3394 = vunpack.c.l.b16 %v1403
        %v3395 = vunpack.c.h.b16 %v1403
        %v3396 = vunpack.c.l.b16 %v1404
        %v3397 = vunpack.c.h.b16 %v1404
        %v3398 = vunpack.c.l.b16 %v1405
        %v3399 = vunpack.c.h.b16 %v1405
        %v3400 = vunpack.c.l.b16 %v1406
        %v3401 = vunpack.c.h.b16 %v1406
        %v3402 = vunpack.c.l.b16 %v1407
        %v3403 = vunpack.c.h.b16 %v1407
        %v3404 = vunpack.c.l.b16 %v1408
        %v3405 = vunpack.c.h.b16 %v1408
        %v3406 = vunpack.c.l.b16 %v1409
        %v3407 = vunpack.c.h.b16 %v1409
        %v3408 = vunpack.c.l.b16 %v1410
        %v3409 = vunpack.c.h.b16 %v1410
        %v3410 = vunpack.c.l.b16 %v1411
        %v3411 = vunpack.c.h.b16 %v1411
        %v3412 = vunpack.c.l.b16 %v1412
        %v3413 = vunpack.c.h.b16 %v1412
        %v3414 = vunpack.c.l.b16 %v1413
        %v3415 = vunpack.c.h.b16 %v1413
        %v3416 = vunpack.c.l.b16 %v1414
        %v3417 = vunpack.c.h.b16 %v1414
        %v3418 = vunpack.c.l.b16 %v1415
        %v3419 = vunpack.c.h.b16 %v1415
        %v3420 = vunpack.c.l.b16 %v1416
        %v3421 = vunpack.c.h.b16 %v1416
        %v3422 = vunpack.c.l.b16 %v1417
        %v3423 = vunpack.c.h.b16 %v1417
        %v3424 = vunpack.c.l.b16 %v1418
        %v3425 = vunpack.c.h.b16 %v1418
        %v3426 = vunpack.c.l.b16 %v1419
        %v3427 = vunpack.c.h.b16 %v1419
        %v3428 = vunpack.c.l.b16 %v1420
        %v3429 = vunpack.c.h.b16 %v1420
        %v3430 = vunpack.c.l.b16 %v1421
        %v3431 = vunpack.c.h.b16 %v1421
        %v3432 = vunpack.c.l.b16 %v1422
        %v3433 = vunpack.c.h.b16 %v1422
        %v3434 = vunpack.c.l.b16 %v1423
        %v3435 = vunpack.c.h.b16 %v1423
        %v3436 = vunpack.c.l.b16 %v1424
        %v3437 = vunpack.c.h.b16 %v1424
        %v3438 = vunpack.c.l.b16 %v1425
        %v3439 = vunpack.c.h.b16 %v1425
        %v3440 = vunpack.c.l.b16 %v1426
        %v3441 = vunpack.c.h.b16 %v1426
        %v3442 = vunpack.c.l.b16 %v1427
        %v3443 = vunpack.c.h.b16 %v1427
        %v3444 = vunpack.c.l.b16 %v1428
        %v3445 = vunpack.c.h.b16 %v1428
        %v3446 = vunpack.c.l.b16 %v1429
        %v3447 = vunpack.c.h.b16 %v1429
        %v3448 = vunpack.c.l.b16 %v1430
        %v3449 = vunpack.c.h.b16 %v1430
        %v3450 = vunpack.c.l.b16 %v1431
        %v3451 = vunpack.c.h.b16 %v1431
        %v3452 = vunpack.c.l.b16 %v1432
        %v3453 = vunpack.c.h.b16 %v1432
        %v3454 = vunpack.c.l.b16 %v1433
        %v3455 = vunpack.c.h.b16 %v1433
        %v3456 = vunpack.c.l.b16 %v1434
        %v3457 = vunpack.c.h.b16 %v1434
        %v3458 = vunpack.c.l.b16 %v1435
        %v3459 = vunpack.c.h.b16 %v1435
        %v3460 = vunpack.c.l.b16 %v1436
        %v3461 = vunpack.c.h.b16 %v1436
        %v3462 = vunpack.c.l.b16 %v1437
        %v3463 = vunpack.c.h.b16 %v1437
        %v3464 = vunpack.c.l.b16 %v1438
        %v3465 = vunpack.c.h.b16 %v1438
        %v3466 = vunpack.c.l.b16 %v1439
        %v3467 = vunpack.c.h.b16 %v1439
        %v3468 = vunpack.c.l.b16 %v1440
        %v3469 = vunpack.c.h.b16 %v1440
        %v3470 = vunpack.c.l.b16 %v1441
        %v3471 = vunpack.c.h.b16 %v1441
        %v3472 = vunpack.c.l.b16 %v1442
        %v3473 = vunpack.c.h.b16 %v1442
        %v3474 = vunpack.c.l.b16 %v1443
        %v3475 = vunpack.c.h.b16 %v1443
        %v3476 = vunpack.c.l.b16 %v1444
        %v3477 = vunpack.c.h.b16 %v1444
        %v3478 = vunpack.c.l.b16 %v1445
        %v3479 = vunpack.c.h.b16 %v1445
        %v3480 = vunpack.c.l.b16 %v1446
        %v3481 = vunpack.c.h.b16 %v1446
        %v3482 = vunpack.c.l.b16 %v1447
        %v3483 = vunpack.c.h.b16 %v1447
        %v3484 = vunpack.c.l.b16 %v1448
        %v3485 = vunpack.c.h.b16 %v1448
        %v3486 = vunpack.c.l.b16 %v1449
        %v3487 = vunpack.c.h.b16 %v1449
        %v3488 = vunpack.c.l.b16 %v1450
        %v3489 = vunpack.c.h.b16 %v1450
        %v3490 = vunpack.c.l.b16 %v1451
        %v3491 = vunpack.c.h.b16 %v1451
        %v3492 = vunpack.c.l.b16 %v1452
        %v3493 = vunpack.c.h.b16 %v1452
        %v3494 = vunpack.c.l.b16 %v1453
        %v3495 = vunpack.c.h.b16 %v1453
        %v3496 = vunpack.c.l.b16 %v1454
        %v3497 = vunpack.c.h.b16 %v1454
        %v3498 = vunpack.c.l.b16 %v1455
        %v3499 = vunpack.c.h.b16 %v1455
        %v3500 = vunpack.c.l.b16 %v1456
        %v3501 = vunpack.c.h.b16 %v1456
        %v3502 = vunpack.c.l.b16 %v1457
        %v3503 = vunpack.c.h.b16 %v1457
        %v3504 = vunpack.c.l.b16 %v1458
        %v3505 = vunpack.c.h.b16 %v1458
        %v3506 = vunpack.c.l.b16 %v1459
        %v3507 = vunpack.c.h.b16 %v1459
        %v3508 = vunpack.c.l.b16 %v1460
        %v3509 = vunpack.c.h.b16 %v1460
        %v3510 = vunpack.c.l.b16 %v1461
        %v3511 = vunpack.c.h.b16 %v1461
        %v3512 = vunpack.c.l.b16 %v1462
        %v3513 = vunpack.c.h.b16 %v1462
        %v3514 = vunpack.c.l.b16 %v1463
        %v3515 = vunpack.c.h.b16 %v1463
        %v3516 = vunpack.c.l.b16 %v1464
        %v3517 = vunpack.c.h.b16 %v1464
        %v3518 = vunpack.c.l.b16 %v1465
        %v3519 = vunpack.c.h.b16 %v1465
        %v3520 = vunpack.c.l.b16 %v1466
        %v3521 = vunpack.c.h.b16 %v1466
        %v3522 = vunpack.c.l.b16 %v1467
        %v3523 = vunpack.c.h.b16 %v1467
        %v3524 = vunpack.c.l.b16 %v1468
        %v3525 = vunpack.c.h.b16 %v1468
        %v3526 = vunpack.c.l.b16 %v1469
        %v3527 = vunpack.c.h.b16 %v1469
        %v3528 = vunpack.c.l.b16 %v1470
        %v3529 = vunpack.c.h.b16 %v1470
        %v3530 = vunpack.c.l.b16 %v1471
        %v3531 = vunpack.c.h.b16 %v1471
        %v3532 = vunpack.c.l.b16 %v1472
        %v3533 = vunpack.c.h.b16 %v1472
        %v3534 = vunpack.c.l.b16 %v1473
        %v3535 = vunpack.c.h.b16 %v1473
        %v3536 = vunpack.c.l.b16 %v1474
        %v3537 = vunpack.c.h.b16 %v1474
        %v3538 = vunpack.c.l.b16 %v1475
        %v3539 = vunpack.c.h.b16 %v1475
        %v3540 = vunpack.c.l.b16 %v1476
        %v3541 = vunpack.c.h.b16 %v1476
        %v3542 = vunpack.c.l.b16 %v1477
        %v3543 = vunpack.c.h.b16 %v1477
        %v3544 = vunpack.c.l.b16 %v1478
        %v3545 = vunpack.c.h.b16 %v1478
        %v3546 = vunpack.c.l.b16 %v1479
        %v3547 = vunpack.c.h.b16 %v1479
        %v3548 = vunpack.c.l.b16 %v1480
        %v3549 = vunpack.c.h.b16 %v1480
        %v3550 = vunpack.c.l.b16 %v1481
        %v3551 = vunpack.c.h.b16 %v1481
        %v3552 = vunpack.c.l.b16 %v1482
        %v3553 = vunpack.c.h.b16 %v1482
        %v3554 = vunpack.c.l.b16 %v1483
        %v3555 = vunpack.c.h.b16 %v1483
        %v3556 = vunpack.c.l.b16 %v1484
        %v3557 = vunpack.c.h.b16 %v1484
        %v3558 = vunpack.c.l.b16 %v1485
        %v3559 = vunpack.c.h.b16 %v1485
        %v3560 = vunpack.c.l.b16 %v1486
        %v3561 = vunpack.c.h.b16 %v1486
        %v3562 = vunpack.c.l.b16 %v1487
        %v3563 = vunpack.c.h.b16 %v1487
        %v3564 = vunpack.c.l.b16 %v1488
        %v3565 = vunpack.c.h.b16 %v1488
        %v3566 = vunpack.c.l.b16 %v1489
        %v3567 = vunpack.c.h.b16 %v1489
        %v3568 = vunpack.c.l.b16 %v1490
        %v3569 = vunpack.c.h.b16 %v1490
        %v3570 = vunpack.c.l.b16 %v1491
        %v3571 = vunpack.c.h.b16 %v1491
        %v3572 = vunpack.c.l.b16 %v1492
        %v3573 = vunpack.c.h.b16 %v1492
        %v3574 = vunpack.c.l.b16 %v1493
        %v3575 = vunpack.c.h.b16 %v1493
        %v3576 = vunpack.c.l.b16 %v1494
        %v3577 = vunpack.c.h.b16 %v1494
        %v3578 = vunpack.c.l.b16 %v1495
        %v3579 = vunpack.c.h.b16 %v1495
        %v3580 = vunpack.c.l.b16 %v1496
        %v3581 = vunpack.c.h.b16 %v1496
        %v3582 = vunpack.c.l.b16 %v1497
        %v3583 = vunpack.c.h.b16 %v1497
        %v3584 = vunpack.c.l.b16 %v1498
        %v3585 = vunpack.c.h.b16 %v1498
        %v3586 = vunpack.c.l.b16 %v1499
        %v3587 = vunpack.c.h.b16 %v1499
        %v3588 = vunpack.c.l.b16 %v1500
        %v3589 = vunpack.c.h.b16 %v1500
        %v3590 = vunpack.c.l.b16 %v1501
        %v3591 = vunpack.c.h.b16 %v1501
        %v3592 = vunpack.c.l.b16 %v1502
        %v3593 = vunpack.c.h.b16 %v1502
        %v3594 = vunpack.c.l.b16 %v1503
        %v3595 = vunpack.c.h.b16 %v1503
        %v3596 = vunpack.c.l.b16 %v1504
        %v3597 = vunpack.c.h.b16 %v1504
        %v3598 = vunpack.c.l.b16 %v1505
        %v3599 = vunpack.c.h.b16 %v1505
        %v3600 = vunpack.c.l.b16 %v1506
        %v3601 = vunpack.c.h.b16 %v1506
        %v3602 = vunpack.c.l.b16 %v1507
        %v3603 = vunpack.c.h.b16 %v1507
        %v3604 = vunpack.c.l.b16 %v1508
        %v3605 = vunpack.c.h.b16 %v1508
        %v3606 = vunpack.c.l.b16 %v1509
        %v3607 = vunpack.c.h.b16 %v1509
        %v3608 = vunpack.c.l.b16 %v1510
        %v3609 = vunpack.c.h.b16 %v1510
        %v3610 = vunpack.c.l.b16 %v1511
        %v3611 = vunpack.c.h.b16 %v1511
        %v3612 = vunpack.c.l.b16 %v1512
        %v3613 = vunpack.c.h.b16 %v1512
        %v3614 = vunpack.c.l.b16 %v1513
        %v3615 = vunpack.c.h.b16 %v1513
        %v3616 = vunpack.c.l.b16 %v1514
        %v3617 = vunpack.c.h.b16 %v1514
        %v3618 = vunpack.c.l.b16 %v1515
        %v3619 = vunpack.c.h.b16 %v1515
        %v3620 = vunpack.c.l.b16 %v1516
        %v3621 = vunpack.c.h.b16 %v1516
        %v3622 = vunpack.c.l.b16 %v1517
        %v3623 = vunpack.c.h.b16 %v1517
        %v3624 = vunpack.c.l.b16 %v1518
        %v3625 = vunpack.c.h.b16 %v1518
        %v3626 = vunpack.c.l.b16 %v1519
        %v3627 = vunpack.c.h.b16 %v1519
        %v3628 = vunpack.c.l.b16 %v1520
        %v3629 = vunpack.c.h.b16 %v1520
        %v3630 = vunpack.c.l.b16 %v1521
        %v3631 = vunpack.c.h.b16 %v1521
        %v3632 = vunpack.c.l.b16 %v1522
        %v3633 = vunpack.c.h.b16 %v1522
        %v3634 = vunpack.c.l.b16 %v1523
        %v3635 = vunpack.c.h.b16 %v1523
        %v3636 = vunpack.c.l.b16 %v1524
        %v3637 = vunpack.c.h.b16 %v1524
        %v3638 = vunpack.c.l.b16 %v1525
        %v3639 = vunpack.c.h.b16 %v1525
        %v3640 = vunpack.c.l.b16 %v1526
        %v3641 = vunpack.c.h.b16 %v1526
        %v3642 = vunpack.c.l.b16 %v1527
        %v3643 = vunpack.c.h.b16 %v1527
        %v3644 = vunpack.c.l.b16 %v1528
        %v3645 = vunpack.c.h.b16 %v1528
        %v3646 = vunpack.c.l.b16 %v1529
        %v3647 = vunpack.c.h.b16 %v1529
        %v3648 = vunpack.c.l.b16 %v1530
        %v3649 = vunpack.c.h.b16 %v1530
        %v3650 = vunpack.c.l.b16 %v1531
        %v3651 = vunpack.c.h.b16 %v1531
        %v3652 = vunpack.c.l.b16 %v1532
        %v3653 = vunpack.c.h.b16 %v1532
        %v3654 = vunpack.c.l.b16 %v1533
        %v3655 = vunpack.c.h.b16 %v1533
        %v3656 = vunpack.c.l.b16 %v1534
        %v3657 = vunpack.c.h.b16 %v1534
        %v3658 = vunpack.c.l.b16 %v1535
        %v3659 = vunpack.c.h.b16 %v1535
        %v3660 = vunpack.c.l.b16 %v1536
        %v3661 = vunpack.c.h.b16 %v1536
        %v3662 = vunpack.c.l.b16 %v1537
        %v3663 = vunpack.c.h.b16 %v1537
        %v3664 = vunpack.c.l.b16 %v1538
        %v3665 = vunpack.c.h.b16 %v1538
        %v3666 = vunpack.c.l.b16 %v1539
        %v3667 = vunpack.c.h.b16 %v1539
        %v3668 = vunpack.c.l.b16 %v1540
        %v3669 = vunpack.c.h.b16 %v1540
        %v3670 = vunpack.c.l.b16 %v1541
        %v3671 = vunpack.c.h.b16 %v1541
        %v3672 = vunpack.c.l.b16 %v1542
        %v3673 = vunpack.c.h.b16 %v1542
        %v3674 = vunpack.c.l.b16 %v1543
        %v3675 = vunpack.c.h.b16 %v1543
        %v3676 = vunpack.c.l.b16 %v1544
        %v3677 = vunpack.c.h.b16 %v1544
        %v3678 = vunpack.c.l.b16 %v1545
        %v3679 = vunpack.c.h.b16 %v1545
        %v3680 = vunpack.c.l.b16 %v1546
        %v3681 = vunpack.c.h.b16 %v1546
        %v3682 = vunpack.c.l.b16 %v1547
        %v3683 = vunpack.c.h.b16 %v1547
        %v3684 = vunpack.c.l.b16 %v1548
        %v3685 = vunpack.c.h.b16 %v1548
        %v3686 = vunpack.c.l.b16 %v1549
        %v3687 = vunpack.c.h.b16 %v1549
        %v3688 = vunpack.c.l.b16 %v1550
        %v3689 = vunpack.c.h.b16 %v1550
        %v3690 = vunpack.c.l.b16 %v1551
        %v3691 = vunpack.c.h.b16 %v1551
        %v3692 = vunpack.c.l.b16 %v1552
        %v3693 = vunpack.c.h.b16 %v1552
        %v3694 = vunpack.c.l.b16 %v1553
        %v3695 = vunpack.c.h.b16 %v1553
        %v3696 = vunpack.c.l.b16 %v1554
        %v3697 = vunpack.c.h.b16 %v1554
        %v3698 = vunpack.c.l.b16 %v1555
        %v3699 = vunpack.c.h.b16 %v1555
        %v3700 = vunpack.c.l.b16 %v1556
        %v3701 = vunpack.c.h.b16 %v1556
        %v3702 = vunpack.c.l.b16 %v1557
        %v3703 = vunpack.c.h.b16 %v1557
        %v3704 = vunpack.c.l.b16 %v1558
        %v3705 = vunpack.c.h.b16 %v1558
        %v3706 = vunpack.c.l.b16 %v1559
        %v3707 = vunpack.c.h.b16 %v1559
        %v3708 = vunpack.c.l.b16 %v1560
        %v3709 = vunpack.c.h.b16 %v1560
        %v3710 = vunpack.c.l.b16 %v1561
        %v3711 = vunpack.c.h.b16 %v1561
        %v3712 = vunpack.c.l.b16 %v1562
        %v3713 = vunpack.c.h.b16 %v1562
        %v3714 = vunpack.c.l.b16 %v1563
        %v3715 = vunpack.c.h.b16 %v1563
        %v3716 = vunpack.c.l.b16 %v1564
        %v3717 = vunpack.c.h.b16 %v1564
        %v3718 = vunpack.c.l.b16 %v1565
        %v3719 = vunpack.c.h.b16 %v1565
        %v3720 = vunpack.c.l.b16 %v1566
        %v3721 = vunpack.c.h.b16 %v1566
        %v3722 = vunpack.c.l.b16 %v1567
        %v3723 = vunpack.c.h.b16 %v1567
        %v3724 = vunpack.c.l.b16 %v1568
        %v3725 = vunpack.c.h.b16 %v1568
        %v3726 = vunpack.c.l.b16 %v1569
        %v3727 = vunpack.c.h.b16 %v1569
        %v3728 = vunpack.c.l.b16 %v1570
        %v3729 = vunpack.c.h.b16 %v1570
        %v3730 = vunpack.c.l.b16 %v1571
        %v3731 = vunpack.c.h.b16 %v1571
        %v3732 = vunpack.c.l.b16 %v1572
        %v3733 = vunpack.c.h.b16 %v1572
        %v3734 = vunpack.c.l.b16 %v1573
        %v3735 = vunpack.c.h.b16 %v1573
        %v3736 = vunpack.c.l.b16 %v1574
        %v3737 = vunpack.c.h.b16 %v1574
        %v3738 = vunpack.c.l.b16 %v1575
        %v3739 = vunpack.c.h.b16 %v1575
        %v3740 = vunpack.c.l.b16 %v1576
        %v3741 = vunpack.c.h.b16 %v1576
        %v3742 = vunpack.c.l.b16 %v1577
        %v3743 = vunpack.c.h.b16 %v1577
        %v3744 = vunpack.c.l.b16 %v1578
        %v3745 = vunpack.c.h.b16 %v1578
        %v3746 = vunpack.c.l.b16 %v1579
        %v3747 = vunpack.c.h.b16 %v1579
        %v3748 = vunpack.c.l.b16 %v1580
        %v3749 = vunpack.c.h.b16 %v1580
        %v3750 = vunpack.c.l.b16 %v1581
        %v3751 = vunpack.c.h.b16 %v1581
        %v3752 = vunpack.c.l.b16 %v1582
        %v3753 = vunpack.c.h.b16 %v1582
        %v3754 = vunpack.c.l.b16 %v1583
        %v3755 = vunpack.c.h.b16 %v1583
        %v3756 = vunpack.c.l.b16 %v1584
        %v3757 = vunpack.c.h.b16 %v1584
        %v3758 = vunpack.c.l.b16 %v1585
        %v3759 = vunpack.c.h.b16 %v1585
        %v3760 = vunpack.c.l.b16 %v1586
        %v3761 = vunpack.c.h.b16 %v1586
        %v3762 = vunpack.c.l.b16 %v1587
        %v3763 = vunpack.c.h.b16 %v1587
        %v3764 = vunpack.c.l.b16 %v1588
        %v3765 = vunpack.c.h.b16 %v1588
        %v3766 = vunpack.c.l.b16 %v1589
        %v3767 = vunpack.c.h.b16 %v1589
        %v3768 = vunpack.c.l.b16 %v1590
        %v3769 = vunpack.c.h.b16 %v1590
        %v3770 = vunpack.c.l.b16 %v1591
        %v3771 = vunpack.c.h.b16 %v1591
        %v3772 = vunpack.c.l.b16 %v1592
        %v3773 = vunpack.c.h.b16 %v1592
        %v3774 = vunpack.c.l.b16 %v1593
        %v3775 = vunpack.c.h.b16 %v1593
        %v3776 = vunpack.c.l.b16 %v1594
        %v3777 = vunpack.c.h.b16 %v1594
        %v3778 = vunpack.c.l.b16 %v1595
        %v3779 = vunpack.c.h.b16 %v1595
        %v3780 = vunpack.c.l.b16 %v1596
        %v3781 = vunpack.c.h.b16 %v1596
        %v3782 = vunpack.c.l.b16 %v1597
        %v3783 = vunpack.c.h.b16 %v1597
        %v3784 = vunpack.c.l.b16 %v1598
        %v3785 = vunpack.c.h.b16 %v1598
        %v3786 = vunpack.c.l.b16 %v1599
        %v3787 = vunpack.c.h.b16 %v1599
        %v3788 = vunpack.c.l.b16 %v1600
        %v3789 = vunpack.c.h.b16 %v1600
        %v3790 = vunpack.c.l.b16 %v1601
        %v3791 = vunpack.c.h.b16 %v1601
        %v3792 = vunpack.c.l.b16 %v1602
        %v3793 = vunpack.c.h.b16 %v1602
        %v3794 = vunpack.c.l.b16 %v1603
        %v3795 = vunpack.c.h.b16 %v1603
        %v3796 = vunpack.c.l.b16 %v1604
        %v3797 = vunpack.c.h.b16 %v1604
        %v3798 = vunpack.c.l.b16 %v1605
        %v3799 = vunpack.c.h.b16 %v1605
        %v3800 = vunpack.c.l.b16 %v1606
        %v3801 = vunpack.c.h.b16 %v1606
        %v3802 = vunpack.c.l.b16 %v1607
        %v3803 = vunpack.c.h.b16 %v1607
        %v3804 = vunpack.c.l.b16 %v1608
        %v3805 = vunpack.c.h.b16 %v1608
        %v3806 = vunpack.c.l.b16 %v1609
        %v3807 = vunpack.c.h.b16 %v1609
        %v3808 = vunpack.c.l.b16 %v1610
        %v3809 = vunpack.c.h.b16 %v1610
        %v3810 = vunpack.c.l.b16 %v1611
        %v3811 = vunpack.c.h.b16 %v1611
        %v3812 = vunpack.c.l.b16 %v1612
        %v3813 = vunpack.c.h.b16 %v1612
        %v3814 = vunpack.c.l.b16 %v1613
        %v3815 = vunpack.c.h.b16 %v1613
        %v3816 = vunpack.c.l.b16 %v1614
        %v3817 = vunpack.c.h.b16 %v1614
        %v3818 = vunpack.c.l.b16 %v1615
        %v3819 = vunpack.c.h.b16 %v1615
        %v3820 = vunpack.c.l.b16 %v1616
        %v3821 = vunpack.c.h.b16 %v1616
        %v3822 = vunpack.c.l.b16 %v1617
        %v3823 = vunpack.c.h.b16 %v1617
        %v3824 = vunpack.c.l.b16 %v1618
        %v3825 = vunpack.c.h.b16 %v1618
        %v3826 = vunpack.c.l.b16 %v1619
        %v3827 = vunpack.c.h.b16 %v1619
        %v3828 = vunpack.c.l.b16 %v1620
        %v3829 = vunpack.c.h.b16 %v1620
        %v3830 = vunpack.c.l.b16 %v1621
        %v3831 = vunpack.c.h.b16 %v1621
        %v3832 = vunpack.c.l.b16 %v1622
        %v3833 = vunpack.c.h.b16 %v1622
        %v3834 = vunpack.c.l.b16 %v1623
        %v3835 = vunpack.c.h.b16 %v1623
        %v3836 = vunpack.c.l.b16 %v1624
        %v3837 = vunpack.c.h.b16 %v1624
        %v3838 = vunpack.c.l.b16 %v1625
        %v3839 = vunpack.c.h.b16 %v1625
        %v3840 = vunpack.c.l.b16 %v1626
        %v3841 = vunpack.c.h.b16 %v1626
        %v3842 = vunpack.c.l.b16 %v1627
        %v3843 = vunpack.c.h.b16 %v1627
        %v3844 = vunpack.c.l.b16 %v1628
        %v3845 = vunpack.c.h.b16 %v1628
        %v3846 = vunpack.c.l.b16 %v1629
        %v3847 = vunpack.c.h.b16 %v1629
        %v3848 = vunpack.c.l.b16 %v1630
        %v3849 = vunpack.c.h.b16 %v1630
        %v3850 = vunpack.c.l.b16 %v1631
        %v3851 = vunpack.c.h.b16 %v1631
        %v3852 = vunpack.c.l.b16 %v1632
        %v3853 = vunpack.c.h.b16 %v1632
        %v3854 = vunpack.c.l.b16 %v1633
        %v3855 = vunpack.c.h.b16 %v1633
        %v3856 = vunpack.c.l.b16 %v1634
        %v3857 = vunpack.c.h.b16 %v1634
        %v3858 = vunpack.c.l.b16 %v1635
        %v3859 = vunpack.c.h.b16 %v1635
        %v3860 = vunpack.c.l.b16 %v1636
        %v3861 = vunpack.c.h.b16 %v1636
        %v3862 = vunpack.c.l.b16 %v1637
        %v3863 = vunpack.c.h.b16 %v1637
        %v3864 = vunpack.c.l.b16 %v1638
        %v3865 = vunpack.c.h.b16 %v1638
        %v3866 = vunpack.c.l.b16 %v1639
        %v3867 = vunpack.c.h.b16 %v1639
        %v3868 = vunpack.c.l.b16 %v1640
        %v3869 = vunpack.c.h.b16 %v1640
        %v3870 = vunpack.c.l.b16 %v1641
        %v3871 = vunpack.c.h.b16 %v1641
        %v3872 = vunpack.c.l.b16 %v1642
        %v3873 = vunpack.c.h.b16 %v1642
        %v3874 = vunpack.c.l.b16 %v1643
        %v3875 = vunpack.c.h.b16 %v1643
        %v3876 = vunpack.c.l.b16 %v1644
        %v3877 = vunpack.c.h.b16 %v1644
        %v3878 = vunpack.c.l.b16 %v1645
        %v3879 = vunpack.c.h.b16 %v1645
        %v3880 = vunpack.c.l.b16 %v1646
        %v3881 = vunpack.c.h.b16 %v1646
        %v3882 = vunpack.c.l.b16 %v1647
        %v3883 = vunpack.c.h.b16 %v1647
        %v3884 = vunpack.c.l.b16 %v1648
        %v3885 = vunpack.c.h.b16 %v1648
        %v3886 = vunpack.c.l.b16 %v1649
        %v3887 = vunpack.c.h.b16 %v1649
        %v3888 = vunpack.c.l.b16 %v1650
        %v3889 = vunpack.c.h.b16 %v1650
        %v3890 = vunpack.c.l.b16 %v1651
        %v3891 = vunpack.c.h.b16 %v1651
        %v3892 = vunpack.c.l.b16 %v1652
        %v3893 = vunpack.c.h.b16 %v1652
        %v3894 = vunpack.c.l.b16 %v1653
        %v3895 = vunpack.c.h.b16 %v1653
        %v3896 = vunpack.c.l.b16 %v1654
        %v3897 = vunpack.c.h.b16 %v1654
        %v3898 = vunpack.c.l.b16 %v1655
        %v3899 = vunpack.c.h.b16 %v1655
        %v3900 = vunpack.c.l.b16 %v1656
        %v3901 = vunpack.c.h.b16 %v1656
        %v3902 = vunpack.c.l.b16 %v1657
        %v3903 = vunpack.c.h.b16 %v1657
        %v3904 = vunpack.c.l.b16 %v1658
        %v3905 = vunpack.c.h.b16 %v1658
        %v3906 = vunpack.c.l.b16 %v1659
        %v3907 = vunpack.c.h.b16 %v1659
        %v3908 = vunpack.c.l.b16 %v1660
        %v3909 = vunpack.c.h.b16 %v1660
        %v3910 = vunpack.c.l.b16 %v1661
        %v3911 = vunpack.c.h.b16 %v1661
        %v3912 = vunpack.c.l.b16 %v1662
        %v3913 = vunpack.c.h.b16 %v1662
        %v3914 = vunpack.c.l.b16 %v1663
        %v3915 = vunpack.c.h.b16 %v1663
        %v3916 = vunpack.c.l.b16 %v1664
        %v3917 = vunpack.c.h.b16 %v1664
        %v3918 = vunpack.c.l.b16 %v1665
        %v3919 = vunpack.c.h.b16 %v1665
        %v3920 = vunpack.c.l.b16 %v1666
        %v3921 = vunpack.c.h.b16 %v1666
        %v3922 = vunpack.c.l.b16 %v1667
        %v3923 = vunpack.c.h.b16 %v1667
        %v3924 = vunpack.c.l.b16 %v1668
        %v3925 = vunpack.c.h.b16 %v1668
        %v3926 = vunpack.c.l.b16 %v1669
        %v3927 = vunpack.c.h.b16 %v1669
        %v3928 = vunpack.c.l.b16 %v1670
        %v3929 = vunpack.c.h.b16 %v1670
        %v3930 = vunpack.c.l.b16 %v1671
        %v3931 = vunpack.c.h.b16 %v1671
        %v3932 = vunpack.c.l.b16 %v1672
        %v3933 = vunpack.c.h.b16 %v1672
        %v3934 = vunpack.c.l.b16 %v1673
        %v3935 = vunpack.c.h.b16 %v1673
        %v3936 = vunpack.c.l.b16 %v1674
        %v3937 = vunpack.c.h.b16 %v1674
        %v3938 = vunpack.c.l.b16 %v1675
        %v3939 = vunpack.c.h.b16 %v1675
        %v3940 = vunpack.c.l.b16 %v1676
        %v3941 = vunpack.c.h.b16 %v1676
        %v3942 = vunpack.c.l.b16 %v1677
        %v3943 = vunpack.c.h.b16 %v1677
        %v3944 = vunpack.c.l.b16 %v1678
        %v3945 = vunpack.c.h.b16 %v1678
        %v3946 = vunpack.c.l.b16 %v1679
        %v3947 = vunpack.c.h.b16 %v1679
        %v3948 = vunpack.c.l.b16 %v1680
        %v3949 = vunpack.c.h.b16 %v1680
        %v3950 = vunpack.c.l.b16 %v1681
        %v3951 = vunpack.c.h.b16 %v1681
        %v3952 = vunpack.c.l.b16 %v1682
        %v3953 = vunpack.c.h.b16 %v1682
        %v3954 = vunpack.c.l.b16 %v1683
        %v3955 = vunpack.c.h.b16 %v1683
        %v3956 = vunpack.c.l.b16 %v1684
        %v3957 = vunpack.c.h.b16 %v1684
        %v3958 = vunpack.c.l.b16 %v1685
        %v3959 = vunpack.c.h.b16 %v1685
        %v3960 = vunpack.c.l.b16 %v1686
        %v3961 = vunpack.c.h.b16 %v1686
        %v3962 = vunpack.c.l.b16 %v1687
        %v3963 = vunpack.c.h.b16 %v1687
        %v3964 = vunpack.c.l.b16 %v1688
        %v3965 = vunpack.c.h.b16 %v1688
        %v3966 = vunpack.c.l.b16 %v1689
        %v3967 = vunpack.c.h.b16 %v1689
        %v3968 = vunpack.c.l.b16 %v1690
        %v3969 = vunpack.c.h.b16 %v1690
        %v3970 = vunpack.c.l.b16 %v1691
        %v3971 = vunpack.c.h.b16 %v1691
        %v3972 = vunpack.c.l.b16 %v1692
        %v3973 = vunpack.c.h.b16 %v1692
        %v3974 = vunpack.c.l.b16 %v1693
        %v3975 = vunpack.c.h.b16 %v1693
        %v3976 = vunpack.c.l.b16 %v1694
        %v3977 = vunpack.c.h.b16 %v1694
        %v3978 = vunpack.c.l.b16 %v1695
        %v3979 = vunpack.c.h.b16 %v1695
        %v3980 = vunpack.c.l.b16 %v1696
        %v3981 = vunpack.c.h.b16 %v1696
        %v3982 = vunpack.c.l.b16 %v1697
        %v3983 = vunpack.c.h.b16 %v1697
        %v3984 = vunpack.c.l.b16 %v1698
        %v3985 = vunpack.c.h.b16 %v1698
        %v3986 = vunpack.c.l.b16 %v1699
        %v3987 = vunpack.c.h.b16 %v1699
        %v3988 = vunpack.c.l.b16 %v1700
        %v3989 = vunpack.c.h.b16 %v1700
        %v3990 = vunpack.c.l.b16 %v1701
        %v3991 = vunpack.c.h.b16 %v1701
        %v3992 = vunpack.c.l.b16 %v1702
        %v3993 = vunpack.c.h.b16 %v1702
        %v3994 = vunpack.c.l.b16 %v1703
        %v3995 = vunpack.c.h.b16 %v1703
        %v3996 = vunpack.c.l.b16 %v1704
        %v3997 = vunpack.c.h.b16 %v1704
        %v3998 = vunpack.c.l.b16 %v1705
        %v3999 = vunpack.c.h.b16 %v1705
        %v4000 = vunpack.c.l.b16 %v1706
        %v4001 = vunpack.c.h.b16 %v1706
        %v4002 = vunpack.c.l.b16 %v1707
        %v4003 = vunpack.c.h.b16 %v1707
        %v4004 = vunpack.c.l.b16 %v1708
        %v4005 = vunpack.c.h.b16 %v1708
        %v4006 = vunpack.c.l.b16 %v1709
        %v4007 = vunpack.c.h.b16 %v1709
        %v4008 = vunpack.c.l.b16 %v1710
        %v4009 = vunpack.c.h.b16 %v1710
        %v4010 = vunpack.c.l.b16 %v1711
        %v4011 = vunpack.c.h.b16 %v1711
        %v4012 = vunpack.c.l.b16 %v1712
        %v4013 = vunpack.c.h.b16 %v1712
        %v4014 = vunpack.c.l.b16 %v1713
        %v4015 = vunpack.c.h.b16 %v1713
        %v4016 = vunpack.c.l.b16 %v1714
        %v4017 = vunpack.c.h.b16 %v1714
        %v4018 = vunpack.c.l.b16 %v1715
        %v4019 = vunpack.c.h.b16 %v1715
        %v4020 = vunpack.c.l.b16 %v1716
        %v4021 = vunpack.c.h.b16 %v1716
        %v4022 = vunpack.c.l.b16 %v1717
        %v4023 = vunpack.c.h.b16 %v1717
        %v4024 = vunpack.c.l.b16 %v1718
        %v4025 = vunpack.c.h.b16 %v1718
        %v4026 = vunpack.c.l.b16 %v1719
        %v4027 = vunpack.c.h.b16 %v1719
        %v4028 = vunpack.c.l.b16 %v1720
        %v4029 = vunpack.c.h.b16 %v1720
        %v4030 = vunpack.c.l.b16 %v1721
        %v4031 = vunpack.c.h.b16 %v1721
        %v4032 = vunpack.c.l.b16 %v1722
        %v4033 = vunpack.c.h.b16 %v1722
        %v4034 = vunpack.c.l.b16 %v1723
        %v4035 = vunpack.c.h.b16 %v1723
        %v4036 = vunpack.c.l.b16 %v1724
        %v4037 = vunpack.c.h.b16 %v1724
        %v4038 = vunpack.c.l.b16 %v1725
        %v4039 = vunpack.c.h.b16 %v1725
        %v4040 = vunpack.c.l.b16 %v1726
        %v4041 = vunpack.c.h.b16 %v1726
        %v4042 = vunpack.c.l.b16 %v1727
        %v4043 = vunpack.c.h.b16 %v1727
        %v4044 = vunpack.c.l.b16 %v1728
        %v4045 = vunpack.c.h.b16 %v1728
        %v4046 = vunpack.c.l.b16 %v1729
        %v4047 = vunpack.c.h.b16 %v1729
        %v4048 = vunpack.c.l.b16 %v1730
        %v4049 = vunpack.c.h.b16 %v1730
        %v4050 = vunpack.c.l.b16 %v1731
        %v4051 = vunpack.c.h.b16 %v1731
        %v4052 = vunpack.c.l.b16 %v1732
        %v4053 = vunpack.c.h.b16 %v1732
        %v4054 = vunpack.c.l.b16 %v1733
        %v4055 = vunpack.c.h.b16 %v1733
        %v4056 = vunpack.c.l.b16 %v1734
        %v4057 = vunpack.c.h.b16 %v1734
        %v4058 = vunpack.c.l.b16 %v1735
        %v4059 = vunpack.c.h.b16 %v1735
        %v4060 = vunpack.c.l.b16 %v1736
        %v4061 = vunpack.c.h.b16 %v1736
        %v4062 = vunpack.c.l.b16 %v1737
        %v4063 = vunpack.c.h.b16 %v1737
        %v4064 = vunpack.c.l.b16 %v1738
        %v4065 = vunpack.c.h.b16 %v1738
        %v4066 = vunpack.c.l.b16 %v1739
        %v4067 = vunpack.c.h.b16 %v1739
        %v4068 = vunpack.c.l.b16 %v1740
        %v4069 = vunpack.c.h.b16 %v1740
        %v4070 = vunpack.c.l.b16 %v1741
        %v4071 = vunpack.c.h.b16 %v1741
        %v4072 = vunpack.c.l.b16 %v1742
        %v4073 = vunpack.c.h.b16 %v1742
        %v4074 = vunpack.c.l.b16 %v1743
        %v4075 = vunpack.c.h.b16 %v1743
        %v4076 = vunpack.c.l.b16 %v1744
        %v4077 = vunpack.c.h.b16 %v1744
        %v4078 = vunpack.c.l.b16 %v1745
        %v4079 = vunpack.c.h.b16 %v1745
        %v4080 = vunpack.c.l.b16 %v1746
        %v4081 = vunpack.c.h.b16 %v1746
        %v4082 = vunpack.c.l.b16 %v1747
        %v4083 = vunpack.c.h.b16 %v1747
        %v4084 = vunpack.c.l.b16 %v1748
        %v4085 = vunpack.c.h.b16 %v1748
        %v4086 = vunpack.c.l.b16 %v1749
        %v4087 = vunpack.c.h.b16 %v1749
        %v4088 = vunpack.c.l.b16 %v1750
        %v4089 = vunpack.c.h.b16 %v1750
        %v4090 = vunpack.c.l.b16 %v1751
        %v4091 = vunpack.c.h.b16 %v1751
        %v4092 = vunpack.c.l.b16 %v1752
        %v4093 = vunpack.c.h.b16 %v1752
        %v4094 = vunpack.c.l.b16 %v1753
        %v4095 = vunpack.c.h.b16 %v1753
        %v4096 = vunpack.c.l.b16 %v1754
        %v4097 = vunpack.c.h.b16 %v1754
        %v4098 = vunpack.c.l.b16 %v1755
        %v4099 = vunpack.c.h.b16 %v1755
        %v4100 = vunpack.c.l.b16 %v1756
        %v4101 = vunpack.c.h.b16 %v1756
        %v4102 = vunpack.c.l.b16 %v1757
        %v4103 = vunpack.c.h.b16 %v1757
        %v4104 = vunpack.c.l.b16 %v1758
        %v4105 = vunpack.c.h.b16 %v1758
        %v4106 = vunpack.c.l.b16 %v1759
        %v4107 = vunpack.c.h.b16 %v1759
        %v4108 = vunpack.c.l.b16 %v1760
        %v4109 = vunpack.c.h.b16 %v1760
        %v4110 = vunpack.c.l.b16 %v1761
        %v4111 = vunpack.c.h.b16 %v1761
        %v4112 = vunpack.c.l.b16 %v1762
        %v4113 = vunpack.c.h.b16 %v1762
        %v4114 = vunpack.c.l.b16 %v1763
        %v4115 = vunpack.c.h.b16 %v1763
        %v4116 = vunpack.c.l.b16 %v1764
        %v4117 = vunpack.c.h.b16 %v1764
        %v4118 = vunpack.c.l.b16 %v1765
        %v4119 = vunpack.c.h.b16 %v1765
        %v4120 = vunpack.c.l.b16 %v1766
        %v4121 = vunpack.c.h.b16 %v1766
        %v4122 = vunpack.c.l.b16 %v1767
        %v4123 = vunpack.c.h.b16 %v1767
        %v4124 = vunpack.c.l.b16 %v1768
        %v4125 = vunpack.c.h.b16 %v1768
        %v4126 = vunpack.c.l.b16 %v1769
        %v4127 = vunpack.c.h.b16 %v1769
        %v4128 = vunpack.c.l.b16 %v1770
        %v4129 = vunpack.c.h.b16 %v1770
        %v4130 = vunpack.c.l.b16 %v1771
        %v4131 = vunpack.c.h.b16 %v1771
        %v4132 = vunpack.c.l.b16 %v1772
        %v4133 = vunpack.c.h.b16 %v1772
        %v4134 = vunpack.c.l.b16 %v1773
        %v4135 = vunpack.c.h.b16 %v1773
        %v4136 = vunpack.c.l.b16 %v1774
        %v4137 = vunpack.c.h.b16 %v1774
        %v4138 = vunpack.c.l.b16 %v1775
        %v4139 = vunpack.c.h.b16 %v1775
        %v4140 = vunpack.c.l.b16 %v1776
        %v4141 = vunpack.c.h.b16 %v1776
        %v4142 = vunpack.c.l.b16 %v1777
        %v4143 = vunpack.c.h.b16 %v1777
        %v4144 = vunpack.c.l.b16 %v1778
        %v4145 = vunpack.c.h.b16 %v1778
        %v4146 = vunpack.c.l.b16 %v1779
        %v4147 = vunpack.c.h.b16 %v1779
        %v4148 = vunpack.c.l.b16 %v1780
        %v4149 = vunpack.c.h.b16 %v1780
        %v4150 = vunpack.c.l.b16 %v1781
        %v4151 = vunpack.c.h.b16 %v1781
        %v4152 = vunpack.c.l.b16 %v1782
        %v4153 = vunpack.c.h.b16 %v1782
        %v4154 = vunpack.c.l.b16 %v1783
        %v4155 = vunpack.c.h.b16 %v1783
        %v4156 = vunpack.c.l.b16 %v1784
        %v4157 = vunpack.c.h.b16 %v1784
        %v4158 = vunpack.c.l.b16 %v1785
        %v4159 = vunpack.c.h.b16 %v1785
        %v4160 = vunpack.c.l.b16 %v1786
        %v4161 = vunpack.c.h.b16 %v1786
        %v4162 = vunpack.c.l.b16 %v1787
        %v4163 = vunpack.c.h.b16 %v1787
        %v4164 = vunpack.c.l.b16 %v1788
        %v4165 = vunpack.c.h.b16 %v1788
        %v4166 = vunpack.c.l.b16 %v1789
        %v4167 = vunpack.c.h.b16 %v1789
        %v4168 = vunpack.c.l.b16 %v1790
        %v4169 = vunpack.c.h.b16 %v1790
        %v4170 = vunpack.c.l.b16 %v1791
        %v4171 = vunpack.c.h.b16 %v1791
        %v4172 = vunpack.c.l.b16 %v1792
        %v4173 = vunpack.c.h.b16 %v1792
        %v4174 = vunpack.c.l.b16 %v1793
        %v4175 = vunpack.c.h.b16 %v1793
        %v4176 = vunpack.c.l.b16 %v1794
        %v4177 = vunpack.c.h.b16 %v1794
        %v4178 = vunpack.c.l.b16 %v1795
        %v4179 = vunpack.c.h.b16 %v1795
        %v4180 = vunpack.c.l.b16 %v1796
        %v4181 = vunpack.c.h.b16 %v1796
        %v4182 = vunpack.c.l.b16 %v1797
        %v4183 = vunpack.c.h.b16 %v1797
        %v4184 = vunpack.c.l.b16 %v1798
        %v4185 = vunpack.c.h.b16 %v1798
        %v4186 = vunpack.c.l.b16 %v1799
        %v4187 = vunpack.c.h.b16 %v1799
        %v4188 = vunpack.c.l.b16 %v1800
        %v4189 = vunpack.c.h.b16 %v1800
        %v4190 = vunpack.c.l.b16 %v1801
        %v4191 = vunpack.c.h.b16 %v1801
        %v4192 = vunpack.c.l.b16 %v1802
        %v4193 = vunpack.c.h.b16 %v1802
        %v4194 = vunpack.c.l.b16 %v1803
        %v4195 = vunpack.c.h.b16 %v1803
        %v4196 = vunpack.c.l.b16 %v1804
        %v4197 = vunpack.c.h.b16 %v1804
        %v4198 = vunpack.c.l.b16 %v1805
        %v4199 = vunpack.c.h.b16 %v1805
        %v4200 = vunpack.c.l.b16 %v1806
        %v4201 = vunpack.c.h.b16 %v1806
        %v4202 = vunpack.c.l.b16 %v1807
        %v4203 = vunpack.c.h.b16 %v1807
        %v4204 = vunpack.c.l.b16 %v1808
        %v4205 = vunpack.c.h.b16 %v1808
        %v4206 = vunpack.c.l.b16 %v1809
        %v4207 = vunpack.c.h.b16 %v1809
        %v4208 = vunpack.c.l.b16 %v1810
        %v4209 = vunpack.c.h.b16 %v1810
        %v4210 = vunpack.c.l.b16 %v1811
        %v4211 = vunpack.c.h.b16 %v1811
        %v4212 = vunpack.c.l.b16 %v1812
        %v4213 = vunpack.c.h.b16 %v1812
        %v4214 = vunpack.c.l.b16 %v1813
        %v4215 = vunpack.c.h.b16 %v1813
        %v4216 = vunpack.c.l.b16 %v1814
        %v4217 = vunpack.c.h.b16 %v1814
        %v4218 = vunpack.c.l.b16 %v1815
        %v4219 = vunpack.c.h.b16 %v1815
        %v4220 = vunpack.c.l.b16 %v1816
        %v4221 = vunpack.c.h.b16 %v1816
        %v4222 = vunpack.c.l.b16 %v1817
        %v4223 = vunpack.c.h.b16 %v1817
        %v4224 = vunpack.c.l.b16 %v1818
        %v4225 = vunpack.c.h.b16 %v1818
        %v4226 = vunpack.c.l.b16 %v1819
        %v4227 = vunpack.c.h.b16 %v1819
        %v4228 = vunpack.c.l.b16 %v1820
        %v4229 = vunpack.c.h.b16 %v1820
        %v4230 = vunpack.c.l.b16 %v1821
        %v4231 = vunpack.c.h.b16 %v1821
        %v4232 = vunpack.c.l.b16 %v1822
        %v4233 = vunpack.c.h.b16 %v1822
        %v4234 = vunpack.c.l.b16 %v1823
        %v4235 = vunpack.c.h.b16 %v1823
        %v4236 = vunpack.c.l.b16 %v1824
        %v4237 = vunpack.c.h.b16 %v1824
        %v4238 = vunpack.c.l.b16 %v1825
        %v4239 = vunpack.c.h.b16 %v1825
        %v4240 = vunpack.c.l.b16 %v1826
        %v4241 = vunpack.c.h.b16 %v1826
        %v4242 = vunpack.c.l.b16 %v1827
        %v4243 = vunpack.c.h.b16 %v1827
        %v4244 = vunpack.c.l.b16 %v1828
        %v4245 = vunpack.c.h.b16 %v1828
        %v4246 = vunpack.c.l.b16 %v1829
        %v4247 = vunpack.c.h.b16 %v1829
        %v4248 = vunpack.c.l.b16 %v1830
        %v4249 = vunpack.c.h.b16 %v1830
        %v4250 = vunpack.c.l.b16 %v1831
        %v4251 = vunpack.c.h.b16 %v1831
        %v4252 = vunpack.c.l.b16 %v1832
        %v4253 = vunpack.c.h.b16 %v1832
        %v4254 = vunpack.c.l.b16 %v1833
        %v4255 = vunpack.c.h.b16 %v1833
        %v4256 = vunpack.c.l.b16 %v1834
        %v4257 = vunpack.c.h.b16 %v1834
        %v4258 = vunpack.c.l.b16 %v1835
        %v4259 = vunpack.c.h.b16 %v1835
        %v4260 = vunpack.c.l.b16 %v1836
        %v4261 = vunpack.c.h.b16 %v1836
        %v4262 = vunpack.c.l.b16 %v1837
        %v4263 = vunpack.c.h.b16 %v1837
        %v4264 = vunpack.c.l.b16 %v1838
        %v4265 = vunpack.c.h.b16 %v1838
        %v4266 = vunpack.c.l.b16 %v1839
        %v4267 = vunpack.c.h.b16 %v1839
        %v4268 = vunpack.c.l.b16 %v1840
        %v4269 = vunpack.c.h.b16 %v1840
        %v4270 = vunpack.c.l.b16 %v1841
        %v4271 = vunpack.c.h.b16 %v1841
        %v4272 = vunpack.c.l.b16 %v1842
        %v4273 = vunpack.c.h.b16 %v1842
        %v4274 = vunpack.c.l.b16 %v1843
        %v4275 = vunpack.c.h.b16 %v1843
        %v4276 = vunpack.c.l.b16 %v1844
        %v4277 = vunpack.c.h.b16 %v1844
        %v4278 = vunpack.c.l.b16 %v1845
        %v4279 = vunpack.c.h.b16 %v1845
        %v4280 = vunpack.c.l.b16 %v1846
        %v4281 = vunpack.c.h.b16 %v1846
        %v4282 = vunpack.c.l.b16 %v1847
        %v4283 = vunpack.c.h.b16 %v1847
        %v4284 = vunpack.c.l.b16 %v1848
        %v4285 = vunpack.c.h.b16 %v1848
        %v4286 = vunpack.c.l.b16 %v1849
        %v4287 = vunpack.c.h.b16 %v1849
        %v4288 = vunpack.c.l.b16 %v1850
        %v4289 = vunpack.c.h.b16 %v1850
        %v4290 = vunpack.c.l.b16 %v1851
        %v4291 = vunpack.c.h.b16 %v1851
        %v4292 = vunpack.c.l.b16 %v1852
        %v4293 = vunpack.c.h.b16 %v1852
        %v4294 = vunpack.c.l.b16 %v1853
        %v4295 = vunpack.c.h.b16 %v1853
        %v4296 = vunpack.c.l.b16 %v1854
        %v4297 = vunpack.c.h.b16 %v1854
        %v4298 = vunpack.c.l.b16 %v1855
        %v4299 = vunpack.c.h.b16 %v1855
        %v4300 = vunpack.c.l.b16 %v1856
        %v4301 = vunpack.c.h.b16 %v1856
        %v4302 = vunpack.c.l.b16 %v1857
        %v4303 = vunpack.c.h.b16 %v1857
        %v4304 = vunpack.c.l.b16 %v1858
        %v4305 = vunpack.c.h.b16 %v1858
        %v4306 = vunpack.c.l.b16 %v1859
        %v4307 = vunpack.c.h.b16 %v1859
        %v4308 = vunpack.c.l.b16 %v1860
        %v4309 = vunpack.c.h.b16 %v1860
        %v4310 = vunpack.c.l.b16 %v1861
        %v4311 = vunpack.c.h.b16 %v1861
        %v4312 = vunpack.c.l.b16 %v1862
        %v4313 = vunpack.c.h.b16 %v1862
        %v4314 = vunpack.c.l.b16 %v1863
        %v4315 = vunpack.c.h.b16 %v1863
        %v4316 = vunpack.c.l.b16 %v1864
        %v4317 = vunpack.c.h.b16 %v1864
        %v4318 = vunpack.c.l.b16 %v1865
        %v4319 = vunpack.c.h.b16 %v1865
        %v4320 = vunpack.c.l.b16 %v1866
        %v4321 = vunpack.c.h.b16 %v1866
        %v4322 = vunpack.c.l.b16 %v1867
        %v4323 = vunpack.c.h.b16 %v1867
        %v4324 = vunpack.c.l.b16 %v1868
        %v4325 = vunpack.c.h.b16 %v1868
        %v4326 = vunpack.c.l.b16 %v1869
        %v4327 = vunpack.c.h.b16 %v1869
        %v4328 = vunpack.c.l.b16 %v1870
        %v4329 = vunpack.c.h.b16 %v1870
        %v4330 = vunpack.c.l.b16 %v1871
        %v4331 = vunpack.c.h.b16 %v1871
        %v4332 = vunpack.c.l.b16 %v1872
        %v4333 = vunpack.c.h.b16 %v1872
        %v4334 = vunpack.c.l.b16 %v1873
        %v4335 = vunpack.c.h.b16 %v1873
        %v4336 = vunpack.c.l.b16 %v1874
        %v4337 = vunpack.c.h.b16 %v1874
        %v4338 = vunpack.c.l.b16 %v1875
        %v4339 = vunpack.c.h.b16 %v1875
        %v4340 = vunpack.c.l.b16 %v1876
        %v4341 = vunpack.c.h.b16 %v1876
        %v4342 = vunpack.c.l.b16 %v1877
        %v4343 = vunpack.c.h.b16 %v1877
        %v4344 = vunpack.c.l.b16 %v1878
        %v4345 = vunpack.c.h.b16 %v1878
        %v4346 = vunpack.c.l.b16 %v1879
        %v4347 = vunpack.c.h.b16 %v1879
        %v4348 = vunpack.c.l.b16 %v1880
        %v4349 = vunpack.c.h.b16 %v1880
        %v4350 = vunpack.c.l.b16 %v1881
        %v4351 = vunpack.c.h.b16 %v1881
        %v4352 = vunpack.c.l.b16 %v1882
        %v4353 = vunpack.c.h.b16 %v1882
        %v4354 = vunpack.c.l.b16 %v1883
        %v4355 = vunpack.c.h.b16 %v1883
        %v4356 = vunpack.c.l.b16 %v1884
        %v4357 = vunpack.c.h.b16 %v1884
        %v4358 = vunpack.c.l.b16 %v1885
        %v4359 = vunpack.c.h.b16 %v1885
        %v4360 = vunpack.c.l.b16 %v1886
        %v4361 = vunpack.c.h.b16 %v1886
        %v4362 = vunpack.c.l.b16 %v1887
        %v4363 = vunpack.c.h.b16 %v1887
        %v4364 = vunpack.c.l.b16 %v1888
        %v4365 = vunpack.c.h.b16 %v1888
        %v4366 = vunpack.c.l.b16 %v1889
        %v4367 = vunpack.c.h.b16 %v1889
        %v4368 = vunpack.c.l.b16 %v1890
        %v4369 = vunpack.c.h.b16 %v1890
        %v4370 = vunpack.c.l.b16 %v1891
        %v4371 = vunpack.c.h.b16 %v1891
        %v4372 = vunpack.c.l.b16 %v1892
        %v4373 = vunpack.c.h.b16 %v1892
        %v4374 = vunpack.c.l.b16 %v1893
        %v4375 = vunpack.c.h.b16 %v1893
        %v4376 = vunpack.c.l.b16 %v1894
        %v4377 = vunpack.c.h.b16 %v1894
        %v4378 = vunpack.c.l.b16 %v1895
        %v4379 = vunpack.c.h.b16 %v1895
        %v4380 = vunpack.c.l.b16 %v1896
        %v4381 = vunpack.c.h.b16 %v1896
        %v4382 = vunpack.c.l.b16 %v1897
        %v4383 = vunpack.c.h.b16 %v1897
        %v4384 = vunpack.c.l.b16 %v1898
        %v4385 = vunpack.c.h.b16 %v1898
        %v4386 = vunpack.c.l.b16 %v1899
        %v4387 = vunpack.c.h.b16 %v1899
        %v4388 = vunpack.c.l.b16 %v1900
        %v4389 = vunpack.c.h.b16 %v1900
        %v4390 = vunpack.c.l.b16 %v1901
        %v4391 = vunpack.c.h.b16 %v1901
        %v4392 = vunpack.c.l.b16 %v1902
        %v4393 = vunpack.c.h.b16 %v1902
        %v4394 = vunpack.c.l.b16 %v1903
        %v4395 = vunpack.c.h.b16 %v1903
        %v4396 = vunpack.c.l.b16 %v1904
        %v4397 = vunpack.c.h.b16 %v1904
        %v4398 = vunpack.c.l.b16 %v1905
        %v4399 = vunpack.c.h.b16 %v1905
        %v4400 = vunpack.c.l.b16 %v1906
        %v4401 = vunpack.c.h.b16 %v1906
        %v4402 = vunpack.c.l.b16 %v1907
        %v4403 = vunpack.c.h.b16 %v1907
        %v4404 = vunpack.c.l.b16 %v1908
        %v4405 = vunpack.c.h.b16 %v1908
        %v4406 = vunpack.c.l.b16 %v1909
        %v4407 = vunpack.c.h.b16 %v1909
        %v4408 = vunpack.c.l.b16 %v1910
        %v4409 = vunpack.c.h.b16 %v1910
        %v4410 = vunpack.c.l.b16 %v1911
        %v4411 = vunpack.c.h.b16 %v1911
        %v4412 = vunpack.c.l.b16 %v1912
        %v4413 = vunpack.c.h.b16 %v1912
        %v4414 = vunpack.c.l.b16 %v1913
        %v4415 = vunpack.c.h.b16 %v1913
        %v4416 = vunpack.c.l.b16 %v1914
        %v4417 = vunpack.c.h.b16 %v1914
        %v4418 = vunpack.c.l.b16 %v1915
        %v4419 = vunpack.c.h.b16 %v1915
        %v4420 = vunpack.c.l.b16 %v1916
        %v4421 = vunpack.c.h.b16 %v1916
        %v4422 = vunpack.c.l.b16 %v1917
        %v4423 = vunpack.c.h.b16 %v1917
        %v4424 = vunpack.c.l.b16 %v1918
        %v4425 = vunpack.c.h.b16 %v1918
        %v4426 = vunpack.c.l.b16 %v1919
        %v4427 = vunpack.c.h.b16 %v1919
        %v4428 = vunpack.c.l.b16 %v1920
        %v4429 = vunpack.c.h.b16 %v1920
        %v4430 = vunpack.c.l.b16 %v1921
        %v4431 = vunpack.c.h.b16 %v1921
        %v4432 = vunpack.c.l.b16 %v1922
        %v4433 = vunpack.c.h.b16 %v1922
        %v4434 = vunpack.c.l.b16 %v1923
        %v4435 = vunpack.c.h.b16 %v1923
        %v4436 = vunpack.c.l.b16 %v1924
        %v4437 = vunpack.c.h.b16 %v1924
        %v4438 = vunpack.c.l.b16 %v1925
        %v4439 = vunpack.c.h.b16 %v1925
        %v4440 = vunpack.c.l.b16 %v1926
        %v4441 = vunpack.c.h.b16 %v1926
        %v4442 = vunpack.c.l.b16 %v1927
        %v4443 = vunpack.c.h.b16 %v1927
        %v4444 = vunpack.c.l.b16 %v1928
        %v4445 = vunpack.c.h.b16 %v1928
        %v4446 = vunpack.c.l.b16 %v1929
        %v4447 = vunpack.c.h.b16 %v1929
        %v4448 = vunpack.c.l.b16 %v1930
        %v4449 = vunpack.c.h.b16 %v1930
        %v4450 = vunpack.c.l.b16 %v1931
        %v4451 = vunpack.c.h.b16 %v1931
        %v4452 = vunpack.c.l.b16 %v1932
        %v4453 = vunpack.c.h.b16 %v1932
        %v4454 = vunpack.c.l.b16 %v1933
        %v4455 = vunpack.c.h.b16 %v1933
        %v4456 = vunpack.c.l.b16 %v1934
        %v4457 = vunpack.c.h.b16 %v1934
        %v4458 = vunpack.c.l.b16 %v1935
        %v4459 = vunpack.c.h.b16 %v1935
        %v4460 = vunpack.c.l.b16 %v1936
        %v4461 = vunpack.c.h.b16 %v1936
        %v4462 = vunpack.c.l.b16 %v1937
        %v4463 = vunpack.c.h.b16 %v1937
        %v4464 = vunpack.c.l.b16 %v1938
        %v4465 = vunpack.c.h.b16 %v1938
        %v4466 = vunpack.c.l.b16 %v1939
        %v4467 = vunpack.c.h.b16 %v1939
        %v4468 = vunpack.c.l.b16 %v1940
        %v4469 = vunpack.c.h.b16 %v1940
        %v4470 = vunpack.c.l.b16 %v1941
        %v4471 = vunpack.c.h.b16 %v1941
        %v4472 = vunpack.c.l.b16 %v1942
        %v4473 = vunpack.c.h.b16 %v1942
        %v4474 = vunpack.c.l.b16 %v1943
        %v4475 = vunpack.c.h.b16 %v1943
        %v4476 = vunpack.c.l.b16 %v1944
        %v4477 = vunpack.c.h.b16 %v1944
        %v4478 = vunpack.c.l.b16 %v1945
        %v4479 = vunpack.c.h.b16 %v1945
        %v4480 = vunpack.c.l.b16 %v1946
        %v4481 = vunpack.c.h.b16 %v1946
        %v4482 = vunpack.c.l.b16 %v1947
        %v4483 = vunpack.c.h.b16 %v1947
        %v4484 = vunpack.c.l.b16 %v1948
        %v4485 = vunpack.c.h.b16 %v1948
        %v4486 = vunpack.c.l.b16 %v1949
        %v4487 = vunpack.c.h.b16 %v1949
        %v4488 = vunpack.c.l.b16 %v1950
        %v4489 = vunpack.c.h.b16 %v1950
        %v4490 = vunpack.c.l.b16 %v1951
        %v4491 = vunpack.c.h.b16 %v1951
        %v4492 = vunpack.c.l.b16 %v1952
        %v4493 = vunpack.c.h.b16 %v1952
        %v4494 = vunpack.c.l.b16 %v1953
        %v4495 = vunpack.c.h.b16 %v1953
        %v4496 = vunpack.c.l.b16 %v1954
        %v4497 = vunpack.c.h.b16 %v1954
        %v4498 = vunpack.c.l.b16 %v1955
        %v4499 = vunpack.c.h.b16 %v1955
        %v4500 = vunpack.c.l.b16 %v1956
        %v4501 = vunpack.c.h.b16 %v1956
        %v4502 = vunpack.c.l.b16 %v1957
        %v4503 = vunpack.c.h.b16 %v1957
        %v4504 = vunpack.c.l.b16 %v1958
        %v4505 = vunpack.c.h.b16 %v1958
        %v4506 = vunpack.c.l.b16 %v1959
        %v4507 = vunpack.c.h.b16 %v1959
        %v4508 = vunpack.c.l.b16 %v1960
        %v4509 = vunpack.c.h.b16 %v1960
        %v4510 = vunpack.c.l.b16 %v1961
        %v4511 = vunpack.c.h.b16 %v1961
        %v4512 = vunpack.c.l.b16 %v1962
        %v4513 = vunpack.c.h.b16 %v1962
        %v4514 = vunpack.c.l.b16 %v1963
        %v4515 = vunpack.c.h.b16 %v1963
        %v4516 = vunpack.c.l.b16 %v1964
        %v4517 = vunpack.c.h.b16 %v1964
        %v4518 = vunpack.c.l.b16 %v1965
        %v4519 = vunpack.c.h.b16 %v1965
        %v4520 = vunpack.c.l.b16 %v1966
        %v4521 = vunpack.c.h.b16 %v1966
        %v4522 = vunpack.c.l.b16 %v1967
        %v4523 = vunpack.c.h.b16 %v1967
        %v4524 = vunpack.c.l.b16 %v1968
        %v4525 = vunpack.c.h.b16 %v1968
        %v4526 = vunpack.c.l.b16 %v1969
        %v4527 = vunpack.c.h.b16 %v1969
        %v4528 = vunpack.c.l.b16 %v1970
        %v4529 = vunpack.c.h.b16 %v1970
        %v4530 = vunpack.c.l.b16 %v1971
        %v4531 = vunpack.c.h.b16 %v1971
        %v4532 = vunpack.c.l.b16 %v1972
        %v4533 = vunpack.c.h.b16 %v1972
        %v4534 = vunpack.c.l.b16 %v1973
        %v4535 = vunpack.c.h.b16 %v1973
        %v4536 = vunpack.c.l.b16 %v1974
        %v4537 = vunpack.c.h.b16 %v1974
        %v4538 = vunpack.c.l.b16 %v1975
        %v4539 = vunpack.c.h.b16 %v1975
        %v4540 = vunpack.c.l.b16 %v1976
        %v4541 = vunpack.c.h.b16 %v1976
        %v4542 = vunpack.c.l.b16 %v1977
        %v4543 = vunpack.c.h.b16 %v1977
        %v4544 = vunpack.c.l.b16 %v1978
        %v4545 = vunpack.c.h.b16 %v1978
        %v4546 = vunpack.c.l.b16 %v1979
        %v4547 = vunpack.c.h.b16 %v1979
        %v4548 = vunpack.c.l.b16 %v1980
        %v4549 = vunpack.c.h.b16 %v1980
        %v4550 = vunpack.c.l.b16 %v1981
        %v4551 = vunpack.c.h.b16 %v1981
        %v4552 = vunpack.c.l.b16 %v1982
        %v4553 = vunpack.c.h.b16 %v1982
        %v4554 = vunpack.c.l.b16 %v1983
        %v4555 = vunpack.c.h.b16 %v1983
        %v4556 = vunpack.c.l.b16 %v1984
        %v4557 = vunpack.c.h.b16 %v1984
        %v4558 = vunpack.c.l.b16 %v1985
        %v4559 = vunpack.c.h.b16 %v1985
        %v4560 = vunpack.c.l.b16 %v1986
        %v4561 = vunpack.c.h.b16 %v1986
        %v4562 = vunpack.c.l.b16 %v1987
        %v4563 = vunpack.c.h.b16 %v1987
        %v4564 = vunpack.c.l.b16 %v1988
        %v4565 = vunpack.c.h.b16 %v1988
        %v4566 = vunpack.c.l.b16 %v1989
        %v4567 = vunpack.c.h.b16 %v1989
        %v4568 = vunpack.c.l.b16 %v1990
        %v4569 = vunpack.c.h.b16 %v1990
        %v4570 = vunpack.c.l.b16 %v1991
        %v4571 = vunpack.c.h.b16 %v1991
        %v4572 = vunpack.c.l.b16 %v1992
        %v4573 = vunpack.c.h.b16 %v1992
        %v4574 = vunpack.c.l.b16 %v1993
        %v4575 = vunpack.c.h.b16 %v1993
        %v4576 = vunpack.c.l.b16 %v1994
        %v4577 = vunpack.c.h.b16 %v1994
        %v4578 = vunpack.c.l.b16 %v1995
        %v4579 = vunpack.c.h.b16 %v1995
        %v4580 = vunpack.c.l.b16 %v1996
        %v4581 = vunpack.c.h.b16 %v1996
        %v4582 = vunpack.c.l.b16 %v1997
        %v4583 = vunpack.c.h.b16 %v1997
        %v4584 = vunpack.c.l.b16 %v1998
        %v4585 = vunpack.c.h.b16 %v1998
        %v4586 = vunpack.c.l.b16 %v1999
        %v4587 = vunpack.c.h.b16 %v1999
        %v4588 = vunpack.c.l.b16 %v2000
        %v4589 = vunpack.c.h.b16 %v2000
        %v4590 = vunpack.c.l.b16 %v2001
        %v4591 = vunpack.c.h.b16 %v2001
        %v4592 = vunpack.c.l.b16 %v2002
        %v4593 = vunpack.c.h.b16 %v2002
        %v4594 = vunpack.c.l.b16 %v2003
        %v4595 = vunpack.c.h.b16 %v2003
        %v4596 = vunpack.c.l.b16 %v2004
        %v4597 = vunpack.c.h.b16 %v2004
        %v4598 = vunpack.c.l.b16 %v2005
        %v4599 = vunpack.c.h.b16 %v2005
        %v4600 = vunpack.c.l.b16 %v2006
        %v4601 = vunpack.c.h.b16 %v2006
        %v4602 = vunpack.c.l.b16 %v2007
        %v4603 = vunpack.c.h.b16 %v2007
        %v4604 = vunpack.c.l.b16 %v2008
        %v4605 = vunpack.c.h.b16 %v2008
        %v4606 = vunpack.c.l.b16 %v2009
        %v4607 = vunpack.c.h.b16 %v2009
        %v4608 = vunpack.c.l.b16 %v2010
        %v4609 = vunpack.c.h.b16 %v2010
        %v4610 = vunpack.c.l.b16 %v2011
        %v4611 = vunpack.c.h.b16 %v2011
        %v4612 = vunpack.c.l.b16 %v2012
        %v4613 = vunpack.c.h.b16 %v2012
        %v4614 = vunpack.c.l.b16 %v2013
        %v4615 = vunpack.c.h.b16 %v2013
        %v4616 = vunpack.c.l.b16 %v2014
        %v4617 = vunpack.c.h.b16 %v2014
        %v4618 = vunpack.c.l.b16 %v2015
        %v4619 = vunpack.c.h.b16 %v2015
        %v4620 = vunpack.c.l.b16 %v2016
        %v4621 = vunpack.c.h.b16 %v2016
        %v4622 = vunpack.c.l.b16 %v2017
        %v4623 = vunpack.c.h.b16 %v2017
        %v4624 = vunpack.c.l.b16 %v2018
        %v4625 = vunpack.c.h.b16 %v2018
        %v4626 = vunpack.c.l.b16 %v2019
        %v4627 = vunpack.c.h.b16 %v2019
        %v4628 = vunpack.c.l.b16 %v2020
        %v4629 = vunpack.c.h.b16 %v2020
        %v4630 = vunpack.c.l.b16 %v2021
        %v4631 = vunpack.c.h.b16 %v2021
        %v4632 = vunpack.c.l.b16 %v2022
        %v4633 = vunpack.c.h.b16 %v2022
        %v4634 = vunpack.c.l.b16 %v2023
        %v4635 = vunpack.c.h.b16 %v2023
        %v4636 = vunpack.c.l.b16 %v2024
        %v4637 = vunpack.c.h.b16 %v2024
        %v4638 = vunpack.c.l.b16 %v2025
        %v4639 = vunpack.c.h.b16 %v2025
        %v4640 = vunpack.c.l.b16 %v2026
        %v4641 = vunpack.c.h.b16 %v2026
        %v4642 = vunpack.c.l.b16 %v2027
        %v4643 = vunpack.c.h.b16 %v2027
        %v4644 = vunpack.c.l.b16 %v2028
        %v4645 = vunpack.c.h.b16 %v2028
        %v4646 = vunpack.c.l.b16 %v2029
        %v4647 = vunpack.c.h.b16 %v2029
        %v4648 = vunpack.c.l.b16 %v2030
        %v4649 = vunpack.c.h.b16 %v2030
        %v4650 = vunpack.c.l.b16 %v2031
        %v4651 = vunpack.c.h.b16 %v2031
        %v4652 = vunpack.c.l.b16 %v2032
        %v4653 = vunpack.c.h.b16 %v2032
        %v4654 = vunpack.c.l.b16 %v2033
        %v4655 = vunpack.c.h.b16 %v2033
        %v4656 = vunpack.c.l.b16 %v2034
        %v4657 = vunpack.c.h.b16 %v2034
        %v4658 = vunpack.c.l.b16 %v2035
        %v4659 = vunpack.c.h.b16 %v2035
        %v4660 = vunpack.c.l.b16 %v2036
        %v4661 = vunpack.c.h.b16 %v2036
        %v4662 = vunpack.c.l.b16 %v2037
        %v4663 = vunpack.c.h.b16 %v2037
        %v4664 = vunpack.c.l.b16 %v2038
        %v4665 = vunpack.c.h.b16 %v2038
        %v4666 = vunpack.c.l.b16 %v2039
        %v4667 = vunpack.c.h.b16 %v2039
        %v4668 = vunpack.c.l.b16 %v2040
        %v4669 = vunpack.c.h.b16 %v2040
        %v4670 = vunpack.c.l.b16 %v2041
        %v4671 = vunpack.c.h.b16 %v2041
        %v4672 = vunpack.c.l.b16 %v2042
        %v4673 = vunpack.c.h.b16 %v2042
        %v4674 = vunpack.c.l.b16 %v2043
        %v4675 = vunpack.c.h.b16 %v2043
        %v4676 = vunpack.c.l.b16 %v2044
        %v4677 = vunpack.c.h.b16 %v2044
        %v4678 = vunpack.c.l.b16 %v2045
        %v4679 = vunpack.c.h.b16 %v2045
        %v4680 = vunpack.c.l.b16 %v2046
        %v4681 = vunpack.c.h.b16 %v2046
        %v4682 = vunpack.c.l.b16 %v2047
        %v4683 = vunpack.c.h.b16 %v2047
        %v4684 = vunpack.c.l.b16 %v2048
        %v4685 = vunpack.c.h.b16 %v2048
        %v4686 = vunpack.c.l.b16 %v2049
        %v4687 = vunpack.c.h.b16 %v2049
        %v4688 = vunpack.c.l.b16 %v2050
        %v4689 = vunpack.c.h.b16 %v2050
        %v4690 = vunpack.c.l.b16 %v2051
        %v4691 = vunpack.c.h.b16 %v2051
        %v4692 = vunpack.c.l.b16 %v2052
        %v4693 = vunpack.c.h.b16 %v2052
        %v4694 = vunpack.c.l.b16 %v2053
        %v4695 = vunpack.c.h.b16 %v2053
        %v4696 = vunpack.c.l.b16 %v2054
        %v4697 = vunpack.c.h.b16 %v2054
        %v4698 = vunpack.c.l.b16 %v2055
        %v4699 = vunpack.c.h.b16 %v2055
        %v4700 = vunpack.c.l.b16 %v2056
        %v4701 = vunpack.c.h.b16 %v2056
        %v4702 = vunpack.c.l.b16 %v2057
        %v4703 = vunpack.c.h.b16 %v2057
        %v4704 = vunpack.c.l.b16 %v2058
        %v4705 = vunpack.c.h.b16 %v2058
        %v4706 = vunpack.c.l.b16 %v2059
        %v4707 = vunpack.c.h.b16 %v2059
        %v4708 = vunpack.c.l.b16 %v2060
        %v4709 = vunpack.c.h.b16 %v2060
        %v4710 = vunpack.c.l.b16 %v2061
        %v4711 = vunpack.c.h.b16 %v2061
        %v4712 = vunpack.c.l.b16 %v2062
        %v4713 = vunpack.c.h.b16 %v2062
        %v4714 = vunpack.c.l.b16 %v2063
        %v4715 = vunpack.c.h.b16 %v2063
        %v4716 = vunpack.c.l.b16 %v2064
        %v4717 = vunpack.c.h.b16 %v2064
        %v4718 = vunpack.c.l.b16 %v2065
        %v4719 = vunpack.c.h.b16 %v2065
        %v4720 = vunpack.c.l.b16 %v2066
        %v4721 = vunpack.c.h.b16 %v2066
        %v4722 = vunpack.c.l.b16 %v2067
        %v4723 = vunpack.c.h.b16 %v2067
        %v4724 = vunpack.c.l.b16 %v2068
        %v4725 = vunpack.c.h.b16 %v2068
        %v4726 = vunpack.c.l.b16 %v2069
        %v4727 = vunpack.c.h.b16 %v2069
        %v4728 = vunpack.c.l.b16 %v2070
        %v4729 = vunpack.c.h.b16 %v2070
        %v4730 = vunpack.c.l.b16 %v2071
        %v4731 = vunpack.c.h.b16 %v2071
        %v4732 = vunpack.c.l.b16 %v2072
        %v4733 = vunpack.c.h.b16 %v2072
        %v4734 = vunpack.c.l.b16 %v2073
        %v4735 = vunpack.c.h.b16 %v2073
        %v4736 = vunpack.c.l.b16 %v2074
        %v4737 = vunpack.c.h.b16 %v2074
        %v4738 = vunpack.c.l.b16 %v2075
        %v4739 = vunpack.c.h.b16 %v2075
        %v4740 = vunpack.c.l.b16 %v2076
        %v4741 = vunpack.c.h.b16 %v2076
        %v4742 = vunpack.c.l.b16 %v2077
        %v4743 = vunpack.c.h.b16 %v2077
        %v4744 = vunpack.c.l.b16 %v2078
        %v4745 = vunpack.c.h.b16 %v2078
        %v4746 = vunpack.c.l.b16 %v2079
        %v4747 = vunpack.c.h.b16 %v2079
        %v4748 = vunpack.c.l.b16 %v2080
        %v4749 = vunpack.c.h.b16 %v2080
        %v4750 = vunpack.c.l.b16 %v2081
        %v4751 = vunpack.c.h.b16 %v2081
        %v4752 = vunpack.c.l.b16 %v2082
        %v4753 = vunpack.c.h.b16 %v2082
        %v4754 = vunpack.c.l.b16 %v2083
        %v4755 = vunpack.c.h.b16 %v2083
        %v4756 = vunpack.c.l.b16 %v2084
        %v4757 = vunpack.c.h.b16 %v2084
        %v4758 = vunpack.c.l.b16 %v2085
        %v4759 = vunpack.c.h.b16 %v2085
        %v4760 = vunpack.c.l.b16 %v2086
        %v4761 = vunpack.c.h.b16 %v2086
        %v4762 = vunpack.c.l.b16 %v2087
        %v4763 = vunpack.c.h.b16 %v2087
        %v4764 = vunpack.c.l.b16 %v2088
        %v4765 = vunpack.c.h.b16 %v2088
        %v4766 = vunpack.c.l.b16 %v2089
        %v4767 = vunpack.c.h.b16 %v2089
        %v4768 = vunpack.c.l.b16 %v2090
        %v4769 = vunpack.c.h.b16 %v2090
        %v4770 = vunpack.c.l.b16 %v2091
        %v4771 = vunpack.c.h.b16 %v2091
        %v4772 = vunpack.c.l.b16 %v2092
        %v4773 = vunpack.c.h.b16 %v2092
        %v4774 = vunpack.c.l.b16 %v2093
        %v4775 = vunpack.c.h.b16 %v2093
        %v4776 = vunpack.c.l.b16 %v2094
        %v4777 = vunpack.c.h.b16 %v2094
        %v4778 = vunpack.c.l.b16 %v2095
        %v4779 = vunpack.c.h.b16 %v2095
        %v4780 = vunpack.c.l.b16 %v2096
        %v4781 = vunpack.c.h.b16 %v2096
        %v4782 = vunpack.c.l.b16 %v2097
        %v4783 = vunpack.c.h.b16 %v2097
        %v4784 = vunpack.c.l.b16 %v2098
        %v4785 = vunpack.c.h.b16 %v2098
        %v4786 = vunpack.c.l.b16 %v2099
        %v4787 = vunpack.c.h.b16 %v2099
        %v4788 = vpack.c.b16 %v3078, %v3060
        %v4789 = vpack.c.b16 %v3079, %v3061
        %v4790 = vpack.c.b16 %v3080, %v3062
        %v4791 = vpack.c.b16 %v3081, %v3063
        %v4792 = vpack.c.b16 %v3082, %v3064
        %v4793 = vpack.c.b16 %v3083, %v3065
        %v4794 = vpack.c.b16 %v3084, %v3066
        %v4795 = vpack.c.b16 %v3085, %v3067
        %v4796 = vpack.c.b16 %v3086, %v3068
        %v4797 = vpack.c.b16 %v3087, %v3069
        %v4798 = vpack.c.b16 %v3088, %v3070
        %v4799 = vpack.c.b16 %v3089, %v3071
        %v4800 = vpack.c.b16 %v3090, %v3072
        %v4801 = vpack.c.b16 %v3091, %v3073
        %v4802 = vpack.c.b16 %v3092, %v3074
        %v4803 = vpack.c.b16 %v3093, %v3075
        %v4804 = vpack.c.b16 %v3094, %v3076
        %v4805 = vpack.c.b16 %v3095, %v3077
        %v4806 = vpack.c.b16 %v3114, %v3096
        %v4807 = vpack.c.b16 %v3115, %v3097
        %v4808 = vpack.c.b16 %v3116, %v3098
        %v4809 = vpack.c.b16 %v3117, %v3099
        %v4810 = vpack.c.b16 %v3118, %v3100
        %v4811 = vpack.c.b16 %v3119, %v3101
        %v4812 = vpack.c.b16 %v3120, %v3102
        %v4813 = vpack.c.b16 %v3121, %v3103
        %v4814 = vpack.c.b16 %v3122, %v3104
        %v4815 = vpack.c.b16 %v3123, %v3105
        %v4816 = vpack.c.b16 %v3124, %v3106
        %v4817 = vpack.c.b16 %v3125, %v3107
        %v4818 = vpack.c.b16 %v3126, %v3108
        %v4819 = vpack.c.b16 %v3127, %v3109
        %v4820 = vpack.c.b16 %v3128, %v3110
        %v4821 = vpack.c.b16 %v3129, %v3111
        %v4822 = vpack.c.b16 %v3130, %v3112
        %v4823 = vpack.c.b16 %v3131, %v3113
        %v4824 = vpack.c.b16 %v3150, %v3132
        %v4825 = vpack.c.b16 %v3151, %v3133
        %v4826 = vpack.c.b16 %v3152, %v3134
        %v4827 = vpack.c.b16 %v3153, %v3135
        %v4828 = vpack.c.b16 %v3154, %v3136
        %v4829 = vpack.c.b16 %v3155, %v3137
        %v4830 = vpack.c.b16 %v3156, %v3138
        %v4831 = vpack.c.b16 %v3157, %v3139
        %v4832 = vpack.c.b16 %v3158, %v3140
        %v4833 = vpack.c.b16 %v3159, %v3141
        %v4834 = vpack.c.b16 %v3160, %v3142
        %v4835 = vpack.c.b16 %v3161, %v3143
        %v4836 = vpack.c.b16 %v3162, %v3144
        %v4837 = vpack.c.b16 %v3163, %v3145
        %v4838 = vpack.c.b16 %v3164, %v3146
        %v4839 = vpack.c.b16 %v3165, %v3147
        %v4840 = vpack.c.b16 %v3166, %v3148
        %v4841 = vpack.c.b16 %v3167, %v3149
        %v4842 = vpack.c.b16 %v3186, %v3168
        %v4843 = vpack.c.b16 %v3187, %v3169
        %v4844 = vpack.c.b16 %v3188, %v3170
        %v4845 = vpack.c.b16 %v3189, %v3171
        %v4846 = vpack.c.b16 %v3190, %v3172
        %v4847 = vpack.c.b16 %v3191, %v3173
        %v4848 = vpack.c.b16 %v3192, %v3174
        %v4849 = vpack.c.b16 %v3193, %v3175
        %v4850 = vpack.c.b16 %v3194, %v3176
        %v4851 = vpack.c.b16 %v3195, %v3177
        %v4852 = vpack.c.b16 %v3196, %v3178
        %v4853 = vpack.c.b16 %v3197, %v3179
        %v4854 = vpack.c.b16 %v3198, %v3180
        %v4855 = vpack.c.b16 %v3199, %v3181
        %v4856 = vpack.c.b16 %v3200, %v3182
        %v4857 = vpack.c.b16 %v3201, %v3183
        %v4858 = vpack.c.b16 %v3202, %v3184
        %v4859 = vpack.c.b16 %v3203, %v3185
        %v4860 = vpack.c.b16 %v3222, %v3204
        %v4861 = vpack.c.b16 %v3223, %v3205
        %v4862 = vpack.c.b16 %v3224, %v3206
        %v4863 = vpack.c.b16 %v3225, %v3207
        %v4864 = vpack.c.b16 %v3226, %v3208
        %v4865 = vpack.c.b16 %v3227, %v3209
        %v4866 = vpack.c.b16 %v3228, %v3210
        %v4867 = vpack.c.b16 %v3229, %v3211
        %v4868 = vpack.c.b16 %v3230, %v3212
        %v4869 = vpack.c.b16 %v3231, %v3213
        %v4870 = vpack.c.b16 %v3232, %v3214
        %v4871 = vpack.c.b16 %v3233, %v3215
        %v4872 = vpack.c.b16 %v3234, %v3216
        %v4873 = vpack.c.b16 %v3235, %v3217
        %v4874 = vpack.c.b16 %v3236, %v3218
        %v4875 = vpack.c.b16 %v3237, %v3219
        %v4876 = vpack.c.b16 %v3238, %v3220
        %v4877 = vpack.c.b16 %v3239, %v3221
        %v4878 = vpack.c.b16 %v3258, %v3240
        %v4879 = vpack.c.b16 %v3259, %v3241
        %v4880 = vpack.c.b16 %v3260, %v3242
        %v4881 = vpack.c.b16 %v3261, %v3243
        %v4882 = vpack.c.b16 %v3262, %v3244
        %v4883 = vpack.c.b16 %v3263, %v3245
        %v4884 = vpack.c.b16 %v3264, %v3246
        %v4885 = vpack.c.b16 %v3265, %v3247
        %v4886 = vpack.c.b16 %v3266, %v3248
        %v4887 = vpack.c.b16 %v3267, %v3249
        %v4888 = vpack.c.b16 %v3268, %v3250
        %v4889 = vpack.c.b16 %v3269, %v3251
        %v4890 = vpack.c.b16 %v3270, %v3252
        %v4891 = vpack.c.b16 %v3271, %v3253
        %v4892 = vpack.c.b16 %v3272, %v3254
        %v4893 = vpack.c.b16 %v3273, %v3255
        %v4894 = vpack.c.b16 %v3274, %v3256
        %v4895 = vpack.c.b16 %v3275, %v3257
        %v4896 = vpack.c.b16 %v3294, %v3276
        %v4897 = vpack.c.b16 %v3295, %v3277
        %v4898 = vpack.c.b16 %v3296, %v3278
        %v4899 = vpack.c.b16 %v3297, %v3279
        %v4900 = vpack.c.b16 %v3298, %v3280
        %v4901 = vpack.c.b16 %v3299, %v3281
        %v4902 = vpack.c.b16 %v3300, %v3282
        %v4903 = vpack.c.b16 %v3301, %v3283
        %v4904 = vpack.c.b16 %v3302, %v3284
        %v4905 = vpack.c.b16 %v3303, %v3285
        %v4906 = vpack.c.b16 %v3304, %v3286
        %v4907 = vpack.c.b16 %v3305, %v3287
        %v4908 = vpack.c.b16 %v3306, %v3288
        %v4909 = vpack.c.b16 %v3307, %v3289
        %v4910 = vpack.c.b16 %v3308, %v3290
        %v4911 = vpack.c.b16 %v3309, %v3291
        %v4912 = vpack.c.b16 %v3310, %v3292
        %v4913 = vpack.c.b16 %v3311, %v3293
        %v4914 = vpack.c.b16 %v3330, %v3312
        %v4915 = vpack.c.b16 %v3331, %v3313
        %v4916 = vpack.c.b16 %v3332, %v3314
        %v4917 = vpack.c.b16 %v3333, %v3315
        %v4918 = vpack.c.b16 %v3334, %v3316
        %v4919 = vpack.c.b16 %v3335, %v3317
        %v4920 = vpack.c.b16 %v3336, %v3318
        %v4921 = vpack.c.b16 %v3337, %v3319
        %v4922 = vpack.c.b16 %v3338, %v3320
        %v4923 = vpack.c.b16 %v3339, %v3321
        %v4924 = vpack.c.b16 %v3340, %v3322
        %v4925 = vpack.c.b16 %v3341, %v3323
        %v4926 = vpack.c.b16 %v3342, %v3324
        %v4927 = vpack.c.b16 %v3343, %v3325
        %v4928 = vpack.c.b16 %v3344, %v3326
        %v4929 = vpack.c.b16 %v3345, %v3327
        %v4930 = vpack.c.b16 %v3346, %v3328
        %v4931 = vpack.c.b16 %v3347, %v3329
        %v4932 = vpack.c.b16 %v3366, %v3348
        %v4933 = vpack.c.b16 %v3367, %v3349
        %v4934 = vpack.c.b16 %v3368, %v3350
        %v4935 = vpack.c.b16 %v3369, %v3351
        %v4936 = vpack.c.b16 %v3370, %v3352
        %v4937 = vpack.c.b16 %v3371, %v3353
        %v4938 = vpack.c.b16 %v3372, %v3354
        %v4939 = vpack.c.b16 %v3373, %v3355
        %v4940 = vpack.c.b16 %v3374, %v3356
        %v4941 = vpack.c.b16 %v3375, %v3357
        %v4942 = vpack.c.b16 %v3376, %v3358
        %v4943 = vpack.c.b16 %v3377, %v3359
        %v4944 = vpack.c.b16 %v3378, %v3360
        %v4945 = vpack.c.b16 %v3379, %v3361
        %v4946 = vpack.c.b16 %v3380, %v3362
        %v4947 = vpack.c.b16 %v3381, %v3363
        %v4948 = vpack.c.b16 %v3382, %v3364
        %v4949 = vpack.c.b16 %v3383, %v3365
        %v4950 = vpack.c.b16 %v3402, %v3384
        %v4951 = vpack.c.b16 %v3403, %v3385
        %v4952 = vpack.c.b16 %v3404, %v3386
        %v4953 = vpack.c.b16 %v3405, %v3387
        %v4954 = vpack.c.b16 %v3406, %v3388
        %v4955 = vpack.c.b16 %v3407, %v3389
        %v4956 = vpack.c.b16 %v3408, %v3390
        %v4957 = vpack.c.b16 %v3409, %v3391
        %v4958 = vpack.c.b16 %v3410, %v3392
        %v4959 = vpack.c.b16 %v3411, %v3393
        %v4960 = vpack.c.b16 %v3412, %v3394
        %v4961 = vpack.c.b16 %v3413, %v3395
        %v4962 = vpack.c.b16 %v3414, %v3396
        %v4963 = vpack.c.b16 %v3415, %v3397
        %v4964 = vpack.c.b16 %v3416, %v3398
        %v4965 = vpack.c.b16 %v3417, %v3399
        %v4966 = vpack.c.b16 %v3418, %v3400
        %v4967 = vpack.c.b16 %v3419, %v3401
        %v4968 = vpack.c.b16 %v3438, %v3420
        %v4969 = vpack.c.b16 %v3439, %v3421
        %v4970 = vpack.c.b16 %v3440, %v3422
        %v4971 = vpack.c.b16 %v3441, %v3423
        %v4972 = vpack.c.b16 %v3442, %v3424
        %v4973 = vpack.c.b16 %v3443, %v3425
        %v4974 = vpack.c.b16 %v3444, %v3426
        %v4975 = vpack.c.b16 %v3445, %v3427
        %v4976 = vpack.c.b16 %v3446, %v3428
        %v4977 = vpack.c.b16 %v3447, %v3429
        %v4978 = vpack.c.b16 %v3448, %v3430
        %v4979 = vpack.c.b16 %v3449, %v3431
        %v4980 = vpack.c.b16 %v3450, %v3432
        %v4981 = vpack.c.b16 %v3451, %v3433
        %v4982 = vpack.c.b16 %v3452, %v3434
        %v4983 = vpack.c.b16 %v3453, %v3435
        %v4984 = vpack.c.b16 %v3454, %v3436
        %v4985 = vpack.c.b16 %v3455, %v3437
        %v4986 = vpack.c.b16 %v3474, %v3456
        %v4987 = vpack.c.b16 %v3475, %v3457
        %v4988 = vpack.c.b16 %v3476, %v3458
        %v4989 = vpack.c.b16 %v3477, %v3459
        %v4990 = vpack.c.b16 %v3478, %v3460
        %v4991 = vpack.c.b16 %v3479, %v3461
        %v4992 = vpack.c.b16 %v3480, %v3462
        %v4993 = vpack.c.b16 %v3481, %v3463
        %v4994 = vpack.c.b16 %v3482, %v3464
        %v4995 = vpack.c.b16 %v3483, %v3465
        %v4996 = vpack.c.b16 %v3484, %v3466
        %v4997 = vpack.c.b16 %v3485, %v3467
        %v4998 = vpack.c.b16 %v3486, %v3468
        %v4999 = vpack.c.b16 %v3487, %v3469
        %v5000 = vpack.c.b16 %v3488, %v3470
        %v5001 = vpack.c.b16 %v3489, %v3471
        %v5002 = vpack.c.b16 %v3490, %v3472
        %v5003 = vpack.c.b16 %v3491, %v3473
        %v5004 = vpack.c.b16 %v3510, %v3492
        %v5005 = vpack.c.b16 %v3511, %v3493
        %v5006 = vpack.c.b16 %v3512, %v3494
        %v5007 = vpack.c.b16 %v3513, %v3495
        %v5008 = vpack.c.b16 %v3514, %v3496
        %v5009 = vpack.c.b16 %v3515, %v3497
        %v5010 = vpack.c.b16 %v3516, %v3498
        %v5011 = vpack.c.b16 %v3517, %v3499
        %v5012 = vpack.c.b16 %v3518, %v3500
        %v5013 = vpack.c.b16 %v3519, %v3501
        %v5014 = vpack.c.b16 %v3520, %v3502
        %v5015 = vpack.c.b16 %v3521, %v3503
        %v5016 = vpack.c.b16 %v3522, %v3504
        %v5017 = vpack.c.b16 %v3523, %v3505
        %v5018 = vpack.c.b16 %v3524, %v3506
        %v5019 = vpack.c.b16 %v3525, %v3507
        %v5020 = vpack.c.b16 %v3526, %v3508
        %v5021 = vpack.c.b16 %v3527, %v3509
        %v5022 = vpack.c.b16 %v3546, %v3528
        %v5023 = vpack.c.b16 %v3547, %v3529
        %v5024 = vpack.c.b16 %v3548, %v3530
        %v5025 = vpack.c.b16 %v3549, %v3531
        %v5026 = vpack.c.b16 %v3550, %v3532
        %v5027 = vpack.c.b16 %v3551, %v3533
        %v5028 = vpack.c.b16 %v3552, %v3534
        %v5029 = vpack.c.b16 %v3553, %v3535
        %v5030 = vpack.c.b16 %v3554, %v3536
        %v5031 = vpack.c.b16 %v3555, %v3537
        %v5032 = vpack.c.b16 %v3556, %v3538
        %v5033 = vpack.c.b16 %v3557, %v3539
        %v5034 = vpack.c.b16 %v3558, %v3540
        %v5035 = vpack.c.b16 %v3559, %v3541
        %v5036 = vpack.c.b16 %v3560, %v3542
        %v5037 = vpack.c.b16 %v3561, %v3543
        %v5038 = vpack.c.b16 %v3562, %v3544
        %v5039 = vpack.c.b16 %v3563, %v3545
        %v5040 = vpack.c.b16 %v3582, %v3564
        %v5041 = vpack.c.b16 %v3583, %v3565
        %v5042 = vpack.c.b16 %v3584, %v3566
        %v5043 = vpack.c.b16 %v3585, %v3567
        %v5044 = vpack.c.b16 %v3586, %v3568
        %v5045 = vpack.c.b16 %v3587, %v3569
        %v5046 = vpack.c.b16 %v3588, %v3570
        %v5047 = vpack.c.b16 %v3589, %v3571
        %v5048 = vpack.c.b16 %v3590, %v3572
        %v5049 = vpack.c.b16 %v3591, %v3573
        %v5050 = vpack.c.b16 %v3592, %v3574
        %v5051 = vpack.c.b16 %v3593, %v3575
        %v5052 = vpack.c.b16 %v3594, %v3576
        %v5053 = vpack.c.b16 %v3595, %v3577
        %v5054 = vpack.c.b16 %v3596, %v3578
        %v5055 = vpack.c.b16 %v3597, %v3579
        %v5056 = vpack.c.b16 %v3598, %v3580
        %v5057 = vpack.c.b16 %v3599, %v3581
        %v5058 = vpack.c.b16 %v3618, %v3600
        %v5059 = vpack.c.b16 %v3619, %v3601
        %v5060 = vpack.c.b16 %v3620, %v3602
        %v5061 = vpack.c.b16 %v3621, %v3603
        %v5062 = vpack.c.b16 %v3622, %v3604
        %v5063 = vpack.c.b16 %v3623, %v3605
        %v5064 = vpack.c.b16 %v3624, %v3606
        %v5065 = vpack.c.b16 %v3625, %v3607
        %v5066 = vpack.c.b16 %v3626, %v3608
        %v5067 = vpack.c.b16 %v3627, %v3609
        %v5068 = vpack.c.b16 %v3628, %v3610
        %v5069 = vpack.c.b16 %v3629, %v3611
        %v5070 = vpack.c.b16 %v3630, %v3612
        %v5071 = vpack.c.b16 %v3631, %v3613
        %v5072 = vpack.c.b16 %v3632, %v3614
        %v5073 = vpack.c.b16 %v3633, %v3615
        %v5074 = vpack.c.b16 %v3634, %v3616
        %v5075 = vpack.c.b16 %v3635, %v3617
        %v5076 = vpack.c.b16 %v3654, %v3636
        %v5077 = vpack.c.b16 %v3655, %v3637
        %v5078 = vpack.c.b16 %v3656, %v3638
        %v5079 = vpack.c.b16 %v3657, %v3639
        %v5080 = vpack.c.b16 %v3658, %v3640
        %v5081 = vpack.c.b16 %v3659, %v3641
        %v5082 = vpack.c.b16 %v3660, %v3642
        %v5083 = vpack.c.b16 %v3661, %v3643
        %v5084 = vpack.c.b16 %v3662, %v3644
        %v5085 = vpack.c.b16 %v3663, %v3645
        %v5086 = vpack.c.b16 %v3664, %v3646
        %v5087 = vpack.c.b16 %v3665, %v3647
        %v5088 = vpack.c.b16 %v3666, %v3648
        %v5089 = vpack.c.b16 %v3667, %v3649
        %v5090 = vpack.c.b16 %v3668, %v3650
        %v5091 = vpack.c.b16 %v3669, %v3651
        %v5092 = vpack.c.b16 %v3670, %v3652
        %v5093 = vpack.c.b16 %v3671, %v3653
        %v5094 = vpack.c.b16 %v3690, %v3672
        %v5095 = vpack.c.b16 %v3691, %v3673
        %v5096 = vpack.c.b16 %v3692, %v3674
        %v5097 = vpack.c.b16 %v3693, %v3675
        %v5098 = vpack.c.b16 %v3694, %v3676
        %v5099 = vpack.c.b16 %v3695, %v3677
        %v5100 = vpack.c.b16 %v3696, %v3678
        %v5101 = vpack.c.b16 %v3697, %v3679
        %v5102 = vpack.c.b16 %v3698, %v3680
        %v5103 = vpack.c.b16 %v3699, %v3681
        %v5104 = vpack.c.b16 %v3700, %v3682
        %v5105 = vpack.c.b16 %v3701, %v3683
        %v5106 = vpack.c.b16 %v3702, %v3684
        %v5107 = vpack.c.b16 %v3703, %v3685
        %v5108 = vpack.c.b16 %v3704, %v3686
        %v5109 = vpack.c.b16 %v3705, %v3687
        %v5110 = vpack.c.b16 %v3706, %v3688
        %v5111 = vpack.c.b16 %v3707, %v3689
        %v5112 = vpack.c.b16 %v3726, %v3708
        %v5113 = vpack.c.b16 %v3727, %v3709
        %v5114 = vpack.c.b16 %v3728, %v3710
        %v5115 = vpack.c.b16 %v3729, %v3711
        %v5116 = vpack.c.b16 %v3730, %v3712
        %v5117 = vpack.c.b16 %v3731, %v3713
        %v5118 = vpack.c.b16 %v3732, %v3714
        %v5119 = vpack.c.b16 %v3733, %v3715
        %v5120 = vpack.c.b16 %v3734, %v3716
        %v5121 = vpack.c.b16 %v3735, %v3717
        %v5122 = vpack.c.b16 %v3736, %v3718
        %v5123 = vpack.c.b16 %v3737, %v3719
        %v5124 = vpack.c.b16 %v3738, %v3720
        %v5125 = vpack.c.b16 %v3739, %v3721
        %v5126 = vpack.c.b16 %v3740, %v3722
        %v5127 = vpack.c.b16 %v3741, %v3723
        %v5128 = vpack.c.b16 %v3742, %v3724
        %v5129 = vpack.c.b16 %v3743, %v3725
        %v5130 = vpack.c.b16 %v3762, %v3744
        %v5131 = vpack.c.b16 %v3763, %v3745
        %v5132 = vpack.c.b16 %v3764, %v3746
        %v5133 = vpack.c.b16 %v3765, %v3747
        %v5134 = vpack.c.b16 %v3766, %v3748
        %v5135 = vpack.c.b16 %v3767, %v3749
        %v5136 = vpack.c.b16 %v3768, %v3750
        %v5137 = vpack.c.b16 %v3769, %v3751
        %v5138 = vpack.c.b16 %v3770, %v3752
        %v5139 = vpack.c.b16 %v3771, %v3753
        %v5140 = vpack.c.b16 %v3772, %v3754
        %v5141 = vpack.c.b16 %v3773, %v3755
        %v5142 = vpack.c.b16 %v3774, %v3756
        %v5143 = vpack.c.b16 %v3775, %v3757
        %v5144 = vpack.c.b16 %v3776, %v3758
        %v5145 = vpack.c.b16 %v3777, %v3759
        %v5146 = vpack.c.b16 %v3778, %v3760
        %v5147 = vpack.c.b16 %v3779, %v3761
        %v5148 = vpack.c.b16 %v3798, %v3780
        %v5149 = vpack.c.b16 %v3799, %v3781
        %v5150 = vpack.c.b16 %v3800, %v3782
        %v5151 = vpack.c.b16 %v3801, %v3783
        %v5152 = vpack.c.b16 %v3802, %v3784
        %v5153 = vpack.c.b16 %v3803, %v3785
        %v5154 = vpack.c.b16 %v3804, %v3786
        %v5155 = vpack.c.b16 %v3805, %v3787
        %v5156 = vpack.c.b16 %v3806, %v3788
        %v5157 = vpack.c.b16 %v3807, %v3789
        %v5158 = vpack.c.b16 %v3808, %v3790
        %v5159 = vpack.c.b16 %v3809, %v3791
        %v5160 = vpack.c.b16 %v3810, %v3792
        %v5161 = vpack.c.b16 %v3811, %v3793
        %v5162 = vpack.c.b16 %v3812, %v3794
        %v5163 = vpack.c.b16 %v3813, %v3795
        %v5164 = vpack.c.b16 %v3814, %v3796
        %v5165 = vpack.c.b16 %v3815, %v3797
        %v5166 = vpack.c.b16 %v3834, %v3816
        %v5167 = vpack.c.b16 %v3835, %v3817
        %v5168 = vpack.c.b16 %v3836, %v3818
        %v5169 = vpack.c.b16 %v3837, %v3819
        %v5170 = vpack.c.b16 %v3838, %v3820
        %v5171 = vpack.c.b16 %v3839, %v3821
        %v5172 = vpack.c.b16 %v3840, %v3822
        %v5173 = vpack.c.b16 %v3841, %v3823
        %v5174 = vpack.c.b16 %v3842, %v3824
        %v5175 = vpack.c.b16 %v3843, %v3825
        %v5176 = vpack.c.b16 %v3844, %v3826
        %v5177 = vpack.c.b16 %v3845, %v3827
        %v5178 = vpack.c.b16 %v3846, %v3828
        %v5179 = vpack.c.b16 %v3847, %v3829
        %v5180 = vpack.c.b16 %v3848, %v3830
        %v5181 = vpack.c.b16 %v3849, %v3831
        %v5182 = vpack.c.b16 %v3850, %v3832
        %v5183 = vpack.c.b16 %v3851, %v3833
        %v5184 = vpack.c.b16 %v3870, %v3852
        %v5185 = vpack.c.b16 %v3871, %v3853
        %v5186 = vpack.c.b16 %v3872, %v3854
        %v5187 = vpack.c.b16 %v3873, %v3855
        %v5188 = vpack.c.b16 %v3874, %v3856
        %v5189 = vpack.c.b16 %v3875, %v3857
        %v5190 = vpack.c.b16 %v3876, %v3858
        %v5191 = vpack.c.b16 %v3877, %v3859
        %v5192 = vpack.c.b16 %v3878, %v3860
        %v5193 = vpack.c.b16 %v3879, %v3861
        %v5194 = vpack.c.b16 %v3880, %v3862
        %v5195 = vpack.c.b16 %v3881, %v3863
        %v5196 = vpack.c.b16 %v3882, %v3864
        %v5197 = vpack.c.b16 %v3883, %v3865
        %v5198 = vpack.c.b16 %v3884, %v3866
        %v5199 = vpack.c.b16 %v3885, %v3867
        %v5200 = vpack.c.b16 %v3886, %v3868
        %v5201 = vpack.c.b16 %v3887, %v3869
        %v5202 = vpack.c.b16 %v3906, %v3888
        %v5203 = vpack.c.b16 %v3907, %v3889
        %v5204 = vpack.c.b16 %v3908, %v3890
        %v5205 = vpack.c.b16 %v3909, %v3891
        %v5206 = vpack.c.b16 %v3910, %v3892
        %v5207 = vpack.c.b16 %v3911, %v3893
        %v5208 = vpack.c.b16 %v3912, %v3894
        %v5209 = vpack.c.b16 %v3913, %v3895
        %v5210 = vpack.c.b16 %v3914, %v3896
        %v5211 = vpack.c.b16 %v3915, %v3897
        %v5212 = vpack.c.b16 %v3916, %v3898
        %v5213 = vpack.c.b16 %v3917, %v3899
        %v5214 = vpack.c.b16 %v3918, %v3900
        %v5215 = vpack.c.b16 %v3919, %v3901
        %v5216 = vpack.c.b16 %v3920, %v3902
        %v5217 = vpack.c.b16 %v3921, %v3903
        %v5218 = vpack.c.b16 %v3922, %v3904
        %v5219 = vpack.c.b16 %v3923, %v3905
        %v5220 = vpack.c.b16 %v3942, %v3924
        %v5221 = vpack.c.b16 %v3943, %v3925
        %v5222 = vpack.c.b16 %v3944, %v3926
        %v5223 = vpack.c.b16 %v3945, %v3927
        %v5224 = vpack.c.b16 %v3946, %v3928
        %v5225 = vpack.c.b16 %v3947, %v3929
        %v5226 = vpack.c.b16 %v3948, %v3930
        %v5227 = vpack.c.b16 %v3949, %v3931
        %v5228 = vpack.c.b16 %v3950, %v3932
        %v5229 = vpack.c.b16 %v3951, %v3933
        %v5230 = vpack.c.b16 %v3952, %v3934
        %v5231 = vpack.c.b16 %v3953, %v3935
        %v5232 = vpack.c.b16 %v3954, %v3936
        %v5233 = vpack.c.b16 %v3955, %v3937
        %v5234 = vpack.c.b16 %v3956, %v3938
        %v5235 = vpack.c.b16 %v3957, %v3939
        %v5236 = vpack.c.b16 %v3958, %v3940
        %v5237 = vpack.c.b16 %v3959, %v3941
        %v5238 = vpack.c.b16 %v3978, %v3960
        %v5239 = vpack.c.b16 %v3979, %v3961
        %v5240 = vpack.c.b16 %v3980, %v3962
        %v5241 = vpack.c.b16 %v3981, %v3963
        %v5242 = vpack.c.b16 %v3982, %v3964
        %v5243 = vpack.c.b16 %v3983, %v3965
        %v5244 = vpack.c.b16 %v3984, %v3966
        %v5245 = vpack.c.b16 %v3985, %v3967
        %v5246 = vpack.c.b16 %v3986, %v3968
        %v5247 = vpack.c.b16 %v3987, %v3969
        %v5248 = vpack.c.b16 %v3988, %v3970
        %v5249 = vpack.c.b16 %v3989, %v3971
        %v5250 = vpack.c.b16 %v3990, %v3972
        %v5251 = vpack.c.b16 %v3991, %v3973
        %v5252 = vpack.c.b16 %v3992, %v3974
        %v5253 = vpack.c.b16 %v3993, %v3975
        %v5254 = vpack.c.b16 %v3994, %v3976
        %v5255 = vpack.c.b16 %v3995, %v3977
        %v5256 = vpack.c.b16 %v4014, %v3996
        %v5257 = vpack.c.b16 %v4015, %v3997
        %v5258 = vpack.c.b16 %v4016, %v3998
        %v5259 = vpack.c.b16 %v4017, %v3999
        %v5260 = vpack.c.b16 %v4018, %v4000
        %v5261 = vpack.c.b16 %v4019, %v4001
        %v5262 = vpack.c.b16 %v4020, %v4002
        %v5263 = vpack.c.b16 %v4021, %v4003
        %v5264 = vpack.c.b16 %v4022, %v4004
        %v5265 = vpack.c.b16 %v4023, %v4005
        %v5266 = vpack.c.b16 %v4024, %v4006
        %v5267 = vpack.c.b16 %v4025, %v4007
        %v5268 = vpack.c.b16 %v4026, %v4008
        %v5269 = vpack.c.b16 %v4027, %v4009
        %v5270 = vpack.c.b16 %v4028, %v4010
        %v5271 = vpack.c.b16 %v4029, %v4011
        %v5272 = vpack.c.b16 %v4030, %v4012
        %v5273 = vpack.c.b16 %v4031, %v4013
        %v5274 = vpack.c.b16 %v4050, %v4032
        %v5275 = vpack.c.b16 %v4051, %v4033
        %v5276 = vpack.c.b16 %v4052, %v4034
        %v5277 = vpack.c.b16 %v4053, %v4035
        %v5278 = vpack.c.b16 %v4054, %v4036
        %v5279 = vpack.c.b16 %v4055, %v4037
        %v5280 = vpack.c.b16 %v4056, %v4038
        %v5281 = vpack.c.b16 %v4057, %v4039
        %v5282 = vpack.c.b16 %v4058, %v4040
        %v5283 = vpack.c.b16 %v4059, %v4041
        %v5284 = vpack.c.b16 %v4060, %v4042
        %v5285 = vpack.c.b16 %v4061, %v4043
        %v5286 = vpack.c.b16 %v4062, %v4044
        %v5287 = vpack.c.b16 %v4063, %v4045
        %v5288 = vpack.c.b16 %v4064, %v4046
        %v5289 = vpack.c.b16 %v4065, %v4047
        %v5290 = vpack.c.b16 %v4066, %v4048
        %v5291 = vpack.c.b16 %v4067, %v4049
        %v5292 = vpack.c.b16 %v4086, %v4068
        %v5293 = vpack.c.b16 %v4087, %v4069
        %v5294 = vpack.c.b16 %v4088, %v4070
        %v5295 = vpack.c.b16 %v4089, %v4071
        %v5296 = vpack.c.b16 %v4090, %v4072
        %v5297 = vpack.c.b16 %v4091, %v4073
        %v5298 = vpack.c.b16 %v4092, %v4074
        %v5299 = vpack.c.b16 %v4093, %v4075
        %v5300 = vpack.c.b16 %v4094, %v4076
        %v5301 = vpack.c.b16 %v4095, %v4077
        %v5302 = vpack.c.b16 %v4096, %v4078
        %v5303 = vpack.c.b16 %v4097, %v4079
        %v5304 = vpack.c.b16 %v4098, %v4080
        %v5305 = vpack.c.b16 %v4099, %v4081
        %v5306 = vpack.c.b16 %v4100, %v4082
        %v5307 = vpack.c.b16 %v4101, %v4083
        %v5308 = vpack.c.b16 %v4102, %v4084
        %v5309 = vpack.c.b16 %v4103, %v4085
        %v5310 = vpack.c.b16 %v4122, %v4104
        %v5311 = vpack.c.b16 %v4123, %v4105
        %v5312 = vpack.c.b16 %v4124, %v4106
        %v5313 = vpack.c.b16 %v4125, %v4107
        %v5314 = vpack.c.b16 %v4126, %v4108
        %v5315 = vpack.c.b16 %v4127, %v4109
        %v5316 = vpack.c.b16 %v4128, %v4110
        %v5317 = vpack.c.b16 %v4129, %v4111
        %v5318 = vpack.c.b16 %v4130, %v4112
        %v5319 = vpack.c.b16 %v4131, %v4113
        %v5320 = vpack.c.b16 %v4132, %v4114
        %v5321 = vpack.c.b16 %v4133, %v4115
        %v5322 = vpack.c.b16 %v4134, %v4116
        %v5323 = vpack.c.b16 %v4135, %v4117
        %v5324 = vpack.c.b16 %v4136, %v4118
        %v5325 = vpack.c.b16 %v4137, %v4119
        %v5326 = vpack.c.b16 %v4138, %v4120
        %v5327 = vpack.c.b16 %v4139, %v4121
        %v5328 = vpack.c.b16 %v4158, %v4140
        %v5329 = vpack.c.b16 %v4159, %v4141
        %v5330 = vpack.c.b16 %v4160, %v4142
        %v5331 = vpack.c.b16 %v4161, %v4143
        %v5332 = vpack.c.b16 %v4162, %v4144
        %v5333 = vpack.c.b16 %v4163, %v4145
        %v5334 = vpack.c.b16 %v4164, %v4146
        %v5335 = vpack.c.b16 %v4165, %v4147
        %v5336 = vpack.c.b16 %v4166, %v4148
        %v5337 = vpack.c.b16 %v4167, %v4149
        %v5338 = vpack.c.b16 %v4168, %v4150
        %v5339 = vpack.c.b16 %v4169, %v4151
        %v5340 = vpack.c.b16 %v4170, %v4152
        %v5341 = vpack.c.b16 %v4171, %v4153
        %v5342 = vpack.c.b16 %v4172, %v4154
        %v5343 = vpack.c.b16 %v4173, %v4155
        %v5344 = vpack.c.b16 %v4174, %v4156
        %v5345 = vpack.c.b16 %v4175, %v4157
        %v5346 = vpack.c.b16 %v4194, %v4176
        %v5347 = vpack.c.b16 %v4195, %v4177
        %v5348 = vpack.c.b16 %v4196, %v4178
        %v5349 = vpack.c.b16 %v4197, %v4179
        %v5350 = vpack.c.b16 %v4198, %v4180
        %v5351 = vpack.c.b16 %v4199, %v4181
        %v5352 = vpack.c.b16 %v4200, %v4182
        %v5353 = vpack.c.b16 %v4201, %v4183
        %v5354 = vpack.c.b16 %v4202, %v4184
        %v5355 = vpack.c.b16 %v4203, %v4185
        %v5356 = vpack.c.b16 %v4204, %v4186
        %v5357 = vpack.c.b16 %v4205, %v4187
        %v5358 = vpack.c.b16 %v4206, %v4188
        %v5359 = vpack.c.b16 %v4207, %v4189
        %v5360 = vpack.c.b16 %v4208, %v4190
        %v5361 = vpack.c.b16 %v4209, %v4191
        %v5362 = vpack.c.b16 %v4210, %v4192
        %v5363 = vpack.c.b16 %v4211, %v4193
        %v5364 = vpack.c.b16 %v4230, %v4212
        %v5365 = vpack.c.b16 %v4231, %v4213
        %v5366 = vpack.c.b16 %v4232, %v4214
        %v5367 = vpack.c.b16 %v4233, %v4215
        %v5368 = vpack.c.b16 %v4234, %v4216
        %v5369 = vpack.c.b16 %v4235, %v4217
        %v5370 = vpack.c.b16 %v4236, %v4218
        %v5371 = vpack.c.b16 %v4237, %v4219
        %v5372 = vpack.c.b16 %v4238, %v4220
        %v5373 = vpack.c.b16 %v4239, %v4221
        %v5374 = vpack.c.b16 %v4240, %v4222
        %v5375 = vpack.c.b16 %v4241, %v4223
        %v5376 = vpack.c.b16 %v4242, %v4224
        %v5377 = vpack.c.b16 %v4243, %v4225
        %v5378 = vpack.c.b16 %v4244, %v4226
        %v5379 = vpack.c.b16 %v4245, %v4227
        %v5380 = vpack.c.b16 %v4246, %v4228
        %v5381 = vpack.c.b16 %v4247, %v4229
        %v5382 = vpack.c.b16 %v4266, %v4248
        %v5383 = vpack.c.b16 %v4267, %v4249
        %v5384 = vpack.c.b16 %v4268, %v4250
        %v5385 = vpack.c.b16 %v4269, %v4251
        %v5386 = vpack.c.b16 %v4270, %v4252
        %v5387 = vpack.c.b16 %v4271, %v4253
        %v5388 = vpack.c.b16 %v4272, %v4254
        %v5389 = vpack.c.b16 %v4273, %v4255
        %v5390 = vpack.c.b16 %v4274, %v4256
        %v5391 = vpack.c.b16 %v4275, %v4257
        %v5392 = vpack.c.b16 %v4276, %v4258
        %v5393 = vpack.c.b16 %v4277, %v4259
        %v5394 = vpack.c.b16 %v4278, %v4260
        %v5395 = vpack.c.b16 %v4279, %v4261
        %v5396 = vpack.c.b16 %v4280, %v4262
        %v5397 = vpack.c.b16 %v4281, %v4263
        %v5398 = vpack.c.b16 %v4282, %v4264
        %v5399 = vpack.c.b16 %v4283, %v4265
        %v5400 = vpack.c.b16 %v4302, %v4284
        %v5401 = vpack.c.b16 %v4303, %v4285
        %v5402 = vpack.c.b16 %v4304, %v4286
        %v5403 = vpack.c.b16 %v4305, %v4287
        %v5404 = vpack.c.b16 %v4306, %v4288
        %v5405 = vpack.c.b16 %v4307, %v4289
        %v5406 = vpack.c.b16 %v4308, %v4290
        %v5407 = vpack.c.b16 %v4309, %v4291
        %v5408 = vpack.c.b16 %v4310, %v4292
        %v5409 = vpack.c.b16 %v4311, %v4293
        %v5410 = vpack.c.b16 %v4312, %v4294
        %v5411 = vpack.c.b16 %v4313, %v4295
        %v5412 = vpack.c.b16 %v4314, %v4296
        %v5413 = vpack.c.b16 %v4315, %v4297
        %v5414 = vpack.c.b16 %v4316, %v4298
        %v5415 = vpack.c.b16 %v4317, %v4299
        %v5416 = vpack.c.b16 %v4318, %v4300
        %v5417 = vpack.c.b16 %v4319, %v4301
        %v5418 = vpack.c.b16 %v4338, %v4320
        %v5419 = vpack.c.b16 %v4339, %v4321
        %v5420 = vpack.c.b16 %v4340, %v4322
        %v5421 = vpack.c.b16 %v4341, %v4323
        %v5422 = vpack.c.b16 %v4342, %v4324
        %v5423 = vpack.c.b16 %v4343, %v4325
        %v5424 = vpack.c.b16 %v4344, %v4326
        %v5425 = vpack.c.b16 %v4345, %v4327
        %v5426 = vpack.c.b16 %v4346, %v4328
        %v5427 = vpack.c.b16 %v4347, %v4329
        %v5428 = vpack.c.b16 %v4348, %v4330
        %v5429 = vpack.c.b16 %v4349, %v4331
        %v5430 = vpack.c.b16 %v4350, %v4332
        %v5431 = vpack.c.b16 %v4351, %v4333
        %v5432 = vpack.c.b16 %v4352, %v4334
        %v5433 = vpack.c.b16 %v4353, %v4335
        %v5434 = vpack.c.b16 %v4354, %v4336
        %v5435 = vpack.c.b16 %v4355, %v4337
        %v5436 = vpack.c.b16 %v4374, %v4356
        %v5437 = vpack.c.b16 %v4375, %v4357
        %v5438 = vpack.c.b16 %v4376, %v4358
        %v5439 = vpack.c.b16 %v4377, %v4359
        %v5440 = vpack.c.b16 %v4378, %v4360
        %v5441 = vpack.c.b16 %v4379, %v4361
        %v5442 = vpack.c.b16 %v4380, %v4362
        %v5443 = vpack.c.b16 %v4381, %v4363
        %v5444 = vpack.c.b16 %v4382, %v4364
        %v5445 = vpack.c.b16 %v4383, %v4365
        %v5446 = vpack.c.b16 %v4384, %v4366
        %v5447 = vpack.c.b16 %v4385, %v4367
        %v5448 = vpack.c.b16 %v4386, %v4368
        %v5449 = vpack.c.b16 %v4387, %v4369
        %v5450 = vpack.c.b16 %v4388, %v4370
        %v5451 = vpack.c.b16 %v4389, %v4371
        %v5452 = vpack.c.b16 %v4390, %v4372
        %v5453 = vpack.c.b16 %v4391, %v4373
        %v5454 = vpack.c.b16 %v4410, %v4392
        %v5455 = vpack.c.b16 %v4411, %v4393
        %v5456 = vpack.c.b16 %v4412, %v4394
        %v5457 = vpack.c.b16 %v4413, %v4395
        %v5458 = vpack.c.b16 %v4414, %v4396
        %v5459 = vpack.c.b16 %v4415, %v4397
        %v5460 = vpack.c.b16 %v4416, %v4398
        %v5461 = vpack.c.b16 %v4417, %v4399
        %v5462 = vpack.c.b16 %v4418, %v4400
        %v5463 = vpack.c.b16 %v4419, %v4401
        %v5464 = vpack.c.b16 %v4420, %v4402
        %v5465 = vpack.c.b16 %v4421, %v4403
        %v5466 = vpack.c.b16 %v4422, %v4404
        %v5467 = vpack.c.b16 %v4423, %v4405
        %v5468 = vpack.c.b16 %v4424, %v4406
        %v5469 = vpack.c.b16 %v4425, %v4407
        %v5470 = vpack.c.b16 %v4426, %v4408
        %v5471 = vpack.c.b16 %v4427, %v4409
        %v5472 = vpack.c.b16 %v4446, %v4428
        %v5473 = vpack.c.b16 %v4447, %v4429
        %v5474 = vpack.c.b16 %v4448, %v4430
        %v5475 = vpack.c.b16 %v4449, %v4431
        %v5476 = vpack.c.b16 %v4450, %v4432
        %v5477 = vpack.c.b16 %v4451, %v4433
        %v5478 = vpack.c.b16 %v4452, %v4434
        %v5479 = vpack.c.b16 %v4453, %v4435
        %v5480 = vpack.c.b16 %v4454, %v4436
        %v5481 = vpack.c.b16 %v4455, %v4437
        %v5482 = vpack.c.b16 %v4456, %v4438
        %v5483 = vpack.c.b16 %v4457, %v4439
        %v5484 = vpack.c.b16 %v4458, %v4440
        %v5485 = vpack.c.b16 %v4459, %v4441
        %v5486 = vpack.c.b16 %v4460, %v4442
        %v5487 = vpack.c.b16 %v4461, %v4443
        %v5488 = vpack.c.b16 %v4462, %v4444
        %v5489 = vpack.c.b16 %v4463, %v4445
        %v5490 = vpack.c.b16 %v4482, %v4464
        %v5491 = vpack.c.b16 %v4483, %v4465
        %v5492 = vpack.c.b16 %v4484, %v4466
        %v5493 = vpack.c.b16 %v4485, %v4467
        %v5494 = vpack.c.b16 %v4486, %v4468
        %v5495 = vpack.c.b16 %v4487, %v4469
        %v5496 = vpack.c.b16 %v4488, %v4470
        %v5497 = vpack.c.b16 %v4489, %v4471
        %v5498 = vpack.c.b16 %v4490, %v4472
        %v5499 = vpack.c.b16 %v4491, %v4473
        %v5500 = vpack.c.b16 %v4492, %v4474
        %v5501 = vpack.c.b16 %v4493, %v4475
        %v5502 = vpack.c.b16 %v4494, %v4476
        %v5503 = vpack.c.b16 %v4495, %v4477
        %v5504 = vpack.c.b16 %v4496, %v4478
        %v5505 = vpack.c.b16 %v4497, %v4479
        %v5506 = vpack.c.b16 %v4498, %v4480
        %v5507 = vpack.c.b16 %v4499, %v4481
        %v5508 = vpack.c.b16 %v4518, %v4500
        %v5509 = vpack.c.b16 %v4519, %v4501
        %v5510 = vpack.c.b16 %v4520, %v4502
        %v5511 = vpack.c.b16 %v4521, %v4503
        %v5512 = vpack.c.b16 %v4522, %v4504
        %v5513 = vpack.c.b16 %v4523, %v4505
        %v5514 = vpack.c.b16 %v4524, %v4506
        %v5515 = vpack.c.b16 %v4525, %v4507
        %v5516 = vpack.c.b16 %v4526, %v4508
        %v5517 = vpack.c.b16 %v4527, %v4509
        %v5518 = vpack.c.b16 %v4528, %v4510
        %v5519 = vpack.c.b16 %v4529, %v4511
        %v5520 = vpack.c.b16 %v4530, %v4512
        %v5521 = vpack.c.b16 %v4531, %v4513
        %v5522 = vpack.c.b16 %v4532, %v4514
        %v5523 = vpack.c.b16 %v4533, %v4515
        %v5524 = vpack.c.b16 %v4534, %v4516
        %v5525 = vpack.c.b16 %v4535, %v4517
        %v5526 = vpack.c.b16 %v4554, %v4536
        %v5527 = vpack.c.b16 %v4555, %v4537
        %v5528 = vpack.c.b16 %v4556, %v4538
        %v5529 = vpack.c.b16 %v4557, %v4539
        %v5530 = vpack.c.b16 %v4558, %v4540
        %v5531 = vpack.c.b16 %v4559, %v4541
        %v5532 = vpack.c.b16 %v4560, %v4542
        %v5533 = vpack.c.b16 %v4561, %v4543
        %v5534 = vpack.c.b16 %v4562, %v4544
        %v5535 = vpack.c.b16 %v4563, %v4545
        %v5536 = vpack.c.b16 %v4564, %v4546
        %v5537 = vpack.c.b16 %v4565, %v4547
        %v5538 = vpack.c.b16 %v4566, %v4548
        %v5539 = vpack.c.b16 %v4567, %v4549
        %v5540 = vpack.c.b16 %v4568, %v4550
        %v5541 = vpack.c.b16 %v4569, %v4551
        %v5542 = vpack.c.b16 %v4570, %v4552
        %v5543 = vpack.c.b16 %v4571, %v4553
        %v5544 = vpack.c.b16 %v4590, %v4572
        %v5545 = vpack.c.b16 %v4591, %v4573
        %v5546 = vpack.c.b16 %v4592, %v4574
        %v5547 = vpack.c.b16 %v4593, %v4575
        %v5548 = vpack.c.b16 %v4594, %v4576
        %v5549 = vpack.c.b16 %v4595, %v4577
        %v5550 = vpack.c.b16 %v4596, %v4578
        %v5551 = vpack.c.b16 %v4597, %v4579
        %v5552 = vpack.c.b16 %v4598, %v4580
        %v5553 = vpack.c.b16 %v4599, %v4581
        %v5554 = vpack.c.b16 %v4600, %v4582
        %v5555 = vpack.c.b16 %v4601, %v4583
        %v5556 = vpack.c.b16 %v4602, %v4584
        %v5557 = vpack.c.b16 %v4603, %v4585
        %v5558 = vpack.c.b16 %v4604, %v4586
        %v5559 = vpack.c.b16 %v4605, %v4587
        %v5560 = vpack.c.b16 %v4606, %v4588
        %v5561 = vpack.c.b16 %v4607, %v4589
        %v5562 = vpack.c.b16 %v4626, %v4608
        %v5563 = vpack.c.b16 %v4627, %v4609
        %v5564 = vpack.c.b16 %v4628, %v4610
        %v5565 = vpack.c.b16 %v4629, %v4611
        %v5566 = vpack.c.b16 %v4630, %v4612
        %v5567 = vpack.c.b16 %v4631, %v4613
        %v5568 = vpack.c.b16 %v4632, %v4614
        %v5569 = vpack.c.b16 %v4633, %v4615
        %v5570 = vpack.c.b16 %v4634, %v4616
        %v5571 = vpack.c.b16 %v4635, %v4617
        %v5572 = vpack.c.b16 %v4636, %v4618
        %v5573 = vpack.c.b16 %v4637, %v4619
        %v5574 = vpack.c.b16 %v4638, %v4620
        %v5575 = vpack.c.b16 %v4639, %v4621
        %v5576 = vpack.c.b16 %v4640, %v4622
        %v5577 = vpack.c.b16 %v4641, %v4623
        %v5578 = vpack.c.b16 %v4642, %v4624
        %v5579 = vpack.c.b16 %v4643, %v4625
        %v5580 = vpack.c.b16 %v4662, %v4644
        %v5581 = vpack.c.b16 %v4663, %v4645
        %v5582 = vpack.c.b16 %v4664, %v4646
        %v5583 = vpack.c.b16 %v4665, %v4647
        %v5584 = vpack.c.b16 %v4666, %v4648
        %v5585 = vpack.c.b16 %v4667, %v4649
        %v5586 = vpack.c.b16 %v4668, %v4650
        %v5587 = vpack.c.b16 %v4669, %v4651
        %v5588 = vpack.c.b16 %v4670, %v4652
        %v5589 = vpack.c.b16 %v4671, %v4653
        %v5590 = vpack.c.b16 %v4672, %v4654
        %v5591 = vpack.c.b16 %v4673, %v4655
        %v5592 = vpack.c.b16 %v4674, %v4656
        %v5593 = vpack.c.b16 %v4675, %v4657
        %v5594 = vpack.c.b16 %v4676, %v4658
        %v5595 = vpack.c.b16 %v4677, %v4659
        %v5596 = vpack.c.b16 %v4678, %v4660
        %v5597 = vpack.c.b16 %v4679, %v4661
        %v5598 = vpack.c.b16 %v4698, %v4680
        %v5599 = vpack.c.b16 %v4699, %v4681
        %v5600 = vpack.c.b16 %v4700, %v4682
        %v5601 = vpack.c.b16 %v4701, %v4683
        %v5602 = vpack.c.b16 %v4702, %v4684
        %v5603 = vpack.c.b16 %v4703, %v4685
        %v5604 = vpack.c.b16 %v4704, %v4686
        %v5605 = vpack.c.b16 %v4705, %v4687
        %v5606 = vpack.c.b16 %v4706, %v4688
        %v5607 = vpack.c.b16 %v4707, %v4689
        %v5608 = vpack.c.b16 %v4708, %v4690
        %v5609 = vpack.c.b16 %v4709, %v4691
        %v5610 = vpack.c.b16 %v4710, %v4692
        %v5611 = vpack.c.b16 %v4711, %v4693
        %v5612 = vpack.c.b16 %v4712, %v4694
        %v5613 = vpack.c.b16 %v4713, %v4695
        %v5614 = vpack.c.b16 %v4714, %v4696
        %v5615 = vpack.c.b16 %v4715, %v4697
        %v5616 = vpack.c.b16 %v4734, %v4716
        %v5617 = vpack.c.b16 %v4735, %v4717
        %v5618 = vpack.c.b16 %v4736, %v4718
        %v5619 = vpack.c.b16 %v4737, %v4719
        %v5620 = vpack.c.b16 %v4738, %v4720
        %v5621 = vpack.c.b16 %v4739, %v4721
        %v5622 = vpack.c.b16 %v4740, %v4722
        %v5623 = vpack.c.b16 %v4741, %v4723
        %v5624 = vpack.c.b16 %v4742, %v4724
        %v5625 = vpack.c.b16 %v4743, %v4725
        %v5626 = vpack.c.b16 %v4744, %v4726
        %v5627 = vpack.c.b16 %v4745, %v4727
        %v5628 = vpack.c.b16 %v4746, %v4728
        %v5629 = vpack.c.b16 %v4747, %v4729
        %v5630 = vpack.c.b16 %v4748, %v4730
        %v5631 = vpack.c.b16 %v4749, %v4731
        %v5632 = vpack.c.b16 %v4750, %v4732
        %v5633 = vpack.c.b16 %v4751, %v4733
        %v5634 = vpack.c.b16 %v4770, %v4752
        %v5635 = vpack.c.b16 %v4771, %v4753
        %v5636 = vpack.c.b16 %v4772, %v4754
        %v5637 = vpack.c.b16 %v4773, %v4755
        %v5638 = vpack.c.b16 %v4774, %v4756
        %v5639 = vpack.c.b16 %v4775, %v4757
        %v5640 = vpack.c.b16 %v4776, %v4758
        %v5641 = vpack.c.b16 %v4777, %v4759
        %v5642 = vpack.c.b16 %v4778, %v4760
        %v5643 = vpack.c.b16 %v4779, %v4761
        %v5644 = vpack.c.b16 %v4780, %v4762
        %v5645 = vpack.c.b16 %v4781, %v4763
        %v5646 = vpack.c.b16 %v4782, %v4764
        %v5647 = vpack.c.b16 %v4783, %v4765
        %v5648 = vpack.c.b16 %v4784, %v4766
        %v5649 = vpack.c.b16 %v4785, %v4767
        %v5650 = vpack.c.b16 %v4786, %v4768
        %v5651 = vpack.c.b16 %v4787, %v4769
        %6516 = vmatprep.subr.bf16.mxu0 %v4915
        %6517 = vmatpush1.bf16.msra.mxu0 %v4914
        %6518 = vmatprep.subr.bf16.mxu0 %v4897
        %6519 = vmatpush1.bf16.msra.mxu0 %v4896
        %6520 = vmatprep.subr.bf16.mxu0 %v4879
        %6521 = vmatpush1.bf16.msra.mxu0 %v4878
        %6522 = vmatprep.subr.bf16.mxu0 %v4861
        %6523 = vmatpush1.bf16.msra.mxu0 %v4860
        %6524 = vmatprep.subr.bf16.mxu0 %v4843
        %6525 = vmatpush1.bf16.msra.mxu0 %v4842
        %6526 = vmatprep.subr.bf16.mxu0 %v4825
        %6527 = vmatpush1.bf16.msra.mxu0 %v4824
        %6528 = vmatprep.subr.bf16.mxu0 %v4807
        %6529 = vmatpush1.bf16.msra.mxu0 %v4806
        %6530 = vmatprep.subr.bf16.mxu0 %v4789
        %6531 = vmatpush1.bf16.msra.mxu0 %v4788
        %6532 = vmatprep.subr.bf16.mxu0 %v5059
        %6533 = vmatpush2.bf16.msra.mxu0 %v5058
        %6534 = vmatprep.subr.bf16.mxu0 %v5041
        %6535 = vmatpush2.bf16.msra.mxu0 %v5040
        %6536 = vmatprep.subr.bf16.mxu0 %v5023
        %6537 = vmatpush2.bf16.msra.mxu0 %v5022
        %6538 = vmatprep.subr.bf16.mxu0 %v5005
        %6539 = vmatpush2.bf16.msra.mxu0 %v5004
        %6540 = vmatprep.subr.bf16.mxu0 %v4987
        %6541 = vmatpush2.bf16.msra.mxu0 %v4986
        %6542 = vmatprep.subr.bf16.mxu0 %v4969
        %6543 = vmatpush2.bf16.msra.mxu0 %v4968
        %6544 = vmatprep.subr.bf16.mxu0 %v4951
        %6545 = vmatpush2.bf16.msra.mxu0 %v4950
        %6546 = vmatprep.subr.bf16.mxu0 %v4933
        %6547 = vmatpush2.bf16.msra.mxu0 %v4932
        %6548 = vmatprep.mubr.bf16.mxu0 %v1231
        %6549 = vmatmul.mubr.bf16.gmra.mxu0 %v1230
        %v6550 = vpop.f32.mrf.mxu0
        %v6551 = vadd.f32 %v2109, %v6550
        %v6552 = vpop.f32.mrf.mxu0
        %v6553 = vadd.f32 %v2113, %v6552
        %v6554 = vpop.f32.mrf.mxu0
        %v6555 = vadd.f32 %v2109, %v6554
        %v6556 = vpop.f32.mrf.mxu0
        %v6557 = vadd.f32 %v2113, %v6556
        %6558 = vdwg.mxu0
        %6559 = vmatprep.subr.bf16.mxu0 %v5203
        %6560 = vmatpush1.bf16.msra.mxu0 %v5202
        %6561 = vmatprep.subr.bf16.mxu0 %v5185
        %6562 = vmatpush1.bf16.msra.mxu0 %v5184
        %6563 = vmatprep.subr.bf16.mxu0 %v5167
        %6564 = vmatpush1.bf16.msra.mxu0 %v5166
        %6565 = vmatprep.subr.bf16.mxu0 %v5149
        %6566 = vmatpush1.bf16.msra.mxu0 %v5148
        %6567 = vmatprep.subr.bf16.mxu0 %v5131
        %6568 = vmatpush1.bf16.msra.mxu0 %v5130
        %6569 = vmatprep.subr.bf16.mxu0 %v5113
        %6570 = vmatpush1.bf16.msra.mxu0 %v5112
        %6571 = vmatprep.subr.bf16.mxu0 %v5095
        %6572 = vmatpush1.bf16.msra.mxu0 %v5094
        %6573 = vmatprep.subr.bf16.mxu0 %v5077
        %6574 = vmatpush1.bf16.msra.mxu0 %v5076
        %6575 = vmatprep.subr.bf16.mxu0 %v5347
        %6576 = vmatpush2.bf16.msra.mxu0 %v5346
        %6577 = vmatprep.subr.bf16.mxu0 %v5329
        %6578 = vmatpush2.bf16.msra.mxu0 %v5328
        %6579 = vmatprep.subr.bf16.mxu0 %v5311
        %6580 = vmatpush2.bf16.msra.mxu0 %v5310
        %6581 = vmatprep.subr.bf16.mxu0 %v5293
        %6582 = vmatpush2.bf16.msra.mxu0 %v5292
        %6583 = vmatprep.subr.bf16.mxu0 %v5275
        %6584 = vmatpush2.bf16.msra.mxu0 %v5274
        %6585 = vmatprep.subr.bf16.mxu0 %v5257
        %6586 = vmatpush2.bf16.msra.mxu0 %v5256
        %6587 = vmatprep.subr.bf16.mxu0 %v5239
        %6588 = vmatpush2.bf16.msra.mxu0 %v5238
        %6589 = vmatprep.subr.bf16.mxu0 %v5221
        %6590 = vmatpush2.bf16.msra.mxu0 %v5220
        %6591 = vmatprep.mubr.bf16.mxu0 %v1233
        %6592 = vmatmul.mubr.bf16.gmra.mxu0 %v1232
        %v6593 = vpop.f32.mrf.mxu0
        %v6594 = vadd.f32 %v6551, %v6593
        %v6595 = vpop.f32.mrf.mxu0
        %v6596 = vadd.f32 %v6553, %v6595
        %v6597 = vpop.f32.mrf.mxu0
        %v6598 = vadd.f32 %v6555, %v6597
        %v6599 = vpop.f32.mrf.mxu0
        %v6600 = vadd.f32 %v6557, %v6599
        %6601 = vdwg.mxu0
        %6602 = vmatprep.subr.bf16.mxu0 %v5491
        %6603 = vmatpush1.bf16.msra.mxu0 %v5490
        %6604 = vmatprep.subr.bf16.mxu0 %v5473
        %6605 = vmatpush1.bf16.msra.mxu0 %v5472
        %6606 = vmatprep.subr.bf16.mxu0 %v5455
        %6607 = vmatpush1.bf16.msra.mxu0 %v5454
        %6608 = vmatprep.subr.bf16.mxu0 %v5437
        %6609 = vmatpush1.bf16.msra.mxu0 %v5436
        %6610 = vmatprep.subr.bf16.mxu0 %v5419
        %6611 = vmatpush1.bf16.msra.mxu0 %v5418
        %6612 = vmatprep.subr.bf16.mxu0 %v5401
        %6613 = vmatpush1.bf16.msra.mxu0 %v5400
        %6614 = vmatprep.subr.bf16.mxu0 %v5383
        %6615 = vmatpush1.bf16.msra.mxu0 %v5382
        %6616 = vmatprep.subr.bf16.mxu0 %v5365
        %6617 = vmatpush1.bf16.msra.mxu0 %v5364
        %6618 = vmatprep.subr.bf16.mxu0 %v5635
        %6619 = vmatpush2.bf16.msra.mxu0 %v5634
        %6620 = vmatprep.subr.bf16.mxu0 %v5617
        %6621 = vmatpush2.bf16.msra.mxu0 %v5616
        %6622 = vmatprep.subr.bf16.mxu0 %v5599
        %6623 = vmatpush2.bf16.msra.mxu0 %v5598
        %6624 = vmatprep.subr.bf16.mxu0 %v5581
        %6625 = vmatpush2.bf16.msra.mxu0 %v5580
        %6626 = vmatprep.subr.bf16.mxu0 %v5563
        %6627 = vmatpush2.bf16.msra.mxu0 %v5562
        %6628 = vmatprep.subr.bf16.mxu0 %v5545
        %6629 = vmatpush2.bf16.msra.mxu0 %v5544
        %6630 = vmatprep.subr.bf16.mxu0 %v5527
        %6631 = vmatpush2.bf16.msra.mxu0 %v5526
        %6632 = vmatprep.subr.bf16.mxu0 %v5509
        %6633 = vmatpush2.bf16.msra.mxu0 %v5508
        %6634 = vmatprep.mubr.bf16.mxu0 %v1235
        %6635 = vmatmul.mubr.bf16.gmra.mxu0 %v1234
        %v6636 = vpop.f32.mrf.mxu0
        %v6637 = vadd.f32 %v6594, %v6636
        %v6638 = vpop.f32.mrf.mxu0
        %v6639 = vadd.f32 %v6596, %v6638
        %v6640 = vpop.f32.mrf.mxu0
        %v6641 = vadd.f32 %v6598, %v6640
        %v6642 = vpop.f32.mrf.mxu0
        %v6643 = vadd.f32 %v6600, %v6642
        %6644 = vdwg.mxu0
        %6645 = vmatprep.subr.bf16.mxu0 %v4917
        %6646 = vmatpush1.bf16.msra.mxu0 %v4916
        %6647 = vmatprep.subr.bf16.mxu0 %v4899
        %6648 = vmatpush1.bf16.msra.mxu0 %v4898
        %6649 = vmatprep.subr.bf16.mxu0 %v4881
        %6650 = vmatpush1.bf16.msra.mxu0 %v4880
        %6651 = vmatprep.subr.bf16.mxu0 %v4863
        %6652 = vmatpush1.bf16.msra.mxu0 %v4862
        %6653 = vmatprep.subr.bf16.mxu0 %v4845
        %6654 = vmatpush1.bf16.msra.mxu0 %v4844
        %6655 = vmatprep.subr.bf16.mxu0 %v4827
        %6656 = vmatpush1.bf16.msra.mxu0 %v4826
        %6657 = vmatprep.subr.bf16.mxu0 %v4809
        %6658 = vmatpush1.bf16.msra.mxu0 %v4808
        %6659 = vmatprep.subr.bf16.mxu0 %v4791
        %6660 = vmatpush1.bf16.msra.mxu0 %v4790
        %6661 = vmatprep.subr.bf16.mxu0 %v5061
        %6662 = vmatpush2.bf16.msra.mxu0 %v5060
        %6663 = vmatprep.subr.bf16.mxu0 %v5043
        %6664 = vmatpush2.bf16.msra.mxu0 %v5042
        %6665 = vmatprep.subr.bf16.mxu0 %v5025
        %6666 = vmatpush2.bf16.msra.mxu0 %v5024
        %6667 = vmatprep.subr.bf16.mxu0 %v5007
        %6668 = vmatpush2.bf16.msra.mxu0 %v5006
        %6669 = vmatprep.subr.bf16.mxu0 %v4989
        %6670 = vmatpush2.bf16.msra.mxu0 %v4988
        %6671 = vmatprep.subr.bf16.mxu0 %v4971
        %6672 = vmatpush2.bf16.msra.mxu0 %v4970
        %6673 = vmatprep.subr.bf16.mxu0 %v4953
        %6674 = vmatpush2.bf16.msra.mxu0 %v4952
        %6675 = vmatprep.subr.bf16.mxu0 %v4935
        %6676 = vmatpush2.bf16.msra.mxu0 %v4934
        %6677 = vmatprep.mubr.bf16.mxu0 %v1231
        %6678 = vmatmul.mubr.bf16.gmra.mxu0 %v1230
        %v6679 = vpop.f32.mrf.mxu0
        %v6680 = vadd.f32 %v2117, %v6679
        %v6681 = vpop.f32.mrf.mxu0
        %v6682 = vadd.f32 %v2121, %v6681
        %v6683 = vpop.f32.mrf.mxu0
        %v6684 = vadd.f32 %v2117, %v6683
        %v6685 = vpop.f32.mrf.mxu0
        %v6686 = vadd.f32 %v2121, %v6685
        %6687 = vdwg.mxu0
        %6688 = vmatprep.subr.bf16.mxu0 %v5205
        %6689 = vmatpush1.bf16.msra.mxu0 %v5204
        %6690 = vmatprep.subr.bf16.mxu0 %v5187
        %6691 = vmatpush1.bf16.msra.mxu0 %v5186
        %6692 = vmatprep.subr.bf16.mxu0 %v5169
        %6693 = vmatpush1.bf16.msra.mxu0 %v5168
        %6694 = vmatprep.subr.bf16.mxu0 %v5151
        %6695 = vmatpush1.bf16.msra.mxu0 %v5150
        %6696 = vmatprep.subr.bf16.mxu0 %v5133
        %6697 = vmatpush1.bf16.msra.mxu0 %v5132
        %6698 = vmatprep.subr.bf16.mxu0 %v5115
        %6699 = vmatpush1.bf16.msra.mxu0 %v5114
        %6700 = vmatprep.subr.bf16.mxu0 %v5097
        %6701 = vmatpush1.bf16.msra.mxu0 %v5096
        %6702 = vmatprep.subr.bf16.mxu0 %v5079
        %6703 = vmatpush1.bf16.msra.mxu0 %v5078
        %6704 = vmatprep.subr.bf16.mxu0 %v5349
        %6705 = vmatpush2.bf16.msra.mxu0 %v5348
        %6706 = vmatprep.subr.bf16.mxu0 %v5331
        %6707 = vmatpush2.bf16.msra.mxu0 %v5330
        %6708 = vmatprep.subr.bf16.mxu0 %v5313
        %6709 = vmatpush2.bf16.msra.mxu0 %v5312
        %6710 = vmatprep.subr.bf16.mxu0 %v5295
        %6711 = vmatpush2.bf16.msra.mxu0 %v5294
        %6712 = vmatprep.subr.bf16.mxu0 %v5277
        %6713 = vmatpush2.bf16.msra.mxu0 %v5276
        %6714 = vmatprep.subr.bf16.mxu0 %v5259
        %6715 = vmatpush2.bf16.msra.mxu0 %v5258
        %6716 = vmatprep.subr.bf16.mxu0 %v5241
        %6717 = vmatpush2.bf16.msra.mxu0 %v5240
        %6718 = vmatprep.subr.bf16.mxu0 %v5223
        %6719 = vmatpush2.bf16.msra.mxu0 %v5222
        %6720 = vmatprep.mubr.bf16.mxu0 %v1233
        %6721 = vmatmul.mubr.bf16.gmra.mxu0 %v1232
        %v6722 = vpop.f32.mrf.mxu0
        %v6723 = vadd.f32 %v6680, %v6722
        %v6724 = vpop.f32.mrf.mxu0
        %v6725 = vadd.f32 %v6682, %v6724
        %v6726 = vpop.f32.mrf.mxu0
        %v6727 = vadd.f32 %v6684, %v6726
        %v6728 = vpop.f32.mrf.mxu0
        %v6729 = vadd.f32 %v6686, %v6728
        %6730 = vdwg.mxu0
        %6731 = vmatprep.subr.bf16.mxu0 %v5493
        %6732 = vmatpush1.bf16.msra.mxu0 %v5492
        %6733 = vmatprep.subr.bf16.mxu0 %v5475
        %6734 = vmatpush1.bf16.msra.mxu0 %v5474
        %6735 = vmatprep.subr.bf16.mxu0 %v5457
        %6736 = vmatpush1.bf16.msra.mxu0 %v5456
        %6737 = vmatprep.subr.bf16.mxu0 %v5439
        %6738 = vmatpush1.bf16.msra.mxu0 %v5438
        %6739 = vmatprep.subr.bf16.mxu0 %v5421
        %6740 = vmatpush1.bf16.msra.mxu0 %v5420
        %6741 = vmatprep.subr.bf16.mxu0 %v5403
        %6742 = vmatpush1.bf16.msra.mxu0 %v5402
        %6743 = vmatprep.subr.bf16.mxu0 %v5385
        %6744 = vmatpush1.bf16.msra.mxu0 %v5384
        %6745 = vmatprep.subr.bf16.mxu0 %v5367
        %6746 = vmatpush1.bf16.msra.mxu0 %v5366
        %6747 = vmatprep.subr.bf16.mxu0 %v5637
        %6748 = vmatpush2.bf16.msra.mxu0 %v5636
        %6749 = vmatprep.subr.bf16.mxu0 %v5619
        %6750 = vmatpush2.bf16.msra.mxu0 %v5618
        %6751 = vmatprep.subr.bf16.mxu0 %v5601
        %6752 = vmatpush2.bf16.msra.mxu0 %v5600
        %6753 = vmatprep.subr.bf16.mxu0 %v5583
        %6754 = vmatpush2.bf16.msra.mxu0 %v5582
        %6755 = vmatprep.subr.bf16.mxu0 %v5565
        %6756 = vmatpush2.bf16.msra.mxu0 %v5564
        %6757 = vmatprep.subr.bf16.mxu0 %v5547
        %6758 = vmatpush2.bf16.msra.mxu0 %v5546
        %6759 = vmatprep.subr.bf16.mxu0 %v5529
        %6760 = vmatpush2.bf16.msra.mxu0 %v5528
        %6761 = vmatprep.subr.bf16.mxu0 %v5511
        %6762 = vmatpush2.bf16.msra.mxu0 %v5510
        %6763 = vmatprep.mubr.bf16.mxu0 %v1235
        %6764 = vmatmul.mubr.bf16.gmra.mxu0 %v1234
        %v6765 = vpop.f32.mrf.mxu0
        %v6766 = vadd.f32 %v6723, %v6765
        %v6767 = vpop.f32.mrf.mxu0
        %v6768 = vadd.f32 %v6725, %v6767
        %v6769 = vpop.f32.mrf.mxu0
        %v6770 = vadd.f32 %v6727, %v6769
        %v6771 = vpop.f32.mrf.mxu0
        %v6772 = vadd.f32 %v6729, %v6771
        %6773 = vdwg.mxu0
        %6774 = vmatprep.subr.bf16.mxu0 %v4919
        %6775 = vmatpush1.bf16.msra.mxu0 %v4918
        %6776 = vmatprep.subr.bf16.mxu0 %v4901
        %6777 = vmatpush1.bf16.msra.mxu0 %v4900
        %6778 = vmatprep.subr.bf16.mxu0 %v4883
        %6779 = vmatpush1.bf16.msra.mxu0 %v4882
        %6780 = vmatprep.subr.bf16.mxu0 %v4865
        %6781 = vmatpush1.bf16.msra.mxu0 %v4864
        %6782 = vmatprep.subr.bf16.mxu0 %v4847
        %6783 = vmatpush1.bf16.msra.mxu0 %v4846
        %6784 = vmatprep.subr.bf16.mxu0 %v4829
        %6785 = vmatpush1.bf16.msra.mxu0 %v4828
        %6786 = vmatprep.subr.bf16.mxu0 %v4811
        %6787 = vmatpush1.bf16.msra.mxu0 %v4810
        %6788 = vmatprep.subr.bf16.mxu0 %v4793
        %6789 = vmatpush1.bf16.msra.mxu0 %v4792
        %6790 = vmatprep.subr.bf16.mxu0 %v5063
        %6791 = vmatpush2.bf16.msra.mxu0 %v5062
        %6792 = vmatprep.subr.bf16.mxu0 %v5045
        %6793 = vmatpush2.bf16.msra.mxu0 %v5044
        %6794 = vmatprep.subr.bf16.mxu0 %v5027
        %6795 = vmatpush2.bf16.msra.mxu0 %v5026
        %6796 = vmatprep.subr.bf16.mxu0 %v5009
        %6797 = vmatpush2.bf16.msra.mxu0 %v5008
        %6798 = vmatprep.subr.bf16.mxu0 %v4991
        %6799 = vmatpush2.bf16.msra.mxu0 %v4990
        %6800 = vmatprep.subr.bf16.mxu0 %v4973
        %6801 = vmatpush2.bf16.msra.mxu0 %v4972
        %6802 = vmatprep.subr.bf16.mxu0 %v4955
        %6803 = vmatpush2.bf16.msra.mxu0 %v4954
        %6804 = vmatprep.subr.bf16.mxu0 %v4937
        %6805 = vmatpush2.bf16.msra.mxu0 %v4936
        %6806 = vmatprep.mubr.bf16.mxu0 %v1231
        %6807 = vmatmul.mubr.bf16.gmra.mxu0 %v1230
        %v6808 = vpop.f32.mrf.mxu0
        %v6809 = vadd.f32 %v2125, %v6808
        %v6810 = vpop.f32.mrf.mxu0
        %v6811 = vadd.f32 %v2129, %v6810
        %v6812 = vpop.f32.mrf.mxu0
        %v6813 = vadd.f32 %v2125, %v6812
        %v6814 = vpop.f32.mrf.mxu0
        %v6815 = vadd.f32 %v2129, %v6814
        %6816 = vdwg.mxu0
        %6817 = vmatprep.subr.bf16.mxu0 %v5207
        %6818 = vmatpush1.bf16.msra.mxu0 %v5206
        %6819 = vmatprep.subr.bf16.mxu0 %v5189
        %6820 = vmatpush1.bf16.msra.mxu0 %v5188
        %6821 = vmatprep.subr.bf16.mxu0 %v5171
        %6822 = vmatpush1.bf16.msra.mxu0 %v5170
        %6823 = vmatprep.subr.bf16.mxu0 %v5153
        %6824 = vmatpush1.bf16.msra.mxu0 %v5152
        %6825 = vmatprep.subr.bf16.mxu0 %v5135
        %6826 = vmatpush1.bf16.msra.mxu0 %v5134
        %6827 = vmatprep.subr.bf16.mxu0 %v5117
        %6828 = vmatpush1.bf16.msra.mxu0 %v5116
        %6829 = vmatprep.subr.bf16.mxu0 %v5099
        %6830 = vmatpush1.bf16.msra.mxu0 %v5098
        %6831 = vmatprep.subr.bf16.mxu0 %v5081
        %6832 = vmatpush1.bf16.msra.mxu0 %v5080
        %6833 = vmatprep.subr.bf16.mxu0 %v5351
        %6834 = vmatpush2.bf16.msra.mxu0 %v5350
        %6835 = vmatprep.subr.bf16.mxu0 %v5333
        %6836 = vmatpush2.bf16.msra.mxu0 %v5332
        %6837 = vmatprep.subr.bf16.mxu0 %v5315
        %6838 = vmatpush2.bf16.msra.mxu0 %v5314
        %6839 = vmatprep.subr.bf16.mxu0 %v5297
        %6840 = vmatpush2.bf16.msra.mxu0 %v5296
        %6841 = vmatprep.subr.bf16.mxu0 %v5279
        %6842 = vmatpush2.bf16.msra.mxu0 %v5278
        %6843 = vmatprep.subr.bf16.mxu0 %v5261
        %6844 = vmatpush2.bf16.msra.mxu0 %v5260
        %6845 = vmatprep.subr.bf16.mxu0 %v5243
        %6846 = vmatpush2.bf16.msra.mxu0 %v5242
        %6847 = vmatprep.subr.bf16.mxu0 %v5225
        %6848 = vmatpush2.bf16.msra.mxu0 %v5224
        %6849 = vmatprep.mubr.bf16.mxu0 %v1233
        %6850 = vmatmul.mubr.bf16.gmra.mxu0 %v1232
        %v6851 = vpop.f32.mrf.mxu0
        %v6852 = vadd.f32 %v6809, %v6851
        %v6853 = vpop.f32.mrf.mxu0
        %v6854 = vadd.f32 %v6811, %v6853
        %v6855 = vpop.f32.mrf.mxu0
        %v6856 = vadd.f32 %v6813, %v6855
        %v6857 = vpop.f32.mrf.mxu0
        %v6858 = vadd.f32 %v6815, %v6857
        %6859 = vdwg.mxu0
        %6860 = vmatprep.subr.bf16.mxu0 %v5495
        %6861 = vmatpush1.bf16.msra.mxu0 %v5494
        %6862 = vmatprep.subr.bf16.mxu0 %v5477
        %6863 = vmatpush1.bf16.msra.mxu0 %v5476
        %6864 = vmatprep.subr.bf16.mxu0 %v5459
        %6865 = vmatpush1.bf16.msra.mxu0 %v5458
        %6866 = vmatprep.subr.bf16.mxu0 %v5441
        %6867 = vmatpush1.bf16.msra.mxu0 %v5440
        %6868 = vmatprep.subr.bf16.mxu0 %v5423
        %6869 = vmatpush1.bf16.msra.mxu0 %v5422
        %6870 = vmatprep.subr.bf16.mxu0 %v5405
        %6871 = vmatpush1.bf16.msra.mxu0 %v5404
        %6872 = vmatprep.subr.bf16.mxu0 %v5387
        %6873 = vmatpush1.bf16.msra.mxu0 %v5386
        %6874 = vmatprep.subr.bf16.mxu0 %v5369
        %6875 = vmatpush1.bf16.msra.mxu0 %v5368
        %6876 = vmatprep.subr.bf16.mxu0 %v5639
        %6877 = vmatpush2.bf16.msra.mxu0 %v5638
        %6878 = vmatprep.subr.bf16.mxu0 %v5621
        %6879 = vmatpush2.bf16.msra.mxu0 %v5620
        %6880 = vmatprep.subr.bf16.mxu0 %v5603
        %6881 = vmatpush2.bf16.msra.mxu0 %v5602
        %6882 = vmatprep.subr.bf16.mxu0 %v5585
        %6883 = vmatpush2.bf16.msra.mxu0 %v5584
        %6884 = vmatprep.subr.bf16.mxu0 %v5567
        %6885 = vmatpush2.bf16.msra.mxu0 %v5566
        %6886 = vmatprep.subr.bf16.mxu0 %v5549
        %6887 = vmatpush2.bf16.msra.mxu0 %v5548
        %6888 = vmatprep.subr.bf16.mxu0 %v5531
        %6889 = vmatpush2.bf16.msra.mxu0 %v5530
        %6890 = vmatprep.subr.bf16.mxu0 %v5513
        %6891 = vmatpush2.bf16.msra.mxu0 %v5512
        %6892 = vmatprep.mubr.bf16.mxu0 %v1235
        %6893 = vmatmul.mubr.bf16.gmra.mxu0 %v1234
        %v6894 = vpop.f32.mrf.mxu0
        %v6895 = vadd.f32 %v6852, %v6894
        %v6896 = vpop.f32.mrf.mxu0
        %v6897 = vadd.f32 %v6854, %v6896
        %v6898 = vpop.f32.mrf.mxu0
        %v6899 = vadd.f32 %v6856, %v6898
        %v6900 = vpop.f32.mrf.mxu0
        %v6901 = vadd.f32 %v6858, %v6900
        %6902 = vdwg.mxu0
        %6903 = vmatprep.subr.bf16.mxu0 %v4921
        %6904 = vmatpush1.bf16.msra.mxu0 %v4920
        %6905 = vmatprep.subr.bf16.mxu0 %v4903
        %6906 = vmatpush1.bf16.msra.mxu0 %v4902
        %6907 = vmatprep.subr.bf16.mxu0 %v4885
        %6908 = vmatpush1.bf16.msra.mxu0 %v4884
        %6909 = vmatprep.subr.bf16.mxu0 %v4867
        %6910 = vmatpush1.bf16.msra.mxu0 %v4866
        %6911 = vmatprep.subr.bf16.mxu0 %v4849
        %6912 = vmatpush1.bf16.msra.mxu0 %v4848
        %6913 = vmatprep.subr.bf16.mxu0 %v4831
        %6914 = vmatpush1.bf16.msra.mxu0 %v4830
        %6915 = vmatprep.subr.bf16.mxu0 %v4813
        %6916 = vmatpush1.bf16.msra.mxu0 %v4812
        %6917 = vmatprep.subr.bf16.mxu0 %v4795
        %6918 = vmatpush1.bf16.msra.mxu0 %v4794
        %6919 = vmatprep.subr.bf16.mxu0 %v5065
        %6920 = vmatpush2.bf16.msra.mxu0 %v5064
        %6921 = vmatprep.subr.bf16.mxu0 %v5047
        %6922 = vmatpush2.bf16.msra.mxu0 %v5046
        %6923 = vmatprep.subr.bf16.mxu0 %v5029
        %6924 = vmatpush2.bf16.msra.mxu0 %v5028
        %6925 = vmatprep.subr.bf16.mxu0 %v5011
        %6926 = vmatpush2.bf16.msra.mxu0 %v5010
        %6927 = vmatprep.subr.bf16.mxu0 %v4993
        %6928 = vmatpush2.bf16.msra.mxu0 %v4992
        %6929 = vmatprep.subr.bf16.mxu0 %v4975
        %6930 = vmatpush2.bf16.msra.mxu0 %v4974
        %6931 = vmatprep.subr.bf16.mxu0 %v4957
        %6932 = vmatpush2.bf16.msra.mxu0 %v4956
        %6933 = vmatprep.subr.bf16.mxu0 %v4939
        %6934 = vmatpush2.bf16.msra.mxu0 %v4938
        %6935 = vmatprep.mubr.bf16.mxu0 %v1231
        %6936 = vmatmul.mubr.bf16.gmra.mxu0 %v1230
        %v6937 = vpop.f32.mrf.mxu0
        %v6938 = vadd.f32 %v2133, %v6937
        %v6939 = vpop.f32.mrf.mxu0
        %v6940 = vadd.f32 %v2137, %v6939
        %v6941 = vpop.f32.mrf.mxu0
        %v6942 = vadd.f32 %v2133, %v6941
        %v6943 = vpop.f32.mrf.mxu0
        %v6944 = vadd.f32 %v2137, %v6943
        %6945 = vdwg.mxu0
        %6946 = vmatprep.subr.bf16.mxu0 %v5209
        %6947 = vmatpush1.bf16.msra.mxu0 %v5208
        %6948 = vmatprep.subr.bf16.mxu0 %v5191
        %6949 = vmatpush1.bf16.msra.mxu0 %v5190
        %6950 = vmatprep.subr.bf16.mxu0 %v5173
        %6951 = vmatpush1.bf16.msra.mxu0 %v5172
        %6952 = vmatprep.subr.bf16.mxu0 %v5155
        %6953 = vmatpush1.bf16.msra.mxu0 %v5154
        %6954 = vmatprep.subr.bf16.mxu0 %v5137
        %6955 = vmatpush1.bf16.msra.mxu0 %v5136
        %6956 = vmatprep.subr.bf16.mxu0 %v5119
        %6957 = vmatpush1.bf16.msra.mxu0 %v5118
        %6958 = vmatprep.subr.bf16.mxu0 %v5101
        %6959 = vmatpush1.bf16.msra.mxu0 %v5100
        %6960 = vmatprep.subr.bf16.mxu0 %v5083
        %6961 = vmatpush1.bf16.msra.mxu0 %v5082
        %6962 = vmatprep.subr.bf16.mxu0 %v5353
        %6963 = vmatpush2.bf16.msra.mxu0 %v5352
        %6964 = vmatprep.subr.bf16.mxu0 %v5335
        %6965 = vmatpush2.bf16.msra.mxu0 %v5334
        %6966 = vmatprep.subr.bf16.mxu0 %v5317
        %6967 = vmatpush2.bf16.msra.mxu0 %v5316
        %6968 = vmatprep.subr.bf16.mxu0 %v5299
        %6969 = vmatpush2.bf16.msra.mxu0 %v5298
        %6970 = vmatprep.subr.bf16.mxu0 %v5281
        %6971 = vmatpush2.bf16.msra.mxu0 %v5280
        %6972 = vmatprep.subr.bf16.mxu0 %v5263
        %6973 = vmatpush2.bf16.msra.mxu0 %v5262
        %6974 = vmatprep.subr.bf16.mxu0 %v5245
        %6975 = vmatpush2.bf16.msra.mxu0 %v5244
        %6976 = vmatprep.subr.bf16.mxu0 %v5227
        %6977 = vmatpush2.bf16.msra.mxu0 %v5226
        %6978 = vmatprep.mubr.bf16.mxu0 %v1233
        %6979 = vmatmul.mubr.bf16.gmra.mxu0 %v1232
        %v6980 = vpop.f32.mrf.mxu0
        %v6981 = vadd.f32 %v6938, %v6980
        %v6982 = vpop.f32.mrf.mxu0
        %v6983 = vadd.f32 %v6940, %v6982
        %v6984 = vpop.f32.mrf.mxu0
        %v6985 = vadd.f32 %v6942, %v6984
        %v6986 = vpop.f32.mrf.mxu0
        %v6987 = vadd.f32 %v6944, %v6986
        %6988 = vdwg.mxu0
        %6989 = vmatprep.subr.bf16.mxu0 %v5497
        %6990 = vmatpush1.bf16.msra.mxu0 %v5496
        %6991 = vmatprep.subr.bf16.mxu0 %v5479
        %6992 = vmatpush1.bf16.msra.mxu0 %v5478
        %6993 = vmatprep.subr.bf16.mxu0 %v5461
        %6994 = vmatpush1.bf16.msra.mxu0 %v5460
        %6995 = vmatprep.subr.bf16.mxu0 %v5443
        %6996 = vmatpush1.bf16.msra.mxu0 %v5442
        %6997 = vmatprep.subr.bf16.mxu0 %v5425
        %6998 = vmatpush1.bf16.msra.mxu0 %v5424
        %6999 = vmatprep.subr.bf16.mxu0 %v5407
        %7000 = vmatpush1.bf16.msra.mxu0 %v5406
        %7001 = vmatprep.subr.bf16.mxu0 %v5389
        %7002 = vmatpush1.bf16.msra.mxu0 %v5388
        %7003 = vmatprep.subr.bf16.mxu0 %v5371
        %7004 = vmatpush1.bf16.msra.mxu0 %v5370
        %7005 = vmatprep.subr.bf16.mxu0 %v5641
        %7006 = vmatpush2.bf16.msra.mxu0 %v5640
        %7007 = vmatprep.subr.bf16.mxu0 %v5623
        %7008 = vmatpush2.bf16.msra.mxu0 %v5622
        %7009 = vmatprep.subr.bf16.mxu0 %v5605
        %7010 = vmatpush2.bf16.msra.mxu0 %v5604
        %7011 = vmatprep.subr.bf16.mxu0 %v5587
        %7012 = vmatpush2.bf16.msra.mxu0 %v5586
        %7013 = vmatprep.subr.bf16.mxu0 %v5569
        %7014 = vmatpush2.bf16.msra.mxu0 %v5568
        %7015 = vmatprep.subr.bf16.mxu0 %v5551
        %7016 = vmatpush2.bf16.msra.mxu0 %v5550
        %7017 = vmatprep.subr.bf16.mxu0 %v5533
        %7018 = vmatpush2.bf16.msra.mxu0 %v5532
        %7019 = vmatprep.subr.bf16.mxu0 %v5515
        %7020 = vmatpush2.bf16.msra.mxu0 %v5514
        %7021 = vmatprep.mubr.bf16.mxu0 %v1235
        %7022 = vmatmul.mubr.bf16.gmra.mxu0 %v1234
        %v7023 = vpop.f32.mrf.mxu0
        %v7024 = vadd.f32 %v6981, %v7023
        %v7025 = vpop.f32.mrf.mxu0
        %v7026 = vadd.f32 %v6983, %v7025
        %v7027 = vpop.f32.mrf.mxu0
        %v7028 = vadd.f32 %v6985, %v7027
        %v7029 = vpop.f32.mrf.mxu0
        %v7030 = vadd.f32 %v6987, %v7029
        %7031 = vdwg.mxu0
        %7032 = vmatprep.subr.bf16.mxu0 %v4923
        %7033 = vmatpush1.bf16.msra.mxu0 %v4922
        %7034 = vmatprep.subr.bf16.mxu0 %v4905
        %7035 = vmatpush1.bf16.msra.mxu0 %v4904
        %7036 = vmatprep.subr.bf16.mxu0 %v4887
        %7037 = vmatpush1.bf16.msra.mxu0 %v4886
        %7038 = vmatprep.subr.bf16.mxu0 %v4869
        %7039 = vmatpush1.bf16.msra.mxu0 %v4868
        %7040 = vmatprep.subr.bf16.mxu0 %v4851
        %7041 = vmatpush1.bf16.msra.mxu0 %v4850
        %7042 = vmatprep.subr.bf16.mxu0 %v4833
        %7043 = vmatpush1.bf16.msra.mxu0 %v4832
        %7044 = vmatprep.subr.bf16.mxu0 %v4815
        %7045 = vmatpush1.bf16.msra.mxu0 %v4814
        %7046 = vmatprep.subr.bf16.mxu0 %v4797
        %7047 = vmatpush1.bf16.msra.mxu0 %v4796
        %7048 = vmatprep.subr.bf16.mxu0 %v5067
        %7049 = vmatpush2.bf16.msra.mxu0 %v5066
        %7050 = vmatprep.subr.bf16.mxu0 %v5049
        %7051 = vmatpush2.bf16.msra.mxu0 %v5048
        %7052 = vmatprep.subr.bf16.mxu0 %v5031
        %7053 = vmatpush2.bf16.msra.mxu0 %v5030
        %7054 = vmatprep.subr.bf16.mxu0 %v5013
        %7055 = vmatpush2.bf16.msra.mxu0 %v5012
        %7056 = vmatprep.subr.bf16.mxu0 %v4995
        %7057 = vmatpush2.bf16.msra.mxu0 %v4994
        %7058 = vmatprep.subr.bf16.mxu0 %v4977
        %7059 = vmatpush2.bf16.msra.mxu0 %v4976
        %7060 = vmatprep.subr.bf16.mxu0 %v4959
        %7061 = vmatpush2.bf16.msra.mxu0 %v4958
        %7062 = vmatprep.subr.bf16.mxu0 %v4941
        %7063 = vmatpush2.bf16.msra.mxu0 %v4940
        %7064 = vmatprep.mubr.bf16.mxu0 %v1231
        %7065 = vmatmul.mubr.bf16.gmra.mxu0 %v1230
        %v7066 = vpop.f32.mrf.mxu0
        %v7067 = vadd.f32 %v2141, %v7066
        %v7068 = vpop.f32.mrf.mxu0
        %v7069 = vadd.f32 %v2145, %v7068
        %v7070 = vpop.f32.mrf.mxu0
        %v7071 = vadd.f32 %v2141, %v7070
        %v7072 = vpop.f32.mrf.mxu0
        %v7073 = vadd.f32 %v2145, %v7072
        %7074 = vdwg.mxu0
        %7075 = vmatprep.subr.bf16.mxu0 %v5211
        %7076 = vmatpush1.bf16.msra.mxu0 %v5210
        %7077 = vmatprep.subr.bf16.mxu0 %v5193
        %7078 = vmatpush1.bf16.msra.mxu0 %v5192
        %7079 = vmatprep.subr.bf16.mxu0 %v5175
        %7080 = vmatpush1.bf16.msra.mxu0 %v5174
        %7081 = vmatprep.subr.bf16.mxu0 %v5157
        %7082 = vmatpush1.bf16.msra.mxu0 %v5156
        %7083 = vmatprep.subr.bf16.mxu0 %v5139
        %7084 = vmatpush1.bf16.msra.mxu0 %v5138
        %7085 = vmatprep.subr.bf16.mxu0 %v5121
        %7086 = vmatpush1.bf16.msra.mxu0 %v5120
        %7087 = vmatprep.subr.bf16.mxu0 %v5103
        %7088 = vmatpush1.bf16.msra.mxu0 %v5102
        %7089 = vmatprep.subr.bf16.mxu0 %v5085
        %7090 = vmatpush1.bf16.msra.mxu0 %v5084
        %7091 = vmatprep.subr.bf16.mxu0 %v5355
        %7092 = vmatpush2.bf16.msra.mxu0 %v5354
        %7093 = vmatprep.subr.bf16.mxu0 %v5337
        %7094 = vmatpush2.bf16.msra.mxu0 %v5336
        %7095 = vmatprep.subr.bf16.mxu0 %v5319
        %7096 = vmatpush2.bf16.msra.mxu0 %v5318
        %7097 = vmatprep.subr.bf16.mxu0 %v5301
        %7098 = vmatpush2.bf16.msra.mxu0 %v5300
        %7099 = vmatprep.subr.bf16.mxu0 %v5283
        %7100 = vmatpush2.bf16.msra.mxu0 %v5282
        %7101 = vmatprep.subr.bf16.mxu0 %v5265
        %7102 = vmatpush2.bf16.msra.mxu0 %v5264
        %7103 = vmatprep.subr.bf16.mxu0 %v5247
        %7104 = vmatpush2.bf16.msra.mxu0 %v5246
        %7105 = vmatprep.subr.bf16.mxu0 %v5229
        %7106 = vmatpush2.bf16.msra.mxu0 %v5228
        %7107 = vmatprep.mubr.bf16.mxu0 %v1233
        %7108 = vmatmul.mubr.bf16.gmra.mxu0 %v1232
        %v7109 = vpop.f32.mrf.mxu0
        %v7110 = vadd.f32 %v7067, %v7109
        %v7111 = vpop.f32.mrf.mxu0
        %v7112 = vadd.f32 %v7069, %v7111
        %v7113 = vpop.f32.mrf.mxu0
        %v7114 = vadd.f32 %v7071, %v7113
        %v7115 = vpop.f32.mrf.mxu0
        %v7116 = vadd.f32 %v7073, %v7115
        %7117 = vdwg.mxu0
        %7118 = vmatprep.subr.bf16.mxu0 %v5499
        %7119 = vmatpush1.bf16.msra.mxu0 %v5498
        %7120 = vmatprep.subr.bf16.mxu0 %v5481
        %7121 = vmatpush1.bf16.msra.mxu0 %v5480
        %7122 = vmatprep.subr.bf16.mxu0 %v5463
        %7123 = vmatpush1.bf16.msra.mxu0 %v5462
        %7124 = vmatprep.subr.bf16.mxu0 %v5445
        %7125 = vmatpush1.bf16.msra.mxu0 %v5444
        %7126 = vmatprep.subr.bf16.mxu0 %v5427
        %7127 = vmatpush1.bf16.msra.mxu0 %v5426
        %7128 = vmatprep.subr.bf16.mxu0 %v5409
        %7129 = vmatpush1.bf16.msra.mxu0 %v5408
        %7130 = vmatprep.subr.bf16.mxu0 %v5391
        %7131 = vmatpush1.bf16.msra.mxu0 %v5390
        %7132 = vmatprep.subr.bf16.mxu0 %v5373
        %7133 = vmatpush1.bf16.msra.mxu0 %v5372
        %7134 = vmatprep.subr.bf16.mxu0 %v5643
        %7135 = vmatpush2.bf16.msra.mxu0 %v5642
        %7136 = vmatprep.subr.bf16.mxu0 %v5625
        %7137 = vmatpush2.bf16.msra.mxu0 %v5624
        %7138 = vmatprep.subr.bf16.mxu0 %v5607
        %7139 = vmatpush2.bf16.msra.mxu0 %v5606
        %7140 = vmatprep.subr.bf16.mxu0 %v5589
        %7141 = vmatpush2.bf16.msra.mxu0 %v5588
        %7142 = vmatprep.subr.bf16.mxu0 %v5571
        %7143 = vmatpush2.bf16.msra.mxu0 %v5570
        %7144 = vmatprep.subr.bf16.mxu0 %v5553
        %7145 = vmatpush2.bf16.msra.mxu0 %v5552
        %7146 = vmatprep.subr.bf16.mxu0 %v5535
        %7147 = vmatpush2.bf16.msra.mxu0 %v5534
        %7148 = vmatprep.subr.bf16.mxu0 %v5517
        %7149 = vmatpush2.bf16.msra.mxu0 %v5516
        %7150 = vmatprep.mubr.bf16.mxu0 %v1235
        %7151 = vmatmul.mubr.bf16.gmra.mxu0 %v1234
        %v7152 = vpop.f32.mrf.mxu0
        %v7153 = vadd.f32 %v7110, %v7152
        %v7154 = vpop.f32.mrf.mxu0
        %v7155 = vadd.f32 %v7112, %v7154
        %v7156 = vpop.f32.mrf.mxu0
        %v7157 = vadd.f32 %v7114, %v7156
        %v7158 = vpop.f32.mrf.mxu0
        %v7159 = vadd.f32 %v7116, %v7158
        %7160 = vdwg.mxu0
        %7161 = vmatprep.subr.bf16.mxu0 %v4925
        %7162 = vmatpush1.bf16.msra.mxu0 %v4924
        %7163 = vmatprep.subr.bf16.mxu0 %v4907
        %7164 = vmatpush1.bf16.msra.mxu0 %v4906
        %7165 = vmatprep.subr.bf16.mxu0 %v4889
        %7166 = vmatpush1.bf16.msra.mxu0 %v4888
        %7167 = vmatprep.subr.bf16.mxu0 %v4871
        %7168 = vmatpush1.bf16.msra.mxu0 %v4870
        %7169 = vmatprep.subr.bf16.mxu0 %v4853
        %7170 = vmatpush1.bf16.msra.mxu0 %v4852
        %7171 = vmatprep.subr.bf16.mxu0 %v4835
        %7172 = vmatpush1.bf16.msra.mxu0 %v4834
        %7173 = vmatprep.subr.bf16.mxu0 %v4817
        %7174 = vmatpush1.bf16.msra.mxu0 %v4816
        %7175 = vmatprep.subr.bf16.mxu0 %v4799
        %7176 = vmatpush1.bf16.msra.mxu0 %v4798
        %7177 = vmatprep.subr.bf16.mxu0 %v5069
        %7178 = vmatpush2.bf16.msra.mxu0 %v5068
        %7179 = vmatprep.subr.bf16.mxu0 %v5051
        %7180 = vmatpush2.bf16.msra.mxu0 %v5050
        %7181 = vmatprep.subr.bf16.mxu0 %v5033
        %7182 = vmatpush2.bf16.msra.mxu0 %v5032
        %7183 = vmatprep.subr.bf16.mxu0 %v5015
        %7184 = vmatpush2.bf16.msra.mxu0 %v5014
        %7185 = vmatprep.subr.bf16.mxu0 %v4997
        %7186 = vmatpush2.bf16.msra.mxu0 %v4996
        %7187 = vmatprep.subr.bf16.mxu0 %v4979
        %7188 = vmatpush2.bf16.msra.mxu0 %v4978
        %7189 = vmatprep.subr.bf16.mxu0 %v4961
        %7190 = vmatpush2.bf16.msra.mxu0 %v4960
        %7191 = vmatprep.subr.bf16.mxu0 %v4943
        %7192 = vmatpush2.bf16.msra.mxu0 %v4942
        %7193 = vmatprep.mubr.bf16.mxu0 %v1231
        %7194 = vmatmul.mubr.bf16.gmra.mxu0 %v1230
        %v7195 = vpop.f32.mrf.mxu0
        %v7196 = vadd.f32 %v2149, %v7195
        %v7197 = vpop.f32.mrf.mxu0
        %v7198 = vadd.f32 %v2153, %v7197
        %v7199 = vpop.f32.mrf.mxu0
        %v7200 = vadd.f32 %v2149, %v7199
        %v7201 = vpop.f32.mrf.mxu0
        %v7202 = vadd.f32 %v2153, %v7201
        %7203 = vdwg.mxu0
        %7204 = vmatprep.subr.bf16.mxu0 %v5213
        %7205 = vmatpush1.bf16.msra.mxu0 %v5212
        %7206 = vmatprep.subr.bf16.mxu0 %v5195
        %7207 = vmatpush1.bf16.msra.mxu0 %v5194
        %7208 = vmatprep.subr.bf16.mxu0 %v5177
        %7209 = vmatpush1.bf16.msra.mxu0 %v5176
        %7210 = vmatprep.subr.bf16.mxu0 %v5159
        %7211 = vmatpush1.bf16.msra.mxu0 %v5158
        %7212 = vmatprep.subr.bf16.mxu0 %v5141
        %7213 = vmatpush1.bf16.msra.mxu0 %v5140
        %7214 = vmatprep.subr.bf16.mxu0 %v5123
        %7215 = vmatpush1.bf16.msra.mxu0 %v5122
        %7216 = vmatprep.subr.bf16.mxu0 %v5105
        %7217 = vmatpush1.bf16.msra.mxu0 %v5104
        %7218 = vmatprep.subr.bf16.mxu0 %v5087
        %7219 = vmatpush1.bf16.msra.mxu0 %v5086
        %7220 = vmatprep.subr.bf16.mxu0 %v5357
        %7221 = vmatpush2.bf16.msra.mxu0 %v5356
        %7222 = vmatprep.subr.bf16.mxu0 %v5339
        %7223 = vmatpush2.bf16.msra.mxu0 %v5338
        %7224 = vmatprep.subr.bf16.mxu0 %v5321
        %7225 = vmatpush2.bf16.msra.mxu0 %v5320
        %7226 = vmatprep.subr.bf16.mxu0 %v5303
        %7227 = vmatpush2.bf16.msra.mxu0 %v5302
        %7228 = vmatprep.subr.bf16.mxu0 %v5285
        %7229 = vmatpush2.bf16.msra.mxu0 %v5284
        %7230 = vmatprep.subr.bf16.mxu0 %v5267
        %7231 = vmatpush2.bf16.msra.mxu0 %v5266
        %7232 = vmatprep.subr.bf16.mxu0 %v5249
        %7233 = vmatpush2.bf16.msra.mxu0 %v5248
        %7234 = vmatprep.subr.bf16.mxu0 %v5231
        %7235 = vmatpush2.bf16.msra.mxu0 %v5230
        %7236 = vmatprep.mubr.bf16.mxu0 %v1233
        %7237 = vmatmul.mubr.bf16.gmra.mxu0 %v1232
        %v7238 = vpop.f32.mrf.mxu0
        %v7239 = vadd.f32 %v7196, %v7238
        %v7240 = vpop.f32.mrf.mxu0
        %v7241 = vadd.f32 %v7198, %v7240
        %v7242 = vpop.f32.mrf.mxu0
        %v7243 = vadd.f32 %v7200, %v7242
        %v7244 = vpop.f32.mrf.mxu0
        %v7245 = vadd.f32 %v7202, %v7244
        %7246 = vdwg.mxu0
        %7247 = vmatprep.subr.bf16.mxu0 %v5501
        %7248 = vmatpush1.bf16.msra.mxu0 %v5500
        %7249 = vmatprep.subr.bf16.mxu0 %v5483
        %7250 = vmatpush1.bf16.msra.mxu0 %v5482
        %7251 = vmatprep.subr.bf16.mxu0 %v5465
        %7252 = vmatpush1.bf16.msra.mxu0 %v5464
        %7253 = vmatprep.subr.bf16.mxu0 %v5447
        %7254 = vmatpush1.bf16.msra.mxu0 %v5446
        %7255 = vmatprep.subr.bf16.mxu0 %v5429
        %7256 = vmatpush1.bf16.msra.mxu0 %v5428
        %7257 = vmatprep.subr.bf16.mxu0 %v5411
        %7258 = vmatpush1.bf16.msra.mxu0 %v5410
        %7259 = vmatprep.subr.bf16.mxu0 %v5393
        %7260 = vmatpush1.bf16.msra.mxu0 %v5392
        %7261 = vmatprep.subr.bf16.mxu0 %v5375
        %7262 = vmatpush1.bf16.msra.mxu0 %v5374
        %7263 = vmatprep.subr.bf16.mxu0 %v5645
        %7264 = vmatpush2.bf16.msra.mxu0 %v5644
        %7265 = vmatprep.subr.bf16.mxu0 %v5627
        %7266 = vmatpush2.bf16.msra.mxu0 %v5626
        %7267 = vmatprep.subr.bf16.mxu0 %v5609
        %7268 = vmatpush2.bf16.msra.mxu0 %v5608
        %7269 = vmatprep.subr.bf16.mxu0 %v5591
        %7270 = vmatpush2.bf16.msra.mxu0 %v5590
        %7271 = vmatprep.subr.bf16.mxu0 %v5573
        %7272 = vmatpush2.bf16.msra.mxu0 %v5572
        %7273 = vmatprep.subr.bf16.mxu0 %v5555
        %7274 = vmatpush2.bf16.msra.mxu0 %v5554
        %7275 = vmatprep.subr.bf16.mxu0 %v5537
        %7276 = vmatpush2.bf16.msra.mxu0 %v5536
        %7277 = vmatprep.subr.bf16.mxu0 %v5519
        %7278 = vmatpush2.bf16.msra.mxu0 %v5518
        %7279 = vmatprep.mubr.bf16.mxu0 %v1235
        %7280 = vmatmul.mubr.bf16.gmra.mxu0 %v1234
        %v7281 = vpop.f32.mrf.mxu0
        %v7282 = vadd.f32 %v7239, %v7281
        %v7283 = vpop.f32.mrf.mxu0
        %v7284 = vadd.f32 %v7241, %v7283
        %v7285 = vpop.f32.mrf.mxu0
        %v7286 = vadd.f32 %v7243, %v7285
        %v7287 = vpop.f32.mrf.mxu0
        %v7288 = vadd.f32 %v7245, %v7287
        %7289 = vdwg.mxu0
        %7290 = vmatprep.subr.bf16.mxu0 %v4927
        %7291 = vmatpush1.bf16.msra.mxu0 %v4926
        %7292 = vmatprep.subr.bf16.mxu0 %v4909
        %7293 = vmatpush1.bf16.msra.mxu0 %v4908
        %7294 = vmatprep.subr.bf16.mxu0 %v4891
        %7295 = vmatpush1.bf16.msra.mxu0 %v4890
        %7296 = vmatprep.subr.bf16.mxu0 %v4873
        %7297 = vmatpush1.bf16.msra.mxu0 %v4872
        %7298 = vmatprep.subr.bf16.mxu0 %v4855
        %7299 = vmatpush1.bf16.msra.mxu0 %v4854
        %7300 = vmatprep.subr.bf16.mxu0 %v4837
        %7301 = vmatpush1.bf16.msra.mxu0 %v4836
        %7302 = vmatprep.subr.bf16.mxu0 %v4819
        %7303 = vmatpush1.bf16.msra.mxu0 %v4818
        %7304 = vmatprep.subr.bf16.mxu0 %v4801
        %7305 = vmatpush1.bf16.msra.mxu0 %v4800
        %7306 = vmatprep.subr.bf16.mxu0 %v5071
        %7307 = vmatpush2.bf16.msra.mxu0 %v5070
        %7308 = vmatprep.subr.bf16.mxu0 %v5053
        %7309 = vmatpush2.bf16.msra.mxu0 %v5052
        %7310 = vmatprep.subr.bf16.mxu0 %v5035
        %7311 = vmatpush2.bf16.msra.mxu0 %v5034
        %7312 = vmatprep.subr.bf16.mxu0 %v5017
        %7313 = vmatpush2.bf16.msra.mxu0 %v5016
        %7314 = vmatprep.subr.bf16.mxu0 %v4999
        %7315 = vmatpush2.bf16.msra.mxu0 %v4998
        %7316 = vmatprep.subr.bf16.mxu0 %v4981
        %7317 = vmatpush2.bf16.msra.mxu0 %v4980
        %7318 = vmatprep.subr.bf16.mxu0 %v4963
        %7319 = vmatpush2.bf16.msra.mxu0 %v4962
        %7320 = vmatprep.subr.bf16.mxu0 %v4945
        %7321 = vmatpush2.bf16.msra.mxu0 %v4944
        %7322 = vmatprep.mubr.bf16.mxu0 %v1231
        %7323 = vmatmul.mubr.bf16.gmra.mxu0 %v1230
        %v7324 = vpop.f32.mrf.mxu0
        %v7325 = vadd.f32 %v2157, %v7324
        %v7326 = vpop.f32.mrf.mxu0
        %v7327 = vadd.f32 %v2161, %v7326
        %v7328 = vpop.f32.mrf.mxu0
        %v7329 = vadd.f32 %v2157, %v7328
        %v7330 = vpop.f32.mrf.mxu0
        %v7331 = vadd.f32 %v2161, %v7330
        %7332 = vdwg.mxu0
        %7333 = vmatprep.subr.bf16.mxu0 %v5215
        %7334 = vmatpush1.bf16.msra.mxu0 %v5214
        %7335 = vmatprep.subr.bf16.mxu0 %v5197
        %7336 = vmatpush1.bf16.msra.mxu0 %v5196
        %7337 = vmatprep.subr.bf16.mxu0 %v5179
        %7338 = vmatpush1.bf16.msra.mxu0 %v5178
        %7339 = vmatprep.subr.bf16.mxu0 %v5161
        %7340 = vmatpush1.bf16.msra.mxu0 %v5160
        %7341 = vmatprep.subr.bf16.mxu0 %v5143
        %7342 = vmatpush1.bf16.msra.mxu0 %v5142
        %7343 = vmatprep.subr.bf16.mxu0 %v5125
        %7344 = vmatpush1.bf16.msra.mxu0 %v5124
        %7345 = vmatprep.subr.bf16.mxu0 %v5107
        %7346 = vmatpush1.bf16.msra.mxu0 %v5106
        %7347 = vmatprep.subr.bf16.mxu0 %v5089
        %7348 = vmatpush1.bf16.msra.mxu0 %v5088
        %7349 = vmatprep.subr.bf16.mxu0 %v5359
        %7350 = vmatpush2.bf16.msra.mxu0 %v5358
        %7351 = vmatprep.subr.bf16.mxu0 %v5341
        %7352 = vmatpush2.bf16.msra.mxu0 %v5340
        %7353 = vmatprep.subr.bf16.mxu0 %v5323
        %7354 = vmatpush2.bf16.msra.mxu0 %v5322
        %7355 = vmatprep.subr.bf16.mxu0 %v5305
        %7356 = vmatpush2.bf16.msra.mxu0 %v5304
        %7357 = vmatprep.subr.bf16.mxu0 %v5287
        %7358 = vmatpush2.bf16.msra.mxu0 %v5286
        %7359 = vmatprep.subr.bf16.mxu0 %v5269
        %7360 = vmatpush2.bf16.msra.mxu0 %v5268
        %7361 = vmatprep.subr.bf16.mxu0 %v5251
        %7362 = vmatpush2.bf16.msra.mxu0 %v5250
        %7363 = vmatprep.subr.bf16.mxu0 %v5233
        %7364 = vmatpush2.bf16.msra.mxu0 %v5232
        %7365 = vmatprep.mubr.bf16.mxu0 %v1233
        %7366 = vmatmul.mubr.bf16.gmra.mxu0 %v1232
        %v7367 = vpop.f32.mrf.mxu0
        %v7368 = vadd.f32 %v7325, %v7367
        %v7369 = vpop.f32.mrf.mxu0
        %v7370 = vadd.f32 %v7327, %v7369
        %v7371 = vpop.f32.mrf.mxu0
        %v7372 = vadd.f32 %v7329, %v7371
        %v7373 = vpop.f32.mrf.mxu0
        %v7374 = vadd.f32 %v7331, %v7373
        %7375 = vdwg.mxu0
        %7376 = vmatprep.subr.bf16.mxu0 %v5503
        %7377 = vmatpush1.bf16.msra.mxu0 %v5502
        %7378 = vmatprep.subr.bf16.mxu0 %v5485
        %7379 = vmatpush1.bf16.msra.mxu0 %v5484
        %7380 = vmatprep.subr.bf16.mxu0 %v5467
        %7381 = vmatpush1.bf16.msra.mxu0 %v5466
        %7382 = vmatprep.subr.bf16.mxu0 %v5449
        %7383 = vmatpush1.bf16.msra.mxu0 %v5448
        %7384 = vmatprep.subr.bf16.mxu0 %v5431
        %7385 = vmatpush1.bf16.msra.mxu0 %v5430
        %7386 = vmatprep.subr.bf16.mxu0 %v5413
        %7387 = vmatpush1.bf16.msra.mxu0 %v5412
        %7388 = vmatprep.subr.bf16.mxu0 %v5395
        %7389 = vmatpush1.bf16.msra.mxu0 %v5394
        %7390 = vmatprep.subr.bf16.mxu0 %v5377
        %7391 = vmatpush1.bf16.msra.mxu0 %v5376
        %7392 = vmatprep.subr.bf16.mxu0 %v5647
        %7393 = vmatpush2.bf16.msra.mxu0 %v5646
        %7394 = vmatprep.subr.bf16.mxu0 %v5629
        %7395 = vmatpush2.bf16.msra.mxu0 %v5628
        %7396 = vmatprep.subr.bf16.mxu0 %v5611
        %7397 = vmatpush2.bf16.msra.mxu0 %v5610
        %7398 = vmatprep.subr.bf16.mxu0 %v5593
        %7399 = vmatpush2.bf16.msra.mxu0 %v5592
        %7400 = vmatprep.subr.bf16.mxu0 %v5575
        %7401 = vmatpush2.bf16.msra.mxu0 %v5574
        %7402 = vmatprep.subr.bf16.mxu0 %v5557
        %7403 = vmatpush2.bf16.msra.mxu0 %v5556
        %7404 = vmatprep.subr.bf16.mxu0 %v5539
        %7405 = vmatpush2.bf16.msra.mxu0 %v5538
        %7406 = vmatprep.subr.bf16.mxu0 %v5521
        %7407 = vmatpush2.bf16.msra.mxu0 %v5520
        %7408 = vmatprep.mubr.bf16.mxu0 %v1235
        %7409 = vmatmul.mubr.bf16.gmra.mxu0 %v1234
        %v7410 = vpop.f32.mrf.mxu0
        %v7411 = vadd.f32 %v7368, %v7410
        %v7412 = vpop.f32.mrf.mxu0
        %v7413 = vadd.f32 %v7370, %v7412
        %v7414 = vpop.f32.mrf.mxu0
        %v7415 = vadd.f32 %v7372, %v7414
        %v7416 = vpop.f32.mrf.mxu0
        %v7417 = vadd.f32 %v7374, %v7416
        %7418 = vdwg.mxu0
        %7419 = vmatprep.subr.bf16.mxu0 %v4929
        %7420 = vmatpush1.bf16.msra.mxu0 %v4928
        %7421 = vmatprep.subr.bf16.mxu0 %v4911
        %7422 = vmatpush1.bf16.msra.mxu0 %v4910
        %7423 = vmatprep.subr.bf16.mxu0 %v4893
        %7424 = vmatpush1.bf16.msra.mxu0 %v4892
        %7425 = vmatprep.subr.bf16.mxu0 %v4875
        %7426 = vmatpush1.bf16.msra.mxu0 %v4874
        %7427 = vmatprep.subr.bf16.mxu0 %v4857
        %7428 = vmatpush1.bf16.msra.mxu0 %v4856
        %7429 = vmatprep.subr.bf16.mxu0 %v4839
        %7430 = vmatpush1.bf16.msra.mxu0 %v4838
        %7431 = vmatprep.subr.bf16.mxu0 %v4821
        %7432 = vmatpush1.bf16.msra.mxu0 %v4820
        %7433 = vmatprep.subr.bf16.mxu0 %v4803
        %7434 = vmatpush1.bf16.msra.mxu0 %v4802
        %7435 = vmatprep.subr.bf16.mxu0 %v5073
        %7436 = vmatpush2.bf16.msra.mxu0 %v5072
        %7437 = vmatprep.subr.bf16.mxu0 %v5055
        %7438 = vmatpush2.bf16.msra.mxu0 %v5054
        %7439 = vmatprep.subr.bf16.mxu0 %v5037
        %7440 = vmatpush2.bf16.msra.mxu0 %v5036
        %7441 = vmatprep.subr.bf16.mxu0 %v5019
        %7442 = vmatpush2.bf16.msra.mxu0 %v5018
        %7443 = vmatprep.subr.bf16.mxu0 %v5001
        %7444 = vmatpush2.bf16.msra.mxu0 %v5000
        %7445 = vmatprep.subr.bf16.mxu0 %v4983
        %7446 = vmatpush2.bf16.msra.mxu0 %v4982
        %7447 = vmatprep.subr.bf16.mxu0 %v4965
        %7448 = vmatpush2.bf16.msra.mxu0 %v4964
        %7449 = vmatprep.subr.bf16.mxu0 %v4947
        %7450 = vmatpush2.bf16.msra.mxu0 %v4946
        %7451 = vmatprep.mubr.bf16.mxu0 %v1231
        %7452 = vmatmul.mubr.bf16.gmra.mxu0 %v1230
        %v7453 = vpop.f32.mrf.mxu0
        %v7454 = vadd.f32 %v2165, %v7453
        %v7455 = vpop.f32.mrf.mxu0
        %v7456 = vadd.f32 %v2169, %v7455
        %v7457 = vpop.f32.mrf.mxu0
        %v7458 = vadd.f32 %v2165, %v7457
        %v7459 = vpop.f32.mrf.mxu0
        %v7460 = vadd.f32 %v2169, %v7459
        %7461 = vdwg.mxu0
        %7462 = vmatprep.subr.bf16.mxu0 %v5217
        %7463 = vmatpush1.bf16.msra.mxu0 %v5216
        %7464 = vmatprep.subr.bf16.mxu0 %v5199
        %7465 = vmatpush1.bf16.msra.mxu0 %v5198
        %7466 = vmatprep.subr.bf16.mxu0 %v5181
        %7467 = vmatpush1.bf16.msra.mxu0 %v5180
        %7468 = vmatprep.subr.bf16.mxu0 %v5163
        %7469 = vmatpush1.bf16.msra.mxu0 %v5162
        %7470 = vmatprep.subr.bf16.mxu0 %v5145
        %7471 = vmatpush1.bf16.msra.mxu0 %v5144
        %7472 = vmatprep.subr.bf16.mxu0 %v5127
        %7473 = vmatpush1.bf16.msra.mxu0 %v5126
        %7474 = vmatprep.subr.bf16.mxu0 %v5109
        %7475 = vmatpush1.bf16.msra.mxu0 %v5108
        %7476 = vmatprep.subr.bf16.mxu0 %v5091
        %7477 = vmatpush1.bf16.msra.mxu0 %v5090
        %7478 = vmatprep.subr.bf16.mxu0 %v5361
        %7479 = vmatpush2.bf16.msra.mxu0 %v5360
        %7480 = vmatprep.subr.bf16.mxu0 %v5343
        %7481 = vmatpush2.bf16.msra.mxu0 %v5342
        %7482 = vmatprep.subr.bf16.mxu0 %v5325
        %7483 = vmatpush2.bf16.msra.mxu0 %v5324
        %7484 = vmatprep.subr.bf16.mxu0 %v5307
        %7485 = vmatpush2.bf16.msra.mxu0 %v5306
        %7486 = vmatprep.subr.bf16.mxu0 %v5289
        %7487 = vmatpush2.bf16.msra.mxu0 %v5288
        %7488 = vmatprep.subr.bf16.mxu0 %v5271
        %7489 = vmatpush2.bf16.msra.mxu0 %v5270
        %7490 = vmatprep.subr.bf16.mxu0 %v5253
        %7491 = vmatpush2.bf16.msra.mxu0 %v5252
        %7492 = vmatprep.subr.bf16.mxu0 %v5235
        %7493 = vmatpush2.bf16.msra.mxu0 %v5234
        %7494 = vmatprep.mubr.bf16.mxu0 %v1233
        %7495 = vmatmul.mubr.bf16.gmra.mxu0 %v1232
        %v7496 = vpop.f32.mrf.mxu0
        %v7497 = vadd.f32 %v7454, %v7496
        %v7498 = vpop.f32.mrf.mxu0
        %v7499 = vadd.f32 %v7456, %v7498
        %v7500 = vpop.f32.mrf.mxu0
        %v7501 = vadd.f32 %v7458, %v7500
        %v7502 = vpop.f32.mrf.mxu0
        %v7503 = vadd.f32 %v7460, %v7502
        %7504 = vdwg.mxu0
        %7505 = vmatprep.subr.bf16.mxu0 %v5505
        %7506 = vmatpush1.bf16.msra.mxu0 %v5504
        %7507 = vmatprep.subr.bf16.mxu0 %v5487
        %7508 = vmatpush1.bf16.msra.mxu0 %v5486
        %7509 = vmatprep.subr.bf16.mxu0 %v5469
        %7510 = vmatpush1.bf16.msra.mxu0 %v5468
        %7511 = vmatprep.subr.bf16.mxu0 %v5451
        %7512 = vmatpush1.bf16.msra.mxu0 %v5450
        %7513 = vmatprep.subr.bf16.mxu0 %v5433
        %7514 = vmatpush1.bf16.msra.mxu0 %v5432
        %7515 = vmatprep.subr.bf16.mxu0 %v5415
        %7516 = vmatpush1.bf16.msra.mxu0 %v5414
        %7517 = vmatprep.subr.bf16.mxu0 %v5397
        %7518 = vmatpush1.bf16.msra.mxu0 %v5396
        %7519 = vmatprep.subr.bf16.mxu0 %v5379
        %7520 = vmatpush1.bf16.msra.mxu0 %v5378
        %7521 = vmatprep.subr.bf16.mxu0 %v5649
        %7522 = vmatpush2.bf16.msra.mxu0 %v5648
        %7523 = vmatprep.subr.bf16.mxu0 %v5631
        %7524 = vmatpush2.bf16.msra.mxu0 %v5630
        %7525 = vmatprep.subr.bf16.mxu0 %v5613
        %7526 = vmatpush2.bf16.msra.mxu0 %v5612
        %7527 = vmatprep.subr.bf16.mxu0 %v5595
        %7528 = vmatpush2.bf16.msra.mxu0 %v5594
        %7529 = vmatprep.subr.bf16.mxu0 %v5577
        %7530 = vmatpush2.bf16.msra.mxu0 %v5576
        %7531 = vmatprep.subr.bf16.mxu0 %v5559
        %7532 = vmatpush2.bf16.msra.mxu0 %v5558
        %7533 = vmatprep.subr.bf16.mxu0 %v5541
        %7534 = vmatpush2.bf16.msra.mxu0 %v5540
        %7535 = vmatprep.subr.bf16.mxu0 %v5523
        %7536 = vmatpush2.bf16.msra.mxu0 %v5522
        %7537 = vmatprep.mubr.bf16.mxu0 %v1235
        %7538 = vmatmul.mubr.bf16.gmra.mxu0 %v1234
        %v7539 = vpop.f32.mrf.mxu0
        %v7540 = vadd.f32 %v7497, %v7539
        %v7541 = vpop.f32.mrf.mxu0
        %v7542 = vadd.f32 %v7499, %v7541
        %v7543 = vpop.f32.mrf.mxu0
        %v7544 = vadd.f32 %v7501, %v7543
        %v7545 = vpop.f32.mrf.mxu0
        %v7546 = vadd.f32 %v7503, %v7545
        %7547 = vdwg.mxu0
        %7548 = vmatprep.subr.bf16.mxu0 %v4931
        %7549 = vmatpush1.bf16.msra.mxu0 %v4930
        %7550 = vmatprep.subr.bf16.mxu0 %v4913
        %7551 = vmatpush1.bf16.msra.mxu0 %v4912
        %7552 = vmatprep.subr.bf16.mxu0 %v4895
        %7553 = vmatpush1.bf16.msra.mxu0 %v4894
        %7554 = vmatprep.subr.bf16.mxu0 %v4877
        %7555 = vmatpush1.bf16.msra.mxu0 %v4876
        %7556 = vmatprep.subr.bf16.mxu0 %v4859
        %7557 = vmatpush1.bf16.msra.mxu0 %v4858
        %7558 = vmatprep.subr.bf16.mxu0 %v4841
        %7559 = vmatpush1.bf16.msra.mxu0 %v4840
        %7560 = vmatprep.subr.bf16.mxu0 %v4823
        %7561 = vmatpush1.bf16.msra.mxu0 %v4822
        %7562 = vmatprep.subr.bf16.mxu0 %v4805
        %7563 = vmatpush1.bf16.msra.mxu0 %v4804
        %7564 = vmatprep.subr.bf16.mxu0 %v5075
        %7565 = vmatpush2.bf16.msra.mxu0 %v5074
        %7566 = vmatprep.subr.bf16.mxu0 %v5057
        %7567 = vmatpush2.bf16.msra.mxu0 %v5056
        %7568 = vmatprep.subr.bf16.mxu0 %v5039
        %7569 = vmatpush2.bf16.msra.mxu0 %v5038
        %7570 = vmatprep.subr.bf16.mxu0 %v5021
        %7571 = vmatpush2.bf16.msra.mxu0 %v5020
        %7572 = vmatprep.subr.bf16.mxu0 %v5003
        %7573 = vmatpush2.bf16.msra.mxu0 %v5002
        %7574 = vmatprep.subr.bf16.mxu0 %v4985
        %7575 = vmatpush2.bf16.msra.mxu0 %v4984
        %7576 = vmatprep.subr.bf16.mxu0 %v4967
        %7577 = vmatpush2.bf16.msra.mxu0 %v4966
        %7578 = vmatprep.subr.bf16.mxu0 %v4949
        %7579 = vmatpush2.bf16.msra.mxu0 %v4948
        %7580 = vmatprep.mubr.bf16.mxu0 %v1231
        %7581 = vmatmul.mubr.bf16.gmra.mxu0 %v1230
        %v7582 = vpop.f32.mrf.mxu0
        %v7583 = vadd.f32 %v2173, %v7582
        %v7584 = vpop.f32.mrf.mxu0
        %v7585 = vadd.f32 %v2177, %v7584
        %v7586 = vpop.f32.mrf.mxu0
        %v7587 = vadd.f32 %v2173, %v7586
        %v7588 = vpop.f32.mrf.mxu0
        %v7589 = vadd.f32 %v2177, %v7588
        %7590 = vdwg.mxu0
        %7591 = vmatprep.subr.bf16.mxu0 %v5219
        %7592 = vmatpush1.bf16.msra.mxu0 %v5218
        %7593 = vmatprep.subr.bf16.mxu0 %v5201
        %7594 = vmatpush1.bf16.msra.mxu0 %v5200
        %7595 = vmatprep.subr.bf16.mxu0 %v5183
        %7596 = vmatpush1.bf16.msra.mxu0 %v5182
        %7597 = vmatprep.subr.bf16.mxu0 %v5165
        %7598 = vmatpush1.bf16.msra.mxu0 %v5164
        %7599 = vmatprep.subr.bf16.mxu0 %v5147
        %7600 = vmatpush1.bf16.msra.mxu0 %v5146
        %7601 = vmatprep.subr.bf16.mxu0 %v5129
        %7602 = vmatpush1.bf16.msra.mxu0 %v5128
        %7603 = vmatprep.subr.bf16.mxu0 %v5111
        %7604 = vmatpush1.bf16.msra.mxu0 %v5110
        %7605 = vmatprep.subr.bf16.mxu0 %v5093
        %7606 = vmatpush1.bf16.msra.mxu0 %v5092
        %7607 = vmatprep.subr.bf16.mxu0 %v5363
        %7608 = vmatpush2.bf16.msra.mxu0 %v5362
        %7609 = vmatprep.subr.bf16.mxu0 %v5345
        %7610 = vmatpush2.bf16.msra.mxu0 %v5344
        %7611 = vmatprep.subr.bf16.mxu0 %v5327
        %7612 = vmatpush2.bf16.msra.mxu0 %v5326
        %7613 = vmatprep.subr.bf16.mxu0 %v5309
        %7614 = vmatpush2.bf16.msra.mxu0 %v5308
        %7615 = vmatprep.subr.bf16.mxu0 %v5291
        %7616 = vmatpush2.bf16.msra.mxu0 %v5290
        %7617 = vmatprep.subr.bf16.mxu0 %v5273
        %7618 = vmatpush2.bf16.msra.mxu0 %v5272
        %7619 = vmatprep.subr.bf16.mxu0 %v5255
        %7620 = vmatpush2.bf16.msra.mxu0 %v5254
        %7621 = vmatprep.subr.bf16.mxu0 %v5237
        %7622 = vmatpush2.bf16.msra.mxu0 %v5236
        %7623 = vmatprep.mubr.bf16.mxu0 %v1233
        %7624 = vmatmul.mubr.bf16.gmra.mxu0 %v1232
        %v7625 = vpop.f32.mrf.mxu0
        %v7626 = vadd.f32 %v7583, %v7625
        %v7627 = vpop.f32.mrf.mxu0
        %v7628 = vadd.f32 %v7585, %v7627
        %v7629 = vpop.f32.mrf.mxu0
        %v7630 = vadd.f32 %v7587, %v7629
        %v7631 = vpop.f32.mrf.mxu0
        %v7632 = vadd.f32 %v7589, %v7631
        %7633 = vdwg.mxu0
        %7634 = vmatprep.subr.bf16.mxu0 %v5507
        %7635 = vmatpush1.bf16.msra.mxu0 %v5506
        %7636 = vmatprep.subr.bf16.mxu0 %v5489
        %7637 = vmatpush1.bf16.msra.mxu0 %v5488
        %7638 = vmatprep.subr.bf16.mxu0 %v5471
        %7639 = vmatpush1.bf16.msra.mxu0 %v5470
        %7640 = vmatprep.subr.bf16.mxu0 %v5453
        %7641 = vmatpush1.bf16.msra.mxu0 %v5452
        %7642 = vmatprep.subr.bf16.mxu0 %v5435
        %7643 = vmatpush1.bf16.msra.mxu0 %v5434
        %7644 = vmatprep.subr.bf16.mxu0 %v5417
        %7645 = vmatpush1.bf16.msra.mxu0 %v5416
        %7646 = vmatprep.subr.bf16.mxu0 %v5399
        %7647 = vmatpush1.bf16.msra.mxu0 %v5398
        %7648 = vmatprep.subr.bf16.mxu0 %v5381
        %7649 = vmatpush1.bf16.msra.mxu0 %v5380
        %7650 = vmatprep.subr.bf16.mxu0 %v5651
        %7651 = vmatpush2.bf16.msra.mxu0 %v5650
        %7652 = vmatprep.subr.bf16.mxu0 %v5633
        %7653 = vmatpush2.bf16.msra.mxu0 %v5632
        %7654 = vmatprep.subr.bf16.mxu0 %v5615
        %7655 = vmatpush2.bf16.msra.mxu0 %v5614
        %7656 = vmatprep.subr.bf16.mxu0 %v5597
        %7657 = vmatpush2.bf16.msra.mxu0 %v5596
        %7658 = vmatprep.subr.bf16.mxu0 %v5579
        %7659 = vmatpush2.bf16.msra.mxu0 %v5578
        %7660 = vmatprep.subr.bf16.mxu0 %v5561
        %7661 = vmatpush2.bf16.msra.mxu0 %v5560
        %7662 = vmatprep.subr.bf16.mxu0 %v5543
        %7663 = vmatpush2.bf16.msra.mxu0 %v5542
        %7664 = vmatprep.subr.bf16.mxu0 %v5525
        %7665 = vmatpush2.bf16.msra.mxu0 %v5524
        %7666 = vmatprep.mubr.bf16.mxu0 %v1235
        %7667 = vmatmul.mubr.bf16.gmra.mxu0 %v1234
        %v7668 = vpop.f32.mrf.mxu0
        %v7669 = vadd.f32 %v7626, %v7668
        %v7670 = vpop.f32.mrf.mxu0
        %v7671 = vadd.f32 %v7628, %v7670
        %v7672 = vpop.f32.mrf.mxu0
        %v7673 = vadd.f32 %v7630, %v7672
        %v7674 = vpop.f32.mrf.mxu0
        %v7675 = vadd.f32 %v7632, %v7674
        %7676 = vdwg.mxu0
        %v7677 = vpack.c.bf16 %v6637, %v6637
        %v7678 = vpack.c.bf16 %v6641, %v6641
        %v7679 = vpack.c.bf16 %v7024, %v7024
        %v7680 = vpack.c.bf16 %v7028, %v7028
        %v7681 = vpack.c.bf16 %v7411, %v7411
        %v7682 = vpack.c.bf16 %v7415, %v7415
        %vm7683 = vcmask 785408
        %v7685 = vsel %vm7683, %v7677, 0
        %v7688 = vsel %vm7683, %v7679, 0
        %7690 = vmatprep.subr.bf16.mxu0 0
        %7691 = vmatpush1.bf16.xpose.msra.mxu0 0
        %7692 = vmatprep.subr.bf16.mxu0 0
        %7693 = vmatpush1.bf16.xpose.msra.mxu0 0
        %7694 = vmatprep.subr.bf16.mxu0 0
        %7695 = vmatpush1.bf16.xpose.msra.mxu0 0
        %7696 = vmatprep.subr.bf16.mxu0 0
        %7697 = vmatpush1.bf16.xpose.msra.mxu0 0
        %7698 = vmatprep.subr.bf16.mxu0 0
        %7699 = vmatpush1.bf16.xpose.msra.mxu0 0
        %7700 = vmatprep.subr.bf16.mxu0 0
        %7701 = vmatpush1.bf16.xpose.msra.mxu0 0
        %7702 = vmatprep.subr.bf16.mxu0 0
        %7703 = vmatpush1.bf16.xpose.msra.mxu0 0
        %7704 = vmatprep.subr.bf16.mxu0 0
        %7705 = vmatpush1.bf16.xpose.msra.mxu0 %v7688
        %7706 = vmatprep.subr.bf16.mxu0 0
        %7707 = vmatpush2.bf16.xpose.msra.mxu0 0
        %7708 = vmatprep.subr.bf16.mxu0 0
        %7709 = vmatpush2.bf16.xpose.msra.mxu0 0
        %7710 = vmatprep.subr.bf16.mxu0 0
        %7711 = vmatpush2.bf16.xpose.msra.mxu0 0
        %7712 = vmatprep.subr.bf16.mxu0 0
        %7713 = vmatpush2.bf16.xpose.msra.mxu0 0
        %7714 = vmatprep.subr.bf16.mxu0 0
        %7715 = vmatpush2.bf16.xpose.msra.mxu0 0
        %7716 = vmatprep.subr.bf16.mxu0 0
        %7717 = vmatpush2.bf16.xpose.msra.mxu0 0
        %7718 = vmatprep.subr.bf16.mxu0 0
        %7719 = vmatpush2.bf16.xpose.msra.mxu0 0
        %7720 = vmatprep.subr.bf16.mxu0 0
        %7721 = vmatpush2.bf16.xpose.msra.mxu0 0
        %7722 = vmatprep.mubr.bf16.mxu0 0
        %7723 = vmatmul.mubr.bf16.gmra.mxu0 %v7685
        %v7724 = vpop.f32.mrf.mxu0
        %v7725 = vadd.f32 0.0, %v7724
        %v7726 = vpop.f32.mrf.mxu0
        %v7727 = vpop.f32.mrf.mxu0
        %v7728 = vpop.f32.mrf.mxu0
        %7729 = vdwg.mxu0
        %v7731 = vsel %vm7683, %v7678, 0
        %v7734 = vsel %vm7683, %v7680, 0
        %7736 = vmatprep.subr.bf16.mxu0 0
        %7737 = vmatpush1.bf16.xpose.msra.mxu0 0
        %7738 = vmatprep.subr.bf16.mxu0 0
        %7739 = vmatpush1.bf16.xpose.msra.mxu0 0
        %7740 = vmatprep.subr.bf16.mxu0 0
        %7741 = vmatpush1.bf16.xpose.msra.mxu0 0
        %7742 = vmatprep.subr.bf16.mxu0 0
        %7743 = vmatpush1.bf16.xpose.msra.mxu0 0
        %7744 = vmatprep.subr.bf16.mxu0 0
        %7745 = vmatpush1.bf16.xpose.msra.mxu0 0
        %7746 = vmatprep.subr.bf16.mxu0 0
        %7747 = vmatpush1.bf16.xpose.msra.mxu0 0
        %7748 = vmatprep.subr.bf16.mxu0 0
        %7749 = vmatpush1.bf16.xpose.msra.mxu0 0
        %7750 = vmatprep.subr.bf16.mxu0 0
        %7751 = vmatpush1.bf16.xpose.msra.mxu0 %v7734
        %7752 = vmatprep.subr.bf16.mxu0 0
        %7753 = vmatpush2.bf16.xpose.msra.mxu0 0
        %7754 = vmatprep.subr.bf16.mxu0 0
        %7755 = vmatpush2.bf16.xpose.msra.mxu0 0
        %7756 = vmatprep.subr.bf16.mxu0 0
        %7757 = vmatpush2.bf16.xpose.msra.mxu0 0
        %7758 = vmatprep.subr.bf16.mxu0 0
        %7759 = vmatpush2.bf16.xpose.msra.mxu0 0
        %7760 = vmatprep.subr.bf16.mxu0 0
        %7761 = vmatpush2.bf16.xpose.msra.mxu0 0
        %7762 = vmatprep.subr.bf16.mxu0 0
        %7763 = vmatpush2.bf16.xpose.msra.mxu0 0
        %7764 = vmatprep.subr.bf16.mxu0 0
        %7765 = vmatpush2.bf16.xpose.msra.mxu0 0
        %7766 = vmatprep.subr.bf16.mxu0 0
        %7767 = vmatpush2.bf16.xpose.msra.mxu0 0
        %7768 = vmatprep.mubr.bf16.mxu0 0
        %7769 = vmatmul.mubr.bf16.gmra.mxu0 %v7731
        %v7770 = vpop.f32.mrf.mxu0
        %v7771 = vadd.f32 0.0, %v7770
        %v7772 = vpop.f32.mrf.mxu0
        %v7773 = vpop.f32.mrf.mxu0
        %v7774 = vpop.f32.mrf.mxu0
        %7775 = vdwg.mxu0
        %vm7776 = vcmask 64512
        %v7777 = vsel %vm7776, %v7725, -inf
        %7778 = vmax.xlane.f32.xlu0 %v7777
        %v7779 = vpop.xlane.xlu0 %7778
        %v7780 = vsel %vm7776, %v7771, -inf
        %7781 = vmax.xlane.f32.xlu0 %v7780
        %v7782 = vpop.xlane.xlu0 %7781
        %v7783 = vsub.f32 %v7725, %v7779
        %v7784 = vsub.f32 %v7771, %v7782
        %v7785 = vmul.f32 %v7783, 1.442695
        %v7786 = vpow.pop %v7785
        %v7787 = vmul.f32 %v7784, 1.442695
        %v7788 = vpow.pop %v7787
        %v7789 = vsel %vm7776, %v7786, 0.0
        %7790 = vadd.xlane.f32.xlu0 %v7789
        %v7791 = vpop.xlane.xlu0 %7790
        %v7792 = vsel %vm7776, %v7788, 0.0
        %7793 = vadd.xlane.f32.xlu0 %v7792
        %v7794 = vpop.xlane.xlu0 %7793
        %v7795 = vrcp.pop %v7791
        %v7796 = vrcp.pop %v7794
        %v7797 = vmul.f32 %v7786, %v7795
        %v7798 = vmul.f32 %v7788, %v7796
        %v7799 = vpack.c.bf16 %v7797, %v7797
        %v7800 = vpack.c.bf16 %v7798, %v7798
        %v7802 = vsel %vm7776, %v7799, 0
        %vm7804 = vcmask 1043456
        %v7806 = vsel %vm7804, %v7681, 0
        %7808 = vmatprep.subr.bf16.mxu0 0
        %7809 = vmatpush1.bf16.msra.mxu0 0
        %7810 = vmatprep.subr.bf16.mxu0 0
        %7811 = vmatpush1.bf16.msra.mxu0 0
        %7812 = vmatprep.subr.bf16.mxu0 0
        %7813 = vmatpush1.bf16.msra.mxu0 0
        %7814 = vmatprep.subr.bf16.mxu0 0
        %7815 = vmatpush1.bf16.msra.mxu0 0
        %7816 = vmatprep.subr.bf16.mxu0 0
        %7817 = vmatpush1.bf16.msra.mxu0 0
        %7818 = vmatprep.subr.bf16.mxu0 0
        %7819 = vmatpush1.bf16.msra.mxu0 0
        %7820 = vmatprep.subr.bf16.mxu0 0
        %7821 = vmatpush1.bf16.msra.mxu0 0
        %7822 = vmatprep.subr.bf16.mxu0 0
        %7823 = vmatpush1.bf16.msra.mxu0 %v7806
        %7824 = vmatprep.subr.bf16.mxu0 0
        %7825 = vmatpush2.bf16.msra.mxu0 0
        %7826 = vmatprep.subr.bf16.mxu0 0
        %7827 = vmatpush2.bf16.msra.mxu0 0
        %7828 = vmatprep.subr.bf16.mxu0 0
        %7829 = vmatpush2.bf16.msra.mxu0 0
        %7830 = vmatprep.subr.bf16.mxu0 0
        %7831 = vmatpush2.bf16.msra.mxu0 0
        %7832 = vmatprep.subr.bf16.mxu0 0
        %7833 = vmatpush2.bf16.msra.mxu0 0
        %7834 = vmatprep.subr.bf16.mxu0 0
        %7835 = vmatpush2.bf16.msra.mxu0 0
        %7836 = vmatprep.subr.bf16.mxu0 0
        %7837 = vmatpush2.bf16.msra.mxu0 0
        %7838 = vmatprep.subr.bf16.mxu0 0
        %7839 = vmatpush2.bf16.msra.mxu0 0
        %7840 = vmatprep.mubr.bf16.mxu0 0
        %7841 = vmatmul.mubr.bf16.gmra.mxu0 %v7802
        %v7842 = vpop.f32.mrf.mxu0
        %v7843 = vadd.f32 0.0, %v7842
        %v7844 = vpop.f32.mrf.mxu0
        %v7845 = vpop.f32.mrf.mxu0
        %v7846 = vpop.f32.mrf.mxu0
        %7847 = vdwg.mxu0
        %v7849 = vsel %vm7776, %v7800, 0
        %v7852 = vsel %vm7804, %v7682, 0
        %7854 = vmatprep.subr.bf16.mxu0 0
        %7855 = vmatpush1.bf16.msra.mxu0 0
        %7856 = vmatprep.subr.bf16.mxu0 0
        %7857 = vmatpush1.bf16.msra.mxu0 0
        %7858 = vmatprep.subr.bf16.mxu0 0
        %7859 = vmatpush1.bf16.msra.mxu0 0
        %7860 = vmatprep.subr.bf16.mxu0 0
        %7861 = vmatpush1.bf16.msra.mxu0 0
        %7862 = vmatprep.subr.bf16.mxu0 0
        %7863 = vmatpush1.bf16.msra.mxu0 0
        %7864 = vmatprep.subr.bf16.mxu0 0
        %7865 = vmatpush1.bf16.msra.mxu0 0
        %7866 = vmatprep.subr.bf16.mxu0 0
        %7867 = vmatpush1.bf16.msra.mxu0 0
        %7868 = vmatprep.subr.bf16.mxu0 0
        %7869 = vmatpush1.bf16.msra.mxu0 %v7852
        %7870 = vmatprep.subr.bf16.mxu0 0
        %7871 = vmatpush2.bf16.msra.mxu0 0
        %7872 = vmatprep.subr.bf16.mxu0 0
        %7873 = vmatpush2.bf16.msra.mxu0 0
        %7874 = vmatprep.subr.bf16.mxu0 0
        %7875 = vmatpush2.bf16.msra.mxu0 0
        %7876 = vmatprep.subr.bf16.mxu0 0
        %7877 = vmatpush2.bf16.msra.mxu0 0
        %7878 = vmatprep.subr.bf16.mxu0 0
        %7879 = vmatpush2.bf16.msra.mxu0 0
        %7880 = vmatprep.subr.bf16.mxu0 0
        %7881 = vmatpush2.bf16.msra.mxu0 0
        %7882 = vmatprep.subr.bf16.mxu0 0
        %7883 = vmatpush2.bf16.msra.mxu0 0
        %7884 = vmatprep.subr.bf16.mxu0 0
        %7885 = vmatpush2.bf16.msra.mxu0 0
        %7886 = vmatprep.mubr.bf16.mxu0 0
        %7887 = vmatmul.mubr.bf16.gmra.mxu0 %v7849
        %v7888 = vpop.f32.mrf.mxu0
        %v7889 = vadd.f32 0.0, %v7888
        %v7890 = vpop.f32.mrf.mxu0
        %v7891 = vpop.f32.mrf.mxu0
        %v7892 = vpop.f32.mrf.mxu0
        %7893 = vdwg.mxu0
        %v7894 = vpack.c.bf16 %v6639, %v6639
        %v7895 = vpack.c.bf16 %v6643, %v6643
        %v7896 = vpack.c.bf16 %v7026, %v7026
        %v7897 = vpack.c.bf16 %v7030, %v7030
        %v7898 = vpack.c.bf16 %v7413, %v7413
        %v7899 = vpack.c.bf16 %v7417, %v7417
        %7902 = vrot.lane.b32.xlu0 %v7677, 32
        %v7903 = vpop.permute.xlu0 %7902
        %7904 = vrot.lane.b32.xlu0 %v7894, 32
        %v7905 = vpop.permute.xlu0 %7904
        %vm7906 = vcmask 261120
        %v7907 = vsel %vm7906, %v7903, %v7905
        %7910 = vrot.lane.b32.xlu0 %v7679, 32
        %v7911 = vpop.permute.xlu0 %7910
        %7912 = vrot.lane.b32.xlu0 %v7896, 32
        %v7913 = vpop.permute.xlu0 %7912
        %v7914 = vsel %vm7906, %v7911, %v7913
        %v7916 = vsel %vm7683, %v7907, 0
        %v7919 = vsel %vm7683, %v7914, 0
        %7921 = vmatprep.subr.bf16.mxu0 0
        %7922 = vmatpush1.bf16.xpose.msra.mxu0 0
        %7923 = vmatprep.subr.bf16.mxu0 0
        %7924 = vmatpush1.bf16.xpose.msra.mxu0 0
        %7925 = vmatprep.subr.bf16.mxu0 0
        %7926 = vmatpush1.bf16.xpose.msra.mxu0 0
        %7927 = vmatprep.subr.bf16.mxu0 0
        %7928 = vmatpush1.bf16.xpose.msra.mxu0 0
        %7929 = vmatprep.subr.bf16.mxu0 0
        %7930 = vmatpush1.bf16.xpose.msra.mxu0 0
        %7931 = vmatprep.subr.bf16.mxu0 0
        %7932 = vmatpush1.bf16.xpose.msra.mxu0 0
        %7933 = vmatprep.subr.bf16.mxu0 0
        %7934 = vmatpush1.bf16.xpose.msra.mxu0 0
        %7935 = vmatprep.subr.bf16.mxu0 0
        %7936 = vmatpush1.bf16.xpose.msra.mxu0 %v7919
        %7937 = vmatprep.subr.bf16.mxu0 0
        %7938 = vmatpush2.bf16.xpose.msra.mxu0 0
        %7939 = vmatprep.subr.bf16.mxu0 0
        %7940 = vmatpush2.bf16.xpose.msra.mxu0 0
        %7941 = vmatprep.subr.bf16.mxu0 0
        %7942 = vmatpush2.bf16.xpose.msra.mxu0 0
        %7943 = vmatprep.subr.bf16.mxu0 0
        %7944 = vmatpush2.bf16.xpose.msra.mxu0 0
        %7945 = vmatprep.subr.bf16.mxu0 0
        %7946 = vmatpush2.bf16.xpose.msra.mxu0 0
        %7947 = vmatprep.subr.bf16.mxu0 0
        %7948 = vmatpush2.bf16.xpose.msra.mxu0 0
        %7949 = vmatprep.subr.bf16.mxu0 0
        %7950 = vmatpush2.bf16.xpose.msra.mxu0 0
        %7951 = vmatprep.subr.bf16.mxu0 0
        %7952 = vmatpush2.bf16.xpose.msra.mxu0 0
        %7953 = vmatprep.mubr.bf16.mxu0 0
        %7954 = vmatmul.mubr.bf16.gmra.mxu0 %v7916
        %v7955 = vpop.f32.mrf.mxu0
        %v7956 = vadd.f32 0.0, %v7955
        %v7957 = vpop.f32.mrf.mxu0
        %v7958 = vpop.f32.mrf.mxu0
        %v7959 = vpop.f32.mrf.mxu0
        %7960 = vdwg.mxu0
        %7963 = vrot.lane.b32.xlu0 %v7678, 32
        %v7964 = vpop.permute.xlu0 %7963
        %7965 = vrot.lane.b32.xlu0 %v7895, 32
        %v7966 = vpop.permute.xlu0 %7965
        %v7967 = vsel %vm7906, %v7964, %v7966
        %7970 = vrot.lane.b32.xlu0 %v7680, 32
        %v7971 = vpop.permute.xlu0 %7970
        %7972 = vrot.lane.b32.xlu0 %v7897, 32
        %v7973 = vpop.permute.xlu0 %7972
        %v7974 = vsel %vm7906, %v7971, %v7973
        %v7976 = vsel %vm7683, %v7967, 0
        %v7979 = vsel %vm7683, %v7974, 0
        %7981 = vmatprep.subr.bf16.mxu0 0
        %7982 = vmatpush1.bf16.xpose.msra.mxu0 0
        %7983 = vmatprep.subr.bf16.mxu0 0
        %7984 = vmatpush1.bf16.xpose.msra.mxu0 0
        %7985 = vmatprep.subr.bf16.mxu0 0
        %7986 = vmatpush1.bf16.xpose.msra.mxu0 0
        %7987 = vmatprep.subr.bf16.mxu0 0
        %7988 = vmatpush1.bf16.xpose.msra.mxu0 0
        %7989 = vmatprep.subr.bf16.mxu0 0
        %7990 = vmatpush1.bf16.xpose.msra.mxu0 0
        %7991 = vmatprep.subr.bf16.mxu0 0
        %7992 = vmatpush1.bf16.xpose.msra.mxu0 0
        %7993 = vmatprep.subr.bf16.mxu0 0
        %7994 = vmatpush1.bf16.xpose.msra.mxu0 0
        %7995 = vmatprep.subr.bf16.mxu0 0
        %7996 = vmatpush1.bf16.xpose.msra.mxu0 %v7979
        %7997 = vmatprep.subr.bf16.mxu0 0
        %7998 = vmatpush2.bf16.xpose.msra.mxu0 0
        %7999 = vmatprep.subr.bf16.mxu0 0
        %8000 = vmatpush2.bf16.xpose.msra.mxu0 0
        %8001 = vmatprep.subr.bf16.mxu0 0
        %8002 = vmatpush2.bf16.xpose.msra.mxu0 0
        %8003 = vmatprep.subr.bf16.mxu0 0
        %8004 = vmatpush2.bf16.xpose.msra.mxu0 0
        %8005 = vmatprep.subr.bf16.mxu0 0
        %8006 = vmatpush2.bf16.xpose.msra.mxu0 0
        %8007 = vmatprep.subr.bf16.mxu0 0
        %8008 = vmatpush2.bf16.xpose.msra.mxu0 0
        %8009 = vmatprep.subr.bf16.mxu0 0
        %8010 = vmatpush2.bf16.xpose.msra.mxu0 0
        %8011 = vmatprep.subr.bf16.mxu0 0
        %8012 = vmatpush2.bf16.xpose.msra.mxu0 0
        %8013 = vmatprep.mubr.bf16.mxu0 0
        %8014 = vmatmul.mubr.bf16.gmra.mxu0 %v7976
        %v8015 = vpop.f32.mrf.mxu0
        %v8016 = vadd.f32 0.0, %v8015
        %v8017 = vpop.f32.mrf.mxu0
        %v8018 = vpop.f32.mrf.mxu0
        %v8019 = vpop.f32.mrf.mxu0
        %8020 = vdwg.mxu0
        %v8021 = vsel %vm7776, %v7956, -inf
        %8022 = vmax.xlane.f32.xlu0 %v8021
        %v8023 = vpop.xlane.xlu0 %8022
        %v8024 = vsel %vm7776, %v8016, -inf
        %8025 = vmax.xlane.f32.xlu0 %v8024
        %v8026 = vpop.xlane.xlu0 %8025
        %v8027 = vsub.f32 %v7956, %v8023
        %v8028 = vsub.f32 %v8016, %v8026
        %v8029 = vmul.f32 %v8027, 1.442695
        %v8030 = vpow.pop %v8029
        %v8031 = vmul.f32 %v8028, 1.442695
        %v8032 = vpow.pop %v8031
        %v8033 = vsel %vm7776, %v8030, 0.0
        %8034 = vadd.xlane.f32.xlu0 %v8033
        %v8035 = vpop.xlane.xlu0 %8034
        %v8036 = vsel %vm7776, %v8032, 0.0
        %8037 = vadd.xlane.f32.xlu0 %v8036
        %v8038 = vpop.xlane.xlu0 %8037
        %v8039 = vrcp.pop %v8035
        %v8040 = vrcp.pop %v8038
        %v8041 = vmul.f32 %v8030, %v8039
        %v8042 = vmul.f32 %v8032, %v8040
        %v8043 = vpack.c.bf16 %v8041, %v8041
        %v8044 = vpack.c.bf16 %v8042, %v8042
        %8047 = vrot.lane.b32.xlu0 %v7681, 32
        %v8048 = vpop.permute.xlu0 %8047
        %8049 = vrot.lane.b32.xlu0 %v7898, 32
        %v8050 = vpop.permute.xlu0 %8049
        %v8051 = vsel %vm7906, %v8048, %v8050
        %v8053 = vsel %vm7776, %v8043, 0
        %v8056 = vsel %vm7804, %v8051, 0
        %8058 = vmatprep.subr.bf16.mxu0 0
        %8059 = vmatpush1.bf16.msra.mxu0 0
        %8060 = vmatprep.subr.bf16.mxu0 0
        %8061 = vmatpush1.bf16.msra.mxu0 0
        %8062 = vmatprep.subr.bf16.mxu0 0
        %8063 = vmatpush1.bf16.msra.mxu0 0
        %8064 = vmatprep.subr.bf16.mxu0 0
        %8065 = vmatpush1.bf16.msra.mxu0 0
        %8066 = vmatprep.subr.bf16.mxu0 0
        %8067 = vmatpush1.bf16.msra.mxu0 0
        %8068 = vmatprep.subr.bf16.mxu0 0
        %8069 = vmatpush1.bf16.msra.mxu0 0
        %8070 = vmatprep.subr.bf16.mxu0 0
        %8071 = vmatpush1.bf16.msra.mxu0 0
        %8072 = vmatprep.subr.bf16.mxu0 0
        %8073 = vmatpush1.bf16.msra.mxu0 %v8056
        %8074 = vmatprep.subr.bf16.mxu0 0
        %8075 = vmatpush2.bf16.msra.mxu0 0
        %8076 = vmatprep.subr.bf16.mxu0 0
        %8077 = vmatpush2.bf16.msra.mxu0 0
        %8078 = vmatprep.subr.bf16.mxu0 0
        %8079 = vmatpush2.bf16.msra.mxu0 0
        %8080 = vmatprep.subr.bf16.mxu0 0
        %8081 = vmatpush2.bf16.msra.mxu0 0
        %8082 = vmatprep.subr.bf16.mxu0 0
        %8083 = vmatpush2.bf16.msra.mxu0 0
        %8084 = vmatprep.subr.bf16.mxu0 0
        %8085 = vmatpush2.bf16.msra.mxu0 0
        %8086 = vmatprep.subr.bf16.mxu0 0
        %8087 = vmatpush2.bf16.msra.mxu0 0
        %8088 = vmatprep.subr.bf16.mxu0 0
        %8089 = vmatpush2.bf16.msra.mxu0 0
        %8090 = vmatprep.mubr.bf16.mxu0 0
        %8091 = vmatmul.mubr.bf16.gmra.mxu0 %v8053
        %v8092 = vpop.f32.mrf.mxu0
        %v8093 = vadd.f32 0.0, %v8092
        %v8094 = vpop.f32.mrf.mxu0
        %v8095 = vpop.f32.mrf.mxu0
        %v8096 = vpop.f32.mrf.mxu0
        %8097 = vdwg.mxu0
        %8100 = vrot.lane.b32.xlu0 %v7682, 32
        %v8101 = vpop.permute.xlu0 %8100
        %8102 = vrot.lane.b32.xlu0 %v7899, 32
        %v8103 = vpop.permute.xlu0 %8102
        %v8104 = vsel %vm7906, %v8101, %v8103
        %v8106 = vsel %vm7776, %v8044, 0
        %v8109 = vsel %vm7804, %v8104, 0
        %8111 = vmatprep.subr.bf16.mxu0 0
        %8112 = vmatpush1.bf16.msra.mxu0 0
        %8113 = vmatprep.subr.bf16.mxu0 0
        %8114 = vmatpush1.bf16.msra.mxu0 0
        %8115 = vmatprep.subr.bf16.mxu0 0
        %8116 = vmatpush1.bf16.msra.mxu0 0
        %8117 = vmatprep.subr.bf16.mxu0 0
        %8118 = vmatpush1.bf16.msra.mxu0 0
        %8119 = vmatprep.subr.bf16.mxu0 0
        %8120 = vmatpush1.bf16.msra.mxu0 0
        %8121 = vmatprep.subr.bf16.mxu0 0
        %8122 = vmatpush1.bf16.msra.mxu0 0
        %8123 = vmatprep.subr.bf16.mxu0 0
        %8124 = vmatpush1.bf16.msra.mxu0 0
        %8125 = vmatprep.subr.bf16.mxu0 0
        %8126 = vmatpush1.bf16.msra.mxu0 %v8109
        %8127 = vmatprep.subr.bf16.mxu0 0
        %8128 = vmatpush2.bf16.msra.mxu0 0
        %8129 = vmatprep.subr.bf16.mxu0 0
        %8130 = vmatpush2.bf16.msra.mxu0 0
        %8131 = vmatprep.subr.bf16.mxu0 0
        %8132 = vmatpush2.bf16.msra.mxu0 0
        %8133 = vmatprep.subr.bf16.mxu0 0
        %8134 = vmatpush2.bf16.msra.mxu0 0
        %8135 = vmatprep.subr.bf16.mxu0 0
        %8136 = vmatpush2.bf16.msra.mxu0 0
        %8137 = vmatprep.subr.bf16.mxu0 0
        %8138 = vmatpush2.bf16.msra.mxu0 0
        %8139 = vmatprep.subr.bf16.mxu0 0
        %8140 = vmatpush2.bf16.msra.mxu0 0
        %8141 = vmatprep.subr.bf16.mxu0 0
        %8142 = vmatpush2.bf16.msra.mxu0 0
        %8143 = vmatprep.mubr.bf16.mxu0 0
        %8144 = vmatmul.mubr.bf16.gmra.mxu0 %v8106
        %v8145 = vpop.f32.mrf.mxu0
        %v8146 = vadd.f32 0.0, %v8145
        %v8147 = vpop.f32.mrf.mxu0
        %v8148 = vpop.f32.mrf.mxu0
        %v8149 = vpop.f32.mrf.mxu0
        %8150 = vdwg.mxu0
        %v8151 = vpack.c.bf16 %v6766, %v6766
        %v8152 = vpack.c.bf16 %v6770, %v6770
        %v8153 = vpack.c.bf16 %v7153, %v7153
        %v8154 = vpack.c.bf16 %v7157, %v7157
        %v8155 = vpack.c.bf16 %v7540, %v7540
        %v8156 = vpack.c.bf16 %v7544, %v7544
        %8158 = vrot.lane.b32.xlu0 %v7894, 64
        %v8159 = vpop.permute.xlu0 %8158
        %8160 = vrot.lane.b32.xlu0 %v8151, 64
        %v8161 = vpop.permute.xlu0 %8160
        %vm8162 = vcmask 523264
        %v8163 = vsel %vm8162, %v8159, %v8161
        %8165 = vrot.lane.b32.xlu0 %v7896, 64
        %v8166 = vpop.permute.xlu0 %8165
        %8167 = vrot.lane.b32.xlu0 %v8153, 64
        %v8168 = vpop.permute.xlu0 %8167
        %v8169 = vsel %vm8162, %v8166, %v8168
        %v8171 = vsel %vm7683, %v8163, 0
        %v8174 = vsel %vm7683, %v8169, 0
        %8176 = vmatprep.subr.bf16.mxu0 0
        %8177 = vmatpush1.bf16.xpose.msra.mxu0 0
        %8178 = vmatprep.subr.bf16.mxu0 0
        %8179 = vmatpush1.bf16.xpose.msra.mxu0 0
        %8180 = vmatprep.subr.bf16.mxu0 0
        %8181 = vmatpush1.bf16.xpose.msra.mxu0 0
        %8182 = vmatprep.subr.bf16.mxu0 0
        %8183 = vmatpush1.bf16.xpose.msra.mxu0 0
        %8184 = vmatprep.subr.bf16.mxu0 0
        %8185 = vmatpush1.bf16.xpose.msra.mxu0 0
        %8186 = vmatprep.subr.bf16.mxu0 0
        %8187 = vmatpush1.bf16.xpose.msra.mxu0 0
        %8188 = vmatprep.subr.bf16.mxu0 0
        %8189 = vmatpush1.bf16.xpose.msra.mxu0 0
        %8190 = vmatprep.subr.bf16.mxu0 0
        %8191 = vmatpush1.bf16.xpose.msra.mxu0 %v8174
        %8192 = vmatprep.subr.bf16.mxu0 0
        %8193 = vmatpush2.bf16.xpose.msra.mxu0 0
        %8194 = vmatprep.subr.bf16.mxu0 0
        %8195 = vmatpush2.bf16.xpose.msra.mxu0 0
        %8196 = vmatprep.subr.bf16.mxu0 0
        %8197 = vmatpush2.bf16.xpose.msra.mxu0 0
        %8198 = vmatprep.subr.bf16.mxu0 0
        %8199 = vmatpush2.bf16.xpose.msra.mxu0 0
        %8200 = vmatprep.subr.bf16.mxu0 0
        %8201 = vmatpush2.bf16.xpose.msra.mxu0 0
        %8202 = vmatprep.subr.bf16.mxu0 0
        %8203 = vmatpush2.bf16.xpose.msra.mxu0 0
        %8204 = vmatprep.subr.bf16.mxu0 0
        %8205 = vmatpush2.bf16.xpose.msra.mxu0 0
        %8206 = vmatprep.subr.bf16.mxu0 0
        %8207 = vmatpush2.bf16.xpose.msra.mxu0 0
        %8208 = vmatprep.mubr.bf16.mxu0 0
        %8209 = vmatmul.mubr.bf16.gmra.mxu0 %v8171
        %v8210 = vpop.f32.mrf.mxu0
        %v8211 = vadd.f32 0.0, %v8210
        %v8212 = vpop.f32.mrf.mxu0
        %v8213 = vpop.f32.mrf.mxu0
        %v8214 = vpop.f32.mrf.mxu0
        %8215 = vdwg.mxu0
        %8217 = vrot.lane.b32.xlu0 %v7895, 64
        %v8218 = vpop.permute.xlu0 %8217
        %8219 = vrot.lane.b32.xlu0 %v8152, 64
        %v8220 = vpop.permute.xlu0 %8219
        %v8221 = vsel %vm8162, %v8218, %v8220
        %8223 = vrot.lane.b32.xlu0 %v7897, 64
        %v8224 = vpop.permute.xlu0 %8223
        %8225 = vrot.lane.b32.xlu0 %v8154, 64
        %v8226 = vpop.permute.xlu0 %8225
        %v8227 = vsel %vm8162, %v8224, %v8226
        %v8229 = vsel %vm7683, %v8221, 0
        %v8232 = vsel %vm7683, %v8227, 0
        %8234 = vmatprep.subr.bf16.mxu0 0
        %8235 = vmatpush1.bf16.xpose.msra.mxu0 0
        %8236 = vmatprep.subr.bf16.mxu0 0
        %8237 = vmatpush1.bf16.xpose.msra.mxu0 0
        %8238 = vmatprep.subr.bf16.mxu0 0
        %8239 = vmatpush1.bf16.xpose.msra.mxu0 0
        %8240 = vmatprep.subr.bf16.mxu0 0
        %8241 = vmatpush1.bf16.xpose.msra.mxu0 0
        %8242 = vmatprep.subr.bf16.mxu0 0
        %8243 = vmatpush1.bf16.xpose.msra.mxu0 0
        %8244 = vmatprep.subr.bf16.mxu0 0
        %8245 = vmatpush1.bf16.xpose.msra.mxu0 0
        %8246 = vmatprep.subr.bf16.mxu0 0
        %8247 = vmatpush1.bf16.xpose.msra.mxu0 0
        %8248 = vmatprep.subr.bf16.mxu0 0
        %8249 = vmatpush1.bf16.xpose.msra.mxu0 %v8232
        %8250 = vmatprep.subr.bf16.mxu0 0
        %8251 = vmatpush2.bf16.xpose.msra.mxu0 0
        %8252 = vmatprep.subr.bf16.mxu0 0
        %8253 = vmatpush2.bf16.xpose.msra.mxu0 0
        %8254 = vmatprep.subr.bf16.mxu0 0
        %8255 = vmatpush2.bf16.xpose.msra.mxu0 0
        %8256 = vmatprep.subr.bf16.mxu0 0
        %8257 = vmatpush2.bf16.xpose.msra.mxu0 0
        %8258 = vmatprep.subr.bf16.mxu0 0
        %8259 = vmatpush2.bf16.xpose.msra.mxu0 0
        %8260 = vmatprep.subr.bf16.mxu0 0
        %8261 = vmatpush2.bf16.xpose.msra.mxu0 0
        %8262 = vmatprep.subr.bf16.mxu0 0
        %8263 = vmatpush2.bf16.xpose.msra.mxu0 0
        %8264 = vmatprep.subr.bf16.mxu0 0
        %8265 = vmatpush2.bf16.xpose.msra.mxu0 0
        %8266 = vmatprep.mubr.bf16.mxu0 0
        %8267 = vmatmul.mubr.bf16.gmra.mxu0 %v8229
        %v8268 = vpop.f32.mrf.mxu0
        %v8269 = vadd.f32 0.0, %v8268
        %v8270 = vpop.f32.mrf.mxu0
        %v8271 = vpop.f32.mrf.mxu0
        %v8272 = vpop.f32.mrf.mxu0
        %8273 = vdwg.mxu0
        %v8274 = vsel %vm7776, %v8211, -inf
        %8275 = vmax.xlane.f32.xlu0 %v8274
        %v8276 = vpop.xlane.xlu0 %8275
        %v8277 = vsel %vm7776, %v8269, -inf
        %8278 = vmax.xlane.f32.xlu0 %v8277
        %v8279 = vpop.xlane.xlu0 %8278
        %v8280 = vsub.f32 %v8211, %v8276
        %v8281 = vsub.f32 %v8269, %v8279
        %v8282 = vmul.f32 %v8280, 1.442695
        %v8283 = vpow.pop %v8282
        %v8284 = vmul.f32 %v8281, 1.442695
        %v8285 = vpow.pop %v8284
        %v8286 = vsel %vm7776, %v8283, 0.0
        %8287 = vadd.xlane.f32.xlu0 %v8286
        %v8288 = vpop.xlane.xlu0 %8287
        %v8289 = vsel %vm7776, %v8285, 0.0
        %8290 = vadd.xlane.f32.xlu0 %v8289
        %v8291 = vpop.xlane.xlu0 %8290
        %v8292 = vrcp.pop %v8288
        %v8293 = vrcp.pop %v8291
        %v8294 = vmul.f32 %v8283, %v8292
        %v8295 = vmul.f32 %v8285, %v8293
        %v8296 = vpack.c.bf16 %v8294, %v8294
        %v8297 = vpack.c.bf16 %v8295, %v8295
        %8299 = vrot.lane.b32.xlu0 %v7898, 64
        %v8300 = vpop.permute.xlu0 %8299
        %8301 = vrot.lane.b32.xlu0 %v8155, 64
        %v8302 = vpop.permute.xlu0 %8301
        %v8303 = vsel %vm8162, %v8300, %v8302
        %v8305 = vsel %vm7776, %v8296, 0
        %v8308 = vsel %vm7804, %v8303, 0
        %8310 = vmatprep.subr.bf16.mxu0 0
        %8311 = vmatpush1.bf16.msra.mxu0 0
        %8312 = vmatprep.subr.bf16.mxu0 0
        %8313 = vmatpush1.bf16.msra.mxu0 0
        %8314 = vmatprep.subr.bf16.mxu0 0
        %8315 = vmatpush1.bf16.msra.mxu0 0
        %8316 = vmatprep.subr.bf16.mxu0 0
        %8317 = vmatpush1.bf16.msra.mxu0 0
        %8318 = vmatprep.subr.bf16.mxu0 0
        %8319 = vmatpush1.bf16.msra.mxu0 0
        %8320 = vmatprep.subr.bf16.mxu0 0
        %8321 = vmatpush1.bf16.msra.mxu0 0
        %8322 = vmatprep.subr.bf16.mxu0 0
        %8323 = vmatpush1.bf16.msra.mxu0 0
        %8324 = vmatprep.subr.bf16.mxu0 0
        %8325 = vmatpush1.bf16.msra.mxu0 %v8308
        %8326 = vmatprep.subr.bf16.mxu0 0
        %8327 = vmatpush2.bf16.msra.mxu0 0
        %8328 = vmatprep.subr.bf16.mxu0 0
        %8329 = vmatpush2.bf16.msra.mxu0 0
        %8330 = vmatprep.subr.bf16.mxu0 0
        %8331 = vmatpush2.bf16.msra.mxu0 0
        %8332 = vmatprep.subr.bf16.mxu0 0
        %8333 = vmatpush2.bf16.msra.mxu0 0
        %8334 = vmatprep.subr.bf16.mxu0 0
        %8335 = vmatpush2.bf16.msra.mxu0 0
        %8336 = vmatprep.subr.bf16.mxu0 0
        %8337 = vmatpush2.bf16.msra.mxu0 0
        %8338 = vmatprep.subr.bf16.mxu0 0
        %8339 = vmatpush2.bf16.msra.mxu0 0
        %8340 = vmatprep.subr.bf16.mxu0 0
        %8341 = vmatpush2.bf16.msra.mxu0 0
        %8342 = vmatprep.mubr.bf16.mxu0 0
        %8343 = vmatmul.mubr.bf16.gmra.mxu0 %v8305
        %v8344 = vpop.f32.mrf.mxu0
        %v8345 = vadd.f32 0.0, %v8344
        %v8346 = vpop.f32.mrf.mxu0
        %v8347 = vpop.f32.mrf.mxu0
        %v8348 = vpop.f32.mrf.mxu0
        %8349 = vdwg.mxu0
        %8351 = vrot.lane.b32.xlu0 %v7899, 64
        %v8352 = vpop.permute.xlu0 %8351
        %8353 = vrot.lane.b32.xlu0 %v8156, 64
        %v8354 = vpop.permute.xlu0 %8353
        %v8355 = vsel %vm8162, %v8352, %v8354
        %v8357 = vsel %vm7776, %v8297, 0
        %v8360 = vsel %vm7804, %v8355, 0
        %8362 = vmatprep.subr.bf16.mxu0 0
        %8363 = vmatpush1.bf16.msra.mxu0 0
        %8364 = vmatprep.subr.bf16.mxu0 0
        %8365 = vmatpush1.bf16.msra.mxu0 0
        %8366 = vmatprep.subr.bf16.mxu0 0
        %8367 = vmatpush1.bf16.msra.mxu0 0
        %8368 = vmatprep.subr.bf16.mxu0 0
        %8369 = vmatpush1.bf16.msra.mxu0 0
        %8370 = vmatprep.subr.bf16.mxu0 0
        %8371 = vmatpush1.bf16.msra.mxu0 0
        %8372 = vmatprep.subr.bf16.mxu0 0
        %8373 = vmatpush1.bf16.msra.mxu0 0
        %8374 = vmatprep.subr.bf16.mxu0 0
        %8375 = vmatpush1.bf16.msra.mxu0 0
        %8376 = vmatprep.subr.bf16.mxu0 0
        %8377 = vmatpush1.bf16.msra.mxu0 %v8360
        %8378 = vmatprep.subr.bf16.mxu0 0
        %8379 = vmatpush2.bf16.msra.mxu0 0
        %8380 = vmatprep.subr.bf16.mxu0 0
        %8381 = vmatpush2.bf16.msra.mxu0 0
        %8382 = vmatprep.subr.bf16.mxu0 0
        %8383 = vmatpush2.bf16.msra.mxu0 0
        %8384 = vmatprep.subr.bf16.mxu0 0
        %8385 = vmatpush2.bf16.msra.mxu0 0
        %8386 = vmatprep.subr.bf16.mxu0 0
        %8387 = vmatpush2.bf16.msra.mxu0 0
        %8388 = vmatprep.subr.bf16.mxu0 0
        %8389 = vmatpush2.bf16.msra.mxu0 0
        %8390 = vmatprep.subr.bf16.mxu0 0
        %8391 = vmatpush2.bf16.msra.mxu0 0
        %8392 = vmatprep.subr.bf16.mxu0 0
        %8393 = vmatpush2.bf16.msra.mxu0 0
        %8394 = vmatprep.mubr.bf16.mxu0 0
        %8395 = vmatmul.mubr.bf16.gmra.mxu0 %v8357
        %v8396 = vpop.f32.mrf.mxu0
        %v8397 = vadd.f32 0.0, %v8396
        %v8398 = vpop.f32.mrf.mxu0
        %v8399 = vpop.f32.mrf.mxu0
        %v8400 = vpop.f32.mrf.mxu0
        %8401 = vdwg.mxu0
        %8402 = vrot.lane.b32.xlu0 %v8151, 96
        %v8403 = vpop.permute.xlu0 %8402
        %8404 = vrot.lane.b32.xlu0 %v8153, 96
        %v8405 = vpop.permute.xlu0 %8404
        %v8407 = vsel %vm7683, %v8403, 0
        %v8410 = vsel %vm7683, %v8405, 0
        %8412 = vmatprep.subr.bf16.mxu0 0
        %8413 = vmatpush1.bf16.xpose.msra.mxu0 0
        %8414 = vmatprep.subr.bf16.mxu0 0
        %8415 = vmatpush1.bf16.xpose.msra.mxu0 0
        %8416 = vmatprep.subr.bf16.mxu0 0
        %8417 = vmatpush1.bf16.xpose.msra.mxu0 0
        %8418 = vmatprep.subr.bf16.mxu0 0
        %8419 = vmatpush1.bf16.xpose.msra.mxu0 0
        %8420 = vmatprep.subr.bf16.mxu0 0
        %8421 = vmatpush1.bf16.xpose.msra.mxu0 0
        %8422 = vmatprep.subr.bf16.mxu0 0
        %8423 = vmatpush1.bf16.xpose.msra.mxu0 0
        %8424 = vmatprep.subr.bf16.mxu0 0
        %8425 = vmatpush1.bf16.xpose.msra.mxu0 0
        %8426 = vmatprep.subr.bf16.mxu0 0
        %8427 = vmatpush1.bf16.xpose.msra.mxu0 %v8410
        %8428 = vmatprep.subr.bf16.mxu0 0
        %8429 = vmatpush2.bf16.xpose.msra.mxu0 0
        %8430 = vmatprep.subr.bf16.mxu0 0
        %8431 = vmatpush2.bf16.xpose.msra.mxu0 0
        %8432 = vmatprep.subr.bf16.mxu0 0
        %8433 = vmatpush2.bf16.xpose.msra.mxu0 0
        %8434 = vmatprep.subr.bf16.mxu0 0
        %8435 = vmatpush2.bf16.xpose.msra.mxu0 0
        %8436 = vmatprep.subr.bf16.mxu0 0
        %8437 = vmatpush2.bf16.xpose.msra.mxu0 0
        %8438 = vmatprep.subr.bf16.mxu0 0
        %8439 = vmatpush2.bf16.xpose.msra.mxu0 0
        %8440 = vmatprep.subr.bf16.mxu0 0
        %8441 = vmatpush2.bf16.xpose.msra.mxu0 0
        %8442 = vmatprep.subr.bf16.mxu0 0
        %8443 = vmatpush2.bf16.xpose.msra.mxu0 0
        %8444 = vmatprep.mubr.bf16.mxu0 0
        %8445 = vmatmul.mubr.bf16.gmra.mxu0 %v8407
        %v8446 = vpop.f32.mrf.mxu0
        %v8447 = vadd.f32 0.0, %v8446
        %v8448 = vpop.f32.mrf.mxu0
        %v8449 = vpop.f32.mrf.mxu0
        %v8450 = vpop.f32.mrf.mxu0
        %8451 = vdwg.mxu0
        %8452 = vrot.lane.b32.xlu0 %v8152, 96
        %v8453 = vpop.permute.xlu0 %8452
        %8454 = vrot.lane.b32.xlu0 %v8154, 96
        %v8455 = vpop.permute.xlu0 %8454
        %v8457 = vsel %vm7683, %v8453, 0
        %v8460 = vsel %vm7683, %v8455, 0
        %8462 = vmatprep.subr.bf16.mxu0 0
        %8463 = vmatpush1.bf16.xpose.msra.mxu0 0
        %8464 = vmatprep.subr.bf16.mxu0 0
        %8465 = vmatpush1.bf16.xpose.msra.mxu0 0
        %8466 = vmatprep.subr.bf16.mxu0 0
        %8467 = vmatpush1.bf16.xpose.msra.mxu0 0
        %8468 = vmatprep.subr.bf16.mxu0 0
        %8469 = vmatpush1.bf16.xpose.msra.mxu0 0
        %8470 = vmatprep.subr.bf16.mxu0 0
        %8471 = vmatpush1.bf16.xpose.msra.mxu0 0
        %8472 = vmatprep.subr.bf16.mxu0 0
        %8473 = vmatpush1.bf16.xpose.msra.mxu0 0
        %8474 = vmatprep.subr.bf16.mxu0 0
        %8475 = vmatpush1.bf16.xpose.msra.mxu0 0
        %8476 = vmatprep.subr.bf16.mxu0 0
        %8477 = vmatpush1.bf16.xpose.msra.mxu0 %v8460
        %8478 = vmatprep.subr.bf16.mxu0 0
        %8479 = vmatpush2.bf16.xpose.msra.mxu0 0
        %8480 = vmatprep.subr.bf16.mxu0 0
        %8481 = vmatpush2.bf16.xpose.msra.mxu0 0
        %8482 = vmatprep.subr.bf16.mxu0 0
        %8483 = vmatpush2.bf16.xpose.msra.mxu0 0
        %8484 = vmatprep.subr.bf16.mxu0 0
        %8485 = vmatpush2.bf16.xpose.msra.mxu0 0
        %8486 = vmatprep.subr.bf16.mxu0 0
        %8487 = vmatpush2.bf16.xpose.msra.mxu0 0
        %8488 = vmatprep.subr.bf16.mxu0 0
        %8489 = vmatpush2.bf16.xpose.msra.mxu0 0
        %8490 = vmatprep.subr.bf16.mxu0 0
        %8491 = vmatpush2.bf16.xpose.msra.mxu0 0
        %8492 = vmatprep.subr.bf16.mxu0 0
        %8493 = vmatpush2.bf16.xpose.msra.mxu0 0
        %8494 = vmatprep.mubr.bf16.mxu0 0
        %8495 = vmatmul.mubr.bf16.gmra.mxu0 %v8457
        %v8496 = vpop.f32.mrf.mxu0
        %v8497 = vadd.f32 0.0, %v8496
        %v8498 = vpop.f32.mrf.mxu0
        %v8499 = vpop.f32.mrf.mxu0
        %v8500 = vpop.f32.mrf.mxu0
        %8501 = vdwg.mxu0
        %v8502 = vsel %vm7776, %v8447, -inf
        %8503 = vmax.xlane.f32.xlu0 %v8502
        %v8504 = vpop.xlane.xlu0 %8503
        %v8505 = vsel %vm7776, %v8497, -inf
        %8506 = vmax.xlane.f32.xlu0 %v8505
        %v8507 = vpop.xlane.xlu0 %8506
        %v8508 = vsub.f32 %v8447, %v8504
        %v8509 = vsub.f32 %v8497, %v8507
        %v8510 = vmul.f32 %v8508, 1.442695
        %v8511 = vpow.pop %v8510
        %v8512 = vmul.f32 %v8509, 1.442695
        %v8513 = vpow.pop %v8512
        %v8514 = vsel %vm7776, %v8511, 0.0
        %8515 = vadd.xlane.f32.xlu0 %v8514
        %v8516 = vpop.xlane.xlu0 %8515
        %v8517 = vsel %vm7776, %v8513, 0.0
        %8518 = vadd.xlane.f32.xlu0 %v8517
        %v8519 = vpop.xlane.xlu0 %8518
        %v8520 = vrcp.pop %v8516
        %v8521 = vrcp.pop %v8519
        %v8522 = vmul.f32 %v8511, %v8520
        %v8523 = vmul.f32 %v8513, %v8521
        %v8524 = vpack.c.bf16 %v8522, %v8522
        %v8525 = vpack.c.bf16 %v8523, %v8523
        %8526 = vrot.lane.b32.xlu0 %v8155, 96
        %v8527 = vpop.permute.xlu0 %8526
        %v8529 = vsel %vm7776, %v8524, 0
        %v8532 = vsel %vm7804, %v8527, 0
        %8534 = vmatprep.subr.bf16.mxu0 0
        %8535 = vmatpush1.bf16.msra.mxu0 0
        %8536 = vmatprep.subr.bf16.mxu0 0
        %8537 = vmatpush1.bf16.msra.mxu0 0
        %8538 = vmatprep.subr.bf16.mxu0 0
        %8539 = vmatpush1.bf16.msra.mxu0 0
        %8540 = vmatprep.subr.bf16.mxu0 0
        %8541 = vmatpush1.bf16.msra.mxu0 0
        %8542 = vmatprep.subr.bf16.mxu0 0
        %8543 = vmatpush1.bf16.msra.mxu0 0
        %8544 = vmatprep.subr.bf16.mxu0 0
        %8545 = vmatpush1.bf16.msra.mxu0 0
        %8546 = vmatprep.subr.bf16.mxu0 0
        %8547 = vmatpush1.bf16.msra.mxu0 0
        %8548 = vmatprep.subr.bf16.mxu0 0
        %8549 = vmatpush1.bf16.msra.mxu0 %v8532
        %8550 = vmatprep.subr.bf16.mxu0 0
        %8551 = vmatpush2.bf16.msra.mxu0 0
        %8552 = vmatprep.subr.bf16.mxu0 0
        %8553 = vmatpush2.bf16.msra.mxu0 0
        %8554 = vmatprep.subr.bf16.mxu0 0
        %8555 = vmatpush2.bf16.msra.mxu0 0
        %8556 = vmatprep.subr.bf16.mxu0 0
        %8557 = vmatpush2.bf16.msra.mxu0 0
        %8558 = vmatprep.subr.bf16.mxu0 0
        %8559 = vmatpush2.bf16.msra.mxu0 0
        %8560 = vmatprep.subr.bf16.mxu0 0
        %8561 = vmatpush2.bf16.msra.mxu0 0
        %8562 = vmatprep.subr.bf16.mxu0 0
        %8563 = vmatpush2.bf16.msra.mxu0 0
        %8564 = vmatprep.subr.bf16.mxu0 0
        %8565 = vmatpush2.bf16.msra.mxu0 0
        %8566 = vmatprep.mubr.bf16.mxu0 0
        %8567 = vmatmul.mubr.bf16.gmra.mxu0 %v8529
        %v8568 = vpop.f32.mrf.mxu0
        %v8569 = vadd.f32 0.0, %v8568
        %v8570 = vpop.f32.mrf.mxu0
        %v8571 = vpop.f32.mrf.mxu0
        %v8572 = vpop.f32.mrf.mxu0
        %8573 = vdwg.mxu0
        %8574 = vrot.lane.b32.xlu0 %v8156, 96
        %v8575 = vpop.permute.xlu0 %8574
        %v8577 = vsel %vm7776, %v8525, 0
        %v8580 = vsel %vm7804, %v8575, 0
        %8582 = vmatprep.subr.bf16.mxu0 0
        %8583 = vmatpush1.bf16.msra.mxu0 0
        %8584 = vmatprep.subr.bf16.mxu0 0
        %8585 = vmatpush1.bf16.msra.mxu0 0
        %8586 = vmatprep.subr.bf16.mxu0 0
        %8587 = vmatpush1.bf16.msra.mxu0 0
        %8588 = vmatprep.subr.bf16.mxu0 0
        %8589 = vmatpush1.bf16.msra.mxu0 0
        %8590 = vmatprep.subr.bf16.mxu0 0
        %8591 = vmatpush1.bf16.msra.mxu0 0
        %8592 = vmatprep.subr.bf16.mxu0 0
        %8593 = vmatpush1.bf16.msra.mxu0 0
        %8594 = vmatprep.subr.bf16.mxu0 0
        %8595 = vmatpush1.bf16.msra.mxu0 0
        %8596 = vmatprep.subr.bf16.mxu0 0
        %8597 = vmatpush1.bf16.msra.mxu0 %v8580
        %8598 = vmatprep.subr.bf16.mxu0 0
        %8599 = vmatpush2.bf16.msra.mxu0 0
        %8600 = vmatprep.subr.bf16.mxu0 0
        %8601 = vmatpush2.bf16.msra.mxu0 0
        %8602 = vmatprep.subr.bf16.mxu0 0
        %8603 = vmatpush2.bf16.msra.mxu0 0
        %8604 = vmatprep.subr.bf16.mxu0 0
        %8605 = vmatpush2.bf16.msra.mxu0 0
        %8606 = vmatprep.subr.bf16.mxu0 0
        %8607 = vmatpush2.bf16.msra.mxu0 0
        %8608 = vmatprep.subr.bf16.mxu0 0
        %8609 = vmatpush2.bf16.msra.mxu0 0
        %8610 = vmatprep.subr.bf16.mxu0 0
        %8611 = vmatpush2.bf16.msra.mxu0 0
        %8612 = vmatprep.subr.bf16.mxu0 0
        %8613 = vmatpush2.bf16.msra.mxu0 0
        %8614 = vmatprep.mubr.bf16.mxu0 0
        %8615 = vmatmul.mubr.bf16.gmra.mxu0 %v8577
        %v8616 = vpop.f32.mrf.mxu0
        %v8617 = vadd.f32 0.0, %v8616
        %v8618 = vpop.f32.mrf.mxu0
        %v8619 = vpop.f32.mrf.mxu0
        %v8620 = vpop.f32.mrf.mxu0
        %8621 = vdwg.mxu0
        %v8622 = vpack.c.bf16 %v6768, %v6768
        %v8623 = vpack.c.bf16 %v6772, %v6772
        %v8624 = vpack.c.bf16 %v7155, %v7155
        %v8625 = vpack.c.bf16 %v7159, %v7159
        %v8626 = vpack.c.bf16 %v7542, %v7542
        %v8627 = vpack.c.bf16 %v7546, %v7546
        %v8629 = vsel %vm7683, %v8622, 0
        %v8632 = vsel %vm7683, %v8624, 0
        %8634 = vmatprep.subr.bf16.mxu0 0
        %8635 = vmatpush1.bf16.xpose.msra.mxu0 0
        %8636 = vmatprep.subr.bf16.mxu0 0
        %8637 = vmatpush1.bf16.xpose.msra.mxu0 0
        %8638 = vmatprep.subr.bf16.mxu0 0
        %8639 = vmatpush1.bf16.xpose.msra.mxu0 0
        %8640 = vmatprep.subr.bf16.mxu0 0
        %8641 = vmatpush1.bf16.xpose.msra.mxu0 0
        %8642 = vmatprep.subr.bf16.mxu0 0
        %8643 = vmatpush1.bf16.xpose.msra.mxu0 0
        %8644 = vmatprep.subr.bf16.mxu0 0
        %8645 = vmatpush1.bf16.xpose.msra.mxu0 0
        %8646 = vmatprep.subr.bf16.mxu0 0
        %8647 = vmatpush1.bf16.xpose.msra.mxu0 0
        %8648 = vmatprep.subr.bf16.mxu0 0
        %8649 = vmatpush1.bf16.xpose.msra.mxu0 %v8632
        %8650 = vmatprep.subr.bf16.mxu0 0
        %8651 = vmatpush2.bf16.xpose.msra.mxu0 0
        %8652 = vmatprep.subr.bf16.mxu0 0
        %8653 = vmatpush2.bf16.xpose.msra.mxu0 0
        %8654 = vmatprep.subr.bf16.mxu0 0
        %8655 = vmatpush2.bf16.xpose.msra.mxu0 0
        %8656 = vmatprep.subr.bf16.mxu0 0
        %8657 = vmatpush2.bf16.xpose.msra.mxu0 0
        %8658 = vmatprep.subr.bf16.mxu0 0
        %8659 = vmatpush2.bf16.xpose.msra.mxu0 0
        %8660 = vmatprep.subr.bf16.mxu0 0
        %8661 = vmatpush2.bf16.xpose.msra.mxu0 0
        %8662 = vmatprep.subr.bf16.mxu0 0
        %8663 = vmatpush2.bf16.xpose.msra.mxu0 0
        %8664 = vmatprep.subr.bf16.mxu0 0
        %8665 = vmatpush2.bf16.xpose.msra.mxu0 0
        %8666 = vmatprep.mubr.bf16.mxu0 0
        %8667 = vmatmul.mubr.bf16.gmra.mxu0 %v8629
        %v8668 = vpop.f32.mrf.mxu0
        %v8669 = vadd.f32 0.0, %v8668
        %v8670 = vpop.f32.mrf.mxu0
        %v8671 = vpop.f32.mrf.mxu0
        %v8672 = vpop.f32.mrf.mxu0
        %8673 = vdwg.mxu0
        %v8675 = vsel %vm7683, %v8623, 0
        %v8678 = vsel %vm7683, %v8625, 0
        %8680 = vmatprep.subr.bf16.mxu0 0
        %8681 = vmatpush1.bf16.xpose.msra.mxu0 0
        %8682 = vmatprep.subr.bf16.mxu0 0
        %8683 = vmatpush1.bf16.xpose.msra.mxu0 0
        %8684 = vmatprep.subr.bf16.mxu0 0
        %8685 = vmatpush1.bf16.xpose.msra.mxu0 0
        %8686 = vmatprep.subr.bf16.mxu0 0
        %8687 = vmatpush1.bf16.xpose.msra.mxu0 0
        %8688 = vmatprep.subr.bf16.mxu0 0
        %8689 = vmatpush1.bf16.xpose.msra.mxu0 0
        %8690 = vmatprep.subr.bf16.mxu0 0
        %8691 = vmatpush1.bf16.xpose.msra.mxu0 0
        %8692 = vmatprep.subr.bf16.mxu0 0
        %8693 = vmatpush1.bf16.xpose.msra.mxu0 0
        %8694 = vmatprep.subr.bf16.mxu0 0
        %8695 = vmatpush1.bf16.xpose.msra.mxu0 %v8678
        %8696 = vmatprep.subr.bf16.mxu0 0
        %8697 = vmatpush2.bf16.xpose.msra.mxu0 0
        %8698 = vmatprep.subr.bf16.mxu0 0
        %8699 = vmatpush2.bf16.xpose.msra.mxu0 0
        %8700 = vmatprep.subr.bf16.mxu0 0
        %8701 = vmatpush2.bf16.xpose.msra.mxu0 0
        %8702 = vmatprep.subr.bf16.mxu0 0
        %8703 = vmatpush2.bf16.xpose.msra.mxu0 0
        %8704 = vmatprep.subr.bf16.mxu0 0
        %8705 = vmatpush2.bf16.xpose.msra.mxu0 0
        %8706 = vmatprep.subr.bf16.mxu0 0
        %8707 = vmatpush2.bf16.xpose.msra.mxu0 0
        %8708 = vmatprep.subr.bf16.mxu0 0
        %8709 = vmatpush2.bf16.xpose.msra.mxu0 0
        %8710 = vmatprep.subr.bf16.mxu0 0
        %8711 = vmatpush2.bf16.xpose.msra.mxu0 0
        %8712 = vmatprep.mubr.bf16.mxu0 0
        %8713 = vmatmul.mubr.bf16.gmra.mxu0 %v8675
        %v8714 = vpop.f32.mrf.mxu0
        %v8715 = vadd.f32 0.0, %v8714
        %v8716 = vpop.f32.mrf.mxu0
        %v8717 = vpop.f32.mrf.mxu0
        %v8718 = vpop.f32.mrf.mxu0
        %8719 = vdwg.mxu0
        %v8720 = vsel %vm7776, %v8669, -inf
        %8721 = vmax.xlane.f32.xlu0 %v8720
        %v8722 = vpop.xlane.xlu0 %8721
        %v8723 = vsel %vm7776, %v8715, -inf
        %8724 = vmax.xlane.f32.xlu0 %v8723
        %v8725 = vpop.xlane.xlu0 %8724
        %v8726 = vsub.f32 %v8669, %v8722
        %v8727 = vsub.f32 %v8715, %v8725
        %v8728 = vmul.f32 %v8726, 1.442695
        %v8729 = vpow.pop %v8728
        %v8730 = vmul.f32 %v8727, 1.442695
        %v8731 = vpow.pop %v8730
        %v8732 = vsel %vm7776, %v8729, 0.0
        %8733 = vadd.xlane.f32.xlu0 %v8732
        %v8734 = vpop.xlane.xlu0 %8733
        %v8735 = vsel %vm7776, %v8731, 0.0
        %8736 = vadd.xlane.f32.xlu0 %v8735
        %v8737 = vpop.xlane.xlu0 %8736
        %v8738 = vrcp.pop %v8734
        %v8739 = vrcp.pop %v8737
        %v8740 = vmul.f32 %v8729, %v8738
        %v8741 = vmul.f32 %v8731, %v8739
        %v8742 = vpack.c.bf16 %v8740, %v8740
        %v8743 = vpack.c.bf16 %v8741, %v8741
        %v8745 = vsel %vm7776, %v8742, 0
        %v8748 = vsel %vm7804, %v8626, 0
        %8750 = vmatprep.subr.bf16.mxu0 0
        %8751 = vmatpush1.bf16.msra.mxu0 0
        %8752 = vmatprep.subr.bf16.mxu0 0
        %8753 = vmatpush1.bf16.msra.mxu0 0
        %8754 = vmatprep.subr.bf16.mxu0 0
        %8755 = vmatpush1.bf16.msra.mxu0 0
        %8756 = vmatprep.subr.bf16.mxu0 0
        %8757 = vmatpush1.bf16.msra.mxu0 0
        %8758 = vmatprep.subr.bf16.mxu0 0
        %8759 = vmatpush1.bf16.msra.mxu0 0
        %8760 = vmatprep.subr.bf16.mxu0 0
        %8761 = vmatpush1.bf16.msra.mxu0 0
        %8762 = vmatprep.subr.bf16.mxu0 0
        %8763 = vmatpush1.bf16.msra.mxu0 0
        %8764 = vmatprep.subr.bf16.mxu0 0
        %8765 = vmatpush1.bf16.msra.mxu0 %v8748
        %8766 = vmatprep.subr.bf16.mxu0 0
        %8767 = vmatpush2.bf16.msra.mxu0 0
        %8768 = vmatprep.subr.bf16.mxu0 0
        %8769 = vmatpush2.bf16.msra.mxu0 0
        %8770 = vmatprep.subr.bf16.mxu0 0
        %8771 = vmatpush2.bf16.msra.mxu0 0
        %8772 = vmatprep.subr.bf16.mxu0 0
        %8773 = vmatpush2.bf16.msra.mxu0 0
        %8774 = vmatprep.subr.bf16.mxu0 0
        %8775 = vmatpush2.bf16.msra.mxu0 0
        %8776 = vmatprep.subr.bf16.mxu0 0
        %8777 = vmatpush2.bf16.msra.mxu0 0
        %8778 = vmatprep.subr.bf16.mxu0 0
        %8779 = vmatpush2.bf16.msra.mxu0 0
        %8780 = vmatprep.subr.bf16.mxu0 0
        %8781 = vmatpush2.bf16.msra.mxu0 0
        %8782 = vmatprep.mubr.bf16.mxu0 0
        %8783 = vmatmul.mubr.bf16.gmra.mxu0 %v8745
        %v8784 = vpop.f32.mrf.mxu0
        %v8785 = vadd.f32 0.0, %v8784
        %v8786 = vpop.f32.mrf.mxu0
        %v8787 = vpop.f32.mrf.mxu0
        %v8788 = vpop.f32.mrf.mxu0
        %8789 = vdwg.mxu0
        %v8791 = vsel %vm7776, %v8743, 0
        %v8794 = vsel %vm7804, %v8627, 0
        %8796 = vmatprep.subr.bf16.mxu0 0
        %8797 = vmatpush1.bf16.msra.mxu0 0
        %8798 = vmatprep.subr.bf16.mxu0 0
        %8799 = vmatpush1.bf16.msra.mxu0 0
        %8800 = vmatprep.subr.bf16.mxu0 0
        %8801 = vmatpush1.bf16.msra.mxu0 0
        %8802 = vmatprep.subr.bf16.mxu0 0
        %8803 = vmatpush1.bf16.msra.mxu0 0
        %8804 = vmatprep.subr.bf16.mxu0 0
        %8805 = vmatpush1.bf16.msra.mxu0 0
        %8806 = vmatprep.subr.bf16.mxu0 0
        %8807 = vmatpush1.bf16.msra.mxu0 0
        %8808 = vmatprep.subr.bf16.mxu0 0
        %8809 = vmatpush1.bf16.msra.mxu0 0
        %8810 = vmatprep.subr.bf16.mxu0 0
        %8811 = vmatpush1.bf16.msra.mxu0 %v8794
        %8812 = vmatprep.subr.bf16.mxu0 0
        %8813 = vmatpush2.bf16.msra.mxu0 0
        %8814 = vmatprep.subr.bf16.mxu0 0
        %8815 = vmatpush2.bf16.msra.mxu0 0
        %8816 = vmatprep.subr.bf16.mxu0 0
        %8817 = vmatpush2.bf16.msra.mxu0 0
        %8818 = vmatprep.subr.bf16.mxu0 0
        %8819 = vmatpush2.bf16.msra.mxu0 0
        %8820 = vmatprep.subr.bf16.mxu0 0
        %8821 = vmatpush2.bf16.msra.mxu0 0
        %8822 = vmatprep.subr.bf16.mxu0 0
        %8823 = vmatpush2.bf16.msra.mxu0 0
        %8824 = vmatprep.subr.bf16.mxu0 0
        %8825 = vmatpush2.bf16.msra.mxu0 0
        %8826 = vmatprep.subr.bf16.mxu0 0
        %8827 = vmatpush2.bf16.msra.mxu0 0
        %8828 = vmatprep.mubr.bf16.mxu0 0
        %8829 = vmatmul.mubr.bf16.gmra.mxu0 %v8791
        %v8830 = vpop.f32.mrf.mxu0
        %v8831 = vadd.f32 0.0, %v8830
        %v8832 = vpop.f32.mrf.mxu0
        %v8833 = vpop.f32.mrf.mxu0
        %v8834 = vpop.f32.mrf.mxu0
        %8835 = vdwg.mxu0
        %v8836 = vpack.c.bf16 %v6895, %v6895
        %v8837 = vpack.c.bf16 %v6899, %v6899
        %v8838 = vpack.c.bf16 %v7282, %v7282
        %v8839 = vpack.c.bf16 %v7286, %v7286
        %v8840 = vpack.c.bf16 %v7669, %v7669
        %v8841 = vpack.c.bf16 %v7673, %v7673
        %8844 = vrot.lane.b32.xlu0 %v8622, 32
        %v8845 = vpop.permute.xlu0 %8844
        %8846 = vrot.lane.b32.xlu0 %v8836, 32
        %v8847 = vpop.permute.xlu0 %8846
        %v8848 = vsel %vm7906, %v8845, %v8847
        %8851 = vrot.lane.b32.xlu0 %v8624, 32
        %v8852 = vpop.permute.xlu0 %8851
        %8853 = vrot.lane.b32.xlu0 %v8838, 32
        %v8854 = vpop.permute.xlu0 %8853
        %v8855 = vsel %vm7906, %v8852, %v8854
        %v8857 = vsel %vm7683, %v8848, 0
        %v8860 = vsel %vm7683, %v8855, 0
        %8862 = vmatprep.subr.bf16.mxu0 0
        %8863 = vmatpush1.bf16.xpose.msra.mxu0 0
        %8864 = vmatprep.subr.bf16.mxu0 0
        %8865 = vmatpush1.bf16.xpose.msra.mxu0 0
        %8866 = vmatprep.subr.bf16.mxu0 0
        %8867 = vmatpush1.bf16.xpose.msra.mxu0 0
        %8868 = vmatprep.subr.bf16.mxu0 0
        %8869 = vmatpush1.bf16.xpose.msra.mxu0 0
        %8870 = vmatprep.subr.bf16.mxu0 0
        %8871 = vmatpush1.bf16.xpose.msra.mxu0 0
        %8872 = vmatprep.subr.bf16.mxu0 0
        %8873 = vmatpush1.bf16.xpose.msra.mxu0 0
        %8874 = vmatprep.subr.bf16.mxu0 0
        %8875 = vmatpush1.bf16.xpose.msra.mxu0 0
        %8876 = vmatprep.subr.bf16.mxu0 0
        %8877 = vmatpush1.bf16.xpose.msra.mxu0 %v8860
        %8878 = vmatprep.subr.bf16.mxu0 0
        %8879 = vmatpush2.bf16.xpose.msra.mxu0 0
        %8880 = vmatprep.subr.bf16.mxu0 0
        %8881 = vmatpush2.bf16.xpose.msra.mxu0 0
        %8882 = vmatprep.subr.bf16.mxu0 0
        %8883 = vmatpush2.bf16.xpose.msra.mxu0 0
        %8884 = vmatprep.subr.bf16.mxu0 0
        %8885 = vmatpush2.bf16.xpose.msra.mxu0 0
        %8886 = vmatprep.subr.bf16.mxu0 0
        %8887 = vmatpush2.bf16.xpose.msra.mxu0 0
        %8888 = vmatprep.subr.bf16.mxu0 0
        %8889 = vmatpush2.bf16.xpose.msra.mxu0 0
        %8890 = vmatprep.subr.bf16.mxu0 0
        %8891 = vmatpush2.bf16.xpose.msra.mxu0 0
        %8892 = vmatprep.subr.bf16.mxu0 0
        %8893 = vmatpush2.bf16.xpose.msra.mxu0 0
        %8894 = vmatprep.mubr.bf16.mxu0 0
        %8895 = vmatmul.mubr.bf16.gmra.mxu0 %v8857
        %v8896 = vpop.f32.mrf.mxu0
        %v8897 = vadd.f32 0.0, %v8896
        %v8898 = vpop.f32.mrf.mxu0
        %v8899 = vpop.f32.mrf.mxu0
        %v8900 = vpop.f32.mrf.mxu0
        %8901 = vdwg.mxu0
        %8904 = vrot.lane.b32.xlu0 %v8623, 32
        %v8905 = vpop.permute.xlu0 %8904
        %8906 = vrot.lane.b32.xlu0 %v8837, 32
        %v8907 = vpop.permute.xlu0 %8906
        %v8908 = vsel %vm7906, %v8905, %v8907
        %8911 = vrot.lane.b32.xlu0 %v8625, 32
        %v8912 = vpop.permute.xlu0 %8911
        %8913 = vrot.lane.b32.xlu0 %v8839, 32
        %v8914 = vpop.permute.xlu0 %8913
        %v8915 = vsel %vm7906, %v8912, %v8914
        %v8917 = vsel %vm7683, %v8908, 0
        %v8920 = vsel %vm7683, %v8915, 0
        %8922 = vmatprep.subr.bf16.mxu0 0
        %8923 = vmatpush1.bf16.xpose.msra.mxu0 0
        %8924 = vmatprep.subr.bf16.mxu0 0
        %8925 = vmatpush1.bf16.xpose.msra.mxu0 0
        %8926 = vmatprep.subr.bf16.mxu0 0
        %8927 = vmatpush1.bf16.xpose.msra.mxu0 0
        %8928 = vmatprep.subr.bf16.mxu0 0
        %8929 = vmatpush1.bf16.xpose.msra.mxu0 0
        %8930 = vmatprep.subr.bf16.mxu0 0
        %8931 = vmatpush1.bf16.xpose.msra.mxu0 0
        %8932 = vmatprep.subr.bf16.mxu0 0
        %8933 = vmatpush1.bf16.xpose.msra.mxu0 0
        %8934 = vmatprep.subr.bf16.mxu0 0
        %8935 = vmatpush1.bf16.xpose.msra.mxu0 0
        %8936 = vmatprep.subr.bf16.mxu0 0
        %8937 = vmatpush1.bf16.xpose.msra.mxu0 %v8920
        %8938 = vmatprep.subr.bf16.mxu0 0
        %8939 = vmatpush2.bf16.xpose.msra.mxu0 0
        %8940 = vmatprep.subr.bf16.mxu0 0
        %8941 = vmatpush2.bf16.xpose.msra.mxu0 0
        %8942 = vmatprep.subr.bf16.mxu0 0
        %8943 = vmatpush2.bf16.xpose.msra.mxu0 0
        %8944 = vmatprep.subr.bf16.mxu0 0
        %8945 = vmatpush2.bf16.xpose.msra.mxu0 0
        %8946 = vmatprep.subr.bf16.mxu0 0
        %8947 = vmatpush2.bf16.xpose.msra.mxu0 0
        %8948 = vmatprep.subr.bf16.mxu0 0
        %8949 = vmatpush2.bf16.xpose.msra.mxu0 0
        %8950 = vmatprep.subr.bf16.mxu0 0
        %8951 = vmatpush2.bf16.xpose.msra.mxu0 0
        %8952 = vmatprep.subr.bf16.mxu0 0
        %8953 = vmatpush2.bf16.xpose.msra.mxu0 0
        %8954 = vmatprep.mubr.bf16.mxu0 0
        %8955 = vmatmul.mubr.bf16.gmra.mxu0 %v8917
        %v8956 = vpop.f32.mrf.mxu0
        %v8957 = vadd.f32 0.0, %v8956
        %v8958 = vpop.f32.mrf.mxu0
        %v8959 = vpop.f32.mrf.mxu0
        %v8960 = vpop.f32.mrf.mxu0
        %8961 = vdwg.mxu0
        %v8962 = vsel %vm7776, %v8897, -inf
        %8963 = vmax.xlane.f32.xlu0 %v8962
        %v8964 = vpop.xlane.xlu0 %8963
        %v8965 = vsel %vm7776, %v8957, -inf
        %8966 = vmax.xlane.f32.xlu0 %v8965
        %v8967 = vpop.xlane.xlu0 %8966
        %v8968 = vsub.f32 %v8897, %v8964
        %v8969 = vsub.f32 %v8957, %v8967
        %v8970 = vmul.f32 %v8968, 1.442695
        %v8971 = vpow.pop %v8970
        %v8972 = vmul.f32 %v8969, 1.442695
        %v8973 = vpow.pop %v8972
        %v8974 = vsel %vm7776, %v8971, 0.0
        %8975 = vadd.xlane.f32.xlu0 %v8974
        %v8976 = vpop.xlane.xlu0 %8975
        %v8977 = vsel %vm7776, %v8973, 0.0
        %8978 = vadd.xlane.f32.xlu0 %v8977
        %v8979 = vpop.xlane.xlu0 %8978
        %v8980 = vrcp.pop %v8976
        %v8981 = vrcp.pop %v8979
        %v8982 = vmul.f32 %v8971, %v8980
        %v8983 = vmul.f32 %v8973, %v8981
        %v8984 = vpack.c.bf16 %v8982, %v8982
        %v8985 = vpack.c.bf16 %v8983, %v8983
        %8988 = vrot.lane.b32.xlu0 %v8626, 32
        %v8989 = vpop.permute.xlu0 %8988
        %8990 = vrot.lane.b32.xlu0 %v8840, 32
        %v8991 = vpop.permute.xlu0 %8990
        %v8992 = vsel %vm7906, %v8989, %v8991
        %v8994 = vsel %vm7776, %v8984, 0
        %v8997 = vsel %vm7804, %v8992, 0
        %8999 = vmatprep.subr.bf16.mxu0 0
        %9000 = vmatpush1.bf16.msra.mxu0 0
        %9001 = vmatprep.subr.bf16.mxu0 0
        %9002 = vmatpush1.bf16.msra.mxu0 0
        %9003 = vmatprep.subr.bf16.mxu0 0
        %9004 = vmatpush1.bf16.msra.mxu0 0
        %9005 = vmatprep.subr.bf16.mxu0 0
        %9006 = vmatpush1.bf16.msra.mxu0 0
        %9007 = vmatprep.subr.bf16.mxu0 0
        %9008 = vmatpush1.bf16.msra.mxu0 0
        %9009 = vmatprep.subr.bf16.mxu0 0
        %9010 = vmatpush1.bf16.msra.mxu0 0
        %9011 = vmatprep.subr.bf16.mxu0 0
        %9012 = vmatpush1.bf16.msra.mxu0 0
        %9013 = vmatprep.subr.bf16.mxu0 0
        %9014 = vmatpush1.bf16.msra.mxu0 %v8997
        %9015 = vmatprep.subr.bf16.mxu0 0
        %9016 = vmatpush2.bf16.msra.mxu0 0
        %9017 = vmatprep.subr.bf16.mxu0 0
        %9018 = vmatpush2.bf16.msra.mxu0 0
        %9019 = vmatprep.subr.bf16.mxu0 0
        %9020 = vmatpush2.bf16.msra.mxu0 0
        %9021 = vmatprep.subr.bf16.mxu0 0
        %9022 = vmatpush2.bf16.msra.mxu0 0
        %9023 = vmatprep.subr.bf16.mxu0 0
        %9024 = vmatpush2.bf16.msra.mxu0 0
        %9025 = vmatprep.subr.bf16.mxu0 0
        %9026 = vmatpush2.bf16.msra.mxu0 0
        %9027 = vmatprep.subr.bf16.mxu0 0
        %9028 = vmatpush2.bf16.msra.mxu0 0
        %9029 = vmatprep.subr.bf16.mxu0 0
        %9030 = vmatpush2.bf16.msra.mxu0 0
        %9031 = vmatprep.mubr.bf16.mxu0 0
        %9032 = vmatmul.mubr.bf16.gmra.mxu0 %v8994
        %v9033 = vpop.f32.mrf.mxu0
        %v9034 = vadd.f32 0.0, %v9033
        %v9035 = vpop.f32.mrf.mxu0
        %v9036 = vpop.f32.mrf.mxu0
        %v9037 = vpop.f32.mrf.mxu0
        %9038 = vdwg.mxu0
        %9041 = vrot.lane.b32.xlu0 %v8627, 32
        %v9042 = vpop.permute.xlu0 %9041
        %9043 = vrot.lane.b32.xlu0 %v8841, 32
        %v9044 = vpop.permute.xlu0 %9043
        %v9045 = vsel %vm7906, %v9042, %v9044
        %v9047 = vsel %vm7776, %v8985, 0
        %v9050 = vsel %vm7804, %v9045, 0
        %9052 = vmatprep.subr.bf16.mxu0 0
        %9053 = vmatpush1.bf16.msra.mxu0 0
        %9054 = vmatprep.subr.bf16.mxu0 0
        %9055 = vmatpush1.bf16.msra.mxu0 0
        %9056 = vmatprep.subr.bf16.mxu0 0
        %9057 = vmatpush1.bf16.msra.mxu0 0
        %9058 = vmatprep.subr.bf16.mxu0 0
        %9059 = vmatpush1.bf16.msra.mxu0 0
        %9060 = vmatprep.subr.bf16.mxu0 0
        %9061 = vmatpush1.bf16.msra.mxu0 0
        %9062 = vmatprep.subr.bf16.mxu0 0
        %9063 = vmatpush1.bf16.msra.mxu0 0
        %9064 = vmatprep.subr.bf16.mxu0 0
        %9065 = vmatpush1.bf16.msra.mxu0 0
        %9066 = vmatprep.subr.bf16.mxu0 0
        %9067 = vmatpush1.bf16.msra.mxu0 %v9050
        %9068 = vmatprep.subr.bf16.mxu0 0
        %9069 = vmatpush2.bf16.msra.mxu0 0
        %9070 = vmatprep.subr.bf16.mxu0 0
        %9071 = vmatpush2.bf16.msra.mxu0 0
        %9072 = vmatprep.subr.bf16.mxu0 0
        %9073 = vmatpush2.bf16.msra.mxu0 0
        %9074 = vmatprep.subr.bf16.mxu0 0
        %9075 = vmatpush2.bf16.msra.mxu0 0
        %9076 = vmatprep.subr.bf16.mxu0 0
        %9077 = vmatpush2.bf16.msra.mxu0 0
        %9078 = vmatprep.subr.bf16.mxu0 0
        %9079 = vmatpush2.bf16.msra.mxu0 0
        %9080 = vmatprep.subr.bf16.mxu0 0
        %9081 = vmatpush2.bf16.msra.mxu0 0
        %9082 = vmatprep.subr.bf16.mxu0 0
        %9083 = vmatpush2.bf16.msra.mxu0 0
        %9084 = vmatprep.mubr.bf16.mxu0 0
        %9085 = vmatmul.mubr.bf16.gmra.mxu0 %v9047
        %v9086 = vpop.f32.mrf.mxu0
        %v9087 = vadd.f32 0.0, %v9086
        %v9088 = vpop.f32.mrf.mxu0
        %v9089 = vpop.f32.mrf.mxu0
        %v9090 = vpop.f32.mrf.mxu0
        %9091 = vdwg.mxu0
        %v9092 = vpack.c.bf16 %v6897, %v6897
        %v9093 = vpack.c.bf16 %v6901, %v6901
        %v9094 = vpack.c.bf16 %v7284, %v7284
        %v9095 = vpack.c.bf16 %v7288, %v7288
        %v9096 = vpack.c.bf16 %v7671, %v7671
        %v9097 = vpack.c.bf16 %v7675, %v7675
        %9099 = vrot.lane.b32.xlu0 %v8836, 64
        %v9100 = vpop.permute.xlu0 %9099
        %9101 = vrot.lane.b32.xlu0 %v9092, 64
        %v9102 = vpop.permute.xlu0 %9101
        %v9103 = vsel %vm8162, %v9100, %v9102
        %9105 = vrot.lane.b32.xlu0 %v8838, 64
        %v9106 = vpop.permute.xlu0 %9105
        %9107 = vrot.lane.b32.xlu0 %v9094, 64
        %v9108 = vpop.permute.xlu0 %9107
        %v9109 = vsel %vm8162, %v9106, %v9108
        %v9111 = vsel %vm7683, %v9103, 0
        %v9114 = vsel %vm7683, %v9109, 0
        %9116 = vmatprep.subr.bf16.mxu0 0
        %9117 = vmatpush1.bf16.xpose.msra.mxu0 0
        %9118 = vmatprep.subr.bf16.mxu0 0
        %9119 = vmatpush1.bf16.xpose.msra.mxu0 0
        %9120 = vmatprep.subr.bf16.mxu0 0
        %9121 = vmatpush1.bf16.xpose.msra.mxu0 0
        %9122 = vmatprep.subr.bf16.mxu0 0
        %9123 = vmatpush1.bf16.xpose.msra.mxu0 0
        %9124 = vmatprep.subr.bf16.mxu0 0
        %9125 = vmatpush1.bf16.xpose.msra.mxu0 0
        %9126 = vmatprep.subr.bf16.mxu0 0
        %9127 = vmatpush1.bf16.xpose.msra.mxu0 0
        %9128 = vmatprep.subr.bf16.mxu0 0
        %9129 = vmatpush1.bf16.xpose.msra.mxu0 0
        %9130 = vmatprep.subr.bf16.mxu0 0
        %9131 = vmatpush1.bf16.xpose.msra.mxu0 %v9114
        %9132 = vmatprep.subr.bf16.mxu0 0
        %9133 = vmatpush2.bf16.xpose.msra.mxu0 0
        %9134 = vmatprep.subr.bf16.mxu0 0
        %9135 = vmatpush2.bf16.xpose.msra.mxu0 0
        %9136 = vmatprep.subr.bf16.mxu0 0
        %9137 = vmatpush2.bf16.xpose.msra.mxu0 0
        %9138 = vmatprep.subr.bf16.mxu0 0
        %9139 = vmatpush2.bf16.xpose.msra.mxu0 0
        %9140 = vmatprep.subr.bf16.mxu0 0
        %9141 = vmatpush2.bf16.xpose.msra.mxu0 0
        %9142 = vmatprep.subr.bf16.mxu0 0
        %9143 = vmatpush2.bf16.xpose.msra.mxu0 0
        %9144 = vmatprep.subr.bf16.mxu0 0
        %9145 = vmatpush2.bf16.xpose.msra.mxu0 0
        %9146 = vmatprep.subr.bf16.mxu0 0
        %9147 = vmatpush2.bf16.xpose.msra.mxu0 0
        %9148 = vmatprep.mubr.bf16.mxu0 0
        %9149 = vmatmul.mubr.bf16.gmra.mxu0 %v9111
        %v9150 = vpop.f32.mrf.mxu0
        %v9151 = vadd.f32 0.0, %v9150
        %v9152 = vpop.f32.mrf.mxu0
        %v9153 = vpop.f32.mrf.mxu0
        %v9154 = vpop.f32.mrf.mxu0
        %9155 = vdwg.mxu0
        %9157 = vrot.lane.b32.xlu0 %v8837, 64
        %v9158 = vpop.permute.xlu0 %9157
        %9159 = vrot.lane.b32.xlu0 %v9093, 64
        %v9160 = vpop.permute.xlu0 %9159
        %v9161 = vsel %vm8162, %v9158, %v9160
        %9163 = vrot.lane.b32.xlu0 %v8839, 64
        %v9164 = vpop.permute.xlu0 %9163
        %9165 = vrot.lane.b32.xlu0 %v9095, 64
        %v9166 = vpop.permute.xlu0 %9165
        %v9167 = vsel %vm8162, %v9164, %v9166
        %v9169 = vsel %vm7683, %v9161, 0
        %v9172 = vsel %vm7683, %v9167, 0
        %9174 = vmatprep.subr.bf16.mxu0 0
        %9175 = vmatpush1.bf16.xpose.msra.mxu0 0
        %9176 = vmatprep.subr.bf16.mxu0 0
        %9177 = vmatpush1.bf16.xpose.msra.mxu0 0
        %9178 = vmatprep.subr.bf16.mxu0 0
        %9179 = vmatpush1.bf16.xpose.msra.mxu0 0
        %9180 = vmatprep.subr.bf16.mxu0 0
        %9181 = vmatpush1.bf16.xpose.msra.mxu0 0
        %9182 = vmatprep.subr.bf16.mxu0 0
        %9183 = vmatpush1.bf16.xpose.msra.mxu0 0
        %9184 = vmatprep.subr.bf16.mxu0 0
        %9185 = vmatpush1.bf16.xpose.msra.mxu0 0
        %9186 = vmatprep.subr.bf16.mxu0 0
        %9187 = vmatpush1.bf16.xpose.msra.mxu0 0
        %9188 = vmatprep.subr.bf16.mxu0 0
        %9189 = vmatpush1.bf16.xpose.msra.mxu0 %v9172
        %9190 = vmatprep.subr.bf16.mxu0 0
        %9191 = vmatpush2.bf16.xpose.msra.mxu0 0
        %9192 = vmatprep.subr.bf16.mxu0 0
        %9193 = vmatpush2.bf16.xpose.msra.mxu0 0
        %9194 = vmatprep.subr.bf16.mxu0 0
        %9195 = vmatpush2.bf16.xpose.msra.mxu0 0
        %9196 = vmatprep.subr.bf16.mxu0 0
        %9197 = vmatpush2.bf16.xpose.msra.mxu0 0
        %9198 = vmatprep.subr.bf16.mxu0 0
        %9199 = vmatpush2.bf16.xpose.msra.mxu0 0
        %9200 = vmatprep.subr.bf16.mxu0 0
        %9201 = vmatpush2.bf16.xpose.msra.mxu0 0
        %9202 = vmatprep.subr.bf16.mxu0 0
        %9203 = vmatpush2.bf16.xpose.msra.mxu0 0
        %9204 = vmatprep.subr.bf16.mxu0 0
        %9205 = vmatpush2.bf16.xpose.msra.mxu0 0
        %9206 = vmatprep.mubr.bf16.mxu0 0
        %9207 = vmatmul.mubr.bf16.gmra.mxu0 %v9169
        %v9208 = vpop.f32.mrf.mxu0
        %v9209 = vadd.f32 0.0, %v9208
        %v9210 = vpop.f32.mrf.mxu0
        %v9211 = vpop.f32.mrf.mxu0
        %v9212 = vpop.f32.mrf.mxu0
        %9213 = vdwg.mxu0
        %v9214 = vsel %vm7776, %v9151, -inf
        %9215 = vmax.xlane.f32.xlu0 %v9214
        %v9216 = vpop.xlane.xlu0 %9215
        %v9217 = vsel %vm7776, %v9209, -inf
        %9218 = vmax.xlane.f32.xlu0 %v9217
        %v9219 = vpop.xlane.xlu0 %9218
        %v9220 = vsub.f32 %v9151, %v9216
        %v9221 = vsub.f32 %v9209, %v9219
        %v9222 = vmul.f32 %v9220, 1.442695
        %v9223 = vpow.pop %v9222
        %v9224 = vmul.f32 %v9221, 1.442695
        %v9225 = vpow.pop %v9224
        %v9226 = vsel %vm7776, %v9223, 0.0
        %9227 = vadd.xlane.f32.xlu0 %v9226
        %v9228 = vpop.xlane.xlu0 %9227
        %v9229 = vsel %vm7776, %v9225, 0.0
        %9230 = vadd.xlane.f32.xlu0 %v9229
        %v9231 = vpop.xlane.xlu0 %9230
        %v9232 = vrcp.pop %v9228
        %v9233 = vrcp.pop %v9231
        %v9234 = vmul.f32 %v9223, %v9232
        %v9235 = vmul.f32 %v9225, %v9233
        %v9236 = vpack.c.bf16 %v9234, %v9234
        %v9237 = vpack.c.bf16 %v9235, %v9235
        %9239 = vrot.lane.b32.xlu0 %v8840, 64
        %v9240 = vpop.permute.xlu0 %9239
        %9241 = vrot.lane.b32.xlu0 %v9096, 64
        %v9242 = vpop.permute.xlu0 %9241
        %v9243 = vsel %vm8162, %v9240, %v9242
        %v9245 = vsel %vm7776, %v9236, 0
        %v9248 = vsel %vm7804, %v9243, 0
        %9250 = vmatprep.subr.bf16.mxu0 0
        %9251 = vmatpush1.bf16.msra.mxu0 0
        %9252 = vmatprep.subr.bf16.mxu0 0
        %9253 = vmatpush1.bf16.msra.mxu0 0
        %9254 = vmatprep.subr.bf16.mxu0 0
        %9255 = vmatpush1.bf16.msra.mxu0 0
        %9256 = vmatprep.subr.bf16.mxu0 0
        %9257 = vmatpush1.bf16.msra.mxu0 0
        %9258 = vmatprep.subr.bf16.mxu0 0
        %9259 = vmatpush1.bf16.msra.mxu0 0
        %9260 = vmatprep.subr.bf16.mxu0 0
        %9261 = vmatpush1.bf16.msra.mxu0 0
        %9262 = vmatprep.subr.bf16.mxu0 0
        %9263 = vmatpush1.bf16.msra.mxu0 0
        %9264 = vmatprep.subr.bf16.mxu0 0
        %9265 = vmatpush1.bf16.msra.mxu0 %v9248
        %9266 = vmatprep.subr.bf16.mxu0 0
        %9267 = vmatpush2.bf16.msra.mxu0 0
        %9268 = vmatprep.subr.bf16.mxu0 0
        %9269 = vmatpush2.bf16.msra.mxu0 0
        %9270 = vmatprep.subr.bf16.mxu0 0
        %9271 = vmatpush2.bf16.msra.mxu0 0
        %9272 = vmatprep.subr.bf16.mxu0 0
        %9273 = vmatpush2.bf16.msra.mxu0 0
        %9274 = vmatprep.subr.bf16.mxu0 0
        %9275 = vmatpush2.bf16.msra.mxu0 0
        %9276 = vmatprep.subr.bf16.mxu0 0
        %9277 = vmatpush2.bf16.msra.mxu0 0
        %9278 = vmatprep.subr.bf16.mxu0 0
        %9279 = vmatpush2.bf16.msra.mxu0 0
        %9280 = vmatprep.subr.bf16.mxu0 0
        %9281 = vmatpush2.bf16.msra.mxu0 0
        %9282 = vmatprep.mubr.bf16.mxu0 0
        %9283 = vmatmul.mubr.bf16.gmra.mxu0 %v9245
        %v9284 = vpop.f32.mrf.mxu0
        %v9285 = vadd.f32 0.0, %v9284
        %v9286 = vpop.f32.mrf.mxu0
        %v9287 = vpop.f32.mrf.mxu0
        %v9288 = vpop.f32.mrf.mxu0
        %9289 = vdwg.mxu0
        %9291 = vrot.lane.b32.xlu0 %v8841, 64
        %v9292 = vpop.permute.xlu0 %9291
        %9293 = vrot.lane.b32.xlu0 %v9097, 64
        %v9294 = vpop.permute.xlu0 %9293
        %v9295 = vsel %vm8162, %v9292, %v9294
        %v9297 = vsel %vm7776, %v9237, 0
        %v9300 = vsel %vm7804, %v9295, 0
        %9302 = vmatprep.subr.bf16.mxu0 0
        %9303 = vmatpush1.bf16.msra.mxu0 0
        %9304 = vmatprep.subr.bf16.mxu0 0
        %9305 = vmatpush1.bf16.msra.mxu0 0
        %9306 = vmatprep.subr.bf16.mxu0 0
        %9307 = vmatpush1.bf16.msra.mxu0 0
        %9308 = vmatprep.subr.bf16.mxu0 0
        %9309 = vmatpush1.bf16.msra.mxu0 0
        %9310 = vmatprep.subr.bf16.mxu0 0
        %9311 = vmatpush1.bf16.msra.mxu0 0
        %9312 = vmatprep.subr.bf16.mxu0 0
        %9313 = vmatpush1.bf16.msra.mxu0 0
        %9314 = vmatprep.subr.bf16.mxu0 0
        %9315 = vmatpush1.bf16.msra.mxu0 0
        %9316 = vmatprep.subr.bf16.mxu0 0
        %9317 = vmatpush1.bf16.msra.mxu0 %v9300
        %9318 = vmatprep.subr.bf16.mxu0 0
        %9319 = vmatpush2.bf16.msra.mxu0 0
        %9320 = vmatprep.subr.bf16.mxu0 0
        %9321 = vmatpush2.bf16.msra.mxu0 0
        %9322 = vmatprep.subr.bf16.mxu0 0
        %9323 = vmatpush2.bf16.msra.mxu0 0
        %9324 = vmatprep.subr.bf16.mxu0 0
        %9325 = vmatpush2.bf16.msra.mxu0 0
        %9326 = vmatprep.subr.bf16.mxu0 0
        %9327 = vmatpush2.bf16.msra.mxu0 0
        %9328 = vmatprep.subr.bf16.mxu0 0
        %9329 = vmatpush2.bf16.msra.mxu0 0
        %9330 = vmatprep.subr.bf16.mxu0 0
        %9331 = vmatpush2.bf16.msra.mxu0 0
        %9332 = vmatprep.subr.bf16.mxu0 0
        %9333 = vmatpush2.bf16.msra.mxu0 0
        %9334 = vmatprep.mubr.bf16.mxu0 0
        %9335 = vmatmul.mubr.bf16.gmra.mxu0 %v9297
        %v9336 = vpop.f32.mrf.mxu0
        %v9337 = vadd.f32 0.0, %v9336
        %v9338 = vpop.f32.mrf.mxu0
        %v9339 = vpop.f32.mrf.mxu0
        %v9340 = vpop.f32.mrf.mxu0
        %9341 = vdwg.mxu0
        %9342 = vrot.lane.b32.xlu0 %v9092, 96
        %v9343 = vpop.permute.xlu0 %9342
        %9344 = vrot.lane.b32.xlu0 %v9094, 96
        %v9345 = vpop.permute.xlu0 %9344
        %v9347 = vsel %vm7683, %v9343, 0
        %v9350 = vsel %vm7683, %v9345, 0
        %9352 = vmatprep.subr.bf16.mxu0 0
        %9353 = vmatpush1.bf16.xpose.msra.mxu0 0
        %9354 = vmatprep.subr.bf16.mxu0 0
        %9355 = vmatpush1.bf16.xpose.msra.mxu0 0
        %9356 = vmatprep.subr.bf16.mxu0 0
        %9357 = vmatpush1.bf16.xpose.msra.mxu0 0
        %9358 = vmatprep.subr.bf16.mxu0 0
        %9359 = vmatpush1.bf16.xpose.msra.mxu0 0
        %9360 = vmatprep.subr.bf16.mxu0 0
        %9361 = vmatpush1.bf16.xpose.msra.mxu0 0
        %9362 = vmatprep.subr.bf16.mxu0 0
        %9363 = vmatpush1.bf16.xpose.msra.mxu0 0
        %9364 = vmatprep.subr.bf16.mxu0 0
        %9365 = vmatpush1.bf16.xpose.msra.mxu0 0
        %9366 = vmatprep.subr.bf16.mxu0 0
        %9367 = vmatpush1.bf16.xpose.msra.mxu0 %v9350
        %9368 = vmatprep.subr.bf16.mxu0 0
        %9369 = vmatpush2.bf16.xpose.msra.mxu0 0
        %9370 = vmatprep.subr.bf16.mxu0 0
        %9371 = vmatpush2.bf16.xpose.msra.mxu0 0
        %9372 = vmatprep.subr.bf16.mxu0 0
        %9373 = vmatpush2.bf16.xpose.msra.mxu0 0
        %9374 = vmatprep.subr.bf16.mxu0 0
        %9375 = vmatpush2.bf16.xpose.msra.mxu0 0
        %9376 = vmatprep.subr.bf16.mxu0 0
        %9377 = vmatpush2.bf16.xpose.msra.mxu0 0
        %9378 = vmatprep.subr.bf16.mxu0 0
        %9379 = vmatpush2.bf16.xpose.msra.mxu0 0
        %9380 = vmatprep.subr.bf16.mxu0 0
        %9381 = vmatpush2.bf16.xpose.msra.mxu0 0
        %9382 = vmatprep.subr.bf16.mxu0 0
        %9383 = vmatpush2.bf16.xpose.msra.mxu0 0
        %9384 = vmatprep.mubr.bf16.mxu0 0
        %9385 = vmatmul.mubr.bf16.gmra.mxu0 %v9347
        %v9386 = vpop.f32.mrf.mxu0
        %v9387 = vadd.f32 0.0, %v9386
        %v9388 = vpop.f32.mrf.mxu0
        %v9389 = vpop.f32.mrf.mxu0
        %v9390 = vpop.f32.mrf.mxu0
        %9391 = vdwg.mxu0
        %9392 = vrot.lane.b32.xlu0 %v9093, 96
        %v9393 = vpop.permute.xlu0 %9392
        %9394 = vrot.lane.b32.xlu0 %v9095, 96
        %v9395 = vpop.permute.xlu0 %9394
        %v9397 = vsel %vm7683, %v9393, 0
        %v9400 = vsel %vm7683, %v9395, 0
        %9402 = vmatprep.subr.bf16.mxu0 0
        %9403 = vmatpush1.bf16.xpose.msra.mxu0 0
        %9404 = vmatprep.subr.bf16.mxu0 0
        %9405 = vmatpush1.bf16.xpose.msra.mxu0 0
        %9406 = vmatprep.subr.bf16.mxu0 0
        %9407 = vmatpush1.bf16.xpose.msra.mxu0 0
        %9408 = vmatprep.subr.bf16.mxu0 0
        %9409 = vmatpush1.bf16.xpose.msra.mxu0 0
        %9410 = vmatprep.subr.bf16.mxu0 0
        %9411 = vmatpush1.bf16.xpose.msra.mxu0 0
        %9412 = vmatprep.subr.bf16.mxu0 0
        %9413 = vmatpush1.bf16.xpose.msra.mxu0 0
        %9414 = vmatprep.subr.bf16.mxu0 0
        %9415 = vmatpush1.bf16.xpose.msra.mxu0 0
        %9416 = vmatprep.subr.bf16.mxu0 0
        %9417 = vmatpush1.bf16.xpose.msra.mxu0 %v9400
        %9418 = vmatprep.subr.bf16.mxu0 0
        %9419 = vmatpush2.bf16.xpose.msra.mxu0 0
        %9420 = vmatprep.subr.bf16.mxu0 0
        %9421 = vmatpush2.bf16.xpose.msra.mxu0 0
        %9422 = vmatprep.subr.bf16.mxu0 0
        %9423 = vmatpush2.bf16.xpose.msra.mxu0 0
        %9424 = vmatprep.subr.bf16.mxu0 0
        %9425 = vmatpush2.bf16.xpose.msra.mxu0 0
        %9426 = vmatprep.subr.bf16.mxu0 0
        %9427 = vmatpush2.bf16.xpose.msra.mxu0 0
        %9428 = vmatprep.subr.bf16.mxu0 0
        %9429 = vmatpush2.bf16.xpose.msra.mxu0 0
        %9430 = vmatprep.subr.bf16.mxu0 0
        %9431 = vmatpush2.bf16.xpose.msra.mxu0 0
        %9432 = vmatprep.subr.bf16.mxu0 0
        %9433 = vmatpush2.bf16.xpose.msra.mxu0 0
        %9434 = vmatprep.mubr.bf16.mxu0 0
        %9435 = vmatmul.mubr.bf16.gmra.mxu0 %v9397
        %v9436 = vpop.f32.mrf.mxu0
        %v9437 = vadd.f32 0.0, %v9436
        %v9438 = vpop.f32.mrf.mxu0
        %v9439 = vpop.f32.mrf.mxu0
        %v9440 = vpop.f32.mrf.mxu0
        %9441 = vdwg.mxu0
        %v9442 = vsel %vm7776, %v9387, -inf
        %9443 = vmax.xlane.f32.xlu0 %v9442
        %v9444 = vpop.xlane.xlu0 %9443
        %v9445 = vsel %vm7776, %v9437, -inf
        %9446 = vmax.xlane.f32.xlu0 %v9445
        %v9447 = vpop.xlane.xlu0 %9446
        %v9448 = vsub.f32 %v9387, %v9444
        %v9449 = vsub.f32 %v9437, %v9447
        %v9450 = vmul.f32 %v9448, 1.442695
        %v9451 = vpow.pop %v9450
        %v9452 = vmul.f32 %v9449, 1.442695
        %v9453 = vpow.pop %v9452
        %v9454 = vsel %vm7776, %v9451, 0.0
        %9455 = vadd.xlane.f32.xlu0 %v9454
        %v9456 = vpop.xlane.xlu0 %9455
        %v9457 = vsel %vm7776, %v9453, 0.0
        %9458 = vadd.xlane.f32.xlu0 %v9457
        %v9459 = vpop.xlane.xlu0 %9458
        %v9460 = vrcp.pop %v9456
        %v9461 = vrcp.pop %v9459
        %v9462 = vmul.f32 %v9451, %v9460
        %v9463 = vmul.f32 %v9453, %v9461
        %v9464 = vpack.c.bf16 %v9462, %v9462
        %v9465 = vpack.c.bf16 %v9463, %v9463
        %9466 = vrot.lane.b32.xlu0 %v9096, 96
        %v9467 = vpop.permute.xlu0 %9466
        %v9469 = vsel %vm7776, %v9464, 0
        %v9472 = vsel %vm7804, %v9467, 0
        %9474 = vmatprep.subr.bf16.mxu0 0
        %9475 = vmatpush1.bf16.msra.mxu0 0
        %9476 = vmatprep.subr.bf16.mxu0 0
        %9477 = vmatpush1.bf16.msra.mxu0 0
        %9478 = vmatprep.subr.bf16.mxu0 0
        %9479 = vmatpush1.bf16.msra.mxu0 0
        %9480 = vmatprep.subr.bf16.mxu0 0
        %9481 = vmatpush1.bf16.msra.mxu0 0
        %9482 = vmatprep.subr.bf16.mxu0 0
        %9483 = vmatpush1.bf16.msra.mxu0 0
        %9484 = vmatprep.subr.bf16.mxu0 0
        %9485 = vmatpush1.bf16.msra.mxu0 0
        %9486 = vmatprep.subr.bf16.mxu0 0
        %9487 = vmatpush1.bf16.msra.mxu0 0
        %9488 = vmatprep.subr.bf16.mxu0 0
        %9489 = vmatpush1.bf16.msra.mxu0 %v9472
        %9490 = vmatprep.subr.bf16.mxu0 0
        %9491 = vmatpush2.bf16.msra.mxu0 0
        %9492 = vmatprep.subr.bf16.mxu0 0
        %9493 = vmatpush2.bf16.msra.mxu0 0
        %9494 = vmatprep.subr.bf16.mxu0 0
        %9495 = vmatpush2.bf16.msra.mxu0 0
        %9496 = vmatprep.subr.bf16.mxu0 0
        %9497 = vmatpush2.bf16.msra.mxu0 0
        %9498 = vmatprep.subr.bf16.mxu0 0
        %9499 = vmatpush2.bf16.msra.mxu0 0
        %9500 = vmatprep.subr.bf16.mxu0 0
        %9501 = vmatpush2.bf16.msra.mxu0 0
        %9502 = vmatprep.subr.bf16.mxu0 0
        %9503 = vmatpush2.bf16.msra.mxu0 0
        %9504 = vmatprep.subr.bf16.mxu0 0
        %9505 = vmatpush2.bf16.msra.mxu0 0
        %9506 = vmatprep.mubr.bf16.mxu0 0
        %9507 = vmatmul.mubr.bf16.gmra.mxu0 %v9469
        %v9508 = vpop.f32.mrf.mxu0
        %v9509 = vadd.f32 0.0, %v9508
        %v9510 = vpop.f32.mrf.mxu0
        %v9511 = vpop.f32.mrf.mxu0
        %v9512 = vpop.f32.mrf.mxu0
        %9513 = vdwg.mxu0
        %9514 = vrot.lane.b32.xlu0 %v9097, 96
        %v9515 = vpop.permute.xlu0 %9514
        %v9517 = vsel %vm7776, %v9465, 0
        %v9520 = vsel %vm7804, %v9515, 0
        %9522 = vmatprep.subr.bf16.mxu0 0
        %9523 = vmatpush1.bf16.msra.mxu0 0
        %9524 = vmatprep.subr.bf16.mxu0 0
        %9525 = vmatpush1.bf16.msra.mxu0 0
        %9526 = vmatprep.subr.bf16.mxu0 0
        %9527 = vmatpush1.bf16.msra.mxu0 0
        %9528 = vmatprep.subr.bf16.mxu0 0
        %9529 = vmatpush1.bf16.msra.mxu0 0
        %9530 = vmatprep.subr.bf16.mxu0 0
        %9531 = vmatpush1.bf16.msra.mxu0 0
        %9532 = vmatprep.subr.bf16.mxu0 0
        %9533 = vmatpush1.bf16.msra.mxu0 0
        %9534 = vmatprep.subr.bf16.mxu0 0
        %9535 = vmatpush1.bf16.msra.mxu0 0
        %9536 = vmatprep.subr.bf16.mxu0 0
        %9537 = vmatpush1.bf16.msra.mxu0 %v9520
        %9538 = vmatprep.subr.bf16.mxu0 0
        %9539 = vmatpush2.bf16.msra.mxu0 0
        %9540 = vmatprep.subr.bf16.mxu0 0
        %9541 = vmatpush2.bf16.msra.mxu0 0
        %9542 = vmatprep.subr.bf16.mxu0 0
        %9543 = vmatpush2.bf16.msra.mxu0 0
        %9544 = vmatprep.subr.bf16.mxu0 0
        %9545 = vmatpush2.bf16.msra.mxu0 0
        %9546 = vmatprep.subr.bf16.mxu0 0
        %9547 = vmatpush2.bf16.msra.mxu0 0
        %9548 = vmatprep.subr.bf16.mxu0 0
        %9549 = vmatpush2.bf16.msra.mxu0 0
        %9550 = vmatprep.subr.bf16.mxu0 0
        %9551 = vmatpush2.bf16.msra.mxu0 0
        %9552 = vmatprep.subr.bf16.mxu0 0
        %9553 = vmatpush2.bf16.msra.mxu0 0
        %9554 = vmatprep.mubr.bf16.mxu0 0
        %9555 = vmatmul.mubr.bf16.gmra.mxu0 %v9517
        %v9556 = vpop.f32.mrf.mxu0
        %v9557 = vadd.f32 0.0, %v9556
        %v9558 = vpop.f32.mrf.mxu0
        %v9559 = vpop.f32.mrf.mxu0
        %v9560 = vpop.f32.mrf.mxu0
        %9561 = vdwg.mxu0
        %9564 = vrot.lane.b32.xlu0 %v8093, 96
        %v9565 = vpop.permute.xlu0 %9564
        %9566 = vrot.lane.b32.xlu0 %v8146, 96
        %v9567 = vpop.permute.xlu0 %9566
        %9572 = vrot.lane.b32.xlu0 %v8345, 64
        %v9573 = vpop.permute.xlu0 %9572
        %9574 = vrot.lane.b32.xlu0 %v8397, 64
        %v9575 = vpop.permute.xlu0 %9574
        %9580 = vrot.lane.b32.xlu0 %v8569, 32
        %v9581 = vpop.permute.xlu0 %9580
        %9582 = vrot.lane.b32.xlu0 %v8617, 32
        %v9583 = vpop.permute.xlu0 %9582
        %9588 = vrot.lane.b32.xlu0 %v9034, 96
        %v9589 = vpop.permute.xlu0 %9588
        %9590 = vrot.lane.b32.xlu0 %v9087, 96
        %v9591 = vpop.permute.xlu0 %9590
        %9596 = vrot.lane.b32.xlu0 %v9285, 64
        %v9597 = vpop.permute.xlu0 %9596
        %9598 = vrot.lane.b32.xlu0 %v9337, 64
        %v9599 = vpop.permute.xlu0 %9598
        %9604 = vrot.lane.b32.xlu0 %v9509, 32
        %v9605 = vpop.permute.xlu0 %9604
        %9606 = vrot.lane.b32.xlu0 %v9557, 32
        %v9607 = vpop.permute.xlu0 %9606
        %v9610 = vsel %vm7683, %v7843, %v9565
        %v9611 = vsel %vm7683, %v7889, %v9567
        %vm9612 = vcmask 523264
        %v9613 = vsel %vm9612, %v9565, %v9573
        %v9614 = vsel %vm9612, %v9567, %v9575
        %vm9615 = vcmask 261120
        %v9616 = vsel %vm9615, %v9573, %v9581
        %v9617 = vsel %vm9615, %v9575, %v9583
        %v9618 = vsel %vm7683, %v8785, %v9589
        %v9619 = vsel %vm7683, %v8831, %v9591
        %v9620 = vsel %vm9612, %v9589, %v9597
        %v9621 = vsel %vm9612, %v9591, %v9599
        %v9622 = vsel %vm9615, %v9597, %v9605
        %v9623 = vsel %vm9615, %v9599, %v9607
        %v9624 = vpack.c.bf16 %v9611, %v9610
        %v9625 = vpack.c.bf16 %v9614, %v9613
        %v9626 = vpack.c.bf16 %v9617, %v9616
        %v9627 = vpack.c.bf16 %v9619, %v9618
        %v9628 = vpack.c.bf16 %v9621, %v9620
        %v9629 = vpack.c.bf16 %v9623, %v9622
        %v9630 = vld [vmem:[%s949] sm:$0xff]
        %v9631 = vld [vmem:[%s949 + $0x8] sm:$0xff]
        %v9632 = vld [vmem:[%s949 + $0x10] sm:$0xff]
        %v9633 = vld [vmem:[%s949 + $0x18] sm:$0xff]
        %v9634 = vld [vmem:[%s949 + $0x20] sm:$0xff]
        %v9635 = vld [vmem:[%s949 + $0x28] sm:$0xff]
        %v9636 = vld [vmem:[%s949 + $0x30] sm:$0xff]
        %v9637 = vld [vmem:[%s949 + $0x38] sm:$0xff]
        %v9638 = vld [vmem:[%s949 + $0x40] sm:$0xff]
        %v9639 = vld [vmem:[%s949 + $0x48] sm:$0xff]
        %v9640 = vld [vmem:[%s949 + $0x50] sm:$0xff]
        %v9641 = vld [vmem:[%s949 + $0x58] sm:$0xff]
        %v9642 = vld [vmem:[%s949 + $0x60] sm:$0xff]
        %v9643 = vld [vmem:[%s949 + $0x68] sm:$0xff]
        %v9644 = vld [vmem:[%s949 + $0x70] sm:$0xff]
        %v9645 = vld [vmem:[%s949 + $0x78] sm:$0xff]
        %v9646 = vld [vmem:[%s949 + $0x80] sm:$0xff]
        %v9647 = vld [vmem:[%s949 + $0x88] sm:$0xff]
        %v9648 = vld [vmem:[%s949 + $0x90] sm:$0xff]
        %v9649 = vld [vmem:[%s949 + $0x98] sm:$0xff]
        %v9650 = vld [vmem:[%s949 + $0xa0] sm:$0xff]
        %v9651 = vld [vmem:[%s949 + $0xa8] sm:$0xff]
        %v9652 = vld [vmem:[%s949 + $0xb0] sm:$0xff]
        %v9653 = vld [vmem:[%s949 + $0xb8] sm:$0xff]
        %v9654 = vld [vmem:[%s949 + $0xc0] sm:$0xff]
        %v9655 = vld [vmem:[%s949 + $0xc8] sm:$0xff]
        %v9656 = vld [vmem:[%s949 + $0xd0] sm:$0xff]
        %v9657 = vld [vmem:[%s949 + $0xd8] sm:$0xff]
        %v9658 = vld [vmem:[%s949 + $0xe0] sm:$0xff]
        %v9659 = vld [vmem:[%s949 + $0xe8] sm:$0xff]
        %v9660 = vld [vmem:[%s949 + $0xf0] sm:$0xff]
        %v9661 = vld [vmem:[%s949 + $0xf8] sm:$0xff]
        %v9662 = vld [vmem:[%s949 + $0x100] sm:$0xff]
        %v9663 = vld [vmem:[%s949 + $0x108] sm:$0xff]
        %v9664 = vld [vmem:[%s949 + $0x110] sm:$0xff]
        %v9665 = vld [vmem:[%s949 + $0x118] sm:$0xff]
        %v9666 = vld [vmem:[%s949 + $0x120] sm:$0xff]
        %v9667 = vld [vmem:[%s949 + $0x128] sm:$0xff]
        %v9668 = vld [vmem:[%s949 + $0x130] sm:$0xff]
        %v9669 = vld [vmem:[%s949 + $0x138] sm:$0xff]
        %v9670 = vld [vmem:[%s949 + $0x140] sm:$0xff]
        %v9671 = vld [vmem:[%s949 + $0x148] sm:$0xff]
        %v9672 = vld [vmem:[%s949 + $0x150] sm:$0xff]
        %v9673 = vld [vmem:[%s949 + $0x158] sm:$0xff]
        %v9674 = vld [vmem:[%s949 + $0x160] sm:$0xff]
        %v9675 = vld [vmem:[%s949 + $0x168] sm:$0xff]
        %v9676 = vld [vmem:[%s949 + $0x170] sm:$0xff]
        %v9677 = vld [vmem:[%s949 + $0x178] sm:$0xff]
        %v9678 = vld [vmem:[%s949 + $0x180] sm:$0xff]
        %v9679 = vld [vmem:[%s949 + $0x188] sm:$0xff]
        %v9680 = vld [vmem:[%s949 + $0x190] sm:$0xff]
        %v9681 = vld [vmem:[%s949 + $0x198] sm:$0xff]
        %v9682 = vld [vmem:[%s949 + $0x1a0] sm:$0xff]
        %v9683 = vld [vmem:[%s949 + $0x1a8] sm:$0xff]
        %v9684 = vld [vmem:[%s949 + $0x1b0] sm:$0xff]
        %v9685 = vld [vmem:[%s949 + $0x1b8] sm:$0xff]
        %v9686 = vld [vmem:[%s949 + $0x1c0] sm:$0xff]
        %v9687 = vld [vmem:[%s949 + $0x1c8] sm:$0xff]
        %v9688 = vld [vmem:[%s949 + $0x1d0] sm:$0xff]
        %v9689 = vld [vmem:[%s949 + $0x1d8] sm:$0xff]
        %v9690 = vld [vmem:[%s949 + $0x1e0] sm:$0xff]
        %v9691 = vld [vmem:[%s949 + $0x1e8] sm:$0xff]
        %v9692 = vld [vmem:[%s949 + $0x1f0] sm:$0xff]
        %v9693 = vld [vmem:[%s949 + $0x1f8] sm:$0xff]
        %v9694 = vld [vmem:[%s949 + $0x200] sm:$0xff]
        %v9695 = vld [vmem:[%s949 + $0x208] sm:$0xff]
        %v9696 = vld [vmem:[%s949 + $0x210] sm:$0xff]
        %v9697 = vld [vmem:[%s949 + $0x218] sm:$0xff]
        %v9698 = vld [vmem:[%s949 + $0x220] sm:$0xff]
        %v9699 = vld [vmem:[%s949 + $0x228] sm:$0xff]
        %v9700 = vld [vmem:[%s949 + $0x230] sm:$0xff]
        %v9701 = vld [vmem:[%s949 + $0x238] sm:$0xff]
        %v9702 = vld [vmem:[%s949 + $0x240] sm:$0xff]
        %v9703 = vld [vmem:[%s949 + $0x248] sm:$0xff]
        %v9704 = vld [vmem:[%s949 + $0x250] sm:$0xff]
        %v9705 = vld [vmem:[%s949 + $0x258] sm:$0xff]
        %v9706 = vld [vmem:[%s949 + $0x260] sm:$0xff]
        %v9707 = vld [vmem:[%s949 + $0x268] sm:$0xff]
        %v9708 = vld [vmem:[%s949 + $0x270] sm:$0xff]
        %v9709 = vld [vmem:[%s949 + $0x278] sm:$0xff]
        %v9710 = vld [vmem:[%s949 + $0x280] sm:$0xff]
        %v9711 = vld [vmem:[%s949 + $0x288] sm:$0xff]
        %v9712 = vld [vmem:[%s949 + $0x290] sm:$0xff]
        %v9713 = vld [vmem:[%s949 + $0x298] sm:$0xff]
        %v9714 = vld [vmem:[%s949 + $0x2a0] sm:$0xff]
        %v9715 = vld [vmem:[%s949 + $0x2a8] sm:$0xff]
        %v9716 = vld [vmem:[%s949 + $0x2b0] sm:$0xff]
        %v9717 = vld [vmem:[%s949 + $0x2b8] sm:$0xff]
        %v9718 = vld [vmem:[%s949 + $0x2c0] sm:$0xff]
        %v9719 = vld [vmem:[%s949 + $0x2c8] sm:$0xff]
        %v9720 = vld [vmem:[%s949 + $0x2d0] sm:$0xff]
        %v9721 = vld [vmem:[%s949 + $0x2d8] sm:$0xff]
        %v9722 = vld [vmem:[%s949 + $0x2e0] sm:$0xff]
        %v9723 = vld [vmem:[%s949 + $0x2e8] sm:$0xff]
        %v9724 = vld [vmem:[%s949 + $0x2f0] sm:$0xff]
        %v9725 = vld [vmem:[%s949 + $0x2f8] sm:$0xff]
        %v9726 = vld [vmem:[%s958] sm:$0x3]
        %v9728 = vlaneseq
        %v9729 = vshrl.u32 %v9728, 7
        %v9730 = vsub.s32 0, %v9729
        %v9731 = vrot.slane %v9726, %v9730
        %v9732 = vlaneseq
        %v9733 = vshrl.u32 %v9732, 7
        %v9734 = vsub.s32 1, %v9733
        %v9735 = vrot.slane %v9726, %v9734
        %v9834 = vunpack.c.l.b16 %v9630
        %v9835 = vunpack.c.h.b16 %v9630
        %v9836 = vunpack.c.l.b16 %v9631
        %v9837 = vunpack.c.h.b16 %v9631
        %v9838 = vunpack.c.l.b16 %v9632
        %v9839 = vunpack.c.h.b16 %v9632
        %v9840 = vunpack.c.l.b16 %v9633
        %v9841 = vunpack.c.h.b16 %v9633
        %v9842 = vunpack.c.l.b16 %v9634
        %v9843 = vunpack.c.h.b16 %v9634
        %v9844 = vunpack.c.l.b16 %v9635
        %v9845 = vunpack.c.h.b16 %v9635
        %v9846 = vunpack.c.l.b16 %v9636
        %v9847 = vunpack.c.h.b16 %v9636
        %v9848 = vunpack.c.l.b16 %v9637
        %v9849 = vunpack.c.h.b16 %v9637
        %v9850 = vunpack.c.l.b16 %v9638
        %v9851 = vunpack.c.h.b16 %v9638
        %v9852 = vunpack.c.l.b16 %v9639
        %v9853 = vunpack.c.h.b16 %v9639
        %v9854 = vunpack.c.l.b16 %v9640
        %v9855 = vunpack.c.h.b16 %v9640
        %v9856 = vunpack.c.l.b16 %v9641
        %v9857 = vunpack.c.h.b16 %v9641
        %v9858 = vunpack.c.l.b16 %v9642
        %v9859 = vunpack.c.h.b16 %v9642
        %v9860 = vunpack.c.l.b16 %v9643
        %v9861 = vunpack.c.h.b16 %v9643
        %v9862 = vunpack.c.l.b16 %v9644
        %v9863 = vunpack.c.h.b16 %v9644
        %v9864 = vunpack.c.l.b16 %v9645
        %v9865 = vunpack.c.h.b16 %v9645
        %v9866 = vunpack.c.l.b16 %v9646
        %v9867 = vunpack.c.h.b16 %v9646
        %v9868 = vunpack.c.l.b16 %v9647
        %v9869 = vunpack.c.h.b16 %v9647
        %v9870 = vunpack.c.l.b16 %v9648
        %v9871 = vunpack.c.h.b16 %v9648
        %v9872 = vunpack.c.l.b16 %v9649
        %v9873 = vunpack.c.h.b16 %v9649
        %v9874 = vunpack.c.l.b16 %v9650
        %v9875 = vunpack.c.h.b16 %v9650
        %v9876 = vunpack.c.l.b16 %v9651
        %v9877 = vunpack.c.h.b16 %v9651
        %v9878 = vunpack.c.l.b16 %v9652
        %v9879 = vunpack.c.h.b16 %v9652
        %v9880 = vunpack.c.l.b16 %v9653
        %v9881 = vunpack.c.h.b16 %v9653
        %v9882 = vunpack.c.l.b16 %v9654
        %v9883 = vunpack.c.h.b16 %v9654
        %v9884 = vunpack.c.l.b16 %v9655
        %v9885 = vunpack.c.h.b16 %v9655
        %v9886 = vunpack.c.l.b16 %v9656
        %v9887 = vunpack.c.h.b16 %v9656
        %v9888 = vunpack.c.l.b16 %v9657
        %v9889 = vunpack.c.h.b16 %v9657
        %v9890 = vunpack.c.l.b16 %v9658
        %v9891 = vunpack.c.h.b16 %v9658
        %v9892 = vunpack.c.l.b16 %v9659
        %v9893 = vunpack.c.h.b16 %v9659
        %v9894 = vunpack.c.l.b16 %v9660
        %v9895 = vunpack.c.h.b16 %v9660
        %v9896 = vunpack.c.l.b16 %v9661
        %v9897 = vunpack.c.h.b16 %v9661
        %v9898 = vunpack.c.l.b16 %v9662
        %v9899 = vunpack.c.h.b16 %v9662
        %v9900 = vunpack.c.l.b16 %v9663
        %v9901 = vunpack.c.h.b16 %v9663
        %v9902 = vunpack.c.l.b16 %v9664
        %v9903 = vunpack.c.h.b16 %v9664
        %v9904 = vunpack.c.l.b16 %v9665
        %v9905 = vunpack.c.h.b16 %v9665
        %v9906 = vunpack.c.l.b16 %v9666
        %v9907 = vunpack.c.h.b16 %v9666
        %v9908 = vunpack.c.l.b16 %v9667
        %v9909 = vunpack.c.h.b16 %v9667
        %v9910 = vunpack.c.l.b16 %v9668
        %v9911 = vunpack.c.h.b16 %v9668
        %v9912 = vunpack.c.l.b16 %v9669
        %v9913 = vunpack.c.h.b16 %v9669
        %v9914 = vunpack.c.l.b16 %v9670
        %v9915 = vunpack.c.h.b16 %v9670
        %v9916 = vunpack.c.l.b16 %v9671
        %v9917 = vunpack.c.h.b16 %v9671
        %v9918 = vunpack.c.l.b16 %v9672
        %v9919 = vunpack.c.h.b16 %v9672
        %v9920 = vunpack.c.l.b16 %v9673
        %v9921 = vunpack.c.h.b16 %v9673
        %v9922 = vunpack.c.l.b16 %v9674
        %v9923 = vunpack.c.h.b16 %v9674
        %v9924 = vunpack.c.l.b16 %v9675
        %v9925 = vunpack.c.h.b16 %v9675
        %v9926 = vunpack.c.l.b16 %v9676
        %v9927 = vunpack.c.h.b16 %v9676
        %v9928 = vunpack.c.l.b16 %v9677
        %v9929 = vunpack.c.h.b16 %v9677
        %v9930 = vunpack.c.l.b16 %v9678
        %v9931 = vunpack.c.h.b16 %v9678
        %v9932 = vunpack.c.l.b16 %v9679
        %v9933 = vunpack.c.h.b16 %v9679
        %v9934 = vunpack.c.l.b16 %v9680
        %v9935 = vunpack.c.h.b16 %v9680
        %v9936 = vunpack.c.l.b16 %v9681
        %v9937 = vunpack.c.h.b16 %v9681
        %v9938 = vunpack.c.l.b16 %v9682
        %v9939 = vunpack.c.h.b16 %v9682
        %v9940 = vunpack.c.l.b16 %v9683
        %v9941 = vunpack.c.h.b16 %v9683
        %v9942 = vunpack.c.l.b16 %v9684
        %v9943 = vunpack.c.h.b16 %v9684
        %v9944 = vunpack.c.l.b16 %v9685
        %v9945 = vunpack.c.h.b16 %v9685
        %v9946 = vunpack.c.l.b16 %v9686
        %v9947 = vunpack.c.h.b16 %v9686
        %v9948 = vunpack.c.l.b16 %v9687
        %v9949 = vunpack.c.h.b16 %v9687
        %v9950 = vunpack.c.l.b16 %v9688
        %v9951 = vunpack.c.h.b16 %v9688
        %v9952 = vunpack.c.l.b16 %v9689
        %v9953 = vunpack.c.h.b16 %v9689
        %v9954 = vunpack.c.l.b16 %v9690
        %v9955 = vunpack.c.h.b16 %v9690
        %v9956 = vunpack.c.l.b16 %v9691
        %v9957 = vunpack.c.h.b16 %v9691
        %v9958 = vunpack.c.l.b16 %v9692
        %v9959 = vunpack.c.h.b16 %v9692
        %v9960 = vunpack.c.l.b16 %v9693
        %v9961 = vunpack.c.h.b16 %v9693
        %v9962 = vunpack.c.l.b16 %v9694
        %v9963 = vunpack.c.h.b16 %v9694
        %v9964 = vunpack.c.l.b16 %v9695
        %v9965 = vunpack.c.h.b16 %v9695
        %v9966 = vunpack.c.l.b16 %v9696
        %v9967 = vunpack.c.h.b16 %v9696
        %v9968 = vunpack.c.l.b16 %v9697
        %v9969 = vunpack.c.h.b16 %v9697
        %v9970 = vunpack.c.l.b16 %v9698
        %v9971 = vunpack.c.h.b16 %v9698
        %v9972 = vunpack.c.l.b16 %v9699
        %v9973 = vunpack.c.h.b16 %v9699
        %v9974 = vunpack.c.l.b16 %v9700
        %v9975 = vunpack.c.h.b16 %v9700
        %v9976 = vunpack.c.l.b16 %v9701
        %v9977 = vunpack.c.h.b16 %v9701
        %v9978 = vunpack.c.l.b16 %v9702
        %v9979 = vunpack.c.h.b16 %v9702
        %v9980 = vunpack.c.l.b16 %v9703
        %v9981 = vunpack.c.h.b16 %v9703
        %v9982 = vunpack.c.l.b16 %v9704
        %v9983 = vunpack.c.h.b16 %v9704
        %v9984 = vunpack.c.l.b16 %v9705
        %v9985 = vunpack.c.h.b16 %v9705
        %v9986 = vunpack.c.l.b16 %v9706
        %v9987 = vunpack.c.h.b16 %v9706
        %v9988 = vunpack.c.l.b16 %v9707
        %v9989 = vunpack.c.h.b16 %v9707
        %v9990 = vunpack.c.l.b16 %v9708
        %v9991 = vunpack.c.h.b16 %v9708
        %v9992 = vunpack.c.l.b16 %v9709
        %v9993 = vunpack.c.h.b16 %v9709
        %v9994 = vunpack.c.l.b16 %v9710
        %v9995 = vunpack.c.h.b16 %v9710
        %v9996 = vunpack.c.l.b16 %v9711
        %v9997 = vunpack.c.h.b16 %v9711
        %v9998 = vunpack.c.l.b16 %v9712
        %v9999 = vunpack.c.h.b16 %v9712
        %v10000 = vunpack.c.l.b16 %v9713
        %v10001 = vunpack.c.h.b16 %v9713
        %v10002 = vunpack.c.l.b16 %v9714
        %v10003 = vunpack.c.h.b16 %v9714
        %v10004 = vunpack.c.l.b16 %v9715
        %v10005 = vunpack.c.h.b16 %v9715
        %v10006 = vunpack.c.l.b16 %v9716
        %v10007 = vunpack.c.h.b16 %v9716
        %v10008 = vunpack.c.l.b16 %v9717
        %v10009 = vunpack.c.h.b16 %v9717
        %v10010 = vunpack.c.l.b16 %v9718
        %v10011 = vunpack.c.h.b16 %v9718
        %v10012 = vunpack.c.l.b16 %v9719
        %v10013 = vunpack.c.h.b16 %v9719
        %v10014 = vunpack.c.l.b16 %v9720
        %v10015 = vunpack.c.h.b16 %v9720
        %v10016 = vunpack.c.l.b16 %v9721
        %v10017 = vunpack.c.h.b16 %v9721
        %v10018 = vunpack.c.l.b16 %v9722
        %v10019 = vunpack.c.h.b16 %v9722
        %v10020 = vunpack.c.l.b16 %v9723
        %v10021 = vunpack.c.h.b16 %v9723
        %v10022 = vunpack.c.l.b16 %v9724
        %v10023 = vunpack.c.h.b16 %v9724
        %v10024 = vunpack.c.l.b16 %v9725
        %v10025 = vunpack.c.h.b16 %v9725
        %v10026 = vpack.c.b16 %v9836, %v9834
        %v10027 = vpack.c.b16 %v9837, %v9835
        %v10028 = vpack.c.b16 %v9840, %v9838
        %v10029 = vpack.c.b16 %v9841, %v9839
        %v10030 = vpack.c.b16 %v9844, %v9842
        %v10031 = vpack.c.b16 %v9845, %v9843
        %v10032 = vpack.c.b16 %v9848, %v9846
        %v10033 = vpack.c.b16 %v9849, %v9847
        %v10034 = vpack.c.b16 %v9852, %v9850
        %v10035 = vpack.c.b16 %v9853, %v9851
        %v10036 = vpack.c.b16 %v9856, %v9854
        %v10037 = vpack.c.b16 %v9857, %v9855
        %v10038 = vpack.c.b16 %v9860, %v9858
        %v10039 = vpack.c.b16 %v9861, %v9859
        %v10040 = vpack.c.b16 %v9864, %v9862
        %v10041 = vpack.c.b16 %v9865, %v9863
        %v10042 = vpack.c.b16 %v9868, %v9866
        %v10043 = vpack.c.b16 %v9869, %v9867
        %v10044 = vpack.c.b16 %v9872, %v9870
        %v10045 = vpack.c.b16 %v9873, %v9871
        %v10046 = vpack.c.b16 %v9876, %v9874
        %v10047 = vpack.c.b16 %v9877, %v9875
        %v10048 = vpack.c.b16 %v9880, %v9878
        %v10049 = vpack.c.b16 %v9881, %v9879
        %v10050 = vpack.c.b16 %v9884, %v9882
        %v10051 = vpack.c.b16 %v9885, %v9883
        %v10052 = vpack.c.b16 %v9888, %v9886
        %v10053 = vpack.c.b16 %v9889, %v9887
        %v10054 = vpack.c.b16 %v9892, %v9890
        %v10055 = vpack.c.b16 %v9893, %v9891
        %v10056 = vpack.c.b16 %v9896, %v9894
        %v10057 = vpack.c.b16 %v9897, %v9895
        %v10058 = vpack.c.b16 %v9900, %v9898
        %v10059 = vpack.c.b16 %v9901, %v9899
        %v10060 = vpack.c.b16 %v9904, %v9902
        %v10061 = vpack.c.b16 %v9905, %v9903
        %v10062 = vpack.c.b16 %v9908, %v9906
        %v10063 = vpack.c.b16 %v9909, %v9907
        %v10064 = vpack.c.b16 %v9912, %v9910
        %v10065 = vpack.c.b16 %v9913, %v9911
        %v10066 = vpack.c.b16 %v9916, %v9914
        %v10067 = vpack.c.b16 %v9917, %v9915
        %v10068 = vpack.c.b16 %v9920, %v9918
        %v10069 = vpack.c.b16 %v9921, %v9919
        %v10070 = vpack.c.b16 %v9924, %v9922
        %v10071 = vpack.c.b16 %v9925, %v9923
        %v10072 = vpack.c.b16 %v9928, %v9926
        %v10073 = vpack.c.b16 %v9929, %v9927
        %v10074 = vpack.c.b16 %v9932, %v9930
        %v10075 = vpack.c.b16 %v9933, %v9931
        %v10076 = vpack.c.b16 %v9936, %v9934
        %v10077 = vpack.c.b16 %v9937, %v9935
        %v10078 = vpack.c.b16 %v9940, %v9938
        %v10079 = vpack.c.b16 %v9941, %v9939
        %v10080 = vpack.c.b16 %v9944, %v9942
        %v10081 = vpack.c.b16 %v9945, %v9943
        %v10082 = vpack.c.b16 %v9948, %v9946
        %v10083 = vpack.c.b16 %v9949, %v9947
        %v10084 = vpack.c.b16 %v9952, %v9950
        %v10085 = vpack.c.b16 %v9953, %v9951
        %v10086 = vpack.c.b16 %v9956, %v9954
        %v10087 = vpack.c.b16 %v9957, %v9955
        %v10088 = vpack.c.b16 %v9960, %v9958
        %v10089 = vpack.c.b16 %v9961, %v9959
        %v10090 = vpack.c.b16 %v9964, %v9962
        %v10091 = vpack.c.b16 %v9965, %v9963
        %v10092 = vpack.c.b16 %v9968, %v9966
        %v10093 = vpack.c.b16 %v9969, %v9967
        %v10094 = vpack.c.b16 %v9972, %v9970
        %v10095 = vpack.c.b16 %v9973, %v9971
        %v10096 = vpack.c.b16 %v9976, %v9974
        %v10097 = vpack.c.b16 %v9977, %v9975
        %v10098 = vpack.c.b16 %v9980, %v9978
        %v10099 = vpack.c.b16 %v9981, %v9979
        %v10100 = vpack.c.b16 %v9984, %v9982
        %v10101 = vpack.c.b16 %v9985, %v9983
        %v10102 = vpack.c.b16 %v9988, %v9986
        %v10103 = vpack.c.b16 %v9989, %v9987
        %v10104 = vpack.c.b16 %v9992, %v9990
        %v10105 = vpack.c.b16 %v9993, %v9991
        %v10106 = vpack.c.b16 %v9996, %v9994
        %v10107 = vpack.c.b16 %v9997, %v9995
        %v10108 = vpack.c.b16 %v10000, %v9998
        %v10109 = vpack.c.b16 %v10001, %v9999
        %v10110 = vpack.c.b16 %v10004, %v10002
        %v10111 = vpack.c.b16 %v10005, %v10003
        %v10112 = vpack.c.b16 %v10008, %v10006
        %v10113 = vpack.c.b16 %v10009, %v10007
        %v10114 = vpack.c.b16 %v10012, %v10010
        %v10115 = vpack.c.b16 %v10013, %v10011
        %v10116 = vpack.c.b16 %v10016, %v10014
        %v10117 = vpack.c.b16 %v10017, %v10015
        %v10118 = vpack.c.b16 %v10020, %v10018
        %v10119 = vpack.c.b16 %v10021, %v10019
        %v10120 = vpack.c.b16 %v10024, %v10022
        %v10121 = vpack.c.b16 %v10025, %v10023
        %10218 = vmatprep.subr.bf16.mxu0 %v10041
        %10219 = vmatpush1.bf16.msra.mxu0 %v10040
        %10220 = vmatprep.subr.bf16.mxu0 %v10039
        %10221 = vmatpush1.bf16.msra.mxu0 %v10038
        %10222 = vmatprep.subr.bf16.mxu0 %v10037
        %10223 = vmatpush1.bf16.msra.mxu0 %v10036
        %10224 = vmatprep.subr.bf16.mxu0 %v10035
        %10225 = vmatpush1.bf16.msra.mxu0 %v10034
        %10226 = vmatprep.subr.bf16.mxu0 %v10033
        %10227 = vmatpush1.bf16.msra.mxu0 %v10032
        %10228 = vmatprep.subr.bf16.mxu0 %v10031
        %10229 = vmatpush1.bf16.msra.mxu0 %v10030
        %10230 = vmatprep.subr.bf16.mxu0 %v10029
        %10231 = vmatpush1.bf16.msra.mxu0 %v10028
        %10232 = vmatprep.subr.bf16.mxu0 %v10027
        %10233 = vmatpush1.bf16.msra.mxu0 %v10026
        %10234 = vmatprep.subr.bf16.mxu0 %v10057
        %10235 = vmatpush2.bf16.msra.mxu0 %v10056
        %10236 = vmatprep.subr.bf16.mxu0 %v10055
        %10237 = vmatpush2.bf16.msra.mxu0 %v10054
        %10238 = vmatprep.subr.bf16.mxu0 %v10053
        %10239 = vmatpush2.bf16.msra.mxu0 %v10052
        %10240 = vmatprep.subr.bf16.mxu0 %v10051
        %10241 = vmatpush2.bf16.msra.mxu0 %v10050
        %10242 = vmatprep.subr.bf16.mxu0 %v10049
        %10243 = vmatpush2.bf16.msra.mxu0 %v10048
        %10244 = vmatprep.subr.bf16.mxu0 %v10047
        %10245 = vmatpush2.bf16.msra.mxu0 %v10046
        %10246 = vmatprep.subr.bf16.mxu0 %v10045
        %10247 = vmatpush2.bf16.msra.mxu0 %v10044
        %10248 = vmatprep.subr.bf16.mxu0 %v10043
        %10249 = vmatpush2.bf16.msra.mxu0 %v10042
        %10250 = vmatprep.mubr.bf16.mxu0 %v9625
        %10251 = vmatmul.mubr.bf16.gmra.mxu0 %v9624
        %v10252 = vpop.f32.mrf.mxu0
        %v10253 = vadd.f32 %v9731, %v10252
        %v10254 = vpop.f32.mrf.mxu0
        %v10255 = vadd.f32 %v9735, %v10254
        %v10256 = vpop.f32.mrf.mxu0
        %v10257 = vadd.f32 %v9731, %v10256
        %v10258 = vpop.f32.mrf.mxu0
        %v10259 = vadd.f32 %v9735, %v10258
        %10260 = vdwg.mxu0
        %10261 = vmatprep.subr.bf16.mxu0 %v10073
        %10262 = vmatpush1.bf16.msra.mxu0 %v10072
        %10263 = vmatprep.subr.bf16.mxu0 %v10071
        %10264 = vmatpush1.bf16.msra.mxu0 %v10070
        %10265 = vmatprep.subr.bf16.mxu0 %v10069
        %10266 = vmatpush1.bf16.msra.mxu0 %v10068
        %10267 = vmatprep.subr.bf16.mxu0 %v10067
        %10268 = vmatpush1.bf16.msra.mxu0 %v10066
        %10269 = vmatprep.subr.bf16.mxu0 %v10065
        %10270 = vmatpush1.bf16.msra.mxu0 %v10064
        %10271 = vmatprep.subr.bf16.mxu0 %v10063
        %10272 = vmatpush1.bf16.msra.mxu0 %v10062
        %10273 = vmatprep.subr.bf16.mxu0 %v10061
        %10274 = vmatpush1.bf16.msra.mxu0 %v10060
        %10275 = vmatprep.subr.bf16.mxu0 %v10059
        %10276 = vmatpush1.bf16.msra.mxu0 %v10058
        %10277 = vmatprep.subr.bf16.mxu0 %v10089
        %10278 = vmatpush2.bf16.msra.mxu0 %v10088
        %10279 = vmatprep.subr.bf16.mxu0 %v10087
        %10280 = vmatpush2.bf16.msra.mxu0 %v10086
        %10281 = vmatprep.subr.bf16.mxu0 %v10085
        %10282 = vmatpush2.bf16.msra.mxu0 %v10084
        %10283 = vmatprep.subr.bf16.mxu0 %v10083
        %10284 = vmatpush2.bf16.msra.mxu0 %v10082
        %10285 = vmatprep.subr.bf16.mxu0 %v10081
        %10286 = vmatpush2.bf16.msra.mxu0 %v10080
        %10287 = vmatprep.subr.bf16.mxu0 %v10079
        %10288 = vmatpush2.bf16.msra.mxu0 %v10078
        %10289 = vmatprep.subr.bf16.mxu0 %v10077
        %10290 = vmatpush2.bf16.msra.mxu0 %v10076
        %10291 = vmatprep.subr.bf16.mxu0 %v10075
        %10292 = vmatpush2.bf16.msra.mxu0 %v10074
        %10293 = vmatprep.mubr.bf16.mxu0 %v9627
        %10294 = vmatmul.mubr.bf16.gmra.mxu0 %v9626
        %v10295 = vpop.f32.mrf.mxu0
        %v10296 = vadd.f32 %v10253, %v10295
        %v10297 = vpop.f32.mrf.mxu0
        %v10298 = vadd.f32 %v10255, %v10297
        %v10299 = vpop.f32.mrf.mxu0
        %v10300 = vadd.f32 %v10257, %v10299
        %v10301 = vpop.f32.mrf.mxu0
        %v10302 = vadd.f32 %v10259, %v10301
        %10303 = vdwg.mxu0
        %10304 = vmatprep.subr.bf16.mxu0 %v10105
        %10305 = vmatpush1.bf16.msra.mxu0 %v10104
        %10306 = vmatprep.subr.bf16.mxu0 %v10103
        %10307 = vmatpush1.bf16.msra.mxu0 %v10102
        %10308 = vmatprep.subr.bf16.mxu0 %v10101
        %10309 = vmatpush1.bf16.msra.mxu0 %v10100
        %10310 = vmatprep.subr.bf16.mxu0 %v10099
        %10311 = vmatpush1.bf16.msra.mxu0 %v10098
        %10312 = vmatprep.subr.bf16.mxu0 %v10097
        %10313 = vmatpush1.bf16.msra.mxu0 %v10096
        %10314 = vmatprep.subr.bf16.mxu0 %v10095
        %10315 = vmatpush1.bf16.msra.mxu0 %v10094
        %10316 = vmatprep.subr.bf16.mxu0 %v10093
        %10317 = vmatpush1.bf16.msra.mxu0 %v10092
        %10318 = vmatprep.subr.bf16.mxu0 %v10091
        %10319 = vmatpush1.bf16.msra.mxu0 %v10090
        %10320 = vmatprep.subr.bf16.mxu0 %v10121
        %10321 = vmatpush2.bf16.msra.mxu0 %v10120
        %10322 = vmatprep.subr.bf16.mxu0 %v10119
        %10323 = vmatpush2.bf16.msra.mxu0 %v10118
        %10324 = vmatprep.subr.bf16.mxu0 %v10117
        %10325 = vmatpush2.bf16.msra.mxu0 %v10116
        %10326 = vmatprep.subr.bf16.mxu0 %v10115
        %10327 = vmatpush2.bf16.msra.mxu0 %v10114
        %10328 = vmatprep.subr.bf16.mxu0 %v10113
        %10329 = vmatpush2.bf16.msra.mxu0 %v10112
        %10330 = vmatprep.subr.bf16.mxu0 %v10111
        %10331 = vmatpush2.bf16.msra.mxu0 %v10110
        %10332 = vmatprep.subr.bf16.mxu0 %v10109
        %10333 = vmatpush2.bf16.msra.mxu0 %v10108
        %10334 = vmatprep.subr.bf16.mxu0 %v10107
        %10335 = vmatpush2.bf16.msra.mxu0 %v10106
        %10336 = vmatprep.mubr.bf16.mxu0 %v9629
        %10337 = vmatmul.mubr.bf16.gmra.mxu0 %v9628
        %v10338 = vpop.f32.mrf.mxu0
        %v10339 = vadd.f32 %v10296, %v10338
        %v10340 = vpop.f32.mrf.mxu0
        %v10341 = vadd.f32 %v10298, %v10340
        %v10342 = vpop.f32.mrf.mxu0
        %v10343 = vadd.f32 %v10300, %v10342
        %v10344 = vpop.f32.mrf.mxu0
        %v10345 = vadd.f32 %v10302, %v10344
        %10346 = vdwg.mxu0
        %v10347 = vld [vmem:[%s967] sm:$0x3]
        %v10348 = vld [vmem:[%s976] sm:$0x3]
        %v10349 = vadd.f32 %v10339, %v10341
        %10350 = vadd.xlane.f32.xlu0 %v10349
        %v10351 = vpop.xlane.xlu0 %10350
        %v10352 = vadd.f32 %v10343, %v10345
        %10353 = vadd.xlane.f32.xlu0 %v10352
        %v10354 = vpop.xlane.xlu0 %10353
        %v10355 = vrcp.pop 256.0
        %v10356 = vmul.f32 %v10351, %v10355
        %v10357 = vmul.f32 %v10354, %v10355
        %v10358 = vsub.f32 %v10339, %v10356
        %v10359 = vsub.f32 %v10341, %v10356
        %v10360 = vsub.f32 %v10343, %v10357
        %v10361 = vsub.f32 %v10345, %v10357
        %v10362 = vmul.f32 %v10358, %v10358
        %v10363 = vmul.f32 %v10359, %v10359
        %v10364 = vmul.f32 %v10360, %v10360
        %v10365 = vmul.f32 %v10361, %v10361
        %v10366 = vadd.f32 %v10362, %v10363
        %10367 = vadd.xlane.f32.xlu0 %v10366
        %v10368 = vpop.xlane.xlu0 %10367
        %v10369 = vadd.f32 %v10364, %v10365
        %10370 = vadd.xlane.f32.xlu0 %v10369
        %v10371 = vpop.xlane.xlu0 %10370
        %v10372 = vmul.f32 %v10368, %v10355
        %v10373 = vmul.f32 %v10371, %v10355
        %v10374 = vadd.f32 %v10372, 1e-05
        %v10375 = vadd.f32 %v10373, 1e-05
        %v10376 = vrsqrt.pop %v10374
        %v10377 = vrsqrt.pop %v10375
        %v10378 = vmul.f32 %v10358, %v10376
        %v10379 = vmul.f32 %v10359, %v10376
        %v10380 = vmul.f32 %v10360, %v10377
        %v10381 = vmul.f32 %v10361, %v10377
        %v10383 = vlaneseq
        %v10384 = vshrl.u32 %v10383, 7
        %v10385 = vsub.s32 0, %v10384
        %v10386 = vrot.slane %v10347, %v10385
        %v10387 = vlaneseq
        %v10388 = vshrl.u32 %v10387, 7
        %v10389 = vsub.s32 1, %v10388
        %v10390 = vrot.slane %v10347, %v10389
        %v10393 = vmul.f32 %v10378, %v10386
        %v10394 = vmul.f32 %v10379, %v10390
        %v10395 = vmul.f32 %v10380, %v10386
        %v10396 = vmul.f32 %v10381, %v10390
        %v10398 = vlaneseq
        %v10399 = vshrl.u32 %v10398, 7
        %v10400 = vsub.s32 0, %v10399
        %v10401 = vrot.slane %v10348, %v10400
        %v10402 = vlaneseq
        %v10403 = vshrl.u32 %v10402, 7
        %v10404 = vsub.s32 1, %v10403
        %v10405 = vrot.slane %v10348, %v10404
        %v10408 = vadd.f32 %v10393, %v10401
        %v10409 = vadd.f32 %v10394, %v10405
        %v10410 = vadd.f32 %v10395, %v10401
        %v10411 = vadd.f32 %v10396, %v10405
        %v10412 = vmax.f32 %v10408, 0.0
        %v10413 = vmax.f32 %v10409, 0.0
        %v10414 = vmax.f32 %v10410, 0.0
        %v10415 = vmax.f32 %v10411, 0.0
        %v10416 = vpack.c.bf16 %v10414, %v10412
        %v10417 = vpack.c.bf16 %v10415, %v10413
        %v10418 = vld [vmem:[%s985] sm:$0xf]
        %v10419 = vld [vmem:[%s985 + $0x4] sm:$0xf]
        %v10420 = vld [vmem:[%s985 + $0x8] sm:$0xf]
        %v10421 = vld [vmem:[%s985 + $0xc] sm:$0xf]
        %v10422 = vld [vmem:[%s985 + $0x10] sm:$0xf]
        %v10423 = vld [vmem:[%s985 + $0x14] sm:$0xf]
        %v10424 = vld [vmem:[%s985 + $0x18] sm:$0xf]
        %v10425 = vld [vmem:[%s985 + $0x1c] sm:$0xf]
        %v10426 = vld [vmem:[%s985 + $0x20] sm:$0xf]
        %v10427 = vld [vmem:[%s985 + $0x24] sm:$0xf]
        %v10428 = vld [vmem:[%s985 + $0x28] sm:$0xf]
        %v10429 = vld [vmem:[%s985 + $0x2c] sm:$0xf]
        %v10430 = vld [vmem:[%s985 + $0x30] sm:$0xf]
        %v10431 = vld [vmem:[%s985 + $0x34] sm:$0xf]
        %v10432 = vld [vmem:[%s985 + $0x38] sm:$0xf]
        %v10433 = vld [vmem:[%s985 + $0x3c] sm:$0xf]
        %v10434 = vld [vmem:[%s985 + $0x40] sm:$0xf]
        %v10435 = vld [vmem:[%s985 + $0x44] sm:$0xf]
        %v10436 = vld [vmem:[%s985 + $0x48] sm:$0xf]
        %v10437 = vld [vmem:[%s985 + $0x4c] sm:$0xf]
        %v10438 = vld [vmem:[%s985 + $0x50] sm:$0xf]
        %v10439 = vld [vmem:[%s985 + $0x54] sm:$0xf]
        %v10440 = vld [vmem:[%s985 + $0x58] sm:$0xf]
        %v10441 = vld [vmem:[%s985 + $0x5c] sm:$0xf]
        %v10442 = vld [vmem:[%s985 + $0x60] sm:$0xf]
        %v10443 = vld [vmem:[%s985 + $0x64] sm:$0xf]
        %v10444 = vld [vmem:[%s985 + $0x68] sm:$0xf]
        %v10445 = vld [vmem:[%s985 + $0x6c] sm:$0xf]
        %v10446 = vld [vmem:[%s985 + $0x70] sm:$0xf]
        %v10447 = vld [vmem:[%s985 + $0x74] sm:$0xf]
        %v10448 = vld [vmem:[%s985 + $0x78] sm:$0xf]
        %v10449 = vld [vmem:[%s985 + $0x7c] sm:$0xf]
        %v10450 = vld [vmem:[%s993] sm:$0x1]
        %v10452 = vlaneseq
        %v10453 = vshrl.u32 %v10452, 7
        %v10454 = vsub.s32 0, %v10453
        %v10455 = vrot.slane %v10450, %v10454
        %v10489 = vunpack.c.l.b16 %v10418
        %v10490 = vunpack.c.l.b16 %v10419
        %v10491 = vunpack.c.l.b16 %v10420
        %v10492 = vunpack.c.l.b16 %v10421
        %v10493 = vunpack.c.l.b16 %v10422
        %v10494 = vunpack.c.l.b16 %v10423
        %v10495 = vunpack.c.l.b16 %v10424
        %v10496 = vunpack.c.l.b16 %v10425
        %v10497 = vunpack.c.l.b16 %v10426
        %v10498 = vunpack.c.l.b16 %v10427
        %v10499 = vunpack.c.l.b16 %v10428
        %v10500 = vunpack.c.l.b16 %v10429
        %v10501 = vunpack.c.l.b16 %v10430
        %v10502 = vunpack.c.l.b16 %v10431
        %v10503 = vunpack.c.l.b16 %v10432
        %v10504 = vunpack.c.l.b16 %v10433
        %v10505 = vunpack.c.l.b16 %v10434
        %v10506 = vunpack.c.l.b16 %v10435
        %v10507 = vunpack.c.l.b16 %v10436
        %v10508 = vunpack.c.l.b16 %v10437
        %v10509 = vunpack.c.l.b16 %v10438
        %v10510 = vunpack.c.l.b16 %v10439
        %v10511 = vunpack.c.l.b16 %v10440
        %v10512 = vunpack.c.l.b16 %v10441
        %v10513 = vunpack.c.l.b16 %v10442
        %v10514 = vunpack.c.l.b16 %v10443
        %v10515 = vunpack.c.l.b16 %v10444
        %v10516 = vunpack.c.l.b16 %v10445
        %v10517 = vunpack.c.l.b16 %v10446
        %v10518 = vunpack.c.l.b16 %v10447
        %v10519 = vunpack.c.l.b16 %v10448
        %v10520 = vunpack.c.l.b16 %v10449
        %v10521 = vpack.c.b16 %v10490, %v10489
        %v10522 = vpack.c.b16 %v10492, %v10491
        %v10523 = vpack.c.b16 %v10494, %v10493
        %v10524 = vpack.c.b16 %v10496, %v10495
        %v10525 = vpack.c.b16 %v10498, %v10497
        %v10526 = vpack.c.b16 %v10500, %v10499
        %v10527 = vpack.c.b16 %v10502, %v10501
        %v10528 = vpack.c.b16 %v10504, %v10503
        %v10529 = vpack.c.b16 %v10506, %v10505
        %v10530 = vpack.c.b16 %v10508, %v10507
        %v10531 = vpack.c.b16 %v10510, %v10509
        %v10532 = vpack.c.b16 %v10512, %v10511
        %v10533 = vpack.c.b16 %v10514, %v10513
        %v10534 = vpack.c.b16 %v10516, %v10515
        %v10535 = vpack.c.b16 %v10518, %v10517
        %v10536 = vpack.c.b16 %v10520, %v10519
        %10553 = vmatprep.subr.bf16.mxu0 0
        %10554 = vmatpush1.bf16.msra.mxu0 %v10528
        %10555 = vmatprep.subr.bf16.mxu0 0
        %10556 = vmatpush1.bf16.msra.mxu0 %v10527
        %10557 = vmatprep.subr.bf16.mxu0 0
        %10558 = vmatpush1.bf16.msra.mxu0 %v10526
        %10559 = vmatprep.subr.bf16.mxu0 0
        %10560 = vmatpush1.bf16.msra.mxu0 %v10525
        %10561 = vmatprep.subr.bf16.mxu0 0
        %10562 = vmatpush1.bf16.msra.mxu0 %v10524
        %10563 = vmatprep.subr.bf16.mxu0 0
        %10564 = vmatpush1.bf16.msra.mxu0 %v10523
        %10565 = vmatprep.subr.bf16.mxu0 0
        %10566 = vmatpush1.bf16.msra.mxu0 %v10522
        %10567 = vmatprep.subr.bf16.mxu0 0
        %10568 = vmatpush1.bf16.msra.mxu0 %v10521
        %10569 = vmatprep.subr.bf16.mxu0 0
        %10570 = vmatpush2.bf16.msra.mxu0 %v10536
        %10571 = vmatprep.subr.bf16.mxu0 0
        %10572 = vmatpush2.bf16.msra.mxu0 %v10535
        %10573 = vmatprep.subr.bf16.mxu0 0
        %10574 = vmatpush2.bf16.msra.mxu0 %v10534
        %10575 = vmatprep.subr.bf16.mxu0 0
        %10576 = vmatpush2.bf16.msra.mxu0 %v10533
        %10577 = vmatprep.subr.bf16.mxu0 0
        %10578 = vmatpush2.bf16.msra.mxu0 %v10532
        %10579 = vmatprep.subr.bf16.mxu0 0
        %10580 = vmatpush2.bf16.msra.mxu0 %v10531
        %10581 = vmatprep.subr.bf16.mxu0 0
        %10582 = vmatpush2.bf16.msra.mxu0 %v10530
        %10583 = vmatprep.subr.bf16.mxu0 0
        %10584 = vmatpush2.bf16.msra.mxu0 %v10529
        %10585 = vmatprep.mubr.bf16.mxu0 %v10417
        %10586 = vmatmul.mubr.bf16.gmra.mxu0 %v10416
        %v10587 = vpop.f32.mrf.mxu0
        %v10588 = vadd.f32 %v10455, %v10587
        %v10589 = vpop.f32.mrf.mxu0
        %v10590 = vpop.f32.mrf.mxu0
        %v10591 = vadd.f32 %v10455, %v10590
        %v10592 = vpop.f32.mrf.mxu0
        %10593 = vdwg.mxu0
        %v10594 = vld [vmem:[%s1001] sm:$0x1]
        %v10595 = vld [vmem:[%s1009] sm:$0x1]
        %10596 = vadd.xlane.f32.xlu0 %v10588
        %v10597 = vpop.xlane.xlu0 %10596
        %10598 = vadd.xlane.f32.xlu0 %v10591
        %v10599 = vpop.xlane.xlu0 %10598
        %v10600 = vrcp.pop 128.0
        %v10601 = vmul.f32 %v10597, %v10600
        %v10602 = vmul.f32 %v10599, %v10600
        %v10603 = vsub.f32 %v10588, %v10601
        %v10604 = vsub.f32 %v10591, %v10602
        %v10605 = vmul.f32 %v10603, %v10603
        %v10606 = vmul.f32 %v10604, %v10604
        %10607 = vadd.xlane.f32.xlu0 %v10605
        %v10608 = vpop.xlane.xlu0 %10607
        %10609 = vadd.xlane.f32.xlu0 %v10606
        %v10610 = vpop.xlane.xlu0 %10609
        %v10611 = vmul.f32 %v10608, %v10600
        %v10612 = vmul.f32 %v10610, %v10600
        %v10613 = vadd.f32 %v10611, 1e-05
        %v10614 = vadd.f32 %v10612, 1e-05
        %v10615 = vrsqrt.pop %v10613
        %v10616 = vrsqrt.pop %v10614
        %v10617 = vmul.f32 %v10603, %v10615
        %v10618 = vmul.f32 %v10604, %v10616
        %v10620 = vlaneseq
        %v10621 = vshrl.u32 %v10620, 7
        %v10622 = vsub.s32 0, %v10621
        %v10623 = vrot.slane %v10594, %v10622
        %v10625 = vmul.f32 %v10617, %v10623
        %v10626 = vmul.f32 %v10618, %v10623
        %v10628 = vlaneseq
        %v10629 = vshrl.u32 %v10628, 7
        %v10630 = vsub.s32 0, %v10629
        %v10631 = vrot.slane %v10595, %v10630
        %v10633 = vadd.f32 %v10625, %v10631
        %v10634 = vadd.f32 %v10626, %v10631
        %v10635 = vmax.f32 %v10633, 0.0
        %v10636 = vmax.f32 %v10634, 0.0
        %v10637 = vpack.c.bf16 %v10636, %v10635
        %v10638 = vld [vmem:[%s1018] sm:$0xf]
        %v10639 = vld [vmem:[%s1018 + $0x4] sm:$0xf]
        %v10640 = vld [vmem:[%s1018 + $0x8] sm:$0xf]
        %v10641 = vld [vmem:[%s1018 + $0xc] sm:$0xf]
        %v10642 = vld [vmem:[%s1018 + $0x10] sm:$0xf]
        %v10643 = vld [vmem:[%s1018 + $0x14] sm:$0xf]
        %v10644 = vld [vmem:[%s1018 + $0x18] sm:$0xf]
        %v10645 = vld [vmem:[%s1018 + $0x1c] sm:$0xf]
        %v10646 = vld [vmem:[%s1018 + $0x20] sm:$0xf]
        %v10647 = vld [vmem:[%s1018 + $0x24] sm:$0xf]
        %v10648 = vld [vmem:[%s1018 + $0x28] sm:$0xf]
        %v10649 = vld [vmem:[%s1018 + $0x2c] sm:$0xf]
        %v10650 = vld [vmem:[%s1018 + $0x30] sm:$0xf]
        %v10651 = vld [vmem:[%s1018 + $0x34] sm:$0xf]
        %v10652 = vld [vmem:[%s1018 + $0x38] sm:$0xf]
        %v10653 = vld [vmem:[%s1018 + $0x3c] sm:$0xf]
        %v10654 = vld [vmem:[%s1026] sm:$0x1]
        %v10656 = vlaneseq
        %v10657 = vshrl.u32 %v10656, 7
        %v10658 = vsub.s32 0, %v10657
        %v10659 = vrot.slane %v10654, %v10658
        %v10677 = vunpack.c.l.b16 %v10638
        %v10678 = vunpack.c.l.b16 %v10639
        %v10679 = vunpack.c.l.b16 %v10640
        %v10680 = vunpack.c.l.b16 %v10641
        %v10681 = vunpack.c.l.b16 %v10642
        %v10682 = vunpack.c.l.b16 %v10643
        %v10683 = vunpack.c.l.b16 %v10644
        %v10684 = vunpack.c.l.b16 %v10645
        %v10685 = vunpack.c.l.b16 %v10646
        %v10686 = vunpack.c.l.b16 %v10647
        %v10687 = vunpack.c.l.b16 %v10648
        %v10688 = vunpack.c.l.b16 %v10649
        %v10689 = vunpack.c.l.b16 %v10650
        %v10690 = vunpack.c.l.b16 %v10651
        %v10691 = vunpack.c.l.b16 %v10652
        %v10692 = vunpack.c.l.b16 %v10653
        %v10693 = vpack.c.b16 %v10678, %v10677
        %v10694 = vpack.c.b16 %v10680, %v10679
        %v10695 = vpack.c.b16 %v10682, %v10681
        %v10696 = vpack.c.b16 %v10684, %v10683
        %v10697 = vpack.c.b16 %v10686, %v10685
        %v10698 = vpack.c.b16 %v10688, %v10687
        %v10699 = vpack.c.b16 %v10690, %v10689
        %v10700 = vpack.c.b16 %v10692, %v10691
        %10709 = vmatprep.subr.bf16.mxu0 0
        %10710 = vmatpush1.bf16.msra.mxu0 %v10700
        %10711 = vmatprep.subr.bf16.mxu0 0
        %10712 = vmatpush1.bf16.msra.mxu0 %v10699
        %10713 = vmatprep.subr.bf16.mxu0 0
        %10714 = vmatpush1.bf16.msra.mxu0 %v10698
        %10715 = vmatprep.subr.bf16.mxu0 0
        %10716 = vmatpush1.bf16.msra.mxu0 %v10697
        %10717 = vmatprep.subr.bf16.mxu0 0
        %10718 = vmatpush1.bf16.msra.mxu0 %v10696
        %10719 = vmatprep.subr.bf16.mxu0 0
        %10720 = vmatpush1.bf16.msra.mxu0 %v10695
        %10721 = vmatprep.subr.bf16.mxu0 0
        %10722 = vmatpush1.bf16.msra.mxu0 %v10694
        %10723 = vmatprep.subr.bf16.mxu0 0
        %10724 = vmatpush1.bf16.msra.mxu0 %v10693
        %10725 = vmatprep.subr.bf16.mxu0 0
        %10726 = vmatpush2.bf16.msra.mxu0 0
        %10727 = vmatprep.subr.bf16.mxu0 0
        %10728 = vmatpush2.bf16.msra.mxu0 0
        %10729 = vmatprep.subr.bf16.mxu0 0
        %10730 = vmatpush2.bf16.msra.mxu0 0
        %10731 = vmatprep.subr.bf16.mxu0 0
        %10732 = vmatpush2.bf16.msra.mxu0 0
        %10733 = vmatprep.subr.bf16.mxu0 0
        %10734 = vmatpush2.bf16.msra.mxu0 0
        %10735 = vmatprep.subr.bf16.mxu0 0
        %10736 = vmatpush2.bf16.msra.mxu0 0
        %10737 = vmatprep.subr.bf16.mxu0 0
        %10738 = vmatpush2.bf16.msra.mxu0 0
        %10739 = vmatprep.subr.bf16.mxu0 0
        %10740 = vmatpush2.bf16.msra.mxu0 0
        %10741 = vmatprep.mubr.bf16.mxu0 0
        %10742 = vmatmul.mubr.bf16.gmra.mxu0 %v10637
        %v10743 = vpop.f32.mrf.mxu0
        %v10744 = vadd.f32 %v10659, %v10743
        %v10745 = vpop.f32.mrf.mxu0
        %v10746 = vpop.f32.mrf.mxu0
        %v10747 = vadd.f32 %v10659, %v10746
        %v10748 = vpop.f32.mrf.mxu0
        %10749 = vdwg.mxu0
        %v10750 = vld [vmem:[%s1034] sm:$0x1]
        %v10751 = vld [vmem:[%s1042] sm:$0x1]
        %10752 = vadd.xlane.f32.xlu0 %v10744
        %v10753 = vpop.xlane.xlu0 %10752
        %10754 = vadd.xlane.f32.xlu0 %v10747
        %v10755 = vpop.xlane.xlu0 %10754
        %v10756 = vmul.f32 %v10753, %v10600
        %v10757 = vmul.f32 %v10755, %v10600
        %v10758 = vsub.f32 %v10744, %v10756
        %v10759 = vsub.f32 %v10747, %v10757
        %v10760 = vmul.f32 %v10758, %v10758
        %v10761 = vmul.f32 %v10759, %v10759
        %10762 = vadd.xlane.f32.xlu0 %v10760
        %v10763 = vpop.xlane.xlu0 %10762
        %10764 = vadd.xlane.f32.xlu0 %v10761
        %v10765 = vpop.xlane.xlu0 %10764
        %v10766 = vmul.f32 %v10763, %v10600
        %v10767 = vmul.f32 %v10765, %v10600
        %v10768 = vadd.f32 %v10766, 1e-05
        %v10769 = vadd.f32 %v10767, 1e-05
        %v10770 = vrsqrt.pop %v10768
        %v10771 = vrsqrt.pop %v10769
        %v10772 = vmul.f32 %v10758, %v10770
        %v10773 = vmul.f32 %v10759, %v10771
        %v10775 = vlaneseq
        %v10776 = vshrl.u32 %v10775, 7
        %v10777 = vsub.s32 0, %v10776
        %v10778 = vrot.slane %v10750, %v10777
        %v10780 = vmul.f32 %v10772, %v10778
        %v10781 = vmul.f32 %v10773, %v10778
        %v10783 = vlaneseq
        %v10784 = vshrl.u32 %v10783, 7
        %v10785 = vsub.s32 0, %v10784
        %v10786 = vrot.slane %v10751, %v10785
        %v10788 = vadd.f32 %v10780, %v10786
        %v10789 = vadd.f32 %v10781, %v10786
        %v10790 = vmax.f32 %v10788, 0.0
        %v10791 = vmax.f32 %v10789, 0.0
        %v10792 = vpack.c.bf16 %v10791, %v10790
        %v10793 = vld [vmem:[%s1211] sm:$0xf]
        %v10794 = vld [vmem:[%s1211 + $0x4] sm:$0xf]
        %v10795 = vld [vmem:[%s1211 + $0x8] sm:$0xf]
        %v10796 = vld [vmem:[%s1211 + $0xc] sm:$0xf]
        %v10797 = vld [vmem:[%s1211 + $0x10] sm:$0xf]
        %v10798 = vld [vmem:[%s1211 + $0x14] sm:$0xf]
        %v10799 = vld [vmem:[%s1211 + $0x18] sm:$0xf]
        %v10800 = vld [vmem:[%s1211 + $0x1c] sm:$0xf]
        %v10801 = vld [vmem:[%s1211 + $0x20] sm:$0xf]
        %v10802 = vld [vmem:[%s1211 + $0x24] sm:$0xf]
        %v10803 = vld [vmem:[%s1211 + $0x28] sm:$0xf]
        %v10804 = vld [vmem:[%s1211 + $0x2c] sm:$0xf]
        %v10805 = vld [vmem:[%s1211 + $0x30] sm:$0xf]
        %v10806 = vld [vmem:[%s1211 + $0x34] sm:$0xf]
        %v10807 = vld [vmem:[%s1211 + $0x38] sm:$0xf]
        %v10808 = vld [vmem:[%s1211 + $0x3c] sm:$0xf]
        %v10809 = vld [vmem:[%s1050] sm:$0x1]
        %v10811 = vlaneseq
        %v10812 = vshrl.u32 %v10811, 7
        %v10813 = vsub.s32 0, %v10812
        %v10814 = vrot.slane %v10809, %v10813
        %v10832 = vunpack.c.l.b16 %v10793
        %v10833 = vunpack.c.l.b16 %v10794
        %v10834 = vunpack.c.l.b16 %v10795
        %v10835 = vunpack.c.l.b16 %v10796
        %v10836 = vunpack.c.l.b16 %v10797
        %v10837 = vunpack.c.l.b16 %v10798
        %v10838 = vunpack.c.l.b16 %v10799
        %v10839 = vunpack.c.l.b16 %v10800
        %v10840 = vunpack.c.l.b16 %v10801
        %v10841 = vunpack.c.l.b16 %v10802
        %v10842 = vunpack.c.l.b16 %v10803
        %v10843 = vunpack.c.l.b16 %v10804
        %v10844 = vunpack.c.l.b16 %v10805
        %v10845 = vunpack.c.l.b16 %v10806
        %v10846 = vunpack.c.l.b16 %v10807
        %v10847 = vunpack.c.l.b16 %v10808
        %v10848 = vpack.c.b16 %v10833, %v10832
        %v10849 = vpack.c.b16 %v10835, %v10834
        %v10850 = vpack.c.b16 %v10837, %v10836
        %v10851 = vpack.c.b16 %v10839, %v10838
        %v10852 = vpack.c.b16 %v10841, %v10840
        %v10853 = vpack.c.b16 %v10843, %v10842
        %v10854 = vpack.c.b16 %v10845, %v10844
        %v10855 = vpack.c.b16 %v10847, %v10846
        %10864 = vmatprep.subr.bf16.mxu0 0
        %10865 = vmatpush1.bf16.msra.mxu0 %v10855
        %10866 = vmatprep.subr.bf16.mxu0 0
        %10867 = vmatpush1.bf16.msra.mxu0 %v10854
        %10868 = vmatprep.subr.bf16.mxu0 0
        %10869 = vmatpush1.bf16.msra.mxu0 %v10853
        %10870 = vmatprep.subr.bf16.mxu0 0
        %10871 = vmatpush1.bf16.msra.mxu0 %v10852
        %10872 = vmatprep.subr.bf16.mxu0 0
        %10873 = vmatpush1.bf16.msra.mxu0 %v10851
        %10874 = vmatprep.subr.bf16.mxu0 0
        %10875 = vmatpush1.bf16.msra.mxu0 %v10850
        %10876 = vmatprep.subr.bf16.mxu0 0
        %10877 = vmatpush1.bf16.msra.mxu0 %v10849
        %10878 = vmatprep.subr.bf16.mxu0 0
        %10879 = vmatpush1.bf16.msra.mxu0 %v10848
        %10880 = vmatprep.subr.bf16.mxu0 0
        %10881 = vmatpush2.bf16.msra.mxu0 0
        %10882 = vmatprep.subr.bf16.mxu0 0
        %10883 = vmatpush2.bf16.msra.mxu0 0
        %10884 = vmatprep.subr.bf16.mxu0 0
        %10885 = vmatpush2.bf16.msra.mxu0 0
        %10886 = vmatprep.subr.bf16.mxu0 0
        %10887 = vmatpush2.bf16.msra.mxu0 0
        %10888 = vmatprep.subr.bf16.mxu0 0
        %10889 = vmatpush2.bf16.msra.mxu0 0
        %10890 = vmatprep.subr.bf16.mxu0 0
        %10891 = vmatpush2.bf16.msra.mxu0 0
        %10892 = vmatprep.subr.bf16.mxu0 0
        %10893 = vmatpush2.bf16.msra.mxu0 0
        %10894 = vmatprep.subr.bf16.mxu0 0
        %10895 = vmatpush2.bf16.msra.mxu0 0
        %10896 = vmatprep.mubr.bf16.mxu0 0
        %10897 = vmatmul.mubr.bf16.gmra.mxu0 %v10792
        %v10898 = vpop.f32.mrf.mxu0
        %v10899 = vadd.f32 %v10814, %v10898
        %v10900 = vpop.f32.mrf.mxu0
        %v10901 = vpop.f32.mrf.mxu0
        %v10902 = vadd.f32 %v10814, %v10901
        %v10903 = vpop.f32.mrf.mxu0
        %10904 = vdwg.mxu0
        %v10905 = vld [vmem:[%s1058] sm:$0x1]
        %v10906 = vld [vmem:[%s1066] sm:$0x1]
        %v10907 = vsel %vm9612, %v10899, 0.0
        %10908 = vadd.xlane.f32.xlu0 %v10907
        %v10909 = vpop.xlane.xlu0 %10908
        %v10910 = vsel %vm9612, %v10902, 0.0
        %10911 = vadd.xlane.f32.xlu0 %v10910
        %v10912 = vpop.xlane.xlu0 %10911
        %v10913 = vrcp.pop 64.0
        %v10914 = vmul.f32 %v10909, %v10913
        %v10915 = vmul.f32 %v10912, %v10913
        %v10916 = vsub.f32 %v10899, %v10914
        %v10917 = vsub.f32 %v10902, %v10915
        %v10918 = vmul.f32 %v10916, %v10916
        %v10919 = vmul.f32 %v10917, %v10917
        %v10920 = vsel %vm9612, %v10918, 0.0
        %10921 = vadd.xlane.f32.xlu0 %v10920
        %v10922 = vpop.xlane.xlu0 %10921
        %v10923 = vsel %vm9612, %v10919, 0.0
        %10924 = vadd.xlane.f32.xlu0 %v10923
        %v10925 = vpop.xlane.xlu0 %10924
        %v10926 = vmul.f32 %v10922, %v10913
        %v10927 = vmul.f32 %v10925, %v10913
        %v10928 = vadd.f32 %v10926, 1e-05
        %v10929 = vadd.f32 %v10927, 1e-05
        %v10930 = vrsqrt.pop %v10928
        %v10931 = vrsqrt.pop %v10929
        %v10932 = vmul.f32 %v10916, %v10930
        %v10933 = vmul.f32 %v10917, %v10931
        %v10935 = vlaneseq
        %v10936 = vshrl.u32 %v10935, 7
        %v10937 = vsub.s32 0, %v10936
        %v10938 = vrot.slane %v10905, %v10937
        %v10940 = vmul.f32 %v10932, %v10938
        %v10941 = vmul.f32 %v10933, %v10938
        %v10943 = vlaneseq
        %v10944 = vshrl.u32 %v10943, 7
        %v10945 = vsub.s32 0, %v10944
        %v10946 = vrot.slane %v10906, %v10945
        %v10948 = vadd.f32 %v10940, %v10946
        %v10949 = vadd.f32 %v10941, %v10946
        %v10950 = vmax.f32 %v10948, 0.0
        %v10951 = vmax.f32 %v10949, 0.0
        %10952 = vst.msk [vmem:[%s1216] sm:$0xff] %vm9612, %v10950
        %10953 = vst.msk [vmem:[%s1216 + $0x8] sm:$0xff] %vm9612, %v10951
        %p10954 = scmp.lt.s32.totalorder %s57, 1
        %s10955 = scalar_select %p10954, %s57, 1
        %s10956 = smul.addr %s10955, 2
        %s10957 = smul.addr %s10956, 8
        %s10958 = scalar_lea.vmem %s19, %s10957
        // Predicated region
        $region165: #{similarity_space_forward.1} parent=95 // pred_check
          %p10959 = pneg %p569
        $region166: #{similarity_space_forward.1} parent=95 // pred_check_branch
          %10961 = sbr.rel (%p10959) target = $region168
        $region167: #{similarity_space_forward.1} parent=95 // pred_region
          _
        $region168: #{similarity_space_forward.1} parent=95 // pred_fallthru
          _
      $region96: #{similarity_space_forward.1} parent=5 // pred_fallthru
        _
      %p10962 = scmp.le.s32.totalorder 2, %s52
      // Predicated region
      $region169: #{similarity_space_forward.1} parent=5 // pred_check
        %p10963 = pneg %p10962
      $region170: #{similarity_space_forward.1} parent=5 // pred_check_branch
        %10965 = sbr.rel (%p10963) target = $region172
      $region171: #{similarity_space_forward.1} parent=5 // pred_region
        %s10966 = ssub.s32 %s52, 2
        // Predicated region
        $region173: #{similarity_space_forward.1} parent=171 // pred_check
          %p10967 = pneg %p575
        $region174: #{similarity_space_forward.1} parent=171 // pred_check_branch
          %10969 = sbr.rel (%p10967) target = $region176
        $region175: #{similarity_space_forward.1} parent=171 // pred_region
          %p10970 = scmp.lt.s32.totalorder %s58, 1
          %s10971 = scalar_select %p10970, %s58, 1
          %s10972 = smul.addr %s10971, 2
          %s10973 = smul.addr %s10972, 8
          %s10974 = scalar_lea.vmem %s19, %s10973
        $region176: #{similarity_space_forward.1} parent=171 // pred_fallthru
          _
      $region172: #{similarity_space_forward.1} parent=5 // pred_fallthru
        _
    $region6: #{similarity_space_forward.1} parent=1 // loop_footer
      %s56 = sadd.s32 1, %s52
    $region7: #{similarity_space_forward.1} parent=1 // loop_footer_branch
      %51 = sbr.rel target = $region3
    $region8: #{similarity_space_forward.1} parent=1 // loop_exit
      _
    %10975 = vsyncpa [#allocation3], 1
    %s10976 = scalar_lea.sflag [#allocation3], 1
    %10977 = vsyncpa %s10976, 1
    %10978 = vsyncpa [#allocation5], 1
    %s10979 = scalar_lea.sflag [#allocation5], 1
    %10980 = vsyncpa %s10979, 1
    %10981 = vsyncpa [#allocation8], 1
    %s10982 = scalar_lea.sflag [#allocation8], 1
    %10983 = vsyncpa %s10982, 1
    %10984 = vsyncpa [#allocation11], 1
    %s10985 = scalar_lea.sflag [#allocation11], 1
    %10986 = vsyncpa %s10985, 1
    %10987 = vsyncpa [#allocation14], 1
    %s10988 = scalar_lea.sflag [#allocation14], 1
    %10989 = vsyncpa %s10988, 1
    %10990 = vsyncpa [#allocation17], 1
    %s10991 = scalar_lea.sflag [#allocation17], 1
    %10992 = vsyncpa %s10991, 1
    %10993 = vsyncpa [#allocation20], 1
    %s10994 = scalar_lea.sflag [#allocation20], 1
    %10995 = vsyncpa %s10994, 1
    %10996 = vsyncpa [#allocation23], 1
    %s10997 = scalar_lea.sflag [#allocation23], 1
    %10998 = vsyncpa %s10997, 1
    %10999 = vsyncpa [#allocation26], 1
    %s11000 = scalar_lea.sflag [#allocation26], 1
    %11001 = vsyncpa %s11000, 1

</llo_original>
